<compile_context>
chip_gen: v7x
topology: tpu7x:2x2x1
jax: 0.10.0
libtpu: 0.0.40
codegen_flags: <defaults>
</compile_context>

<pallas_src>
import numpy as np
import jax
import jax.numpy as jnp
from jax.experimental import pallas as pl
from jax.experimental.pallas import tpu as pltpu


# ----------------------------- Pallas kernel -------------------------------

def _make_fractal_kernel(schedule, n_columns, H, W, CP, Cout):
    """Builds the fused per-image kernel.

    schedule: static tuple over depth of (st, ((col, weight_block_idx), ...)).
    Activations are packed (H, W*C) with channels folded into the lane dim.
    """
    WCP = W * CP
    WCO = W * Cout

    def kernel(x_ref, w_ref, scale_ref, bias_ref, o_ref):
        # x_ref:     (H, W*CP)            one image, channel-packed
        # w_ref:     (NB*9, W*CP, W*CO)   block-diagonal folded conv weights
        # scale_ref: (NB, 1, W*CO)        gamma / sqrt(var + eps), W-tiled
        # bias_ref:  (NB, 1, W*CO)        beta - mean * scale,     W-tiled
        # o_ref:     (H, W*CO)

        def conv_bn_relu(v, widx):
            # zero-pad(1) in packed layout: CP zero lanes left/right (w-pad)
            # and one zero row top/bottom (h-pad).
            zc = jnp.zeros((H, CP), jnp.float32)
            vp = jnp.concatenate([zc, v, zc], axis=1)            # (H, (W+2)*CP)
            zr = jnp.zeros((1, (W + 2) * CP), jnp.float32)
            vp = jnp.concatenate([zr, vp, zr], axis=0)           # (H+2, (W+2)*CP)
            acc = jnp.zeros((H, WCO), jnp.float32)
            for kh in range(3):
                for kw in range(3):
                    tap = vp[kh:kh + H, kw * CP:kw * CP + WCP]   # (H, W*CP)
                    acc = acc + jnp.dot(
                        tap, w_ref[widx * 9 + kh * 3 + kw],
                        preferred_element_type=jnp.float32)
            y = acc * scale_ref[widx] + bias_ref[widx]
            return jnp.maximum(y, 0.0)

        x = x_ref[...].astype(jnp.float32)
        outs = [x] * n_columns
        for st, col_blocks in schedule:          # static Python unroll
            acc = None
            for c, widx in col_blocks:
                y = conv_bn_relu(outs[c], widx)
                acc = y if acc is None else acc + y
            joined = acc * (1.0 / len(col_blocks))   # eval-mode join == mean
            for c, _ in col_blocks:
                outs[c] = joined
        # TODO(synk): dropout_pos == 'FD' training-time Dropout2d not applied (eval mode).
        o_ref[...] = outs[-1].astype(o_ref.dtype)

    return kernel


# ------------------------------ parameters ----------------------------------

def init_conv_block(key, c_in, c_out):
    kw, kg, kb = jax.random.split(key, 3)
    w = jax.random.normal(kw, (3, 3, c_in, c_out), jnp.float32) / np.sqrt(9 * c_in)
    gamma = 1.0 + 0.1 * jax.random.normal(kg, (c_out,), jnp.float32)
    beta = 0.1 * jax.random.normal(kb, (c_out,), jnp.float32)
    run_mean = jnp.zeros((c_out,), jnp.float32)   # BatchNorm defaults
    run_var = jnp.ones((c_out,), jnp.float32)
    return (w, gamma, beta, run_mean, run_var)


# ------------------------------- module -------------------------------------

class FractalBlockPallas:
    """Mirrors FractalBlock.__init__ wiring (which columns own a ConvBlock at
    which depth) and the forward-pass column/join schedule, eval mode."""

    def __init__(self, key, n_columns, C_in, C_out, doubling=False, bn_eps=1e-5):
        if doubling:
            # TODO(synk): 1x1 ConvBlock doubler (doubling=True) not wired up.
            raise NotImplementedError("doubling=True not implemented")
        if C_in > C_out:
            # TODO(synk): lane-repacking path for C_in > C_out not implemented.
            raise NotImplementedError("C_in > C_out not supported")
        self.n_columns = n_columns
        self.C_in = C_in
        self.C_out = C_out
        self.bn_eps = bn_eps
        self.max_depth = 2 ** (n_columns - 1)
        self.count = np.zeros([self.max_depth], dtype=np.int64)
        self.blocks = {}       # (col, depth) -> raw ConvBlock params
        self.block_keys = []   # canonical stacking order
        dist = self.max_depth
        for col in range(n_columns):
            for i in range(self.max_depth):
                if (i + 1) % dist == 0:
                    first_block = (i + 1 == dist)
                    cur_C_in = C_in if (first_block and not doubling) else C_out
                    key, sub = jax.random.split(key)
                    self.blocks[(col, i)] = init_conv_block(sub, cur_C_in, C_out)
                    self.block_keys.append((col, i))
                    self.count[i] += 1
            dist //= 2
        self.block_index = {k: idx for idx, k in enumerate(self.block_keys)}
        self._prepared = {}    # W -> (w_bd, scale, bias)

    def _prepare_params(self, W):
        """Fold BN into scale/bias and expand conv weights to block-diagonal
        kron(I_W, w_tap) form matching the lane-packed activation layout."""
        if W in self._prepared:
            return self._prepared[W]
        CP, Cout = self.C_out, self.C_out
        eyeW = jnp.eye(W, dtype=jnp.float32)
        w_bd, scales, biases = [], [], []
        for key_ci in self.block_keys:
            w, gamma, beta, mean, var = self.blocks[key_ci]
            cin = w.shape[2]
            wpad = jnp.pad(w, ((0, 0), (0, 0), (0, CP - cin), (0, 0)))
            w9 = wpad.reshape(9, CP, Cout)
            # bd[k, w*CP + c, x*Cout + o] = I[w, x] * w9[k, c, o]
            bd = jnp.einsum('wx,kco->kwcxo', eyeW, w9).reshape(9, W * CP, W * Cout)
            inv_std = gamma / jnp.sqrt(var + self.bn_eps)
            scales.append(jnp.tile(inv_std, W).reshape(1, W * Cout))
            biases.append(jnp.tile(beta - mean * inv_std, W).reshape(1, W * Cout))
            w_bd.append(bd)
        prepared = (jnp.concatenate(w_bd, axis=0),   # (NB*9, W*CP, W*CO)
                    jnp.stack(scales, axis=0),        # (NB, 1, W*CO)
                    jnp.stack(biases, axis=0))        # (NB, 1, W*CO)
        self._prepared[W] = prepared
        return prepared

    def __call__(self, x_nchw, deepest=False):
        # eval-mode semantics: drop-path (global_cols) and dropout are inactive.
        N, C, H, W = x_nchw.shape
        assert C == self.C_in, (C, self.C_in)
        CP, Cout = self.C_out, self.C_out
        w_bd, scale, bias = self._prepare_params(W)
        NB = len(self.block_keys)

        # NCHW -> lane-packed (N, H, W*CP), zero-padding channels up to CP.
        x = jnp.transpose(x_nchw, (0, 2, 3, 1))                       # NHWC
        x = jnp.pad(x, ((0, 0), (0, 0), (0, 0), (0, CP - C)))
        x = x.reshape(N, H, W * CP)

        # Static per-depth schedule: (st, ((col, weight_block_idx), ...)).
        schedule = []
        for i in range(self.max_depth):
            st = self.n_columns - int(self.count[i])
            if deepest:
                st = self.n_columns - 1
            cols = tuple((c, self.block_index[(c, i)])
                         for c in range(st, self.n_columns))
            schedule.append((st, cols))

        kernel = _make_fractal_kernel(tuple(schedule), self.n_columns,
                                      H, W, CP, Cout)

        out = pl.pallas_call(
            kernel,
            out_shape=jax.ShapeDtypeStruct((N, H, W * Cout), x_nchw.dtype),
            grid=(N,),
            in_specs=[
                pl.BlockSpec((None, H, W * CP), lambda n: (n, 0, 0)),
                pl.BlockSpec((NB * 9, W * CP, W * Cout), lambda n: (0, 0, 0)),
                pl.BlockSpec((NB, 1, W * Cout), lambda n: (0, 0, 0)),
                pl.BlockSpec((NB, 1, W * Cout), lambda n: (0, 0, 0)),
            ],
            out_specs=pl.BlockSpec((None, H, W * Cout), lambda n: (n, 0, 0)),
            compiler_params=pltpu.CompilerParams(
                dimension_semantics=("parallel",),
                vmem_limit_bytes=32 * 1024 * 1024,
            ),
        )(x, w_bd, scale, bias)

        # packed (N, H, W*Cout) -> NCHW
        out = out.reshape(N, H, W, Cout)
        return jnp.transpose(out, (0, 3, 1, 2))


if __name__ == "__main__":
    key = jax.random.PRNGKey(0)
    k_x, k_p = jax.random.split(key)

    # matches PyTorch NCHW input convention
    x = jax.random.normal(k_x, (2, 4, 16, 16), jnp.float32)

    block = FractalBlockPallas(k_p, n_columns=3, C_in=4, C_out=8, doubling=False)
    y = block(x)
    y = jax.block_until_ready(y)

    assert y.shape == (2, 8, 16, 16), y.shape
    assert bool(jnp.all(jnp.isfinite(y)))
    print("KERNEL_OK")
</pallas_src>

<mosaic_0001>
module attributes {stable_mosaic.version = 11 : i64} {
  func.func @kernel(%arg0: i32, %arg1: memref<1x16x128xf32, #tpu.memory_space<vmem>>, %arg2: memref<63x128x128xf32, #tpu.memory_space<vmem>>, %arg3: memref<7x1x128xf32, #tpu.memory_space<vmem>>, %arg4: memref<7x1x128xf32, #tpu.memory_space<vmem>>, %arg5: memref<1x16x128xf32, #tpu.memory_space<vmem>>) attributes {dimension_semantics = [#tpu.dimension_semantics<parallel>], iteration_bounds = array<i64: 2>, scalar_prefetch = 0 : i64, scratch_operands = 0 : i64, tpu.core_type = #tpu.core_type<tc>, window_params = [{transform_indices = @transform_0, window_bounds = array<i64: 1, 16, 128>}, {pipeline_mode = #tpu.pipeline_mode<synchronous>, transform_indices = @transform_1, window_bounds = array<i64: 63, 128, 128>}, {pipeline_mode = #tpu.pipeline_mode<synchronous>, transform_indices = @transform_2, window_bounds = array<i64: 7, 1, 128>}, {pipeline_mode = #tpu.pipeline_mode<synchronous>, transform_indices = @transform_3, window_bounds = array<i64: 7, 1, 128>}, {transform_indices = @transform_4, window_bounds = array<i64: 1, 16, 128>}]} {
    %c0 = arith.constant 0 : index
    %c0_0 = arith.constant 0 : index
    %c0_1 = arith.constant 0 : index
    %0 = vector.load %arg1[%c0, %c0_0, %c0_1] : memref<1x16x128xf32, #tpu.memory_space<vmem>>, vector<1x16x128xf32>
    %1 = vector.shape_cast %0 : vector<1x16x128xf32> to vector<16x128xf32>
    %cst = arith.constant 0.000000e+00 : f32
    %2 = vector.broadcast %cst : f32 to vector<16x8xf32>
    %3 = tpu.concatenate %2, %1, %2 in 1 : vector<16x8xf32>, vector<16x128xf32>, vector<16x8xf32> -> vector<16x144xf32>
    %cst_2 = arith.constant 0.000000e+00 : f32
    %4 = vector.broadcast %cst_2 : f32 to vector<1x144xf32>
    %5 = tpu.concatenate %4, %3, %4 in 0 : vector<1x144xf32>, vector<16x144xf32>, vector<1x144xf32> -> vector<18x144xf32>
    %cst_3 = arith.constant 0.000000e+00 : f32
    %6 = vector.broadcast %cst_3 : f32 to vector<16x128xf32>
    %7 = vector.extract_strided_slice %5 {offsets = [0, 0], sizes = [16, 128], strides = [1, 1]} : vector<18x144xf32> to vector<16x128xf32>
    %c27 = arith.constant 27 : index
    %c0_4 = arith.constant 0 : index
    %c0_5 = arith.constant 0 : index
    %8 = vector.load %arg2[%c27, %c0_4, %c0_5] : memref<63x128x128xf32, #tpu.memory_space<vmem>>, vector<1x128x128xf32>
    %9 = vector.shape_cast %8 : vector<1x128x128xf32> to vector<128x128xf32>
    %cst_6 = arith.constant dense<0.000000e+00> : vector<16x128xf32>
    %10 = tpu.matmul %7, %9, %cst_6 {dimension_numbers = #tpu.dot_dimension_numbers<[1], [0], [0], [1], [0, 0, 1, 1], [], []>} : vector<16x128xf32>, vector<128x128xf32>, vector<16x128xf32> -> vector<16x128xf32>
    %11 = arith.addf %6, %10 : vector<16x128xf32>
    %12 = vector.extract_strided_slice %5 {offsets = [0, 8], sizes = [16, 128], strides = [1, 1]} : vector<18x144xf32> to vector<16x128xf32>
    %c28 = arith.constant 28 : index
    %c0_7 = arith.constant 0 : index
    %c0_8 = arith.constant 0 : index
    %13 = vector.load %arg2[%c28, %c0_7, %c0_8] : memref<63x128x128xf32, #tpu.memory_space<vmem>>, vector<1x128x128xf32>
    %14 = vector.shape_cast %13 : vector<1x128x128xf32> to vector<128x128xf32>
    %cst_9 = arith.constant dense<0.000000e+00> : vector<16x128xf32>
    %15 = tpu.matmul %12, %14, %cst_9 {dimension_numbers = #tpu.dot_dimension_numbers<[1], [0], [0], [1], [0, 0, 1, 1], [], []>} : vector<16x128xf32>, vector<128x128xf32>, vector<16x128xf32> -> vector<16x128xf32>
    %16 = arith.addf %11, %15 : vector<16x128xf32>
    %17 = vector.extract_strided_slice %5 {offsets = [0, 16], sizes = [16, 128], strides = [1, 1]} : vector<18x144xf32> to vector<16x128xf32>
    %c29 = arith.constant 29 : index
    %c0_10 = arith.constant 0 : index
    %c0_11 = arith.constant 0 : index
    %18 = vector.load %arg2[%c29, %c0_10, %c0_11] : memref<63x128x128xf32, #tpu.memory_space<vmem>>, vector<1x128x128xf32>
    %19 = vector.shape_cast %18 : vector<1x128x128xf32> to vector<128x128xf32>
    %cst_12 = arith.constant dense<0.000000e+00> : vector<16x128xf32>
    %20 = tpu.matmul %17, %19, %cst_12 {dimension_numbers = #tpu.dot_dimension_numbers<[1], [0], [0], [1], [0, 0, 1, 1], [], []>} : vector<16x128xf32>, vector<128x128xf32>, vector<16x128xf32> -> vector<16x128xf32>
    %21 = arith.addf %16, %20 : vector<16x128xf32>
    %22 = vector.extract_strided_slice %5 {offsets = [1, 0], sizes = [16, 128], strides = [1, 1]} : vector<18x144xf32> to vector<16x128xf32>
    %c30 = arith.constant 30 : index
    %c0_13 = arith.constant 0 : index
    %c0_14 = arith.constant 0 : index
    %23 = vector.load %arg2[%c30, %c0_13, %c0_14] : memref<63x128x128xf32, #tpu.memory_space<vmem>>, vector<1x128x128xf32>
    %24 = vector.shape_cast %23 : vector<1x128x128xf32> to vector<128x128xf32>
    %cst_15 = arith.constant dense<0.000000e+00> : vector<16x128xf32>
    %25 = tpu.matmul %22, %24, %cst_15 {dimension_numbers = #tpu.dot_dimension_numbers<[1], [0], [0], [1], [0, 0, 1, 1], [], []>} : vector<16x128xf32>, vector<128x128xf32>, vector<16x128xf32> -> vector<16x128xf32>
    %26 = arith.addf %21, %25 : vector<16x128xf32>
    %27 = vector.extract_strided_slice %5 {offsets = [1, 8], sizes = [16, 128], strides = [1, 1]} : vector<18x144xf32> to vector<16x128xf32>
    %c31 = arith.constant 31 : index
    %c0_16 = arith.constant 0 : index
    %c0_17 = arith.constant 0 : index
    %28 = vector.load %arg2[%c31, %c0_16, %c0_17] : memref<63x128x128xf32, #tpu.memory_space<vmem>>, vector<1x128x128xf32>
    %29 = vector.shape_cast %28 : vector<1x128x128xf32> to vector<128x128xf32>
    %cst_18 = arith.constant dense<0.000000e+00> : vector<16x128xf32>
    %30 = tpu.matmul %27, %29, %cst_18 {dimension_numbers = #tpu.dot_dimension_numbers<[1], [0], [0], [1], [0, 0, 1, 1], [], []>} : vector<16x128xf32>, vector<128x128xf32>, vector<16x128xf32> -> vector<16x128xf32>
    %31 = arith.addf %26, %30 : vector<16x128xf32>
    %32 = vector.extract_strided_slice %5 {offsets = [1, 16], sizes = [16, 128], strides = [1, 1]} : vector<18x144xf32> to vector<16x128xf32>
    %c32 = arith.constant 32 : index
    %c0_19 = arith.constant 0 : index
    %c0_20 = arith.constant 0 : index
    %33 = vector.load %arg2[%c32, %c0_19, %c0_20] : memref<63x128x128xf32, #tpu.memory_space<vmem>>, vector<1x128x128xf32>
    %34 = vector.shape_cast %33 : vector<1x128x128xf32> to vector<128x128xf32>
    %cst_21 = arith.constant dense<0.000000e+00> : vector<16x128xf32>
    %35 = tpu.matmul %32, %34, %cst_21 {dimension_numbers = #tpu.dot_dimension_numbers<[1], [0], [0], [1], [0, 0, 1, 1], [], []>} : vector<16x128xf32>, vector<128x128xf32>, vector<16x128xf32> -> vector<16x128xf32>
    %36 = arith.addf %31, %35 : vector<16x128xf32>
    %37 = vector.extract_strided_slice %5 {offsets = [2, 0], sizes = [16, 128], strides = [1, 1]} : vector<18x144xf32> to vector<16x128xf32>
    %c33 = arith.constant 33 : index
    %c0_22 = arith.constant 0 : index
    %c0_23 = arith.constant 0 : index
    %38 = vector.load %arg2[%c33, %c0_22, %c0_23] : memref<63x128x128xf32, #tpu.memory_space<vmem>>, vector<1x128x128xf32>
    %39 = vector.shape_cast %38 : vector<1x128x128xf32> to vector<128x128xf32>
    %cst_24 = arith.constant dense<0.000000e+00> : vector<16x128xf32>
    %40 = tpu.matmul %37, %39, %cst_24 {dimension_numbers = #tpu.dot_dimension_numbers<[1], [0], [0], [1], [0, 0, 1, 1], [], []>} : vector<16x128xf32>, vector<128x128xf32>, vector<16x128xf32> -> vector<16x128xf32>
    %41 = arith.addf %36, %40 : vector<16x128xf32>
    %42 = vector.extract_strided_slice %5 {offsets = [2, 8], sizes = [16, 128], strides = [1, 1]} : vector<18x144xf32> to vector<16x128xf32>
    %c34 = arith.constant 34 : index
    %c0_25 = arith.constant 0 : index
    %c0_26 = arith.constant 0 : index
    %43 = vector.load %arg2[%c34, %c0_25, %c0_26] : memref<63x128x128xf32, #tpu.memory_space<vmem>>, vector<1x128x128xf32>
    %44 = vector.shape_cast %43 : vector<1x128x128xf32> to vector<128x128xf32>
    %cst_27 = arith.constant dense<0.000000e+00> : vector<16x128xf32>
    %45 = tpu.matmul %42, %44, %cst_27 {dimension_numbers = #tpu.dot_dimension_numbers<[1], [0], [0], [1], [0, 0, 1, 1], [], []>} : vector<16x128xf32>, vector<128x128xf32>, vector<16x128xf32> -> vector<16x128xf32>
    %46 = arith.addf %41, %45 : vector<16x128xf32>
    %47 = vector.extract_strided_slice %5 {offsets = [2, 16], sizes = [16, 128], strides = [1, 1]} : vector<18x144xf32> to vector<16x128xf32>
    %c35 = arith.constant 35 : index
    %c0_28 = arith.constant 0 : index
    %c0_29 = arith.constant 0 : index
    %48 = vector.load %arg2[%c35, %c0_28, %c0_29] : memref<63x128x128xf32, #tpu.memory_space<vmem>>, vector<1x128x128xf32>
    %49 = vector.shape_cast %48 : vector<1x128x128xf32> to vector<128x128xf32>
    %cst_30 = arith.constant dense<0.000000e+00> : vector<16x128xf32>
    %50 = tpu.matmul %47, %49, %cst_30 {dimension_numbers = #tpu.dot_dimension_numbers<[1], [0], [0], [1], [0, 0, 1, 1], [], []>} : vector<16x128xf32>, vector<128x128xf32>, vector<16x128xf32> -> vector<16x128xf32>
    %51 = arith.addf %46, %50 : vector<16x128xf32>
    %c3 = arith.constant 3 : index
    %c0_31 = arith.constant 0 : index
    %c0_32 = arith.constant 0 : index
    %52 = vector.load %arg3[%c3, %c0_31, %c0_32] : memref<7x1x128xf32, #tpu.memory_space<vmem>>, vector<1x1x128xf32>
    %53 = vector.shape_cast %52 : vector<1x1x128xf32> to vector<1x128xf32>
    %54 = vector.broadcast %53 : vector<1x128xf32> to vector<16x128xf32>
    %55 = arith.mulf %51, %54 : vector<16x128xf32>
    %c3_33 = arith.constant 3 : index
    %c0_34 = arith.constant 0 : index
    %c0_35 = arith.constant 0 : index
    %56 = vector.load %arg4[%c3_33, %c0_34, %c0_35] : memref<7x1x128xf32, #tpu.memory_space<vmem>>, vector<1x1x128xf32>
    %57 = vector.shape_cast %56 : vector<1x1x128xf32> to vector<1x128xf32>
    %58 = vector.broadcast %57 : vector<1x128xf32> to vector<16x128xf32>
    %59 = arith.addf %55, %58 : vector<16x128xf32>
    %cst_36 = arith.constant 0.000000e+00 : f32
    %60 = vector.broadcast %cst_36 : f32 to vector<16x128xf32>
    %61 = arith.maximumf %59, %60 : vector<16x128xf32>
    %cst_37 = arith.constant 1.000000e+00 : f32
    %62 = vector.broadcast %cst_37 : f32 to vector<16x128xf32>
    %63 = arith.mulf %61, %62 : vector<16x128xf32>
    %cst_38 = arith.constant 0.000000e+00 : f32
    %64 = vector.broadcast %cst_38 : f32 to vector<16x8xf32>
    %65 = tpu.concatenate %64, %1, %64 in 1 : vector<16x8xf32>, vector<16x128xf32>, vector<16x8xf32> -> vector<16x144xf32>
    %cst_39 = arith.constant 0.000000e+00 : f32
    %66 = vector.broadcast %cst_39 : f32 to vector<1x144xf32>
    %67 = tpu.concatenate %66, %65, %66 in 0 : vector<1x144xf32>, vector<16x144xf32>, vector<1x144xf32> -> vector<18x144xf32>
    %cst_40 = arith.constant 0.000000e+00 : f32
    %68 = vector.broadcast %cst_40 : f32 to vector<16x128xf32>
    %69 = vector.extract_strided_slice %67 {offsets = [0, 0], sizes = [16, 128], strides = [1, 1]} : vector<18x144xf32> to vector<16x128xf32>
    %c9 = arith.constant 9 : index
    %c0_41 = arith.constant 0 : index
    %c0_42 = arith.constant 0 : index
    %70 = vector.load %arg2[%c9, %c0_41, %c0_42] : memref<63x128x128xf32, #tpu.memory_space<vmem>>, vector<1x128x128xf32>
    %71 = vector.shape_cast %70 : vector<1x128x128xf32> to vector<128x128xf32>
    %cst_43 = arith.constant dense<0.000000e+00> : vector<16x128xf32>
    %72 = tpu.matmul %69, %71, %cst_43 {dimension_numbers = #tpu.dot_dimension_numbers<[1], [0], [0], [1], [0, 0, 1, 1], [], []>} : vector<16x128xf32>, vector<128x128xf32>, vector<16x128xf32> -> vector<16x128xf32>
    %73 = arith.addf %68, %72 : vector<16x128xf32>
    %74 = vector.extract_strided_slice %67 {offsets = [0, 8], sizes = [16, 128], strides = [1, 1]} : vector<18x144xf32> to vector<16x128xf32>
    %c10 = arith.constant 10 : index
    %c0_44 = arith.constant 0 : index
    %c0_45 = arith.constant 0 : index
    %75 = vector.load %arg2[%c10, %c0_44, %c0_45] : memref<63x128x128xf32, #tpu.memory_space<vmem>>, vector<1x128x128xf32>
    %76 = vector.shape_cast %75 : vector<1x128x128xf32> to vector<128x128xf32>
    %cst_46 = arith.constant dense<0.000000e+00> : vector<16x128xf32>
    %77 = tpu.matmul %74, %76, %cst_46 {dimension_numbers = #tpu.dot_dimension_numbers<[1], [0], [0], [1], [0, 0, 1, 1], [], []>} : vector<16x128xf32>, vector<128x128xf32>, vector<16x128xf32> -> vector<16x128xf32>
    %78 = arith.addf %73, %77 : vector<16x128xf32>
    %79 = vector.extract_strided_slice %67 {offsets = [0, 16], sizes = [16, 128], strides = [1, 1]} : vector<18x144xf32> to vector<16x128xf32>
    %c11 = arith.constant 11 : index
    %c0_47 = arith.constant 0 : index
    %c0_48 = arith.constant 0 : index
    %80 = vector.load %arg2[%c11, %c0_47, %c0_48] : memref<63x128x128xf32, #tpu.memory_space<vmem>>, vector<1x128x128xf32>
    %81 = vector.shape_cast %80 : vector<1x128x128xf32> to vector<128x128xf32>
    %cst_49 = arith.constant dense<0.000000e+00> : vector<16x128xf32>
    %82 = tpu.matmul %79, %81, %cst_49 {dimension_numbers = #tpu.dot_dimension_numbers<[1], [0], [0], [1], [0, 0, 1, 1], [], []>} : vector<16x128xf32>, vector<128x128xf32>, vector<16x128xf32> -> vector<16x128xf32>
    %83 = arith.addf %78, %82 : vector<16x128xf32>
    %84 = vector.extract_strided_slice %67 {offsets = [1, 0], sizes = [16, 128], strides = [1, 1]} : vector<18x144xf32> to vector<16x128xf32>
    %c12 = arith.constant 12 : index
    %c0_50 = arith.constant 0 : index
    %c0_51 = arith.constant 0 : index
    %85 = vector.load %arg2[%c12, %c0_50, %c0_51] : memref<63x128x128xf32, #tpu.memory_space<vmem>>, vector<1x128x128xf32>
    %86 = vector.shape_cast %85 : vector<1x128x128xf32> to vector<128x128xf32>
    %cst_52 = arith.constant dense<0.000000e+00> : vector<16x128xf32>
    %87 = tpu.matmul %84, %86, %cst_52 {dimension_numbers = #tpu.dot_dimension_numbers<[1], [0], [0], [1], [0, 0, 1, 1], [], []>} : vector<16x128xf32>, vector<128x128xf32>, vector<16x128xf32> -> vector<16x128xf32>
    %88 = arith.addf %83, %87 : vector<16x128xf32>
    %89 = vector.extract_strided_slice %67 {offsets = [1, 8], sizes = [16, 128], strides = [1, 1]} : vector<18x144xf32> to vector<16x128xf32>
    %c13 = arith.constant 13 : index
    %c0_53 = arith.constant 0 : index
    %c0_54 = arith.constant 0 : index
    %90 = vector.load %arg2[%c13, %c0_53, %c0_54] : memref<63x128x128xf32, #tpu.memory_space<vmem>>, vector<1x128x128xf32>
    %91 = vector.shape_cast %90 : vector<1x128x128xf32> to vector<128x128xf32>
    %cst_55 = arith.constant dense<0.000000e+00> : vector<16x128xf32>
    %92 = tpu.matmul %89, %91, %cst_55 {dimension_numbers = #tpu.dot_dimension_numbers<[1], [0], [0], [1], [0, 0, 1, 1], [], []>} : vector<16x128xf32>, vector<128x128xf32>, vector<16x128xf32> -> vector<16x128xf32>
    %93 = arith.addf %88, %92 : vector<16x128xf32>
    %94 = vector.extract_strided_slice %67 {offsets = [1, 16], sizes = [16, 128], strides = [1, 1]} : vector<18x144xf32> to vector<16x128xf32>
    %c14 = arith.constant 14 : index
    %c0_56 = arith.constant 0 : index
    %c0_57 = arith.constant 0 : index
    %95 = vector.load %arg2[%c14, %c0_56, %c0_57] : memref<63x128x128xf32, #tpu.memory_space<vmem>>, vector<1x128x128xf32>
    %96 = vector.shape_cast %95 : vector<1x128x128xf32> to vector<128x128xf32>
    %cst_58 = arith.constant dense<0.000000e+00> : vector<16x128xf32>
    %97 = tpu.matmul %94, %96, %cst_58 {dimension_numbers = #tpu.dot_dimension_numbers<[1], [0], [0], [1], [0, 0, 1, 1], [], []>} : vector<16x128xf32>, vector<128x128xf32>, vector<16x128xf32> -> vector<16x128xf32>
    %98 = arith.addf %93, %97 : vector<16x128xf32>
    %99 = vector.extract_strided_slice %67 {offsets = [2, 0], sizes = [16, 128], strides = [1, 1]} : vector<18x144xf32> to vector<16x128xf32>
    %c15 = arith.constant 15 : index
    %c0_59 = arith.constant 0 : index
    %c0_60 = arith.constant 0 : index
    %100 = vector.load %arg2[%c15, %c0_59, %c0_60] : memref<63x128x128xf32, #tpu.memory_space<vmem>>, vector<1x128x128xf32>
    %101 = vector.shape_cast %100 : vector<1x128x128xf32> to vector<128x128xf32>
    %cst_61 = arith.constant dense<0.000000e+00> : vector<16x128xf32>
    %102 = tpu.matmul %99, %101, %cst_61 {dimension_numbers = #tpu.dot_dimension_numbers<[1], [0], [0], [1], [0, 0, 1, 1], [], []>} : vector<16x128xf32>, vector<128x128xf32>, vector<16x128xf32> -> vector<16x128xf32>
    %103 = arith.addf %98, %102 : vector<16x128xf32>
    %104 = vector.extract_strided_slice %67 {offsets = [2, 8], sizes = [16, 128], strides = [1, 1]} : vector<18x144xf32> to vector<16x128xf32>
    %c16 = arith.constant 16 : index
    %c0_62 = arith.constant 0 : index
    %c0_63 = arith.constant 0 : index
    %105 = vector.load %arg2[%c16, %c0_62, %c0_63] : memref<63x128x128xf32, #tpu.memory_space<vmem>>, vector<1x128x128xf32>
    %106 = vector.shape_cast %105 : vector<1x128x128xf32> to vector<128x128xf32>
    %cst_64 = arith.constant dense<0.000000e+00> : vector<16x128xf32>
    %107 = tpu.matmul %104, %106, %cst_64 {dimension_numbers = #tpu.dot_dimension_numbers<[1], [0], [0], [1], [0, 0, 1, 1], [], []>} : vector<16x128xf32>, vector<128x128xf32>, vector<16x128xf32> -> vector<16x128xf32>
    %108 = arith.addf %103, %107 : vector<16x128xf32>
    %109 = vector.extract_strided_slice %67 {offsets = [2, 16], sizes = [16, 128], strides = [1, 1]} : vector<18x144xf32> to vector<16x128xf32>
    %c17 = arith.constant 17 : index
    %c0_65 = arith.constant 0 : index
    %c0_66 = arith.constant 0 : index
    %110 = vector.load %arg2[%c17, %c0_65, %c0_66] : memref<63x128x128xf32, #tpu.memory_space<vmem>>, vector<1x128x128xf32>
    %111 = vector.shape_cast %110 : vector<1x128x128xf32> to vector<128x128xf32>
    %cst_67 = arith.constant dense<0.000000e+00> : vector<16x128xf32>
    %112 = tpu.matmul %109, %111, %cst_67 {dimension_numbers = #tpu.dot_dimension_numbers<[1], [0], [0], [1], [0, 0, 1, 1], [], []>} : vector<16x128xf32>, vector<128x128xf32>, vector<16x128xf32> -> vector<16x128xf32>
    %113 = arith.addf %108, %112 : vector<16x128xf32>
    %c1 = arith.constant 1 : index
    %c0_68 = arith.constant 0 : index
    %c0_69 = arith.constant 0 : index
    %114 = vector.load %arg3[%c1, %c0_68, %c0_69] : memref<7x1x128xf32, #tpu.memory_space<vmem>>, vector<1x1x128xf32>
    %115 = vector.shape_cast %114 : vector<1x1x128xf32> to vector<1x128xf32>
    %116 = vector.broadcast %115 : vector<1x128xf32> to vector<16x128xf32>
    %117 = arith.mulf %113, %116 : vector<16x128xf32>
    %c1_70 = arith.constant 1 : index
    %c0_71 = arith.constant 0 : index
    %c0_72 = arith.constant 0 : index
    %118 = vector.load %arg4[%c1_70, %c0_71, %c0_72] : memref<7x1x128xf32, #tpu.memory_space<vmem>>, vector<1x1x128xf32>
    %119 = vector.shape_cast %118 : vector<1x1x128xf32> to vector<1x128xf32>
    %120 = vector.broadcast %119 : vector<1x128xf32> to vector<16x128xf32>
    %121 = arith.addf %117, %120 : vector<16x128xf32>
    %cst_73 = arith.constant 0.000000e+00 : f32
    %122 = vector.broadcast %cst_73 : f32 to vector<16x128xf32>
    %123 = arith.maximumf %121, %122 : vector<16x128xf32>
    %cst_74 = arith.constant 0.000000e+00 : f32
    %124 = vector.broadcast %cst_74 : f32 to vector<16x8xf32>
    %125 = tpu.concatenate %124, %63, %124 in 1 : vector<16x8xf32>, vector<16x128xf32>, vector<16x8xf32> -> vector<16x144xf32>
    %cst_75 = arith.constant 0.000000e+00 : f32
    %126 = vector.broadcast %cst_75 : f32 to vector<1x144xf32>
    %127 = tpu.concatenate %126, %125, %126 in 0 : vector<1x144xf32>, vector<16x144xf32>, vector<1x144xf32> -> vector<18x144xf32>
    %cst_76 = arith.constant 0.000000e+00 : f32
    %128 = vector.broadcast %cst_76 : f32 to vector<16x128xf32>
    %129 = vector.extract_strided_slice %127 {offsets = [0, 0], sizes = [16, 128], strides = [1, 1]} : vector<18x144xf32> to vector<16x128xf32>
    %c36 = arith.constant 36 : index
    %c0_77 = arith.constant 0 : index
    %c0_78 = arith.constant 0 : index
    %130 = vector.load %arg2[%c36, %c0_77, %c0_78] : memref<63x128x128xf32, #tpu.memory_space<vmem>>, vector<1x128x128xf32>
    %131 = vector.shape_cast %130 : vector<1x128x128xf32> to vector<128x128xf32>
    %cst_79 = arith.constant dense<0.000000e+00> : vector<16x128xf32>
    %132 = tpu.matmul %129, %131, %cst_79 {dimension_numbers = #tpu.dot_dimension_numbers<[1], [0], [0], [1], [0, 0, 1, 1], [], []>} : vector<16x128xf32>, vector<128x128xf32>, vector<16x128xf32> -> vector<16x128xf32>
    %133 = arith.addf %128, %132 : vector<16x128xf32>
    %134 = vector.extract_strided_slice %127 {offsets = [0, 8], sizes = [16, 128], strides = [1, 1]} : vector<18x144xf32> to vector<16x128xf32>
    %c37 = arith.constant 37 : index
    %c0_80 = arith.constant 0 : index
    %c0_81 = arith.constant 0 : index
    %135 = vector.load %arg2[%c37, %c0_80, %c0_81] : memref<63x128x128xf32, #tpu.memory_space<vmem>>, vector<1x128x128xf32>
    %136 = vector.shape_cast %135 : vector<1x128x128xf32> to vector<128x128xf32>
    %cst_82 = arith.constant dense<0.000000e+00> : vector<16x128xf32>
    %137 = tpu.matmul %134, %136, %cst_82 {dimension_numbers = #tpu.dot_dimension_numbers<[1], [0], [0], [1], [0, 0, 1, 1], [], []>} : vector<16x128xf32>, vector<128x128xf32>, vector<16x128xf32> -> vector<16x128xf32>
    %138 = arith.addf %133, %137 : vector<16x128xf32>
    %139 = vector.extract_strided_slice %127 {offsets = [0, 16], sizes = [16, 128], strides = [1, 1]} : vector<18x144xf32> to vector<16x128xf32>
    %c38 = arith.constant 38 : index
    %c0_83 = arith.constant 0 : index
    %c0_84 = arith.constant 0 : index
    %140 = vector.load %arg2[%c38, %c0_83, %c0_84] : memref<63x128x128xf32, #tpu.memory_space<vmem>>, vector<1x128x128xf32>
    %141 = vector.shape_cast %140 : vector<1x128x128xf32> to vector<128x128xf32>
    %cst_85 = arith.constant dense<0.000000e+00> : vector<16x128xf32>
    %142 = tpu.matmul %139, %141, %cst_85 {dimension_numbers = #tpu.dot_dimension_numbers<[1], [0], [0], [1], [0, 0, 1, 1], [], []>} : vector<16x128xf32>, vector<128x128xf32>, vector<16x128xf32> -> vector<16x128xf32>
    %143 = arith.addf %138, %142 : vector<16x128xf32>
    %144 = vector.extract_strided_slice %127 {offsets = [1, 0], sizes = [16, 128], strides = [1, 1]} : vector<18x144xf32> to vector<16x128xf32>
    %c39 = arith.constant 39 : index
    %c0_86 = arith.constant 0 : index
    %c0_87 = arith.constant 0 : index
    %145 = vector.load %arg2[%c39, %c0_86, %c0_87] : memref<63x128x128xf32, #tpu.memory_space<vmem>>, vector<1x128x128xf32>
    %146 = vector.shape_cast %145 : vector<1x128x128xf32> to vector<128x128xf32>
    %cst_88 = arith.constant dense<0.000000e+00> : vector<16x128xf32>
    %147 = tpu.matmul %144, %146, %cst_88 {dimension_numbers = #tpu.dot_dimension_numbers<[1], [0], [0], [1], [0, 0, 1, 1], [], []>} : vector<16x128xf32>, vector<128x128xf32>, vector<16x128xf32> -> vector<16x128xf32>
    %148 = arith.addf %143, %147 : vector<16x128xf32>
    %149 = vector.extract_strided_slice %127 {offsets = [1, 8], sizes = [16, 128], strides = [1, 1]} : vector<18x144xf32> to vector<16x128xf32>
    %c40 = arith.constant 40 : index
    %c0_89 = arith.constant 0 : index
    %c0_90 = arith.constant 0 : index
    %150 = vector.load %arg2[%c40, %c0_89, %c0_90] : memref<63x128x128xf32, #tpu.memory_space<vmem>>, vector<1x128x128xf32>
    %151 = vector.shape_cast %150 : vector<1x128x128xf32> to vector<128x128xf32>
    %cst_91 = arith.constant dense<0.000000e+00> : vector<16x128xf32>
    %152 = tpu.matmul %149, %151, %cst_91 {dimension_numbers = #tpu.dot_dimension_numbers<[1], [0], [0], [1], [0, 0, 1, 1], [], []>} : vector<16x128xf32>, vector<128x128xf32>, vector<16x128xf32> -> vector<16x128xf32>
    %153 = arith.addf %148, %152 : vector<16x128xf32>
    %154 = vector.extract_strided_slice %127 {offsets = [1, 16], sizes = [16, 128], strides = [1, 1]} : vector<18x144xf32> to vector<16x128xf32>
    %c41 = arith.constant 41 : index
    %c0_92 = arith.constant 0 : index
    %c0_93 = arith.constant 0 : index
    %155 = vector.load %arg2[%c41, %c0_92, %c0_93] : memref<63x128x128xf32, #tpu.memory_space<vmem>>, vector<1x128x128xf32>
    %156 = vector.shape_cast %155 : vector<1x128x128xf32> to vector<128x128xf32>
    %cst_94 = arith.constant dense<0.000000e+00> : vector<16x128xf32>
    %157 = tpu.matmul %154, %156, %cst_94 {dimension_numbers = #tpu.dot_dimension_numbers<[1], [0], [0], [1], [0, 0, 1, 1], [], []>} : vector<16x128xf32>, vector<128x128xf32>, vector<16x128xf32> -> vector<16x128xf32>
    %158 = arith.addf %153, %157 : vector<16x128xf32>
    %159 = vector.extract_strided_slice %127 {offsets = [2, 0], sizes = [16, 128], strides = [1, 1]} : vector<18x144xf32> to vector<16x128xf32>
    %c42 = arith.constant 42 : index
    %c0_95 = arith.constant 0 : index
    %c0_96 = arith.constant 0 : index
    %160 = vector.load %arg2[%c42, %c0_95, %c0_96] : memref<63x128x128xf32, #tpu.memory_space<vmem>>, vector<1x128x128xf32>
    %161 = vector.shape_cast %160 : vector<1x128x128xf32> to vector<128x128xf32>
    %cst_97 = arith.constant dense<0.000000e+00> : vector<16x128xf32>
    %162 = tpu.matmul %159, %161, %cst_97 {dimension_numbers = #tpu.dot_dimension_numbers<[1], [0], [0], [1], [0, 0, 1, 1], [], []>} : vector<16x128xf32>, vector<128x128xf32>, vector<16x128xf32> -> vector<16x128xf32>
    %163 = arith.addf %158, %162 : vector<16x128xf32>
    %164 = vector.extract_strided_slice %127 {offsets = [2, 8], sizes = [16, 128], strides = [1, 1]} : vector<18x144xf32> to vector<16x128xf32>
    %c43 = arith.constant 43 : index
    %c0_98 = arith.constant 0 : index
    %c0_99 = arith.constant 0 : index
    %165 = vector.load %arg2[%c43, %c0_98, %c0_99] : memref<63x128x128xf32, #tpu.memory_space<vmem>>, vector<1x128x128xf32>
    %166 = vector.shape_cast %165 : vector<1x128x128xf32> to vector<128x128xf32>
    %cst_100 = arith.constant dense<0.000000e+00> : vector<16x128xf32>
    %167 = tpu.matmul %164, %166, %cst_100 {dimension_numbers = #tpu.dot_dimension_numbers<[1], [0], [0], [1], [0, 0, 1, 1], [], []>} : vector<16x128xf32>, vector<128x128xf32>, vector<16x128xf32> -> vector<16x128xf32>
    %168 = arith.addf %163, %167 : vector<16x128xf32>
    %169 = vector.extract_strided_slice %127 {offsets = [2, 16], sizes = [16, 128], strides = [1, 1]} : vector<18x144xf32> to vector<16x128xf32>
    %c44 = arith.constant 44 : index
    %c0_101 = arith.constant 0 : index
    %c0_102 = arith.constant 0 : index
    %170 = vector.load %arg2[%c44, %c0_101, %c0_102] : memref<63x128x128xf32, #tpu.memory_space<vmem>>, vector<1x128x128xf32>
    %171 = vector.shape_cast %170 : vector<1x128x128xf32> to vector<128x128xf32>
    %cst_103 = arith.constant dense<0.000000e+00> : vector<16x128xf32>
    %172 = tpu.matmul %169, %171, %cst_103 {dimension_numbers = #tpu.dot_dimension_numbers<[1], [0], [0], [1], [0, 0, 1, 1], [], []>} : vector<16x128xf32>, vector<128x128xf32>, vector<16x128xf32> -> vector<16x128xf32>
    %173 = arith.addf %168, %172 : vector<16x128xf32>
    %c4 = arith.constant 4 : index
    %c0_104 = arith.constant 0 : index
    %c0_105 = arith.constant 0 : index
    %174 = vector.load %arg3[%c4, %c0_104, %c0_105] : memref<7x1x128xf32, #tpu.memory_space<vmem>>, vector<1x1x128xf32>
    %175 = vector.shape_cast %174 : vector<1x1x128xf32> to vector<1x128xf32>
    %176 = vector.broadcast %175 : vector<1x128xf32> to vector<16x128xf32>
    %177 = arith.mulf %173, %176 : vector<16x128xf32>
    %c4_106 = arith.constant 4 : index
    %c0_107 = arith.constant 0 : index
    %c0_108 = arith.constant 0 : index
    %178 = vector.load %arg4[%c4_106, %c0_107, %c0_108] : memref<7x1x128xf32, #tpu.memory_space<vmem>>, vector<1x1x128xf32>
    %179 = vector.shape_cast %178 : vector<1x1x128xf32> to vector<1x128xf32>
    %180 = vector.broadcast %179 : vector<1x128xf32> to vector<16x128xf32>
    %181 = arith.addf %177, %180 : vector<16x128xf32>
    %cst_109 = arith.constant 0.000000e+00 : f32
    %182 = vector.broadcast %cst_109 : f32 to vector<16x128xf32>
    %183 = arith.maximumf %181, %182 : vector<16x128xf32>
    %184 = arith.addf %123, %183 : vector<16x128xf32>
    %cst_110 = arith.constant 5.000000e-01 : f32
    %185 = vector.broadcast %cst_110 : f32 to vector<16x128xf32>
    %186 = arith.mulf %184, %185 : vector<16x128xf32>
    %cst_111 = arith.constant 0.000000e+00 : f32
    %187 = vector.broadcast %cst_111 : f32 to vector<16x8xf32>
    %188 = tpu.concatenate %187, %186, %187 in 1 : vector<16x8xf32>, vector<16x128xf32>, vector<16x8xf32> -> vector<16x144xf32>
    %cst_112 = arith.constant 0.000000e+00 : f32
    %189 = vector.broadcast %cst_112 : f32 to vector<1x144xf32>
    %190 = tpu.concatenate %189, %188, %189 in 0 : vector<1x144xf32>, vector<16x144xf32>, vector<1x144xf32> -> vector<18x144xf32>
    %cst_113 = arith.constant 0.000000e+00 : f32
    %191 = vector.broadcast %cst_113 : f32 to vector<16x128xf32>
    %192 = vector.extract_strided_slice %190 {offsets = [0, 0], sizes = [16, 128], strides = [1, 1]} : vector<18x144xf32> to vector<16x128xf32>
    %c45 = arith.constant 45 : index
    %c0_114 = arith.constant 0 : index
    %c0_115 = arith.constant 0 : index
    %193 = vector.load %arg2[%c45, %c0_114, %c0_115] : memref<63x128x128xf32, #tpu.memory_space<vmem>>, vector<1x128x128xf32>
    %194 = vector.shape_cast %193 : vector<1x128x128xf32> to vector<128x128xf32>
    %cst_116 = arith.constant dense<0.000000e+00> : vector<16x128xf32>
    %195 = tpu.matmul %192, %194, %cst_116 {dimension_numbers = #tpu.dot_dimension_numbers<[1], [0], [0], [1], [0, 0, 1, 1], [], []>} : vector<16x128xf32>, vector<128x128xf32>, vector<16x128xf32> -> vector<16x128xf32>
    %196 = arith.addf %191, %195 : vector<16x128xf32>
    %197 = vector.extract_strided_slice %190 {offsets = [0, 8], sizes = [16, 128], strides = [1, 1]} : vector<18x144xf32> to vector<16x128xf32>
    %c46 = arith.constant 46 : index
    %c0_117 = arith.constant 0 : index
    %c0_118 = arith.constant 0 : index
    %198 = vector.load %arg2[%c46, %c0_117, %c0_118] : memref<63x128x128xf32, #tpu.memory_space<vmem>>, vector<1x128x128xf32>
    %199 = vector.shape_cast %198 : vector<1x128x128xf32> to vector<128x128xf32>
    %cst_119 = arith.constant dense<0.000000e+00> : vector<16x128xf32>
    %200 = tpu.matmul %197, %199, %cst_119 {dimension_numbers = #tpu.dot_dimension_numbers<[1], [0], [0], [1], [0, 0, 1, 1], [], []>} : vector<16x128xf32>, vector<128x128xf32>, vector<16x128xf32> -> vector<16x128xf32>
    %201 = arith.addf %196, %200 : vector<16x128xf32>
    %202 = vector.extract_strided_slice %190 {offsets = [0, 16], sizes = [16, 128], strides = [1, 1]} : vector<18x144xf32> to vector<16x128xf32>
    %c47 = arith.constant 47 : index
    %c0_120 = arith.constant 0 : index
    %c0_121 = arith.constant 0 : index
    %203 = vector.load %arg2[%c47, %c0_120, %c0_121] : memref<63x128x128xf32, #tpu.memory_space<vmem>>, vector<1x128x128xf32>
    %204 = vector.shape_cast %203 : vector<1x128x128xf32> to vector<128x128xf32>
    %cst_122 = arith.constant dense<0.000000e+00> : vector<16x128xf32>
    %205 = tpu.matmul %202, %204, %cst_122 {dimension_numbers = #tpu.dot_dimension_numbers<[1], [0], [0], [1], [0, 0, 1, 1], [], []>} : vector<16x128xf32>, vector<128x128xf32>, vector<16x128xf32> -> vector<16x128xf32>
    %206 = arith.addf %201, %205 : vector<16x128xf32>
    %207 = vector.extract_strided_slice %190 {offsets = [1, 0], sizes = [16, 128], strides = [1, 1]} : vector<18x144xf32> to vector<16x128xf32>
    %c48 = arith.constant 48 : index
    %c0_123 = arith.constant 0 : index
    %c0_124 = arith.constant 0 : index
    %208 = vector.load %arg2[%c48, %c0_123, %c0_124] : memref<63x128x128xf32, #tpu.memory_space<vmem>>, vector<1x128x128xf32>
    %209 = vector.shape_cast %208 : vector<1x128x128xf32> to vector<128x128xf32>
    %cst_125 = arith.constant dense<0.000000e+00> : vector<16x128xf32>
    %210 = tpu.matmul %207, %209, %cst_125 {dimension_numbers = #tpu.dot_dimension_numbers<[1], [0], [0], [1], [0, 0, 1, 1], [], []>} : vector<16x128xf32>, vector<128x128xf32>, vector<16x128xf32> -> vector<16x128xf32>
    %211 = arith.addf %206, %210 : vector<16x128xf32>
    %212 = vector.extract_strided_slice %190 {offsets = [1, 8], sizes = [16, 128], strides = [1, 1]} : vector<18x144xf32> to vector<16x128xf32>
    %c49 = arith.constant 49 : index
    %c0_126 = arith.constant 0 : index
    %c0_127 = arith.constant 0 : index
    %213 = vector.load %arg2[%c49, %c0_126, %c0_127] : memref<63x128x128xf32, #tpu.memory_space<vmem>>, vector<1x128x128xf32>
    %214 = vector.shape_cast %213 : vector<1x128x128xf32> to vector<128x128xf32>
    %cst_128 = arith.constant dense<0.000000e+00> : vector<16x128xf32>
    %215 = tpu.matmul %212, %214, %cst_128 {dimension_numbers = #tpu.dot_dimension_numbers<[1], [0], [0], [1], [0, 0, 1, 1], [], []>} : vector<16x128xf32>, vector<128x128xf32>, vector<16x128xf32> -> vector<16x128xf32>
    %216 = arith.addf %211, %215 : vector<16x128xf32>
    %217 = vector.extract_strided_slice %190 {offsets = [1, 16], sizes = [16, 128], strides = [1, 1]} : vector<18x144xf32> to vector<16x128xf32>
    %c50 = arith.constant 50 : index
    %c0_129 = arith.constant 0 : index
    %c0_130 = arith.constant 0 : index
    %218 = vector.load %arg2[%c50, %c0_129, %c0_130] : memref<63x128x128xf32, #tpu.memory_space<vmem>>, vector<1x128x128xf32>
    %219 = vector.shape_cast %218 : vector<1x128x128xf32> to vector<128x128xf32>
    %cst_131 = arith.constant dense<0.000000e+00> : vector<16x128xf32>
    %220 = tpu.matmul %217, %219, %cst_131 {dimension_numbers = #tpu.dot_dimension_numbers<[1], [0], [0], [1], [0, 0, 1, 1], [], []>} : vector<16x128xf32>, vector<128x128xf32>, vector<16x128xf32> -> vector<16x128xf32>
    %221 = arith.addf %216, %220 : vector<16x128xf32>
    %222 = vector.extract_strided_slice %190 {offsets = [2, 0], sizes = [16, 128], strides = [1, 1]} : vector<18x144xf32> to vector<16x128xf32>
    %c51 = arith.constant 51 : index
    %c0_132 = arith.constant 0 : index
    %c0_133 = arith.constant 0 : index
    %223 = vector.load %arg2[%c51, %c0_132, %c0_133] : memref<63x128x128xf32, #tpu.memory_space<vmem>>, vector<1x128x128xf32>
    %224 = vector.shape_cast %223 : vector<1x128x128xf32> to vector<128x128xf32>
    %cst_134 = arith.constant dense<0.000000e+00> : vector<16x128xf32>
    %225 = tpu.matmul %222, %224, %cst_134 {dimension_numbers = #tpu.dot_dimension_numbers<[1], [0], [0], [1], [0, 0, 1, 1], [], []>} : vector<16x128xf32>, vector<128x128xf32>, vector<16x128xf32> -> vector<16x128xf32>
    %226 = arith.addf %221, %225 : vector<16x128xf32>
    %227 = vector.extract_strided_slice %190 {offsets = [2, 8], sizes = [16, 128], strides = [1, 1]} : vector<18x144xf32> to vector<16x128xf32>
    %c52 = arith.constant 52 : index
    %c0_135 = arith.constant 0 : index
    %c0_136 = arith.constant 0 : index
    %228 = vector.load %arg2[%c52, %c0_135, %c0_136] : memref<63x128x128xf32, #tpu.memory_space<vmem>>, vector<1x128x128xf32>
    %229 = vector.shape_cast %228 : vector<1x128x128xf32> to vector<128x128xf32>
    %cst_137 = arith.constant dense<0.000000e+00> : vector<16x128xf32>
    %230 = tpu.matmul %227, %229, %cst_137 {dimension_numbers = #tpu.dot_dimension_numbers<[1], [0], [0], [1], [0, 0, 1, 1], [], []>} : vector<16x128xf32>, vector<128x128xf32>, vector<16x128xf32> -> vector<16x128xf32>
    %231 = arith.addf %226, %230 : vector<16x128xf32>
    %232 = vector.extract_strided_slice %190 {offsets = [2, 16], sizes = [16, 128], strides = [1, 1]} : vector<18x144xf32> to vector<16x128xf32>
    %c53 = arith.constant 53 : index
    %c0_138 = arith.constant 0 : index
    %c0_139 = arith.constant 0 : index
    %233 = vector.load %arg2[%c53, %c0_138, %c0_139] : memref<63x128x128xf32, #tpu.memory_space<vmem>>, vector<1x128x128xf32>
    %234 = vector.shape_cast %233 : vector<1x128x128xf32> to vector<128x128xf32>
    %cst_140 = arith.constant dense<0.000000e+00> : vector<16x128xf32>
    %235 = tpu.matmul %232, %234, %cst_140 {dimension_numbers = #tpu.dot_dimension_numbers<[1], [0], [0], [1], [0, 0, 1, 1], [], []>} : vector<16x128xf32>, vector<128x128xf32>, vector<16x128xf32> -> vector<16x128xf32>
    %236 = arith.addf %231, %235 : vector<16x128xf32>
    %c5 = arith.constant 5 : index
    %c0_141 = arith.constant 0 : index
    %c0_142 = arith.constant 0 : index
    %237 = vector.load %arg3[%c5, %c0_141, %c0_142] : memref<7x1x128xf32, #tpu.memory_space<vmem>>, vector<1x1x128xf32>
    %238 = vector.shape_cast %237 : vector<1x1x128xf32> to vector<1x128xf32>
    %239 = vector.broadcast %238 : vector<1x128xf32> to vector<16x128xf32>
    %240 = arith.mulf %236, %239 : vector<16x128xf32>
    %c5_143 = arith.constant 5 : index
    %c0_144 = arith.constant 0 : index
    %c0_145 = arith.constant 0 : index
    %241 = vector.load %arg4[%c5_143, %c0_144, %c0_145] : memref<7x1x128xf32, #tpu.memory_space<vmem>>, vector<1x1x128xf32>
    %242 = vector.shape_cast %241 : vector<1x1x128xf32> to vector<1x128xf32>
    %243 = vector.broadcast %242 : vector<1x128xf32> to vector<16x128xf32>
    %244 = arith.addf %240, %243 : vector<16x128xf32>
    %cst_146 = arith.constant 0.000000e+00 : f32
    %245 = vector.broadcast %cst_146 : f32 to vector<16x128xf32>
    %246 = arith.maximumf %244, %245 : vector<16x128xf32>
    %cst_147 = arith.constant 1.000000e+00 : f32
    %247 = vector.broadcast %cst_147 : f32 to vector<16x128xf32>
    %248 = arith.mulf %246, %247 : vector<16x128xf32>
    %cst_148 = arith.constant 0.000000e+00 : f32
    %249 = vector.broadcast %cst_148 : f32 to vector<16x8xf32>
    %250 = tpu.concatenate %249, %1, %249 in 1 : vector<16x8xf32>, vector<16x128xf32>, vector<16x8xf32> -> vector<16x144xf32>
    %cst_149 = arith.constant 0.000000e+00 : f32
    %251 = vector.broadcast %cst_149 : f32 to vector<1x144xf32>
    %252 = tpu.concatenate %251, %250, %251 in 0 : vector<1x144xf32>, vector<16x144xf32>, vector<1x144xf32> -> vector<18x144xf32>
    %cst_150 = arith.constant 0.000000e+00 : f32
    %253 = vector.broadcast %cst_150 : f32 to vector<16x128xf32>
    %254 = vector.extract_strided_slice %252 {offsets = [0, 0], sizes = [16, 128], strides = [1, 1]} : vector<18x144xf32> to vector<16x128xf32>
    %c0_151 = arith.constant 0 : index
    %c0_152 = arith.constant 0 : index
    %c0_153 = arith.constant 0 : index
    %255 = vector.load %arg2[%c0_151, %c0_152, %c0_153] : memref<63x128x128xf32, #tpu.memory_space<vmem>>, vector<1x128x128xf32>
    %256 = vector.shape_cast %255 : vector<1x128x128xf32> to vector<128x128xf32>
    %cst_154 = arith.constant dense<0.000000e+00> : vector<16x128xf32>
    %257 = tpu.matmul %254, %256, %cst_154 {dimension_numbers = #tpu.dot_dimension_numbers<[1], [0], [0], [1], [0, 0, 1, 1], [], []>} : vector<16x128xf32>, vector<128x128xf32>, vector<16x128xf32> -> vector<16x128xf32>
    %258 = arith.addf %253, %257 : vector<16x128xf32>
    %259 = vector.extract_strided_slice %252 {offsets = [0, 8], sizes = [16, 128], strides = [1, 1]} : vector<18x144xf32> to vector<16x128xf32>
    %c1_155 = arith.constant 1 : index
    %c0_156 = arith.constant 0 : index
    %c0_157 = arith.constant 0 : index
    %260 = vector.load %arg2[%c1_155, %c0_156, %c0_157] : memref<63x128x128xf32, #tpu.memory_space<vmem>>, vector<1x128x128xf32>
    %261 = vector.shape_cast %260 : vector<1x128x128xf32> to vector<128x128xf32>
    %cst_158 = arith.constant dense<0.000000e+00> : vector<16x128xf32>
    %262 = tpu.matmul %259, %261, %cst_158 {dimension_numbers = #tpu.dot_dimension_numbers<[1], [0], [0], [1], [0, 0, 1, 1], [], []>} : vector<16x128xf32>, vector<128x128xf32>, vector<16x128xf32> -> vector<16x128xf32>
    %263 = arith.addf %258, %262 : vector<16x128xf32>
    %264 = vector.extract_strided_slice %252 {offsets = [0, 16], sizes = [16, 128], strides = [1, 1]} : vector<18x144xf32> to vector<16x128xf32>
    %c2 = arith.constant 2 : index
    %c0_159 = arith.constant 0 : index
    %c0_160 = arith.constant 0 : index
    %265 = vector.load %arg2[%c2, %c0_159, %c0_160] : memref<63x128x128xf32, #tpu.memory_space<vmem>>, vector<1x128x128xf32>
    %266 = vector.shape_cast %265 : vector<1x128x128xf32> to vector<128x128xf32>
    %cst_161 = arith.constant dense<0.000000e+00> : vector<16x128xf32>
    %267 = tpu.matmul %264, %266, %cst_161 {dimension_numbers = #tpu.dot_dimension_numbers<[1], [0], [0], [1], [0, 0, 1, 1], [], []>} : vector<16x128xf32>, vector<128x128xf32>, vector<16x128xf32> -> vector<16x128xf32>
    %268 = arith.addf %263, %267 : vector<16x128xf32>
    %269 = vector.extract_strided_slice %252 {offsets = [1, 0], sizes = [16, 128], strides = [1, 1]} : vector<18x144xf32> to vector<16x128xf32>
    %c3_162 = arith.constant 3 : index
    %c0_163 = arith.constant 0 : index
    %c0_164 = arith.constant 0 : index
    %270 = vector.load %arg2[%c3_162, %c0_163, %c0_164] : memref<63x128x128xf32, #tpu.memory_space<vmem>>, vector<1x128x128xf32>
    %271 = vector.shape_cast %270 : vector<1x128x128xf32> to vector<128x128xf32>
    %cst_165 = arith.constant dense<0.000000e+00> : vector<16x128xf32>
    %272 = tpu.matmul %269, %271, %cst_165 {dimension_numbers = #tpu.dot_dimension_numbers<[1], [0], [0], [1], [0, 0, 1, 1], [], []>} : vector<16x128xf32>, vector<128x128xf32>, vector<16x128xf32> -> vector<16x128xf32>
    %273 = arith.addf %268, %272 : vector<16x128xf32>
    %274 = vector.extract_strided_slice %252 {offsets = [1, 8], sizes = [16, 128], strides = [1, 1]} : vector<18x144xf32> to vector<16x128xf32>
    %c4_166 = arith.constant 4 : index
    %c0_167 = arith.constant 0 : index
    %c0_168 = arith.constant 0 : index
    %275 = vector.load %arg2[%c4_166, %c0_167, %c0_168] : memref<63x128x128xf32, #tpu.memory_space<vmem>>, vector<1x128x128xf32>
    %276 = vector.shape_cast %275 : vector<1x128x128xf32> to vector<128x128xf32>
    %cst_169 = arith.constant dense<0.000000e+00> : vector<16x128xf32>
    %277 = tpu.matmul %274, %276, %cst_169 {dimension_numbers = #tpu.dot_dimension_numbers<[1], [0], [0], [1], [0, 0, 1, 1], [], []>} : vector<16x128xf32>, vector<128x128xf32>, vector<16x128xf32> -> vector<16x128xf32>
    %278 = arith.addf %273, %277 : vector<16x128xf32>
    %279 = vector.extract_strided_slice %252 {offsets = [1, 16], sizes = [16, 128], strides = [1, 1]} : vector<18x144xf32> to vector<16x128xf32>
    %c5_170 = arith.constant 5 : index
    %c0_171 = arith.constant 0 : index
    %c0_172 = arith.constant 0 : index
    %280 = vector.load %arg2[%c5_170, %c0_171, %c0_172] : memref<63x128x128xf32, #tpu.memory_space<vmem>>, vector<1x128x128xf32>
    %281 = vector.shape_cast %280 : vector<1x128x128xf32> to vector<128x128xf32>
    %cst_173 = arith.constant dense<0.000000e+00> : vector<16x128xf32>
    %282 = tpu.matmul %279, %281, %cst_173 {dimension_numbers = #tpu.dot_dimension_numbers<[1], [0], [0], [1], [0, 0, 1, 1], [], []>} : vector<16x128xf32>, vector<128x128xf32>, vector<16x128xf32> -> vector<16x128xf32>
    %283 = arith.addf %278, %282 : vector<16x128xf32>
    %284 = vector.extract_strided_slice %252 {offsets = [2, 0], sizes = [16, 128], strides = [1, 1]} : vector<18x144xf32> to vector<16x128xf32>
    %c6 = arith.constant 6 : index
    %c0_174 = arith.constant 0 : index
    %c0_175 = arith.constant 0 : index
    %285 = vector.load %arg2[%c6, %c0_174, %c0_175] : memref<63x128x128xf32, #tpu.memory_space<vmem>>, vector<1x128x128xf32>
    %286 = vector.shape_cast %285 : vector<1x128x128xf32> to vector<128x128xf32>
    %cst_176 = arith.constant dense<0.000000e+00> : vector<16x128xf32>
    %287 = tpu.matmul %284, %286, %cst_176 {dimension_numbers = #tpu.dot_dimension_numbers<[1], [0], [0], [1], [0, 0, 1, 1], [], []>} : vector<16x128xf32>, vector<128x128xf32>, vector<16x128xf32> -> vector<16x128xf32>
    %288 = arith.addf %283, %287 : vector<16x128xf32>
    %289 = vector.extract_strided_slice %252 {offsets = [2, 8], sizes = [16, 128], strides = [1, 1]} : vector<18x144xf32> to vector<16x128xf32>
    %c7 = arith.constant 7 : index
    %c0_177 = arith.constant 0 : index
    %c0_178 = arith.constant 0 : index
    %290 = vector.load %arg2[%c7, %c0_177, %c0_178] : memref<63x128x128xf32, #tpu.memory_space<vmem>>, vector<1x128x128xf32>
    %291 = vector.shape_cast %290 : vector<1x128x128xf32> to vector<128x128xf32>
    %cst_179 = arith.constant dense<0.000000e+00> : vector<16x128xf32>
    %292 = tpu.matmul %289, %291, %cst_179 {dimension_numbers = #tpu.dot_dimension_numbers<[1], [0], [0], [1], [0, 0, 1, 1], [], []>} : vector<16x128xf32>, vector<128x128xf32>, vector<16x128xf32> -> vector<16x128xf32>
    %293 = arith.addf %288, %292 : vector<16x128xf32>
    %294 = vector.extract_strided_slice %252 {offsets = [2, 16], sizes = [16, 128], strides = [1, 1]} : vector<18x144xf32> to vector<16x128xf32>
    %c8 = arith.constant 8 : index
    %c0_180 = arith.constant 0 : index
    %c0_181 = arith.constant 0 : index
    %295 = vector.load %arg2[%c8, %c0_180, %c0_181] : memref<63x128x128xf32, #tpu.memory_space<vmem>>, vector<1x128x128xf32>
    %296 = vector.shape_cast %295 : vector<1x128x128xf32> to vector<128x128xf32>
    %cst_182 = arith.constant dense<0.000000e+00> : vector<16x128xf32>
    %297 = tpu.matmul %294, %296, %cst_182 {dimension_numbers = #tpu.dot_dimension_numbers<[1], [0], [0], [1], [0, 0, 1, 1], [], []>} : vector<16x128xf32>, vector<128x128xf32>, vector<16x128xf32> -> vector<16x128xf32>
    %298 = arith.addf %293, %297 : vector<16x128xf32>
    %c0_183 = arith.constant 0 : index
    %c0_184 = arith.constant 0 : index
    %c0_185 = arith.constant 0 : index
    %299 = vector.load %arg3[%c0_183, %c0_184, %c0_185] : memref<7x1x128xf32, #tpu.memory_space<vmem>>, vector<1x1x128xf32>
    %300 = vector.shape_cast %299 : vector<1x1x128xf32> to vector<1x128xf32>
    %301 = vector.broadcast %300 : vector<1x128xf32> to vector<16x128xf32>
    %302 = arith.mulf %298, %301 : vector<16x128xf32>
    %c0_186 = arith.constant 0 : index
    %c0_187 = arith.constant 0 : index
    %c0_188 = arith.constant 0 : index
    %303 = vector.load %arg4[%c0_186, %c0_187, %c0_188] : memref<7x1x128xf32, #tpu.memory_space<vmem>>, vector<1x1x128xf32>
    %304 = vector.shape_cast %303 : vector<1x1x128xf32> to vector<1x128xf32>
    %305 = vector.broadcast %304 : vector<1x128xf32> to vector<16x128xf32>
    %306 = arith.addf %302, %305 : vector<16x128xf32>
    %cst_189 = arith.constant 0.000000e+00 : f32
    %307 = vector.broadcast %cst_189 : f32 to vector<16x128xf32>
    %308 = arith.maximumf %306, %307 : vector<16x128xf32>
    %cst_190 = arith.constant 0.000000e+00 : f32
    %309 = vector.broadcast %cst_190 : f32 to vector<16x8xf32>
    %310 = tpu.concatenate %309, %186, %309 in 1 : vector<16x8xf32>, vector<16x128xf32>, vector<16x8xf32> -> vector<16x144xf32>
    %cst_191 = arith.constant 0.000000e+00 : f32
    %311 = vector.broadcast %cst_191 : f32 to vector<1x144xf32>
    %312 = tpu.concatenate %311, %310, %311 in 0 : vector<1x144xf32>, vector<16x144xf32>, vector<1x144xf32> -> vector<18x144xf32>
    %cst_192 = arith.constant 0.000000e+00 : f32
    %313 = vector.broadcast %cst_192 : f32 to vector<16x128xf32>
    %314 = vector.extract_strided_slice %312 {offsets = [0, 0], sizes = [16, 128], strides = [1, 1]} : vector<18x144xf32> to vector<16x128xf32>
    %c18 = arith.constant 18 : index
    %c0_193 = arith.constant 0 : index
    %c0_194 = arith.constant 0 : index
    %315 = vector.load %arg2[%c18, %c0_193, %c0_194] : memref<63x128x128xf32, #tpu.memory_space<vmem>>, vector<1x128x128xf32>
    %316 = vector.shape_cast %315 : vector<1x128x128xf32> to vector<128x128xf32>
    %cst_195 = arith.constant dense<0.000000e+00> : vector<16x128xf32>
    %317 = tpu.matmul %314, %316, %cst_195 {dimension_numbers = #tpu.dot_dimension_numbers<[1], [0], [0], [1], [0, 0, 1, 1], [], []>} : vector<16x128xf32>, vector<128x128xf32>, vector<16x128xf32> -> vector<16x128xf32>
    %318 = arith.addf %313, %317 : vector<16x128xf32>
    %319 = vector.extract_strided_slice %312 {offsets = [0, 8], sizes = [16, 128], strides = [1, 1]} : vector<18x144xf32> to vector<16x128xf32>
    %c19 = arith.constant 19 : index
    %c0_196 = arith.constant 0 : index
    %c0_197 = arith.constant 0 : index
    %320 = vector.load %arg2[%c19, %c0_196, %c0_197] : memref<63x128x128xf32, #tpu.memory_space<vmem>>, vector<1x128x128xf32>
    %321 = vector.shape_cast %320 : vector<1x128x128xf32> to vector<128x128xf32>
    %cst_198 = arith.constant dense<0.000000e+00> : vector<16x128xf32>
    %322 = tpu.matmul %319, %321, %cst_198 {dimension_numbers = #tpu.dot_dimension_numbers<[1], [0], [0], [1], [0, 0, 1, 1], [], []>} : vector<16x128xf32>, vector<128x128xf32>, vector<16x128xf32> -> vector<16x128xf32>
    %323 = arith.addf %318, %322 : vector<16x128xf32>
    %324 = vector.extract_strided_slice %312 {offsets = [0, 16], sizes = [16, 128], strides = [1, 1]} : vector<18x144xf32> to vector<16x128xf32>
    %c20 = arith.constant 20 : index
    %c0_199 = arith.constant 0 : index
    %c0_200 = arith.constant 0 : index
    %325 = vector.load %arg2[%c20, %c0_199, %c0_200] : memref<63x128x128xf32, #tpu.memory_space<vmem>>, vector<1x128x128xf32>
    %326 = vector.shape_cast %325 : vector<1x128x128xf32> to vector<128x128xf32>
    %cst_201 = arith.constant dense<0.000000e+00> : vector<16x128xf32>
    %327 = tpu.matmul %324, %326, %cst_201 {dimension_numbers = #tpu.dot_dimension_numbers<[1], [0], [0], [1], [0, 0, 1, 1], [], []>} : vector<16x128xf32>, vector<128x128xf32>, vector<16x128xf32> -> vector<16x128xf32>
    %328 = arith.addf %323, %327 : vector<16x128xf32>
    %329 = vector.extract_strided_slice %312 {offsets = [1, 0], sizes = [16, 128], strides = [1, 1]} : vector<18x144xf32> to vector<16x128xf32>
    %c21 = arith.constant 21 : index
    %c0_202 = arith.constant 0 : index
    %c0_203 = arith.constant 0 : index
    %330 = vector.load %arg2[%c21, %c0_202, %c0_203] : memref<63x128x128xf32, #tpu.memory_space<vmem>>, vector<1x128x128xf32>
    %331 = vector.shape_cast %330 : vector<1x128x128xf32> to vector<128x128xf32>
    %cst_204 = arith.constant dense<0.000000e+00> : vector<16x128xf32>
    %332 = tpu.matmul %329, %331, %cst_204 {dimension_numbers = #tpu.dot_dimension_numbers<[1], [0], [0], [1], [0, 0, 1, 1], [], []>} : vector<16x128xf32>, vector<128x128xf32>, vector<16x128xf32> -> vector<16x128xf32>
    %333 = arith.addf %328, %332 : vector<16x128xf32>
    %334 = vector.extract_strided_slice %312 {offsets = [1, 8], sizes = [16, 128], strides = [1, 1]} : vector<18x144xf32> to vector<16x128xf32>
    %c22 = arith.constant 22 : index
    %c0_205 = arith.constant 0 : index
    %c0_206 = arith.constant 0 : index
    %335 = vector.load %arg2[%c22, %c0_205, %c0_206] : memref<63x128x128xf32, #tpu.memory_space<vmem>>, vector<1x128x128xf32>
    %336 = vector.shape_cast %335 : vector<1x128x128xf32> to vector<128x128xf32>
    %cst_207 = arith.constant dense<0.000000e+00> : vector<16x128xf32>
    %337 = tpu.matmul %334, %336, %cst_207 {dimension_numbers = #tpu.dot_dimension_numbers<[1], [0], [0], [1], [0, 0, 1, 1], [], []>} : vector<16x128xf32>, vector<128x128xf32>, vector<16x128xf32> -> vector<16x128xf32>
    %338 = arith.addf %333, %337 : vector<16x128xf32>
    %339 = vector.extract_strided_slice %312 {offsets = [1, 16], sizes = [16, 128], strides = [1, 1]} : vector<18x144xf32> to vector<16x128xf32>
    %c23 = arith.constant 23 : index
    %c0_208 = arith.constant 0 : index
    %c0_209 = arith.constant 0 : index
    %340 = vector.load %arg2[%c23, %c0_208, %c0_209] : memref<63x128x128xf32, #tpu.memory_space<vmem>>, vector<1x128x128xf32>
    %341 = vector.shape_cast %340 : vector<1x128x128xf32> to vector<128x128xf32>
    %cst_210 = arith.constant dense<0.000000e+00> : vector<16x128xf32>
    %342 = tpu.matmul %339, %341, %cst_210 {dimension_numbers = #tpu.dot_dimension_numbers<[1], [0], [0], [1], [0, 0, 1, 1], [], []>} : vector<16x128xf32>, vector<128x128xf32>, vector<16x128xf32> -> vector<16x128xf32>
    %343 = arith.addf %338, %342 : vector<16x128xf32>
    %344 = vector.extract_strided_slice %312 {offsets = [2, 0], sizes = [16, 128], strides = [1, 1]} : vector<18x144xf32> to vector<16x128xf32>
    %c24 = arith.constant 24 : index
    %c0_211 = arith.constant 0 : index
    %c0_212 = arith.constant 0 : index
    %345 = vector.load %arg2[%c24, %c0_211, %c0_212] : memref<63x128x128xf32, #tpu.memory_space<vmem>>, vector<1x128x128xf32>
    %346 = vector.shape_cast %345 : vector<1x128x128xf32> to vector<128x128xf32>
    %cst_213 = arith.constant dense<0.000000e+00> : vector<16x128xf32>
    %347 = tpu.matmul %344, %346, %cst_213 {dimension_numbers = #tpu.dot_dimension_numbers<[1], [0], [0], [1], [0, 0, 1, 1], [], []>} : vector<16x128xf32>, vector<128x128xf32>, vector<16x128xf32> -> vector<16x128xf32>
    %348 = arith.addf %343, %347 : vector<16x128xf32>
    %349 = vector.extract_strided_slice %312 {offsets = [2, 8], sizes = [16, 128], strides = [1, 1]} : vector<18x144xf32> to vector<16x128xf32>
    %c25 = arith.constant 25 : index
    %c0_214 = arith.constant 0 : index
    %c0_215 = arith.constant 0 : index
    %350 = vector.load %arg2[%c25, %c0_214, %c0_215] : memref<63x128x128xf32, #tpu.memory_space<vmem>>, vector<1x128x128xf32>
    %351 = vector.shape_cast %350 : vector<1x128x128xf32> to vector<128x128xf32>
    %cst_216 = arith.constant dense<0.000000e+00> : vector<16x128xf32>
    %352 = tpu.matmul %349, %351, %cst_216 {dimension_numbers = #tpu.dot_dimension_numbers<[1], [0], [0], [1], [0, 0, 1, 1], [], []>} : vector<16x128xf32>, vector<128x128xf32>, vector<16x128xf32> -> vector<16x128xf32>
    %353 = arith.addf %348, %352 : vector<16x128xf32>
    %354 = vector.extract_strided_slice %312 {offsets = [2, 16], sizes = [16, 128], strides = [1, 1]} : vector<18x144xf32> to vector<16x128xf32>
    %c26 = arith.constant 26 : index
    %c0_217 = arith.constant 0 : index
    %c0_218 = arith.constant 0 : index
    %355 = vector.load %arg2[%c26, %c0_217, %c0_218] : memref<63x128x128xf32, #tpu.memory_space<vmem>>, vector<1x128x128xf32>
    %356 = vector.shape_cast %355 : vector<1x128x128xf32> to vector<128x128xf32>
    %cst_219 = arith.constant dense<0.000000e+00> : vector<16x128xf32>
    %357 = tpu.matmul %354, %356, %cst_219 {dimension_numbers = #tpu.dot_dimension_numbers<[1], [0], [0], [1], [0, 0, 1, 1], [], []>} : vector<16x128xf32>, vector<128x128xf32>, vector<16x128xf32> -> vector<16x128xf32>
    %358 = arith.addf %353, %357 : vector<16x128xf32>
    %c2_220 = arith.constant 2 : index
    %c0_221 = arith.constant 0 : index
    %c0_222 = arith.constant 0 : index
    %359 = vector.load %arg3[%c2_220, %c0_221, %c0_222] : memref<7x1x128xf32, #tpu.memory_space<vmem>>, vector<1x1x128xf32>
    %360 = vector.shape_cast %359 : vector<1x1x128xf32> to vector<1x128xf32>
    %361 = vector.broadcast %360 : vector<1x128xf32> to vector<16x128xf32>
    %362 = arith.mulf %358, %361 : vector<16x128xf32>
    %c2_223 = arith.constant 2 : index
    %c0_224 = arith.constant 0 : index
    %c0_225 = arith.constant 0 : index
    %363 = vector.load %arg4[%c2_223, %c0_224, %c0_225] : memref<7x1x128xf32, #tpu.memory_space<vmem>>, vector<1x1x128xf32>
    %364 = vector.shape_cast %363 : vector<1x1x128xf32> to vector<1x128xf32>
    %365 = vector.broadcast %364 : vector<1x128xf32> to vector<16x128xf32>
    %366 = arith.addf %362, %365 : vector<16x128xf32>
    %cst_226 = arith.constant 0.000000e+00 : f32
    %367 = vector.broadcast %cst_226 : f32 to vector<16x128xf32>
    %368 = arith.maximumf %366, %367 : vector<16x128xf32>
    %369 = arith.addf %308, %368 : vector<16x128xf32>
    %cst_227 = arith.constant 0.000000e+00 : f32
    %370 = vector.broadcast %cst_227 : f32 to vector<16x8xf32>
    %371 = tpu.concatenate %370, %248, %370 in 1 : vector<16x8xf32>, vector<16x128xf32>, vector<16x8xf32> -> vector<16x144xf32>
    %cst_228 = arith.constant 0.000000e+00 : f32
    %372 = vector.broadcast %cst_228 : f32 to vector<1x144xf32>
    %373 = tpu.concatenate %372, %371, %372 in 0 : vector<1x144xf32>, vector<16x144xf32>, vector<1x144xf32> -> vector<18x144xf32>
    %cst_229 = arith.constant 0.000000e+00 : f32
    %374 = vector.broadcast %cst_229 : f32 to vector<16x128xf32>
    %375 = vector.extract_strided_slice %373 {offsets = [0, 0], sizes = [16, 128], strides = [1, 1]} : vector<18x144xf32> to vector<16x128xf32>
    %c54 = arith.constant 54 : index
    %c0_230 = arith.constant 0 : index
    %c0_231 = arith.constant 0 : index
    %376 = vector.load %arg2[%c54, %c0_230, %c0_231] : memref<63x128x128xf32, #tpu.memory_space<vmem>>, vector<1x128x128xf32>
    %377 = vector.shape_cast %376 : vector<1x128x128xf32> to vector<128x128xf32>
    %cst_232 = arith.constant dense<0.000000e+00> : vector<16x128xf32>
    %378 = tpu.matmul %375, %377, %cst_232 {dimension_numbers = #tpu.dot_dimension_numbers<[1], [0], [0], [1], [0, 0, 1, 1], [], []>} : vector<16x128xf32>, vector<128x128xf32>, vector<16x128xf32> -> vector<16x128xf32>
    %379 = arith.addf %374, %378 : vector<16x128xf32>
    %380 = vector.extract_strided_slice %373 {offsets = [0, 8], sizes = [16, 128], strides = [1, 1]} : vector<18x144xf32> to vector<16x128xf32>
    %c55 = arith.constant 55 : index
    %c0_233 = arith.constant 0 : index
    %c0_234 = arith.constant 0 : index
    %381 = vector.load %arg2[%c55, %c0_233, %c0_234] : memref<63x128x128xf32, #tpu.memory_space<vmem>>, vector<1x128x128xf32>
    %382 = vector.shape_cast %381 : vector<1x128x128xf32> to vector<128x128xf32>
    %cst_235 = arith.constant dense<0.000000e+00> : vector<16x128xf32>
    %383 = tpu.matmul %380, %382, %cst_235 {dimension_numbers = #tpu.dot_dimension_numbers<[1], [0], [0], [1], [0, 0, 1, 1], [], []>} : vector<16x128xf32>, vector<128x128xf32>, vector<16x128xf32> -> vector<16x128xf32>
    %384 = arith.addf %379, %383 : vector<16x128xf32>
    %385 = vector.extract_strided_slice %373 {offsets = [0, 16], sizes = [16, 128], strides = [1, 1]} : vector<18x144xf32> to vector<16x128xf32>
    %c56 = arith.constant 56 : index
    %c0_236 = arith.constant 0 : index
    %c0_237 = arith.constant 0 : index
    %386 = vector.load %arg2[%c56, %c0_236, %c0_237] : memref<63x128x128xf32, #tpu.memory_space<vmem>>, vector<1x128x128xf32>
    %387 = vector.shape_cast %386 : vector<1x128x128xf32> to vector<128x128xf32>
    %cst_238 = arith.constant dense<0.000000e+00> : vector<16x128xf32>
    %388 = tpu.matmul %385, %387, %cst_238 {dimension_numbers = #tpu.dot_dimension_numbers<[1], [0], [0], [1], [0, 0, 1, 1], [], []>} : vector<16x128xf32>, vector<128x128xf32>, vector<16x128xf32> -> vector<16x128xf32>
    %389 = arith.addf %384, %388 : vector<16x128xf32>
    %390 = vector.extract_strided_slice %373 {offsets = [1, 0], sizes = [16, 128], strides = [1, 1]} : vector<18x144xf32> to vector<16x128xf32>
    %c57 = arith.constant 57 : index
    %c0_239 = arith.constant 0 : index
    %c0_240 = arith.constant 0 : index
    %391 = vector.load %arg2[%c57, %c0_239, %c0_240] : memref<63x128x128xf32, #tpu.memory_space<vmem>>, vector<1x128x128xf32>
    %392 = vector.shape_cast %391 : vector<1x128x128xf32> to vector<128x128xf32>
    %cst_241 = arith.constant dense<0.000000e+00> : vector<16x128xf32>
    %393 = tpu.matmul %390, %392, %cst_241 {dimension_numbers = #tpu.dot_dimension_numbers<[1], [0], [0], [1], [0, 0, 1, 1], [], []>} : vector<16x128xf32>, vector<128x128xf32>, vector<16x128xf32> -> vector<16x128xf32>
    %394 = arith.addf %389, %393 : vector<16x128xf32>
    %395 = vector.extract_strided_slice %373 {offsets = [1, 8], sizes = [16, 128], strides = [1, 1]} : vector<18x144xf32> to vector<16x128xf32>
    %c58 = arith.constant 58 : index
    %c0_242 = arith.constant 0 : index
    %c0_243 = arith.constant 0 : index
    %396 = vector.load %arg2[%c58, %c0_242, %c0_243] : memref<63x128x128xf32, #tpu.memory_space<vmem>>, vector<1x128x128xf32>
    %397 = vector.shape_cast %396 : vector<1x128x128xf32> to vector<128x128xf32>
    %cst_244 = arith.constant dense<0.000000e+00> : vector<16x128xf32>
    %398 = tpu.matmul %395, %397, %cst_244 {dimension_numbers = #tpu.dot_dimension_numbers<[1], [0], [0], [1], [0, 0, 1, 1], [], []>} : vector<16x128xf32>, vector<128x128xf32>, vector<16x128xf32> -> vector<16x128xf32>
    %399 = arith.addf %394, %398 : vector<16x128xf32>
    %400 = vector.extract_strided_slice %373 {offsets = [1, 16], sizes = [16, 128], strides = [1, 1]} : vector<18x144xf32> to vector<16x128xf32>
    %c59 = arith.constant 59 : index
    %c0_245 = arith.constant 0 : index
    %c0_246 = arith.constant 0 : index
    %401 = vector.load %arg2[%c59, %c0_245, %c0_246] : memref<63x128x128xf32, #tpu.memory_space<vmem>>, vector<1x128x128xf32>
    %402 = vector.shape_cast %401 : vector<1x128x128xf32> to vector<128x128xf32>
    %cst_247 = arith.constant dense<0.000000e+00> : vector<16x128xf32>
    %403 = tpu.matmul %400, %402, %cst_247 {dimension_numbers = #tpu.dot_dimension_numbers<[1], [0], [0], [1], [0, 0, 1, 1], [], []>} : vector<16x128xf32>, vector<128x128xf32>, vector<16x128xf32> -> vector<16x128xf32>
    %404 = arith.addf %399, %403 : vector<16x128xf32>
    %405 = vector.extract_strided_slice %373 {offsets = [2, 0], sizes = [16, 128], strides = [1, 1]} : vector<18x144xf32> to vector<16x128xf32>
    %c60 = arith.constant 60 : index
    %c0_248 = arith.constant 0 : index
    %c0_249 = arith.constant 0 : index
    %406 = vector.load %arg2[%c60, %c0_248, %c0_249] : memref<63x128x128xf32, #tpu.memory_space<vmem>>, vector<1x128x128xf32>
    %407 = vector.shape_cast %406 : vector<1x128x128xf32> to vector<128x128xf32>
    %cst_250 = arith.constant dense<0.000000e+00> : vector<16x128xf32>
    %408 = tpu.matmul %405, %407, %cst_250 {dimension_numbers = #tpu.dot_dimension_numbers<[1], [0], [0], [1], [0, 0, 1, 1], [], []>} : vector<16x128xf32>, vector<128x128xf32>, vector<16x128xf32> -> vector<16x128xf32>
    %409 = arith.addf %404, %408 : vector<16x128xf32>
    %410 = vector.extract_strided_slice %373 {offsets = [2, 8], sizes = [16, 128], strides = [1, 1]} : vector<18x144xf32> to vector<16x128xf32>
    %c61 = arith.constant 61 : index
    %c0_251 = arith.constant 0 : index
    %c0_252 = arith.constant 0 : index
    %411 = vector.load %arg2[%c61, %c0_251, %c0_252] : memref<63x128x128xf32, #tpu.memory_space<vmem>>, vector<1x128x128xf32>
    %412 = vector.shape_cast %411 : vector<1x128x128xf32> to vector<128x128xf32>
    %cst_253 = arith.constant dense<0.000000e+00> : vector<16x128xf32>
    %413 = tpu.matmul %410, %412, %cst_253 {dimension_numbers = #tpu.dot_dimension_numbers<[1], [0], [0], [1], [0, 0, 1, 1], [], []>} : vector<16x128xf32>, vector<128x128xf32>, vector<16x128xf32> -> vector<16x128xf32>
    %414 = arith.addf %409, %413 : vector<16x128xf32>
    %415 = vector.extract_strided_slice %373 {offsets = [2, 16], sizes = [16, 128], strides = [1, 1]} : vector<18x144xf32> to vector<16x128xf32>
    %c62 = arith.constant 62 : index
    %c0_254 = arith.constant 0 : index
    %c0_255 = arith.constant 0 : index
    %416 = vector.load %arg2[%c62, %c0_254, %c0_255] : memref<63x128x128xf32, #tpu.memory_space<vmem>>, vector<1x128x128xf32>
    %417 = vector.shape_cast %416 : vector<1x128x128xf32> to vector<128x128xf32>
    %cst_256 = arith.constant dense<0.000000e+00> : vector<16x128xf32>
    %418 = tpu.matmul %415, %417, %cst_256 {dimension_numbers = #tpu.dot_dimension_numbers<[1], [0], [0], [1], [0, 0, 1, 1], [], []>} : vector<16x128xf32>, vector<128x128xf32>, vector<16x128xf32> -> vector<16x128xf32>
    %419 = arith.addf %414, %418 : vector<16x128xf32>
    %c6_257 = arith.constant 6 : index
    %c0_258 = arith.constant 0 : index
    %c0_259 = arith.constant 0 : index
    %420 = vector.load %arg3[%c6_257, %c0_258, %c0_259] : memref<7x1x128xf32, #tpu.memory_space<vmem>>, vector<1x1x128xf32>
    %421 = vector.shape_cast %420 : vector<1x1x128xf32> to vector<1x128xf32>
    %422 = vector.broadcast %421 : vector<1x128xf32> to vector<16x128xf32>
    %423 = arith.mulf %419, %422 : vector<16x128xf32>
    %c6_260 = arith.constant 6 : index
    %c0_261 = arith.constant 0 : index
    %c0_262 = arith.constant 0 : index
    %424 = vector.load %arg4[%c6_260, %c0_261, %c0_262] : memref<7x1x128xf32, #tpu.memory_space<vmem>>, vector<1x1x128xf32>
    %425 = vector.shape_cast %424 : vector<1x1x128xf32> to vector<1x128xf32>
    %426 = vector.broadcast %425 : vector<1x128xf32> to vector<16x128xf32>
    %427 = arith.addf %423, %426 : vector<16x128xf32>
    %cst_263 = arith.constant 0.000000e+00 : f32
    %428 = vector.broadcast %cst_263 : f32 to vector<16x128xf32>
    %429 = arith.maximumf %427, %428 : vector<16x128xf32>
    %430 = arith.addf %369, %429 : vector<16x128xf32>
    %cst_264 = arith.constant 0.333333343 : f32
    %431 = vector.broadcast %cst_264 : f32 to vector<16x128xf32>
    %432 = arith.mulf %430, %431 : vector<16x128xf32>
    %c0_265 = arith.constant 0 : index
    %c0_266 = arith.constant 0 : index
    %c0_267 = arith.constant 0 : index
    %433 = vector.load %arg5[%c0_265, %c0_266, %c0_267] : memref<1x16x128xf32, #tpu.memory_space<vmem>>, vector<1x16x128xf32>
    %434 = vector.shape_cast %433 : vector<1x16x128xf32> to vector<16x128xf32>
    %435 = vector.shape_cast %432 : vector<16x128xf32> to vector<1x16x128xf32>
    tpu.vector_store %arg5[%c0_265, %c0_266, %c0_267], %435 {strides = array<i32>} : memref<1x16x128xf32, #tpu.memory_space<vmem>>, vector<1x16x128xf32>,
    return
  }
  func.func @transform_0(%arg0: i32) -> (i32, i32, i32) {
    %c0_i32 = arith.constant 0 : i32
    %c0_i32_0 = arith.constant 0 : i32
    %c0_i32_1 = arith.constant 0 : i32
    return %arg0, %c0_i32, %c0_i32_0 : i32, i32, i32
  }
  func.func @transform_1(%arg0: i32) -> (i32, i32, i32) {
    %c0_i32 = arith.constant 0 : i32
    %c0_i32_0 = arith.constant 0 : i32
    %c0_i32_1 = arith.constant 0 : i32
    %c0_i32_2 = arith.constant 0 : i32
    return %c0_i32, %c0_i32_0, %c0_i32_1 : i32, i32, i32
  }
  func.func @transform_2(%arg0: i32) -> (i32, i32, i32) {
    %c0_i32 = arith.constant 0 : i32
    %c0_i32_0 = arith.constant 0 : i32
    %c0_i32_1 = arith.constant 0 : i32
    %c0_i32_2 = arith.constant 0 : i32
    return %c0_i32, %c0_i32_0, %c0_i32_1 : i32, i32, i32
  }
  func.func @transform_3(%arg0: i32) -> (i32, i32, i32) {
    %c0_i32 = arith.constant 0 : i32
    %c0_i32_0 = arith.constant 0 : i32
    %c0_i32_1 = arith.constant 0 : i32
    %c0_i32_2 = arith.constant 0 : i32
    return %c0_i32, %c0_i32_0, %c0_i32_1 : i32, i32, i32
  }
  func.func @transform_4(%arg0: i32) -> (i32, i32, i32) {
    %c0_i32 = arith.constant 0 : i32
    %c0_i32_0 = arith.constant 0 : i32
    %c0_i32_1 = arith.constant 0 : i32
    return %arg0, %c0_i32, %c0_i32_0 : i32, i32, i32
  }
}

</mosaic_0001>

<llo_original>
// kernel: tpu_custom_call.1
$region0: #{tpu_custom_call.1}
  #allocation0 [shape = 'u32[]', space=smem, size = 0x4, offset = 0x4, fixed_abs, tag = 'smem constant byte address 0x4 - core index']
  #allocation1 [shape = 'u32[144,128]{1,0:T(1,128)}', space=vmem, size = 0x12000, scoped, tag = 'internal scratch']
  %s0 = inlined_call_operand.hbm [shape: f32[2,16,128], index: 0, kind: input, shape index: {}]
  %s1 = inlined_call_operand.hbm [shape: f32[63,128,128], index: 1, kind: input, shape index: {}]
  %s2 = inlined_call_operand.hbm [shape: f32[7,1,128], index: 2, kind: input, shape index: {}]
  %s3 = inlined_call_operand.hbm [shape: f32[7,1,128], index: 3, kind: input, shape index: {}]
  %s4 = inlined_call_operand.hbm [shape: f32[2,16,128], index: 4, kind: output, shape index: {}]
  %s5 = sld [smem:[#allocation0]]
  $region65: #{tpu_custom_call.1} parent=0
    _
  %s7 = ssub.s32 1, %s5
  %s8 = scalar_select 0, %s7, %s5
  $region1: #{tpu_custom_call.1} parent=0
    #allocation2 [shape = 'u8[16384]{0}', space=vmem, size = 0x4000, scoped, tag = 'input window, operand 0']
    #allocation3 [shape = 's32[2]{0}', space=sflag, size = 0x8, scoped, tag = 'scoped memory for tpu_custom_call.1']
    #allocation4 [shape = 's32[2]{0}', space=sflag, size = 0x8, scoped, tag = 'scoped memory for tpu_custom_call.1']
    #allocation5 [shape = 'u8[4128768]{0}', space=vmem, size = 0x3f0000, scoped, tag = 'input window, operand 1, single buffered']
    #allocation6 [shape = 's32[1]{0}', space=sflag, size = 0x4, scoped, tag = 'scoped memory for tpu_custom_call.1']
    #allocation7 [shape = 'u8[3584]{0}', space=vmem, size = 0x1000, scoped, tag = 'input window, operand 2, single buffered']
    #allocation8 [shape = 'u8[3584]{0}', space=vmem, size = 0x1000, scoped, tag = 'input window, operand 3, single buffered']
    #allocation9 [shape = 's32[1]{0}', space=sflag, size = 0x4, scoped, tag = 'scoped memory for tpu_custom_call.1']
    #allocation10 [shape = 'u8[16384]{0}', space=vmem, size = 0x4000, scoped, tag = 'output window, operand 0']
    %9 = vsyncpa [#allocation3], 0
    %s10 = scalar_lea.sflag [#allocation3], 1
    %11 = vsyncpa %s10, 0
    %12 = vsyncpa [#allocation6], 0
    %13 = vsyncpa [#allocation9], 0
    %14 = vsyncpa [#allocation4], 0
    %s15 = scalar_lea.sflag [#allocation4], 1
    %16 = vsyncpa %s15, 0
    loop: start=0, step=1, limit=4
    $region2: #{tpu_custom_call.1} parent=1 // loop_pre_header
      _
    $region3: #{tpu_custom_call.1} parent=1 // loop_header
      %s18 = sphi 0, %s22
      %p19 = scmp.ge.s32.totalorder %s18, 4
      %s28 = sphi 0, %s30
      %s31 = sphi 0, %s28
      %s32 = sphi 0, %s31
      %s48 = sphi 0, %s32
      %s52 = sphi 0, %s52
      %s54 = sphi 0, %s52
      %s55 = sphi 0, %s54
      %s69 = sphi 0, %s55
      %s73 = sphi 0, %s73
      %s75 = sphi 0, %s73
      %s76 = sphi 0, %s75
      %s90 = sphi 0, %s76
      %s94 = sphi 0, %s94
      %s96 = sphi 0, %s94
      %s97 = sphi 0, %s96
      %s111 = sphi 0, %s97
      %s117 = sphi 0, %s119
      %s120 = sphi 0, %s117
      %s121 = sphi 0, %s120
      %s137 = sphi 0, %s121
    $region4: #{tpu_custom_call.1} parent=1 // loop_header_branch
      %21 = sbr.rel (%p19) target = $region8
    $region5: #{tpu_custom_call.1} parent=1 // loop_body
      %s23 = ssub.s32 %s18, 1
      %s24 = ssub.s32 %s18, 2
      %s25 = sadd.s32 %s18, 1
      %s26 = ssub.s32 %s18, %s25
      %p27 = scmp.eq.s32.totalorder %s26, 0
      %s29 = sadd.s32 %s28, 1
      %s30 = scalar_select %p27, %s28, %s29
      %p33 = pneg %p27
      %p34 = scmp.eq.s32.totalorder %s18, 1
      %p35 = por %p33, %p34
      %p36 = scmp.ne.s32.totalorder %s28, %s31
      %p37 = scmp.eq.s32.totalorder %s18, 0
      %p38 = por %p36, %p37
      %p39 = scmp.ne.s32.totalorder %s28, %s31
      %p40 = scmp.eq.s32.totalorder %s23, 1
      %p41 = por %p39, %p40
      %p42 = scmp.ne.s32.totalorder %s31, %s32
      %p43 = scmp.eq.s32.totalorder %s23, 0
      %p44 = por %p42, %p43
      %p45 = scmp.ne.s32.totalorder %s31, %s32
      %p46 = scmp.eq.s32.totalorder %s24, 1
      %p47 = por %p45, %p46
      %p49 = scmp.ne.s32.totalorder %s32, %s48
      %p50 = scmp.eq.s32.totalorder %s24, 0
      %p51 = por %p49, %p50
      %s53 = sadd.s32 %s52, 1
      %p56 = scmp.eq.s32.totalorder %s18, 1
      %p57 = scmp.ne.s32.totalorder %s52, %s54
      %p58 = scmp.eq.s32.totalorder %s18, 0
      %p59 = por %p57, %p58
      %p60 = scmp.ne.s32.totalorder %s52, %s54
      %p61 = scmp.eq.s32.totalorder %s23, 1
      %p62 = por %p60, %p61
      %p63 = scmp.ne.s32.totalorder %s54, %s55
      %p64 = scmp.eq.s32.totalorder %s23, 0
      %p65 = por %p63, %p64
      %p66 = scmp.ne.s32.totalorder %s54, %s55
      %p67 = scmp.eq.s32.totalorder %s24, 1
      %p68 = por %p66, %p67
      %p70 = scmp.ne.s32.totalorder %s55, %s69
      %p71 = scmp.eq.s32.totalorder %s24, 0
      %p72 = por %p70, %p71
      %s74 = sadd.s32 %s73, 1
      %p77 = scmp.eq.s32.totalorder %s18, 1
      %p78 = scmp.ne.s32.totalorder %s73, %s75
      %p79 = scmp.eq.s32.totalorder %s18, 0
      %p80 = por %p78, %p79
      %p81 = scmp.ne.s32.totalorder %s73, %s75
      %p82 = scmp.eq.s32.totalorder %s23, 1
      %p83 = por %p81, %p82
      %p84 = scmp.ne.s32.totalorder %s75, %s76
      %p85 = scmp.eq.s32.totalorder %s23, 0
      %p86 = por %p84, %p85
      %p87 = scmp.ne.s32.totalorder %s75, %s76
      %p88 = scmp.eq.s32.totalorder %s24, 1
      %p89 = por %p87, %p88
      %p91 = scmp.ne.s32.totalorder %s76, %s90
      %p92 = scmp.eq.s32.totalorder %s24, 0
      %p93 = por %p91, %p92
      %s95 = sadd.s32 %s94, 1
      %p98 = scmp.eq.s32.totalorder %s18, 1
      %p99 = scmp.ne.s32.totalorder %s94, %s96
      %p100 = scmp.eq.s32.totalorder %s18, 0
      %p101 = por %p99, %p100
      %p102 = scmp.ne.s32.totalorder %s94, %s96
      %p103 = scmp.eq.s32.totalorder %s23, 1
      %p104 = por %p102, %p103
      %p105 = scmp.ne.s32.totalorder %s96, %s97
      %p106 = scmp.eq.s32.totalorder %s23, 0
      %p107 = por %p105, %p106
      %p108 = scmp.ne.s32.totalorder %s96, %s97
      %p109 = scmp.eq.s32.totalorder %s24, 1
      %p110 = por %p108, %p109
      %p112 = scmp.ne.s32.totalorder %s97, %s111
      %p113 = scmp.eq.s32.totalorder %s24, 0
      %p114 = por %p112, %p113
      %s115 = ssub.s32 %s18, %s25
      %p116 = scmp.eq.s32.totalorder %s115, 0
      %s118 = sadd.s32 %s117, 1
      %s119 = scalar_select %p116, %s117, %s118
      %p122 = pneg %p116
      %p123 = scmp.eq.s32.totalorder %s18, 1
      %p124 = por %p122, %p123
      %p125 = scmp.ne.s32.totalorder %s117, %s120
      %p126 = scmp.eq.s32.totalorder %s18, 0
      %p127 = por %p125, %p126
      %p128 = scmp.ne.s32.totalorder %s117, %s120
      %p129 = scmp.eq.s32.totalorder %s23, 1
      %p130 = por %p128, %p129
      %p131 = scmp.ne.s32.totalorder %s120, %s121
      %p132 = scmp.eq.s32.totalorder %s23, 0
      %p133 = por %p131, %p132
      %p134 = scmp.ne.s32.totalorder %s120, %s121
      %p135 = scmp.eq.s32.totalorder %s24, 1
      %p136 = por %p134, %p135
      %p138 = scmp.ne.s32.totalorder %s121, %s137
      %p139 = scmp.eq.s32.totalorder %s24, 0
      %p140 = por %p138, %p139
      %p141 = scmp.le.s32.totalorder 1, %s18
      %p142 = scmp.lt.s32.totalorder %s18, 3
      %p143 = pnand %p141, %p142
      %p144 = pneg %p143
      // Predicated region
      $region9: #{tpu_custom_call.1} parent=5 // pred_check
        _
      $region10: #{tpu_custom_call.1} parent=5 // pred_check_branch
        %146 = sbr.rel (%p143) target = $region12
      $region11: #{tpu_custom_call.1} parent=5 // pred_region
        %s147 = ssub.s32 %s18, 1
        // Predicated region
        $region13: #{tpu_custom_call.1} parent=11 // pred_check
          %p148 = pneg %p65
        $region14: #{tpu_custom_call.1} parent=11 // pred_check_branch
          %150 = sbr.rel (%p148) target = $region16
        $region15: #{tpu_custom_call.1} parent=11 // pred_region
          %s152 = ssub.s32 129024, 129024
          %153 = vsyncadd [#allocation6], %s152
          %s154 = sshll.u32 [#allocation5], 4
          %s155 = int_to_ptr.vmem [resolvable:$true] %s154
          %160 = dma.hbm_to_vmem [thread:$0]  %s1, 129024, %s155, [#allocation6], 128, 128, 8
        $region16: #{tpu_custom_call.1} parent=11 // pred_fallthru
          _
        // Predicated region
        $region17: #{tpu_custom_call.1} parent=11 // pred_check
          %p161 = pneg %p86
        $region18: #{tpu_custom_call.1} parent=11 // pred_check_branch
          %163 = sbr.rel (%p161) target = $region20
        $region19: #{tpu_custom_call.1} parent=11 // pred_region
          %s165 = ssub.s32 112, 112
          %166 = vsyncadd [#allocation6], %s165
          %s167 = sshll.u32 [#allocation7], 4
          %s168 = int_to_ptr.vmem [resolvable:$true] %s167
          %173 = dma.hbm_to_vmem [thread:$0]  %s2, 112, %s168, [#allocation6], 16, 16, 1
        $region20: #{tpu_custom_call.1} parent=11 // pred_fallthru
          _
        // Predicated region
        $region21: #{tpu_custom_call.1} parent=11 // pred_check
          %p174 = pneg %p107
        $region22: #{tpu_custom_call.1} parent=11 // pred_check_branch
          %176 = sbr.rel (%p174) target = $region24
        $region23: #{tpu_custom_call.1} parent=11 // pred_region
          %s178 = ssub.s32 112, 112
          %179 = vsyncadd [#allocation9], %s178
          %s180 = sshll.u32 [#allocation8], 4
          %s181 = int_to_ptr.vmem [resolvable:$true] %s180
          %186 = dma.hbm_to_vmem [thread:$0]  %s3, 112, %s181, [#allocation9], 16, 16, 1
        $region24: #{tpu_custom_call.1} parent=11 // pred_fallthru
          _
      $region12: #{tpu_custom_call.1} parent=5 // pred_fallthru
        _
      %p187 = scmp.lt.s32.totalorder %s18, 2
      // Predicated region
      $region25: #{tpu_custom_call.1} parent=5 // pred_check
        %p188 = pneg %p187
      $region26: #{tpu_custom_call.1} parent=5 // pred_check_branch
        %190 = sbr.rel (%p188) target = $region28
      $region27: #{tpu_custom_call.1} parent=5 // pred_region
        // Predicated region
        $region29: #{tpu_custom_call.1} parent=27 // pred_check
          %p191 = pneg %p38
        $region30: #{tpu_custom_call.1} parent=27 // pred_check_branch
          %193 = sbr.rel (%p191) target = $region32
        $region31: #{tpu_custom_call.1} parent=27 // pred_region
          %s194 = sand.u32 %s28, 1
          %s195 = scalar_lea.sflag [#allocation3], %s194
          %s196 = sand.u32 %s28, 1
          %s197 = smul.addr %s196, 16
          %s198 = scalar_lea.vmem [#allocation2], %s197
          %s200 = ssub.s32 256, 256
          %201 = vsyncadd %s195, %s200
          %s202 = smul.addr %s18, 2
          %s203 = smul.addr %s202, 128
          %s204 = scalar_lea.hbm %s0, %s203
          %s205 = sshll.u32 %s198, 4
          %s206 = int_to_ptr.vmem [resolvable:$true] %s205
          %211 = dma.hbm_to_vmem [thread:$0]  %s204, 256, %s206, %s195, 128, 128, 8
        $region32: #{tpu_custom_call.1} parent=27 // pred_fallthru
          _
      $region28: #{tpu_custom_call.1} parent=5 // pred_fallthru
        _
      %p212 = scmp.le.s32.totalorder 1, %s18
      %p213 = scmp.lt.s32.totalorder %s18, 3
      %p214 = pnand %p212, %p213
      %p215 = pneg %p214
      // Predicated region
      $region33: #{tpu_custom_call.1} parent=5 // pred_check
        _
      $region34: #{tpu_custom_call.1} parent=5 // pred_check_branch
        %217 = sbr.rel (%p214) target = $region36
      $region35: #{tpu_custom_call.1} parent=5 // pred_region
        %s218 = ssub.s32 %s18, 1
        %s219 = sand.u32 %s31, 1
        %s220 = scalar_lea.sflag [#allocation3], %s219
        %s221 = sand.u32 %s31, 1
        %s222 = smul.addr %s221, 16
        %s223 = scalar_lea.vmem [#allocation2], %s222
        // Predicated region
        $region37: #{tpu_custom_call.1} parent=35 // pred_check
          %p224 = pneg %p44
        $region38: #{tpu_custom_call.1} parent=35 // pred_check_branch
          %226 = sbr.rel (%p224) target = $region40
        $region39: #{tpu_custom_call.1} parent=35 // pred_region
          %227 = dma.done %s220, 256
        $region40: #{tpu_custom_call.1} parent=35 // pred_fallthru
          _
        // Predicated region
        $region41: #{tpu_custom_call.1} parent=35 // pred_check
          %p228 = pneg %p65
        $region42: #{tpu_custom_call.1} parent=35 // pred_check_branch
          %230 = sbr.rel (%p228) target = $region44
        $region43: #{tpu_custom_call.1} parent=35 // pred_region
          %231 = dma.done [#allocation6], 129024
        $region44: #{tpu_custom_call.1} parent=35 // pred_fallthru
          _
        // Predicated region
        $region45: #{tpu_custom_call.1} parent=35 // pred_check
          %p232 = pneg %p86
        $region46: #{tpu_custom_call.1} parent=35 // pred_check_branch
          %234 = sbr.rel (%p232) target = $region48
        $region47: #{tpu_custom_call.1} parent=35 // pred_region
          %235 = dma.done [#allocation6], 112
        $region48: #{tpu_custom_call.1} parent=35 // pred_fallthru
          _
        // Predicated region
        $region49: #{tpu_custom_call.1} parent=35 // pred_check
          %p236 = pneg %p107
        $region50: #{tpu_custom_call.1} parent=35 // pred_check_branch
          %238 = sbr.rel (%p236) target = $region52
        $region51: #{tpu_custom_call.1} parent=35 // pred_region
          %239 = dma.done [#allocation9], 112
        $region52: #{tpu_custom_call.1} parent=35 // pred_fallthru
          _
        %s240 = sand.u32 %s31, 1
        %s241 = scalar_lea.sflag [#allocation3], %s240
        %s242 = sand.u32 %s31, 1
        %s243 = smul.addr %s242, 16
        %s244 = scalar_lea.vmem [#allocation2], %s243
        %p245 = pneg %p44
        %p246 = pneg %p41
        %p247 = pneg %p65
        %p248 = pneg %p62
        %p249 = pneg %p86
        %p250 = pneg %p83
        %p251 = pneg %p107
        %p252 = pneg %p104
        %p253 = pneg %p133
        %p254 = pneg %p130
        %s255 = sand.u32 %s120, 1
        %s256 = scalar_lea.sflag [#allocation4], %s255
        %s257 = sand.u32 %s120, 1
        %s258 = smul.addr %s257, 16
        %s259 = scalar_lea.vmem [#allocation10], %s258
        %v260 = vld [vmem:[%s223] sm:$0xff]
        %v261 = vld [vmem:[%s223 + $0x8] sm:$0xff]
        %264 = vrot.lane.b32.xlu0 %v260, 8
        %v265 = vpop.permute.xlu0 %264
        %266 = vrot.lane.b32.xlu0 %v261, 8
        %v267 = vpop.permute.xlu0 %266
        %vm270 = vcmask 64512
        %v271 = vsel %vm270, 0.0, %v265
        %v272 = vsel %vm270, 0.0, %v267
        %v273 = vsel %vm270, %v265, 0.0
        %v274 = vsel %vm270, %v267, 0.0
        %vm279 = vcmask 1040384
        %v280 = vrot.slane %v271, 7
        %v281 = vrot.slane %v273, 7
        %v282 = vrot.slane %v272, 7
        %v283 = vsel %vm279, %v280, %v282
        %v284 = vrot.slane %v274, 7
        %v285 = vsel %vm279, %v281, %v284
        %v291 = vsel %vm279, 0.0, %v280
        %v292 = vsel %vm279, 0.0, %v281
        %v293 = vsel %vm279, %v282, 0.0
        %v294 = vsel %vm279, %v284, 0.0
        %s295 = scalar_lea.vmem [#allocation5], 3456
        %v296 = vld [vmem:[%s295] sm:$0xff]
        %v297 = vld [vmem:[%s295 + $0x8] sm:$0xff]
        %v298 = vld [vmem:[%s295 + $0x10] sm:$0xff]
        %v299 = vld [vmem:[%s295 + $0x18] sm:$0xff]
        %v300 = vld [vmem:[%s295 + $0x20] sm:$0xff]
        %v301 = vld [vmem:[%s295 + $0x28] sm:$0xff]
        %v302 = vld [vmem:[%s295 + $0x30] sm:$0xff]
        %v303 = vld [vmem:[%s295 + $0x38] sm:$0xff]
        %v304 = vld [vmem:[%s295 + $0x40] sm:$0xff]
        %v305 = vld [vmem:[%s295 + $0x48] sm:$0xff]
        %v306 = vld [vmem:[%s295 + $0x50] sm:$0xff]
        %v307 = vld [vmem:[%s295 + $0x58] sm:$0xff]
        %v308 = vld [vmem:[%s295 + $0x60] sm:$0xff]
        %v309 = vld [vmem:[%s295 + $0x68] sm:$0xff]
        %v310 = vld [vmem:[%s295 + $0x70] sm:$0xff]
        %v311 = vld [vmem:[%s295 + $0x78] sm:$0xff]
        %s312 = scalar_lea.vmem [#allocation5], 3584
        %v313 = vld [vmem:[%s312] sm:$0xff]
        %v314 = vld [vmem:[%s312 + $0x8] sm:$0xff]
        %v315 = vld [vmem:[%s312 + $0x10] sm:$0xff]
        %v316 = vld [vmem:[%s312 + $0x18] sm:$0xff]
        %v317 = vld [vmem:[%s312 + $0x20] sm:$0xff]
        %v318 = vld [vmem:[%s312 + $0x28] sm:$0xff]
        %v319 = vld [vmem:[%s312 + $0x30] sm:$0xff]
        %v320 = vld [vmem:[%s312 + $0x38] sm:$0xff]
        %v321 = vld [vmem:[%s312 + $0x40] sm:$0xff]
        %v322 = vld [vmem:[%s312 + $0x48] sm:$0xff]
        %v323 = vld [vmem:[%s312 + $0x50] sm:$0xff]
        %v324 = vld [vmem:[%s312 + $0x58] sm:$0xff]
        %v325 = vld [vmem:[%s312 + $0x60] sm:$0xff]
        %v326 = vld [vmem:[%s312 + $0x68] sm:$0xff]
        %v327 = vld [vmem:[%s312 + $0x70] sm:$0xff]
        %v328 = vld [vmem:[%s312 + $0x78] sm:$0xff]
        %331 = vrot.lane.b32.xlu0 %v291, 120
        %v332 = vpop.permute.xlu0 %331
        %333 = vrot.lane.b32.xlu0 %v292, 120
        %v334 = vpop.permute.xlu0 %333
        %335 = vrot.lane.b32.xlu0 %v283, 120
        %v336 = vpop.permute.xlu0 %335
        %337 = vrot.lane.b32.xlu0 %v285, 120
        %v338 = vpop.permute.xlu0 %337
        %vm339 = vcmask 982016
        %v340 = vsel %vm339, %v332, %v334
        %v341 = vsel %vm339, %v336, %v338
        %344 = vmatprep.subr.mxu0 0.0
        %345 = vmatpush1.msra.mxu0 %v313
        %346 = vmatprep.subr.mxu0 0.0
        %347 = vmatpush1.msra.mxu0 %v314
        %348 = vmatprep.subr.mxu0 0.0
        %349 = vmatpush1.msra.mxu0 %v315
        %350 = vmatprep.subr.mxu0 0.0
        %351 = vmatpush1.msra.mxu0 %v316
        %352 = vmatprep.subr.mxu0 0.0
        %353 = vmatpush1.msra.mxu0 %v317
        %354 = vmatprep.subr.mxu0 0.0
        %355 = vmatpush1.msra.mxu0 %v318
        %356 = vmatprep.subr.mxu0 0.0
        %357 = vmatpush1.msra.mxu0 %v319
        %358 = vmatprep.subr.mxu0 0.0
        %359 = vmatpush1.msra.mxu0 %v320
        %360 = vmatprep.subr.mxu0 0.0
        %361 = vmatpush1.msra.mxu0 %v321
        %362 = vmatprep.subr.mxu0 0.0
        %363 = vmatpush1.msra.mxu0 %v322
        %364 = vmatprep.subr.mxu0 0.0
        %365 = vmatpush1.msra.mxu0 %v323
        %366 = vmatprep.subr.mxu0 0.0
        %367 = vmatpush1.msra.mxu0 %v324
        %368 = vmatprep.subr.mxu0 0.0
        %369 = vmatpush1.msra.mxu0 %v325
        %370 = vmatprep.subr.mxu0 0.0
        %371 = vmatpush1.msra.mxu0 %v326
        %372 = vmatprep.subr.mxu0 0.0
        %373 = vmatpush1.msra.mxu0 %v327
        %374 = vmatprep.subr.mxu0 0.0
        %375 = vmatpush1.msra.mxu0 %v328
        %376 = vmatprep.subr.mxu0 0.0
        %377 = vmatpush1.msra.mxu0 0.0
        %378 = vmatprep.subr.mxu0 0.0
        %379 = vmatpush1.msra.mxu0 0.0
        %380 = vmatprep.subr.mxu0 0.0
        %381 = vmatpush1.msra.mxu0 0.0
        %382 = vmatprep.subr.mxu0 0.0
        %383 = vmatpush1.msra.mxu0 0.0
        %384 = vmatprep.subr.mxu0 0.0
        %385 = vmatpush1.msra.mxu0 0.0
        %386 = vmatprep.subr.mxu0 0.0
        %387 = vmatpush1.msra.mxu0 0.0
        %388 = vmatprep.subr.mxu0 0.0
        %389 = vmatpush1.msra.mxu0 0.0
        %390 = vmatprep.subr.mxu0 0.0
        %391 = vmatpush1.msra.mxu0 0.0
        %392 = vmatprep.subr.mxu0 0.0
        %393 = vmatpush1.msra.mxu0 0.0
        %394 = vmatprep.subr.mxu0 0.0
        %395 = vmatpush1.msra.mxu0 0.0
        %396 = vmatprep.subr.mxu0 0.0
        %397 = vmatpush1.msra.mxu0 0.0
        %398 = vmatprep.subr.mxu0 0.0
        %399 = vmatpush1.msra.mxu0 0.0
        %400 = vmatprep.subr.mxu0 0.0
        %401 = vmatpush1.msra.mxu0 0.0
        %402 = vmatprep.subr.mxu0 0.0
        %403 = vmatpush1.msra.mxu0 0.0
        %404 = vmatprep.subr.mxu0 0.0
        %405 = vmatpush1.msra.mxu0 0.0
        %406 = vmatprep.subr.mxu0 0.0
        %407 = vmatpush1.msra.mxu0 0.0
        %408 = vmatprep.mubr.f32.mxu0 0.0
        %409 = vmatmul.mubr.f32.gmra.mrb[0].mxu0 %v340
        %v410 = vpop.f32.mrb[0].mxu0
        %v411 = vadd.f32 0.0, %v410
        %v412 = vpop.f32.mrb[0].mxu0
        %413 = vmatprep.mubr.f32.mxu0 0.0
        %414 = vmatmul.mubr.f32.gmra.mrb[0].mxu0 %v341
        %v415 = vpop.f32.mrb[0].mxu0
        %v416 = vadd.f32 0.0, %v415
        %v417 = vpop.f32.mrb[0].mxu0
        %418 = vdwg.mxu0
        %419 = vmatprep.subr.mxu0 0.0
        %420 = vmatpush1.msra.mxu0 %v296
        %421 = vmatprep.subr.mxu0 0.0
        %422 = vmatpush1.msra.mxu0 %v297
        %423 = vmatprep.subr.mxu0 0.0
        %424 = vmatpush1.msra.mxu0 %v298
        %425 = vmatprep.subr.mxu0 0.0
        %426 = vmatpush1.msra.mxu0 %v299
        %427 = vmatprep.subr.mxu0 0.0
        %428 = vmatpush1.msra.mxu0 %v300
        %429 = vmatprep.subr.mxu0 0.0
        %430 = vmatpush1.msra.mxu0 %v301
        %431 = vmatprep.subr.mxu0 0.0
        %432 = vmatpush1.msra.mxu0 %v302
        %433 = vmatprep.subr.mxu0 0.0
        %434 = vmatpush1.msra.mxu0 %v303
        %435 = vmatprep.subr.mxu0 0.0
        %436 = vmatpush1.msra.mxu0 %v304
        %437 = vmatprep.subr.mxu0 0.0
        %438 = vmatpush1.msra.mxu0 %v305
        %439 = vmatprep.subr.mxu0 0.0
        %440 = vmatpush1.msra.mxu0 %v306
        %441 = vmatprep.subr.mxu0 0.0
        %442 = vmatpush1.msra.mxu0 %v307
        %443 = vmatprep.subr.mxu0 0.0
        %444 = vmatpush1.msra.mxu0 %v308
        %445 = vmatprep.subr.mxu0 0.0
        %446 = vmatpush1.msra.mxu0 %v309
        %447 = vmatprep.subr.mxu0 0.0
        %448 = vmatpush1.msra.mxu0 %v310
        %449 = vmatprep.subr.mxu0 0.0
        %450 = vmatpush1.msra.mxu0 %v311
        %451 = vmatprep.subr.mxu0 0.0
        %452 = vmatpush1.msra.mxu0 0.0
        %453 = vmatprep.subr.mxu0 0.0
        %454 = vmatpush1.msra.mxu0 0.0
        %455 = vmatprep.subr.mxu0 0.0
        %456 = vmatpush1.msra.mxu0 0.0
        %457 = vmatprep.subr.mxu0 0.0
        %458 = vmatpush1.msra.mxu0 0.0
        %459 = vmatprep.subr.mxu0 0.0
        %460 = vmatpush1.msra.mxu0 0.0
        %461 = vmatprep.subr.mxu0 0.0
        %462 = vmatpush1.msra.mxu0 0.0
        %463 = vmatprep.subr.mxu0 0.0
        %464 = vmatpush1.msra.mxu0 0.0
        %465 = vmatprep.subr.mxu0 0.0
        %466 = vmatpush1.msra.mxu0 0.0
        %467 = vmatprep.subr.mxu0 0.0
        %468 = vmatpush1.msra.mxu0 0.0
        %469 = vmatprep.subr.mxu0 0.0
        %470 = vmatpush1.msra.mxu0 0.0
        %471 = vmatprep.subr.mxu0 0.0
        %472 = vmatpush1.msra.mxu0 0.0
        %473 = vmatprep.subr.mxu0 0.0
        %474 = vmatpush1.msra.mxu0 0.0
        %475 = vmatprep.subr.mxu0 0.0
        %476 = vmatpush1.msra.mxu0 0.0
        %477 = vmatprep.subr.mxu0 0.0
        %478 = vmatpush1.msra.mxu0 0.0
        %479 = vmatprep.subr.mxu0 0.0
        %480 = vmatpush1.msra.mxu0 0.0
        %481 = vmatprep.subr.mxu0 0.0
        %482 = vmatpush1.msra.mxu0 0.0
        %483 = vmatprep.mubr.f32.mxu0 0.0
        %484 = vmatmul.mubr.f32.gmra.mrb[0].mxu0 %v291
        %v485 = vpop.f32.mrb[0].mxu0
        %v486 = vadd.f32 %v411, %v485
        %v487 = vpop.f32.mrb[0].mxu0
        %488 = vmatprep.mubr.f32.mxu0 0.0
        %489 = vmatmul.mubr.f32.gmra.mrb[0].mxu0 %v283
        %v490 = vpop.f32.mrb[0].mxu0
        %v491 = vadd.f32 %v416, %v490
        %v492 = vpop.f32.mrb[0].mxu0
        %493 = vdwg.mxu0
        %s494 = scalar_lea.vmem [#allocation5], 3712
        %v495 = vld [vmem:[%s494] sm:$0xff]
        %v496 = vld [vmem:[%s494 + $0x8] sm:$0xff]
        %v497 = vld [vmem:[%s494 + $0x10] sm:$0xff]
        %v498 = vld [vmem:[%s494 + $0x18] sm:$0xff]
        %v499 = vld [vmem:[%s494 + $0x20] sm:$0xff]
        %v500 = vld [vmem:[%s494 + $0x28] sm:$0xff]
        %v501 = vld [vmem:[%s494 + $0x30] sm:$0xff]
        %v502 = vld [vmem:[%s494 + $0x38] sm:$0xff]
        %v503 = vld [vmem:[%s494 + $0x40] sm:$0xff]
        %v504 = vld [vmem:[%s494 + $0x48] sm:$0xff]
        %v505 = vld [vmem:[%s494 + $0x50] sm:$0xff]
        %v506 = vld [vmem:[%s494 + $0x58] sm:$0xff]
        %v507 = vld [vmem:[%s494 + $0x60] sm:$0xff]
        %v508 = vld [vmem:[%s494 + $0x68] sm:$0xff]
        %v509 = vld [vmem:[%s494 + $0x70] sm:$0xff]
        %v510 = vld [vmem:[%s494 + $0x78] sm:$0xff]
        %511 = vrot.lane.b32.xlu0 %v291, 112
        %v512 = vpop.permute.xlu0 %511
        %513 = vrot.lane.b32.xlu0 %v292, 112
        %v514 = vpop.permute.xlu0 %513
        %515 = vrot.lane.b32.xlu0 %v283, 112
        %v516 = vpop.permute.xlu0 %515
        %517 = vrot.lane.b32.xlu0 %v285, 112
        %v518 = vpop.permute.xlu0 %517
        %vm519 = vcmask 916480
        %v520 = vsel %vm519, %v512, %v514
        %v521 = vsel %vm519, %v516, %v518
        %524 = vmatprep.subr.mxu0 0.0
        %525 = vmatpush1.msra.mxu0 %v495
        %526 = vmatprep.subr.mxu0 0.0
        %527 = vmatpush1.msra.mxu0 %v496
        %528 = vmatprep.subr.mxu0 0.0
        %529 = vmatpush1.msra.mxu0 %v497
        %530 = vmatprep.subr.mxu0 0.0
        %531 = vmatpush1.msra.mxu0 %v498
        %532 = vmatprep.subr.mxu0 0.0
        %533 = vmatpush1.msra.mxu0 %v499
        %534 = vmatprep.subr.mxu0 0.0
        %535 = vmatpush1.msra.mxu0 %v500
        %536 = vmatprep.subr.mxu0 0.0
        %537 = vmatpush1.msra.mxu0 %v501
        %538 = vmatprep.subr.mxu0 0.0
        %539 = vmatpush1.msra.mxu0 %v502
        %540 = vmatprep.subr.mxu0 0.0
        %541 = vmatpush1.msra.mxu0 %v503
        %542 = vmatprep.subr.mxu0 0.0
        %543 = vmatpush1.msra.mxu0 %v504
        %544 = vmatprep.subr.mxu0 0.0
        %545 = vmatpush1.msra.mxu0 %v505
        %546 = vmatprep.subr.mxu0 0.0
        %547 = vmatpush1.msra.mxu0 %v506
        %548 = vmatprep.subr.mxu0 0.0
        %549 = vmatpush1.msra.mxu0 %v507
        %550 = vmatprep.subr.mxu0 0.0
        %551 = vmatpush1.msra.mxu0 %v508
        %552 = vmatprep.subr.mxu0 0.0
        %553 = vmatpush1.msra.mxu0 %v509
        %554 = vmatprep.subr.mxu0 0.0
        %555 = vmatpush1.msra.mxu0 %v510
        %556 = vmatprep.subr.mxu0 0.0
        %557 = vmatpush1.msra.mxu0 0.0
        %558 = vmatprep.subr.mxu0 0.0
        %559 = vmatpush1.msra.mxu0 0.0
        %560 = vmatprep.subr.mxu0 0.0
        %561 = vmatpush1.msra.mxu0 0.0
        %562 = vmatprep.subr.mxu0 0.0
        %563 = vmatpush1.msra.mxu0 0.0
        %564 = vmatprep.subr.mxu0 0.0
        %565 = vmatpush1.msra.mxu0 0.0
        %566 = vmatprep.subr.mxu0 0.0
        %567 = vmatpush1.msra.mxu0 0.0
        %568 = vmatprep.subr.mxu0 0.0
        %569 = vmatpush1.msra.mxu0 0.0
        %570 = vmatprep.subr.mxu0 0.0
        %571 = vmatpush1.msra.mxu0 0.0
        %572 = vmatprep.subr.mxu0 0.0
        %573 = vmatpush1.msra.mxu0 0.0
        %574 = vmatprep.subr.mxu0 0.0
        %575 = vmatpush1.msra.mxu0 0.0
        %576 = vmatprep.subr.mxu0 0.0
        %577 = vmatpush1.msra.mxu0 0.0
        %578 = vmatprep.subr.mxu0 0.0
        %579 = vmatpush1.msra.mxu0 0.0
        %580 = vmatprep.subr.mxu0 0.0
        %581 = vmatpush1.msra.mxu0 0.0
        %582 = vmatprep.subr.mxu0 0.0
        %583 = vmatpush1.msra.mxu0 0.0
        %584 = vmatprep.subr.mxu0 0.0
        %585 = vmatpush1.msra.mxu0 0.0
        %586 = vmatprep.subr.mxu0 0.0
        %587 = vmatpush1.msra.mxu0 0.0
        %588 = vmatprep.mubr.f32.mxu0 0.0
        %589 = vmatmul.mubr.f32.gmra.mrb[0].mxu0 %v520
        %v590 = vpop.f32.mrb[0].mxu0
        %v591 = vadd.f32 0.0, %v590
        %v592 = vpop.f32.mrb[0].mxu0
        %593 = vmatprep.mubr.f32.mxu0 0.0
        %594 = vmatmul.mubr.f32.gmra.mrb[0].mxu0 %v521
        %v595 = vpop.f32.mrb[0].mxu0
        %v596 = vadd.f32 0.0, %v595
        %v597 = vpop.f32.mrb[0].mxu0
        %598 = vdwg.mxu0
        %v599 = vadd.f32 %v486, %v591
        %v600 = vadd.f32 %v491, %v596
        %s601 = scalar_lea.vmem [#allocation5], 3840
        %v602 = vld [vmem:[%s601] sm:$0xff]
        %v603 = vld [vmem:[%s601 + $0x8] sm:$0xff]
        %v604 = vld [vmem:[%s601 + $0x10] sm:$0xff]
        %v605 = vld [vmem:[%s601 + $0x18] sm:$0xff]
        %v606 = vld [vmem:[%s601 + $0x20] sm:$0xff]
        %v607 = vld [vmem:[%s601 + $0x28] sm:$0xff]
        %v608 = vld [vmem:[%s601 + $0x30] sm:$0xff]
        %v609 = vld [vmem:[%s601 + $0x38] sm:$0xff]
        %v610 = vld [vmem:[%s601 + $0x40] sm:$0xff]
        %v611 = vld [vmem:[%s601 + $0x48] sm:$0xff]
        %v612 = vld [vmem:[%s601 + $0x50] sm:$0xff]
        %v613 = vld [vmem:[%s601 + $0x58] sm:$0xff]
        %v614 = vld [vmem:[%s601 + $0x60] sm:$0xff]
        %v615 = vld [vmem:[%s601 + $0x68] sm:$0xff]
        %v616 = vld [vmem:[%s601 + $0x70] sm:$0xff]
        %v617 = vld [vmem:[%s601 + $0x78] sm:$0xff]
        %vm619 = vcmask 1046528
        %v620 = vrot.slane %v291, 1
        %v621 = vrot.slane %v283, 1
        %v622 = vsel %vm619, %v620, %v621
        %v623 = vrot.slane %v293, 1
        %v624 = vsel %vm619, %v621, %v623
        %627 = vmatprep.subr.mxu0 0.0
        %628 = vmatpush1.msra.mxu0 %v602
        %629 = vmatprep.subr.mxu0 0.0
        %630 = vmatpush1.msra.mxu0 %v603
        %631 = vmatprep.subr.mxu0 0.0
        %632 = vmatpush1.msra.mxu0 %v604
        %633 = vmatprep.subr.mxu0 0.0
        %634 = vmatpush1.msra.mxu0 %v605
        %635 = vmatprep.subr.mxu0 0.0
        %636 = vmatpush1.msra.mxu0 %v606
        %637 = vmatprep.subr.mxu0 0.0
        %638 = vmatpush1.msra.mxu0 %v607
        %639 = vmatprep.subr.mxu0 0.0
        %640 = vmatpush1.msra.mxu0 %v608
        %641 = vmatprep.subr.mxu0 0.0
        %642 = vmatpush1.msra.mxu0 %v609
        %643 = vmatprep.subr.mxu0 0.0
        %644 = vmatpush1.msra.mxu0 %v610
        %645 = vmatprep.subr.mxu0 0.0
        %646 = vmatpush1.msra.mxu0 %v611
        %647 = vmatprep.subr.mxu0 0.0
        %648 = vmatpush1.msra.mxu0 %v612
        %649 = vmatprep.subr.mxu0 0.0
        %650 = vmatpush1.msra.mxu0 %v613
        %651 = vmatprep.subr.mxu0 0.0
        %652 = vmatpush1.msra.mxu0 %v614
        %653 = vmatprep.subr.mxu0 0.0
        %654 = vmatpush1.msra.mxu0 %v615
        %655 = vmatprep.subr.mxu0 0.0
        %656 = vmatpush1.msra.mxu0 %v616
        %657 = vmatprep.subr.mxu0 0.0
        %658 = vmatpush1.msra.mxu0 %v617
        %659 = vmatprep.subr.mxu0 0.0
        %660 = vmatpush1.msra.mxu0 0.0
        %661 = vmatprep.subr.mxu0 0.0
        %662 = vmatpush1.msra.mxu0 0.0
        %663 = vmatprep.subr.mxu0 0.0
        %664 = vmatpush1.msra.mxu0 0.0
        %665 = vmatprep.subr.mxu0 0.0
        %666 = vmatpush1.msra.mxu0 0.0
        %667 = vmatprep.subr.mxu0 0.0
        %668 = vmatpush1.msra.mxu0 0.0
        %669 = vmatprep.subr.mxu0 0.0
        %670 = vmatpush1.msra.mxu0 0.0
        %671 = vmatprep.subr.mxu0 0.0
        %672 = vmatpush1.msra.mxu0 0.0
        %673 = vmatprep.subr.mxu0 0.0
        %674 = vmatpush1.msra.mxu0 0.0
        %675 = vmatprep.subr.mxu0 0.0
        %676 = vmatpush1.msra.mxu0 0.0
        %677 = vmatprep.subr.mxu0 0.0
        %678 = vmatpush1.msra.mxu0 0.0
        %679 = vmatprep.subr.mxu0 0.0
        %680 = vmatpush1.msra.mxu0 0.0
        %681 = vmatprep.subr.mxu0 0.0
        %682 = vmatpush1.msra.mxu0 0.0
        %683 = vmatprep.subr.mxu0 0.0
        %684 = vmatpush1.msra.mxu0 0.0
        %685 = vmatprep.subr.mxu0 0.0
        %686 = vmatpush1.msra.mxu0 0.0
        %687 = vmatprep.subr.mxu0 0.0
        %688 = vmatpush1.msra.mxu0 0.0
        %689 = vmatprep.subr.mxu0 0.0
        %690 = vmatpush1.msra.mxu0 0.0
        %691 = vmatprep.mubr.f32.mxu0 0.0
        %692 = vmatmul.mubr.f32.gmra.mrb[0].mxu0 %v622
        %v693 = vpop.f32.mrb[0].mxu0
        %v694 = vadd.f32 0.0, %v693
        %v695 = vpop.f32.mrb[0].mxu0
        %696 = vmatprep.mubr.f32.mxu0 0.0
        %697 = vmatmul.mubr.f32.gmra.mrb[0].mxu0 %v624
        %v698 = vpop.f32.mrb[0].mxu0
        %v699 = vadd.f32 0.0, %v698
        %v700 = vpop.f32.mrb[0].mxu0
        %701 = vdwg.mxu0
        %v702 = vadd.f32 %v599, %v694
        %v703 = vadd.f32 %v600, %v699
        %s704 = scalar_lea.vmem [#allocation5], 3968
        %v705 = vld [vmem:[%s704] sm:$0xff]
        %v706 = vld [vmem:[%s704 + $0x8] sm:$0xff]
        %v707 = vld [vmem:[%s704 + $0x10] sm:$0xff]
        %v708 = vld [vmem:[%s704 + $0x18] sm:$0xff]
        %v709 = vld [vmem:[%s704 + $0x20] sm:$0xff]
        %v710 = vld [vmem:[%s704 + $0x28] sm:$0xff]
        %v711 = vld [vmem:[%s704 + $0x30] sm:$0xff]
        %v712 = vld [vmem:[%s704 + $0x38] sm:$0xff]
        %v713 = vld [vmem:[%s704 + $0x40] sm:$0xff]
        %v714 = vld [vmem:[%s704 + $0x48] sm:$0xff]
        %v715 = vld [vmem:[%s704 + $0x50] sm:$0xff]
        %v716 = vld [vmem:[%s704 + $0x58] sm:$0xff]
        %v717 = vld [vmem:[%s704 + $0x60] sm:$0xff]
        %v718 = vld [vmem:[%s704 + $0x68] sm:$0xff]
        %v719 = vld [vmem:[%s704 + $0x70] sm:$0xff]
        %v720 = vld [vmem:[%s704 + $0x78] sm:$0xff]
        %v722 = vrot.slane %v292, 1
        %v723 = vrot.slane %v285, 1
        %v724 = vsel %vm619, %v722, %v723
        %v725 = vrot.slane %v294, 1
        %v726 = vsel %vm619, %v723, %v725
        %727 = vrot.lane.b32.xlu0 %v622, 120
        %v728 = vpop.permute.xlu0 %727
        %729 = vrot.lane.b32.xlu0 %v724, 120
        %v730 = vpop.permute.xlu0 %729
        %731 = vrot.lane.b32.xlu0 %v624, 120
        %v732 = vpop.permute.xlu0 %731
        %733 = vrot.lane.b32.xlu0 %v726, 120
        %v734 = vpop.permute.xlu0 %733
        %v735 = vsel %vm339, %v728, %v730
        %v736 = vsel %vm339, %v732, %v734
        %739 = vmatprep.subr.mxu0 0.0
        %740 = vmatpush1.msra.mxu0 %v705
        %741 = vmatprep.subr.mxu0 0.0
        %742 = vmatpush1.msra.mxu0 %v706
        %743 = vmatprep.subr.mxu0 0.0
        %744 = vmatpush1.msra.mxu0 %v707
        %745 = vmatprep.subr.mxu0 0.0
        %746 = vmatpush1.msra.mxu0 %v708
        %747 = vmatprep.subr.mxu0 0.0
        %748 = vmatpush1.msra.mxu0 %v709
        %749 = vmatprep.subr.mxu0 0.0
        %750 = vmatpush1.msra.mxu0 %v710
        %751 = vmatprep.subr.mxu0 0.0
        %752 = vmatpush1.msra.mxu0 %v711
        %753 = vmatprep.subr.mxu0 0.0
        %754 = vmatpush1.msra.mxu0 %v712
        %755 = vmatprep.subr.mxu0 0.0
        %756 = vmatpush1.msra.mxu0 %v713
        %757 = vmatprep.subr.mxu0 0.0
        %758 = vmatpush1.msra.mxu0 %v714
        %759 = vmatprep.subr.mxu0 0.0
        %760 = vmatpush1.msra.mxu0 %v715
        %761 = vmatprep.subr.mxu0 0.0
        %762 = vmatpush1.msra.mxu0 %v716
        %763 = vmatprep.subr.mxu0 0.0
        %764 = vmatpush1.msra.mxu0 %v717
        %765 = vmatprep.subr.mxu0 0.0
        %766 = vmatpush1.msra.mxu0 %v718
        %767 = vmatprep.subr.mxu0 0.0
        %768 = vmatpush1.msra.mxu0 %v719
        %769 = vmatprep.subr.mxu0 0.0
        %770 = vmatpush1.msra.mxu0 %v720
        %771 = vmatprep.subr.mxu0 0.0
        %772 = vmatpush1.msra.mxu0 0.0
        %773 = vmatprep.subr.mxu0 0.0
        %774 = vmatpush1.msra.mxu0 0.0
        %775 = vmatprep.subr.mxu0 0.0
        %776 = vmatpush1.msra.mxu0 0.0
        %777 = vmatprep.subr.mxu0 0.0
        %778 = vmatpush1.msra.mxu0 0.0
        %779 = vmatprep.subr.mxu0 0.0
        %780 = vmatpush1.msra.mxu0 0.0
        %781 = vmatprep.subr.mxu0 0.0
        %782 = vmatpush1.msra.mxu0 0.0
        %783 = vmatprep.subr.mxu0 0.0
        %784 = vmatpush1.msra.mxu0 0.0
        %785 = vmatprep.subr.mxu0 0.0
        %786 = vmatpush1.msra.mxu0 0.0
        %787 = vmatprep.subr.mxu0 0.0
        %788 = vmatpush1.msra.mxu0 0.0
        %789 = vmatprep.subr.mxu0 0.0
        %790 = vmatpush1.msra.mxu0 0.0
        %791 = vmatprep.subr.mxu0 0.0
        %792 = vmatpush1.msra.mxu0 0.0
        %793 = vmatprep.subr.mxu0 0.0
        %794 = vmatpush1.msra.mxu0 0.0
        %795 = vmatprep.subr.mxu0 0.0
        %796 = vmatpush1.msra.mxu0 0.0
        %797 = vmatprep.subr.mxu0 0.0
        %798 = vmatpush1.msra.mxu0 0.0
        %799 = vmatprep.subr.mxu0 0.0
        %800 = vmatpush1.msra.mxu0 0.0
        %801 = vmatprep.subr.mxu0 0.0
        %802 = vmatpush1.msra.mxu0 0.0
        %803 = vmatprep.mubr.f32.mxu0 0.0
        %804 = vmatmul.mubr.f32.gmra.mrb[0].mxu0 %v735
        %v805 = vpop.f32.mrb[0].mxu0
        %v806 = vadd.f32 0.0, %v805
        %v807 = vpop.f32.mrb[0].mxu0
        %808 = vmatprep.mubr.f32.mxu0 0.0
        %809 = vmatmul.mubr.f32.gmra.mrb[0].mxu0 %v736
        %v810 = vpop.f32.mrb[0].mxu0
        %v811 = vadd.f32 0.0, %v810
        %v812 = vpop.f32.mrb[0].mxu0
        %813 = vdwg.mxu0
        %v814 = vadd.f32 %v702, %v806
        %v815 = vadd.f32 %v703, %v811
        %s816 = scalar_lea.vmem [#allocation5], 4096
        %v817 = vld [vmem:[%s816] sm:$0xff]
        %v818 = vld [vmem:[%s816 + $0x8] sm:$0xff]
        %v819 = vld [vmem:[%s816 + $0x10] sm:$0xff]
        %v820 = vld [vmem:[%s816 + $0x18] sm:$0xff]
        %v821 = vld [vmem:[%s816 + $0x20] sm:$0xff]
        %v822 = vld [vmem:[%s816 + $0x28] sm:$0xff]
        %v823 = vld [vmem:[%s816 + $0x30] sm:$0xff]
        %v824 = vld [vmem:[%s816 + $0x38] sm:$0xff]
        %v825 = vld [vmem:[%s816 + $0x40] sm:$0xff]
        %v826 = vld [vmem:[%s816 + $0x48] sm:$0xff]
        %v827 = vld [vmem:[%s816 + $0x50] sm:$0xff]
        %v828 = vld [vmem:[%s816 + $0x58] sm:$0xff]
        %v829 = vld [vmem:[%s816 + $0x60] sm:$0xff]
        %v830 = vld [vmem:[%s816 + $0x68] sm:$0xff]
        %v831 = vld [vmem:[%s816 + $0x70] sm:$0xff]
        %v832 = vld [vmem:[%s816 + $0x78] sm:$0xff]
        %833 = vrot.lane.b32.xlu0 %v622, 112
        %v834 = vpop.permute.xlu0 %833
        %835 = vrot.lane.b32.xlu0 %v724, 112
        %v836 = vpop.permute.xlu0 %835
        %837 = vrot.lane.b32.xlu0 %v624, 112
        %v838 = vpop.permute.xlu0 %837
        %839 = vrot.lane.b32.xlu0 %v726, 112
        %v840 = vpop.permute.xlu0 %839
        %v841 = vsel %vm519, %v834, %v836
        %v842 = vsel %vm519, %v838, %v840
        %845 = vmatprep.subr.mxu0 0.0
        %846 = vmatpush1.msra.mxu0 %v817
        %847 = vmatprep.subr.mxu0 0.0
        %848 = vmatpush1.msra.mxu0 %v818
        %849 = vmatprep.subr.mxu0 0.0
        %850 = vmatpush1.msra.mxu0 %v819
        %851 = vmatprep.subr.mxu0 0.0
        %852 = vmatpush1.msra.mxu0 %v820
        %853 = vmatprep.subr.mxu0 0.0
        %854 = vmatpush1.msra.mxu0 %v821
        %855 = vmatprep.subr.mxu0 0.0
        %856 = vmatpush1.msra.mxu0 %v822
        %857 = vmatprep.subr.mxu0 0.0
        %858 = vmatpush1.msra.mxu0 %v823
        %859 = vmatprep.subr.mxu0 0.0
        %860 = vmatpush1.msra.mxu0 %v824
        %861 = vmatprep.subr.mxu0 0.0
        %862 = vmatpush1.msra.mxu0 %v825
        %863 = vmatprep.subr.mxu0 0.0
        %864 = vmatpush1.msra.mxu0 %v826
        %865 = vmatprep.subr.mxu0 0.0
        %866 = vmatpush1.msra.mxu0 %v827
        %867 = vmatprep.subr.mxu0 0.0
        %868 = vmatpush1.msra.mxu0 %v828
        %869 = vmatprep.subr.mxu0 0.0
        %870 = vmatpush1.msra.mxu0 %v829
        %871 = vmatprep.subr.mxu0 0.0
        %872 = vmatpush1.msra.mxu0 %v830
        %873 = vmatprep.subr.mxu0 0.0
        %874 = vmatpush1.msra.mxu0 %v831
        %875 = vmatprep.subr.mxu0 0.0
        %876 = vmatpush1.msra.mxu0 %v832
        %877 = vmatprep.subr.mxu0 0.0
        %878 = vmatpush1.msra.mxu0 0.0
        %879 = vmatprep.subr.mxu0 0.0
        %880 = vmatpush1.msra.mxu0 0.0
        %881 = vmatprep.subr.mxu0 0.0
        %882 = vmatpush1.msra.mxu0 0.0
        %883 = vmatprep.subr.mxu0 0.0
        %884 = vmatpush1.msra.mxu0 0.0
        %885 = vmatprep.subr.mxu0 0.0
        %886 = vmatpush1.msra.mxu0 0.0
        %887 = vmatprep.subr.mxu0 0.0
        %888 = vmatpush1.msra.mxu0 0.0
        %889 = vmatprep.subr.mxu0 0.0
        %890 = vmatpush1.msra.mxu0 0.0
        %891 = vmatprep.subr.mxu0 0.0
        %892 = vmatpush1.msra.mxu0 0.0
        %893 = vmatprep.subr.mxu0 0.0
        %894 = vmatpush1.msra.mxu0 0.0
        %895 = vmatprep.subr.mxu0 0.0
        %896 = vmatpush1.msra.mxu0 0.0
        %897 = vmatprep.subr.mxu0 0.0
        %898 = vmatpush1.msra.mxu0 0.0
        %899 = vmatprep.subr.mxu0 0.0
        %900 = vmatpush1.msra.mxu0 0.0
        %901 = vmatprep.subr.mxu0 0.0
        %902 = vmatpush1.msra.mxu0 0.0
        %903 = vmatprep.subr.mxu0 0.0
        %904 = vmatpush1.msra.mxu0 0.0
        %905 = vmatprep.subr.mxu0 0.0
        %906 = vmatpush1.msra.mxu0 0.0
        %907 = vmatprep.subr.mxu0 0.0
        %908 = vmatpush1.msra.mxu0 0.0
        %909 = vmatprep.mubr.f32.mxu0 0.0
        %910 = vmatmul.mubr.f32.gmra.mrb[0].mxu0 %v841
        %v911 = vpop.f32.mrb[0].mxu0
        %v912 = vadd.f32 0.0, %v911
        %v913 = vpop.f32.mrb[0].mxu0
        %914 = vmatprep.mubr.f32.mxu0 0.0
        %915 = vmatmul.mubr.f32.gmra.mrb[0].mxu0 %v842
        %v916 = vpop.f32.mrb[0].mxu0
        %v917 = vadd.f32 0.0, %v916
        %v918 = vpop.f32.mrb[0].mxu0
        %919 = vdwg.mxu0
        %v920 = vadd.f32 %v814, %v912
        %v921 = vadd.f32 %v815, %v917
        %s922 = scalar_lea.vmem [#allocation5], 4224
        %v923 = vld [vmem:[%s922] sm:$0xff]
        %v924 = vld [vmem:[%s922 + $0x8] sm:$0xff]
        %v925 = vld [vmem:[%s922 + $0x10] sm:$0xff]
        %v926 = vld [vmem:[%s922 + $0x18] sm:$0xff]
        %v927 = vld [vmem:[%s922 + $0x20] sm:$0xff]
        %v928 = vld [vmem:[%s922 + $0x28] sm:$0xff]
        %v929 = vld [vmem:[%s922 + $0x30] sm:$0xff]
        %v930 = vld [vmem:[%s922 + $0x38] sm:$0xff]
        %v931 = vld [vmem:[%s922 + $0x40] sm:$0xff]
        %v932 = vld [vmem:[%s922 + $0x48] sm:$0xff]
        %v933 = vld [vmem:[%s922 + $0x50] sm:$0xff]
        %v934 = vld [vmem:[%s922 + $0x58] sm:$0xff]
        %v935 = vld [vmem:[%s922 + $0x60] sm:$0xff]
        %v936 = vld [vmem:[%s922 + $0x68] sm:$0xff]
        %v937 = vld [vmem:[%s922 + $0x70] sm:$0xff]
        %v938 = vld [vmem:[%s922 + $0x78] sm:$0xff]
        %vm939 = vcmask 1045504
        %v940 = vrot.slane %v291, 2
        %v941 = vrot.slane %v283, 2
        %v942 = vsel %vm939, %v940, %v941
        %v943 = vrot.slane %v293, 2
        %v944 = vsel %vm939, %v941, %v943
        %947 = vmatprep.subr.mxu0 0.0
        %948 = vmatpush1.msra.mxu0 %v923
        %949 = vmatprep.subr.mxu0 0.0
        %950 = vmatpush1.msra.mxu0 %v924
        %951 = vmatprep.subr.mxu0 0.0
        %952 = vmatpush1.msra.mxu0 %v925
        %953 = vmatprep.subr.mxu0 0.0
        %954 = vmatpush1.msra.mxu0 %v926
        %955 = vmatprep.subr.mxu0 0.0
        %956 = vmatpush1.msra.mxu0 %v927
        %957 = vmatprep.subr.mxu0 0.0
        %958 = vmatpush1.msra.mxu0 %v928
        %959 = vmatprep.subr.mxu0 0.0
        %960 = vmatpush1.msra.mxu0 %v929
        %961 = vmatprep.subr.mxu0 0.0
        %962 = vmatpush1.msra.mxu0 %v930
        %963 = vmatprep.subr.mxu0 0.0
        %964 = vmatpush1.msra.mxu0 %v931
        %965 = vmatprep.subr.mxu0 0.0
        %966 = vmatpush1.msra.mxu0 %v932
        %967 = vmatprep.subr.mxu0 0.0
        %968 = vmatpush1.msra.mxu0 %v933
        %969 = vmatprep.subr.mxu0 0.0
        %970 = vmatpush1.msra.mxu0 %v934
        %971 = vmatprep.subr.mxu0 0.0
        %972 = vmatpush1.msra.mxu0 %v935
        %973 = vmatprep.subr.mxu0 0.0
        %974 = vmatpush1.msra.mxu0 %v936
        %975 = vmatprep.subr.mxu0 0.0
        %976 = vmatpush1.msra.mxu0 %v937
        %977 = vmatprep.subr.mxu0 0.0
        %978 = vmatpush1.msra.mxu0 %v938
        %979 = vmatprep.subr.mxu0 0.0
        %980 = vmatpush1.msra.mxu0 0.0
        %981 = vmatprep.subr.mxu0 0.0
        %982 = vmatpush1.msra.mxu0 0.0
        %983 = vmatprep.subr.mxu0 0.0
        %984 = vmatpush1.msra.mxu0 0.0
        %985 = vmatprep.subr.mxu0 0.0
        %986 = vmatpush1.msra.mxu0 0.0
        %987 = vmatprep.subr.mxu0 0.0
        %988 = vmatpush1.msra.mxu0 0.0
        %989 = vmatprep.subr.mxu0 0.0
        %990 = vmatpush1.msra.mxu0 0.0
        %991 = vmatprep.subr.mxu0 0.0
        %992 = vmatpush1.msra.mxu0 0.0
        %993 = vmatprep.subr.mxu0 0.0
        %994 = vmatpush1.msra.mxu0 0.0
        %995 = vmatprep.subr.mxu0 0.0
        %996 = vmatpush1.msra.mxu0 0.0
        %997 = vmatprep.subr.mxu0 0.0
        %998 = vmatpush1.msra.mxu0 0.0
        %999 = vmatprep.subr.mxu0 0.0
        %1000 = vmatpush1.msra.mxu0 0.0
        %1001 = vmatprep.subr.mxu0 0.0
        %1002 = vmatpush1.msra.mxu0 0.0
        %1003 = vmatprep.subr.mxu0 0.0
        %1004 = vmatpush1.msra.mxu0 0.0
        %1005 = vmatprep.subr.mxu0 0.0
        %1006 = vmatpush1.msra.mxu0 0.0
        %1007 = vmatprep.subr.mxu0 0.0
        %1008 = vmatpush1.msra.mxu0 0.0
        %1009 = vmatprep.subr.mxu0 0.0
        %1010 = vmatpush1.msra.mxu0 0.0
        %1011 = vmatprep.mubr.f32.mxu0 0.0
        %1012 = vmatmul.mubr.f32.gmra.mrb[0].mxu0 %v942
        %v1013 = vpop.f32.mrb[0].mxu0
        %v1014 = vadd.f32 0.0, %v1013
        %v1015 = vpop.f32.mrb[0].mxu0
        %1016 = vmatprep.mubr.f32.mxu0 0.0
        %1017 = vmatmul.mubr.f32.gmra.mrb[0].mxu0 %v944
        %v1018 = vpop.f32.mrb[0].mxu0
        %v1019 = vadd.f32 0.0, %v1018
        %v1020 = vpop.f32.mrb[0].mxu0
        %1021 = vdwg.mxu0
        %v1022 = vadd.f32 %v920, %v1014
        %v1023 = vadd.f32 %v921, %v1019
        %s1024 = scalar_lea.vmem [#allocation5], 4352
        %v1025 = vld [vmem:[%s1024] sm:$0xff]
        %v1026 = vld [vmem:[%s1024 + $0x8] sm:$0xff]
        %v1027 = vld [vmem:[%s1024 + $0x10] sm:$0xff]
        %v1028 = vld [vmem:[%s1024 + $0x18] sm:$0xff]
        %v1029 = vld [vmem:[%s1024 + $0x20] sm:$0xff]
        %v1030 = vld [vmem:[%s1024 + $0x28] sm:$0xff]
        %v1031 = vld [vmem:[%s1024 + $0x30] sm:$0xff]
        %v1032 = vld [vmem:[%s1024 + $0x38] sm:$0xff]
        %v1033 = vld [vmem:[%s1024 + $0x40] sm:$0xff]
        %v1034 = vld [vmem:[%s1024 + $0x48] sm:$0xff]
        %v1035 = vld [vmem:[%s1024 + $0x50] sm:$0xff]
        %v1036 = vld [vmem:[%s1024 + $0x58] sm:$0xff]
        %v1037 = vld [vmem:[%s1024 + $0x60] sm:$0xff]
        %v1038 = vld [vmem:[%s1024 + $0x68] sm:$0xff]
        %v1039 = vld [vmem:[%s1024 + $0x70] sm:$0xff]
        %v1040 = vld [vmem:[%s1024 + $0x78] sm:$0xff]
        %v1041 = vrot.slane %v292, 2
        %v1042 = vrot.slane %v285, 2
        %v1043 = vsel %vm939, %v1041, %v1042
        %v1044 = vrot.slane %v294, 2
        %v1045 = vsel %vm939, %v1042, %v1044
        %1046 = vrot.lane.b32.xlu0 %v942, 120
        %v1047 = vpop.permute.xlu0 %1046
        %1048 = vrot.lane.b32.xlu0 %v1043, 120
        %v1049 = vpop.permute.xlu0 %1048
        %1050 = vrot.lane.b32.xlu0 %v944, 120
        %v1051 = vpop.permute.xlu0 %1050
        %1052 = vrot.lane.b32.xlu0 %v1045, 120
        %v1053 = vpop.permute.xlu0 %1052
        %v1054 = vsel %vm339, %v1047, %v1049
        %v1055 = vsel %vm339, %v1051, %v1053
        %1058 = vmatprep.subr.mxu0 0.0
        %1059 = vmatpush1.msra.mxu0 %v1025
        %1060 = vmatprep.subr.mxu0 0.0
        %1061 = vmatpush1.msra.mxu0 %v1026
        %1062 = vmatprep.subr.mxu0 0.0
        %1063 = vmatpush1.msra.mxu0 %v1027
        %1064 = vmatprep.subr.mxu0 0.0
        %1065 = vmatpush1.msra.mxu0 %v1028
        %1066 = vmatprep.subr.mxu0 0.0
        %1067 = vmatpush1.msra.mxu0 %v1029
        %1068 = vmatprep.subr.mxu0 0.0
        %1069 = vmatpush1.msra.mxu0 %v1030
        %1070 = vmatprep.subr.mxu0 0.0
        %1071 = vmatpush1.msra.mxu0 %v1031
        %1072 = vmatprep.subr.mxu0 0.0
        %1073 = vmatpush1.msra.mxu0 %v1032
        %1074 = vmatprep.subr.mxu0 0.0
        %1075 = vmatpush1.msra.mxu0 %v1033
        %1076 = vmatprep.subr.mxu0 0.0
        %1077 = vmatpush1.msra.mxu0 %v1034
        %1078 = vmatprep.subr.mxu0 0.0
        %1079 = vmatpush1.msra.mxu0 %v1035
        %1080 = vmatprep.subr.mxu0 0.0
        %1081 = vmatpush1.msra.mxu0 %v1036
        %1082 = vmatprep.subr.mxu0 0.0
        %1083 = vmatpush1.msra.mxu0 %v1037
        %1084 = vmatprep.subr.mxu0 0.0
        %1085 = vmatpush1.msra.mxu0 %v1038
        %1086 = vmatprep.subr.mxu0 0.0
        %1087 = vmatpush1.msra.mxu0 %v1039
        %1088 = vmatprep.subr.mxu0 0.0
        %1089 = vmatpush1.msra.mxu0 %v1040
        %1090 = vmatprep.subr.mxu0 0.0
        %1091 = vmatpush1.msra.mxu0 0.0
        %1092 = vmatprep.subr.mxu0 0.0
        %1093 = vmatpush1.msra.mxu0 0.0
        %1094 = vmatprep.subr.mxu0 0.0
        %1095 = vmatpush1.msra.mxu0 0.0
        %1096 = vmatprep.subr.mxu0 0.0
        %1097 = vmatpush1.msra.mxu0 0.0
        %1098 = vmatprep.subr.mxu0 0.0
        %1099 = vmatpush1.msra.mxu0 0.0
        %1100 = vmatprep.subr.mxu0 0.0
        %1101 = vmatpush1.msra.mxu0 0.0
        %1102 = vmatprep.subr.mxu0 0.0
        %1103 = vmatpush1.msra.mxu0 0.0
        %1104 = vmatprep.subr.mxu0 0.0
        %1105 = vmatpush1.msra.mxu0 0.0
        %1106 = vmatprep.subr.mxu0 0.0
        %1107 = vmatpush1.msra.mxu0 0.0
        %1108 = vmatprep.subr.mxu0 0.0
        %1109 = vmatpush1.msra.mxu0 0.0
        %1110 = vmatprep.subr.mxu0 0.0
        %1111 = vmatpush1.msra.mxu0 0.0
        %1112 = vmatprep.subr.mxu0 0.0
        %1113 = vmatpush1.msra.mxu0 0.0
        %1114 = vmatprep.subr.mxu0 0.0
        %1115 = vmatpush1.msra.mxu0 0.0
        %1116 = vmatprep.subr.mxu0 0.0
        %1117 = vmatpush1.msra.mxu0 0.0
        %1118 = vmatprep.subr.mxu0 0.0
        %1119 = vmatpush1.msra.mxu0 0.0
        %1120 = vmatprep.subr.mxu0 0.0
        %1121 = vmatpush1.msra.mxu0 0.0
        %1122 = vmatprep.mubr.f32.mxu0 0.0
        %1123 = vmatmul.mubr.f32.gmra.mrb[0].mxu0 %v1054
        %v1124 = vpop.f32.mrb[0].mxu0
        %v1125 = vadd.f32 0.0, %v1124
        %v1126 = vpop.f32.mrb[0].mxu0
        %1127 = vmatprep.mubr.f32.mxu0 0.0
        %1128 = vmatmul.mubr.f32.gmra.mrb[0].mxu0 %v1055
        %v1129 = vpop.f32.mrb[0].mxu0
        %v1130 = vadd.f32 0.0, %v1129
        %v1131 = vpop.f32.mrb[0].mxu0
        %1132 = vdwg.mxu0
        %v1133 = vadd.f32 %v1022, %v1125
        %v1134 = vadd.f32 %v1023, %v1130
        %s1135 = scalar_lea.vmem [#allocation5], 4480
        %v1136 = vld [vmem:[%s1135] sm:$0xff]
        %v1137 = vld [vmem:[%s1135 + $0x8] sm:$0xff]
        %v1138 = vld [vmem:[%s1135 + $0x10] sm:$0xff]
        %v1139 = vld [vmem:[%s1135 + $0x18] sm:$0xff]
        %v1140 = vld [vmem:[%s1135 + $0x20] sm:$0xff]
        %v1141 = vld [vmem:[%s1135 + $0x28] sm:$0xff]
        %v1142 = vld [vmem:[%s1135 + $0x30] sm:$0xff]
        %v1143 = vld [vmem:[%s1135 + $0x38] sm:$0xff]
        %v1144 = vld [vmem:[%s1135 + $0x40] sm:$0xff]
        %v1145 = vld [vmem:[%s1135 + $0x48] sm:$0xff]
        %v1146 = vld [vmem:[%s1135 + $0x50] sm:$0xff]
        %v1147 = vld [vmem:[%s1135 + $0x58] sm:$0xff]
        %v1148 = vld [vmem:[%s1135 + $0x60] sm:$0xff]
        %v1149 = vld [vmem:[%s1135 + $0x68] sm:$0xff]
        %v1150 = vld [vmem:[%s1135 + $0x70] sm:$0xff]
        %v1151 = vld [vmem:[%s1135 + $0x78] sm:$0xff]
        %1152 = vrot.lane.b32.xlu0 %v942, 112
        %v1153 = vpop.permute.xlu0 %1152
        %1154 = vrot.lane.b32.xlu0 %v1043, 112
        %v1155 = vpop.permute.xlu0 %1154
        %1156 = vrot.lane.b32.xlu0 %v944, 112
        %v1157 = vpop.permute.xlu0 %1156
        %1158 = vrot.lane.b32.xlu0 %v1045, 112
        %v1159 = vpop.permute.xlu0 %1158
        %v1160 = vsel %vm519, %v1153, %v1155
        %v1161 = vsel %vm519, %v1157, %v1159
        %1164 = vmatprep.subr.mxu0 0.0
        %1165 = vmatpush1.msra.mxu0 %v1136
        %1166 = vmatprep.subr.mxu0 0.0
        %1167 = vmatpush1.msra.mxu0 %v1137
        %1168 = vmatprep.subr.mxu0 0.0
        %1169 = vmatpush1.msra.mxu0 %v1138
        %1170 = vmatprep.subr.mxu0 0.0
        %1171 = vmatpush1.msra.mxu0 %v1139
        %1172 = vmatprep.subr.mxu0 0.0
        %1173 = vmatpush1.msra.mxu0 %v1140
        %1174 = vmatprep.subr.mxu0 0.0
        %1175 = vmatpush1.msra.mxu0 %v1141
        %1176 = vmatprep.subr.mxu0 0.0
        %1177 = vmatpush1.msra.mxu0 %v1142
        %1178 = vmatprep.subr.mxu0 0.0
        %1179 = vmatpush1.msra.mxu0 %v1143
        %1180 = vmatprep.subr.mxu0 0.0
        %1181 = vmatpush1.msra.mxu0 %v1144
        %1182 = vmatprep.subr.mxu0 0.0
        %1183 = vmatpush1.msra.mxu0 %v1145
        %1184 = vmatprep.subr.mxu0 0.0
        %1185 = vmatpush1.msra.mxu0 %v1146
        %1186 = vmatprep.subr.mxu0 0.0
        %1187 = vmatpush1.msra.mxu0 %v1147
        %1188 = vmatprep.subr.mxu0 0.0
        %1189 = vmatpush1.msra.mxu0 %v1148
        %1190 = vmatprep.subr.mxu0 0.0
        %1191 = vmatpush1.msra.mxu0 %v1149
        %1192 = vmatprep.subr.mxu0 0.0
        %1193 = vmatpush1.msra.mxu0 %v1150
        %1194 = vmatprep.subr.mxu0 0.0
        %1195 = vmatpush1.msra.mxu0 %v1151
        %1196 = vmatprep.subr.mxu0 0.0
        %1197 = vmatpush1.msra.mxu0 0.0
        %1198 = vmatprep.subr.mxu0 0.0
        %1199 = vmatpush1.msra.mxu0 0.0
        %1200 = vmatprep.subr.mxu0 0.0
        %1201 = vmatpush1.msra.mxu0 0.0
        %1202 = vmatprep.subr.mxu0 0.0
        %1203 = vmatpush1.msra.mxu0 0.0
        %1204 = vmatprep.subr.mxu0 0.0
        %1205 = vmatpush1.msra.mxu0 0.0
        %1206 = vmatprep.subr.mxu0 0.0
        %1207 = vmatpush1.msra.mxu0 0.0
        %1208 = vmatprep.subr.mxu0 0.0
        %1209 = vmatpush1.msra.mxu0 0.0
        %1210 = vmatprep.subr.mxu0 0.0
        %1211 = vmatpush1.msra.mxu0 0.0
        %1212 = vmatprep.subr.mxu0 0.0
        %1213 = vmatpush1.msra.mxu0 0.0
        %1214 = vmatprep.subr.mxu0 0.0
        %1215 = vmatpush1.msra.mxu0 0.0
        %1216 = vmatprep.subr.mxu0 0.0
        %1217 = vmatpush1.msra.mxu0 0.0
        %1218 = vmatprep.subr.mxu0 0.0
        %1219 = vmatpush1.msra.mxu0 0.0
        %1220 = vmatprep.subr.mxu0 0.0
        %1221 = vmatpush1.msra.mxu0 0.0
        %1222 = vmatprep.subr.mxu0 0.0
        %1223 = vmatpush1.msra.mxu0 0.0
        %1224 = vmatprep.subr.mxu0 0.0
        %1225 = vmatpush1.msra.mxu0 0.0
        %1226 = vmatprep.subr.mxu0 0.0
        %1227 = vmatpush1.msra.mxu0 0.0
        %1228 = vmatprep.mubr.f32.mxu0 0.0
        %1229 = vmatmul.mubr.f32.gmra.mrb[0].mxu0 %v1160
        %v1230 = vpop.f32.mrb[0].mxu0
        %v1231 = vadd.f32 0.0, %v1230
        %v1232 = vpop.f32.mrb[0].mxu0
        %1233 = vmatprep.mubr.f32.mxu0 0.0
        %1234 = vmatmul.mubr.f32.gmra.mrb[0].mxu0 %v1161
        %v1235 = vpop.f32.mrb[0].mxu0
        %v1236 = vadd.f32 0.0, %v1235
        %v1237 = vpop.f32.mrb[0].mxu0
        %1238 = vdwg.mxu0
        %v1239 = vadd.f32 %v1133, %v1231
        %v1240 = vadd.f32 %v1134, %v1236
        %s1241 = scalar_lea.vmem [#allocation7], 3
        %v1242 = vld [vmem:[%s1241] sm:$0x1]
        %v1244 = vlaneseq
        %v1245 = vshrl.u32 %v1244, 7
        %v1246 = vsub.s32 0, %v1245
        %v1247 = vrot.slane %v1242, %v1246
        %v1249 = vmul.f32 %v1239, %v1247
        %v1250 = vmul.f32 %v1240, %v1247
        %s1251 = scalar_lea.vmem [#allocation8], 3
        %v1252 = vld [vmem:[%s1251] sm:$0x1]
        %v1254 = vlaneseq
        %v1255 = vshrl.u32 %v1254, 7
        %v1256 = vsub.s32 0, %v1255
        %v1257 = vrot.slane %v1252, %v1256
        %v1259 = vadd.f32 %v1249, %v1257
        %v1260 = vadd.f32 %v1250, %v1257
        %v1261 = vmax.f32 %v1259, 0.0
        %v1262 = vmax.f32 %v1260, 0.0
        %s1263 = scalar_lea.vmem [#allocation5], 1152
        %v1264 = vld [vmem:[%s1263] sm:$0xff]
        %v1265 = vld [vmem:[%s1263 + $0x8] sm:$0xff]
        %v1266 = vld [vmem:[%s1263 + $0x10] sm:$0xff]
        %v1267 = vld [vmem:[%s1263 + $0x18] sm:$0xff]
        %v1268 = vld [vmem:[%s1263 + $0x20] sm:$0xff]
        %v1269 = vld [vmem:[%s1263 + $0x28] sm:$0xff]
        %v1270 = vld [vmem:[%s1263 + $0x30] sm:$0xff]
        %v1271 = vld [vmem:[%s1263 + $0x38] sm:$0xff]
        %v1272 = vld [vmem:[%s1263 + $0x40] sm:$0xff]
        %v1273 = vld [vmem:[%s1263 + $0x48] sm:$0xff]
        %v1274 = vld [vmem:[%s1263 + $0x50] sm:$0xff]
        %v1275 = vld [vmem:[%s1263 + $0x58] sm:$0xff]
        %v1276 = vld [vmem:[%s1263 + $0x60] sm:$0xff]
        %v1277 = vld [vmem:[%s1263 + $0x68] sm:$0xff]
        %v1278 = vld [vmem:[%s1263 + $0x70] sm:$0xff]
        %v1279 = vld [vmem:[%s1263 + $0x78] sm:$0xff]
        %s1280 = scalar_lea.vmem [#allocation5], 1280
        %v1281 = vld [vmem:[%s1280] sm:$0xff]
        %v1282 = vld [vmem:[%s1280 + $0x8] sm:$0xff]
        %v1283 = vld [vmem:[%s1280 + $0x10] sm:$0xff]
        %v1284 = vld [vmem:[%s1280 + $0x18] sm:$0xff]
        %v1285 = vld [vmem:[%s1280 + $0x20] sm:$0xff]
        %v1286 = vld [vmem:[%s1280 + $0x28] sm:$0xff]
        %v1287 = vld [vmem:[%s1280 + $0x30] sm:$0xff]
        %v1288 = vld [vmem:[%s1280 + $0x38] sm:$0xff]
        %v1289 = vld [vmem:[%s1280 + $0x40] sm:$0xff]
        %v1290 = vld [vmem:[%s1280 + $0x48] sm:$0xff]
        %v1291 = vld [vmem:[%s1280 + $0x50] sm:$0xff]
        %v1292 = vld [vmem:[%s1280 + $0x58] sm:$0xff]
        %v1293 = vld [vmem:[%s1280 + $0x60] sm:$0xff]
        %v1294 = vld [vmem:[%s1280 + $0x68] sm:$0xff]
        %v1295 = vld [vmem:[%s1280 + $0x70] sm:$0xff]
        %v1296 = vld [vmem:[%s1280 + $0x78] sm:$0xff]
        %1297 = vmatprep.subr.mxu0 0.0
        %1298 = vmatpush1.msra.mxu0 %v1281
        %1299 = vmatprep.subr.mxu0 0.0
        %1300 = vmatpush1.msra.mxu0 %v1282
        %1301 = vmatprep.subr.mxu0 0.0
        %1302 = vmatpush1.msra.mxu0 %v1283
        %1303 = vmatprep.subr.mxu0 0.0
        %1304 = vmatpush1.msra.mxu0 %v1284
        %1305 = vmatprep.subr.mxu0 0.0
        %1306 = vmatpush1.msra.mxu0 %v1285
        %1307 = vmatprep.subr.mxu0 0.0
        %1308 = vmatpush1.msra.mxu0 %v1286
        %1309 = vmatprep.subr.mxu0 0.0
        %1310 = vmatpush1.msra.mxu0 %v1287
        %1311 = vmatprep.subr.mxu0 0.0
        %1312 = vmatpush1.msra.mxu0 %v1288
        %1313 = vmatprep.subr.mxu0 0.0
        %1314 = vmatpush1.msra.mxu0 %v1289
        %1315 = vmatprep.subr.mxu0 0.0
        %1316 = vmatpush1.msra.mxu0 %v1290
        %1317 = vmatprep.subr.mxu0 0.0
        %1318 = vmatpush1.msra.mxu0 %v1291
        %1319 = vmatprep.subr.mxu0 0.0
        %1320 = vmatpush1.msra.mxu0 %v1292
        %1321 = vmatprep.subr.mxu0 0.0
        %1322 = vmatpush1.msra.mxu0 %v1293
        %1323 = vmatprep.subr.mxu0 0.0
        %1324 = vmatpush1.msra.mxu0 %v1294
        %1325 = vmatprep.subr.mxu0 0.0
        %1326 = vmatpush1.msra.mxu0 %v1295
        %1327 = vmatprep.subr.mxu0 0.0
        %1328 = vmatpush1.msra.mxu0 %v1296
        %1329 = vmatprep.subr.mxu0 0.0
        %1330 = vmatpush1.msra.mxu0 0.0
        %1331 = vmatprep.subr.mxu0 0.0
        %1332 = vmatpush1.msra.mxu0 0.0
        %1333 = vmatprep.subr.mxu0 0.0
        %1334 = vmatpush1.msra.mxu0 0.0
        %1335 = vmatprep.subr.mxu0 0.0
        %1336 = vmatpush1.msra.mxu0 0.0
        %1337 = vmatprep.subr.mxu0 0.0
        %1338 = vmatpush1.msra.mxu0 0.0
        %1339 = vmatprep.subr.mxu0 0.0
        %1340 = vmatpush1.msra.mxu0 0.0
        %1341 = vmatprep.subr.mxu0 0.0
        %1342 = vmatpush1.msra.mxu0 0.0
        %1343 = vmatprep.subr.mxu0 0.0
        %1344 = vmatpush1.msra.mxu0 0.0
        %1345 = vmatprep.subr.mxu0 0.0
        %1346 = vmatpush1.msra.mxu0 0.0
        %1347 = vmatprep.subr.mxu0 0.0
        %1348 = vmatpush1.msra.mxu0 0.0
        %1349 = vmatprep.subr.mxu0 0.0
        %1350 = vmatpush1.msra.mxu0 0.0
        %1351 = vmatprep.subr.mxu0 0.0
        %1352 = vmatpush1.msra.mxu0 0.0
        %1353 = vmatprep.subr.mxu0 0.0
        %1354 = vmatpush1.msra.mxu0 0.0
        %1355 = vmatprep.subr.mxu0 0.0
        %1356 = vmatpush1.msra.mxu0 0.0
        %1357 = vmatprep.subr.mxu0 0.0
        %1358 = vmatpush1.msra.mxu0 0.0
        %1359 = vmatprep.subr.mxu0 0.0
        %1360 = vmatpush1.msra.mxu0 0.0
        %1361 = vmatprep.mubr.f32.mxu0 0.0
        %1362 = vmatmul.mubr.f32.gmra.mrb[0].mxu0 %v340
        %v1363 = vpop.f32.mrb[0].mxu0
        %v1364 = vadd.f32 0.0, %v1363
        %v1365 = vpop.f32.mrb[0].mxu0
        %1366 = vmatprep.mubr.f32.mxu0 0.0
        %1367 = vmatmul.mubr.f32.gmra.mrb[0].mxu0 %v341
        %v1368 = vpop.f32.mrb[0].mxu0
        %v1369 = vadd.f32 0.0, %v1368
        %v1370 = vpop.f32.mrb[0].mxu0
        %1371 = vdwg.mxu0
        %1372 = vmatprep.subr.mxu0 0.0
        %1373 = vmatpush1.msra.mxu0 %v1264
        %1374 = vmatprep.subr.mxu0 0.0
        %1375 = vmatpush1.msra.mxu0 %v1265
        %1376 = vmatprep.subr.mxu0 0.0
        %1377 = vmatpush1.msra.mxu0 %v1266
        %1378 = vmatprep.subr.mxu0 0.0
        %1379 = vmatpush1.msra.mxu0 %v1267
        %1380 = vmatprep.subr.mxu0 0.0
        %1381 = vmatpush1.msra.mxu0 %v1268
        %1382 = vmatprep.subr.mxu0 0.0
        %1383 = vmatpush1.msra.mxu0 %v1269
        %1384 = vmatprep.subr.mxu0 0.0
        %1385 = vmatpush1.msra.mxu0 %v1270
        %1386 = vmatprep.subr.mxu0 0.0
        %1387 = vmatpush1.msra.mxu0 %v1271
        %1388 = vmatprep.subr.mxu0 0.0
        %1389 = vmatpush1.msra.mxu0 %v1272
        %1390 = vmatprep.subr.mxu0 0.0
        %1391 = vmatpush1.msra.mxu0 %v1273
        %1392 = vmatprep.subr.mxu0 0.0
        %1393 = vmatpush1.msra.mxu0 %v1274
        %1394 = vmatprep.subr.mxu0 0.0
        %1395 = vmatpush1.msra.mxu0 %v1275
        %1396 = vmatprep.subr.mxu0 0.0
        %1397 = vmatpush1.msra.mxu0 %v1276
        %1398 = vmatprep.subr.mxu0 0.0
        %1399 = vmatpush1.msra.mxu0 %v1277
        %1400 = vmatprep.subr.mxu0 0.0
        %1401 = vmatpush1.msra.mxu0 %v1278
        %1402 = vmatprep.subr.mxu0 0.0
        %1403 = vmatpush1.msra.mxu0 %v1279
        %1404 = vmatprep.subr.mxu0 0.0
        %1405 = vmatpush1.msra.mxu0 0.0
        %1406 = vmatprep.subr.mxu0 0.0
        %1407 = vmatpush1.msra.mxu0 0.0
        %1408 = vmatprep.subr.mxu0 0.0
        %1409 = vmatpush1.msra.mxu0 0.0
        %1410 = vmatprep.subr.mxu0 0.0
        %1411 = vmatpush1.msra.mxu0 0.0
        %1412 = vmatprep.subr.mxu0 0.0
        %1413 = vmatpush1.msra.mxu0 0.0
        %1414 = vmatprep.subr.mxu0 0.0
        %1415 = vmatpush1.msra.mxu0 0.0
        %1416 = vmatprep.subr.mxu0 0.0
        %1417 = vmatpush1.msra.mxu0 0.0
        %1418 = vmatprep.subr.mxu0 0.0
        %1419 = vmatpush1.msra.mxu0 0.0
        %1420 = vmatprep.subr.mxu0 0.0
        %1421 = vmatpush1.msra.mxu0 0.0
        %1422 = vmatprep.subr.mxu0 0.0
        %1423 = vmatpush1.msra.mxu0 0.0
        %1424 = vmatprep.subr.mxu0 0.0
        %1425 = vmatpush1.msra.mxu0 0.0
        %1426 = vmatprep.subr.mxu0 0.0
        %1427 = vmatpush1.msra.mxu0 0.0
        %1428 = vmatprep.subr.mxu0 0.0
        %1429 = vmatpush1.msra.mxu0 0.0
        %1430 = vmatprep.subr.mxu0 0.0
        %1431 = vmatpush1.msra.mxu0 0.0
        %1432 = vmatprep.subr.mxu0 0.0
        %1433 = vmatpush1.msra.mxu0 0.0
        %1434 = vmatprep.subr.mxu0 0.0
        %1435 = vmatpush1.msra.mxu0 0.0
        %1436 = vmatprep.mubr.f32.mxu0 0.0
        %1437 = vmatmul.mubr.f32.gmra.mrb[0].mxu0 %v291
        %v1438 = vpop.f32.mrb[0].mxu0
        %v1439 = vadd.f32 %v1364, %v1438
        %v1440 = vpop.f32.mrb[0].mxu0
        %1441 = vmatprep.mubr.f32.mxu0 0.0
        %1442 = vmatmul.mubr.f32.gmra.mrb[0].mxu0 %v283
        %v1443 = vpop.f32.mrb[0].mxu0
        %v1444 = vadd.f32 %v1369, %v1443
        %v1445 = vpop.f32.mrb[0].mxu0
        %1446 = vdwg.mxu0
        %s1447 = scalar_lea.vmem [#allocation5], 1408
        %v1448 = vld [vmem:[%s1447] sm:$0xff]
        %v1449 = vld [vmem:[%s1447 + $0x8] sm:$0xff]
        %v1450 = vld [vmem:[%s1447 + $0x10] sm:$0xff]
        %v1451 = vld [vmem:[%s1447 + $0x18] sm:$0xff]
        %v1452 = vld [vmem:[%s1447 + $0x20] sm:$0xff]
        %v1453 = vld [vmem:[%s1447 + $0x28] sm:$0xff]
        %v1454 = vld [vmem:[%s1447 + $0x30] sm:$0xff]
        %v1455 = vld [vmem:[%s1447 + $0x38] sm:$0xff]
        %v1456 = vld [vmem:[%s1447 + $0x40] sm:$0xff]
        %v1457 = vld [vmem:[%s1447 + $0x48] sm:$0xff]
        %v1458 = vld [vmem:[%s1447 + $0x50] sm:$0xff]
        %v1459 = vld [vmem:[%s1447 + $0x58] sm:$0xff]
        %v1460 = vld [vmem:[%s1447 + $0x60] sm:$0xff]
        %v1461 = vld [vmem:[%s1447 + $0x68] sm:$0xff]
        %v1462 = vld [vmem:[%s1447 + $0x70] sm:$0xff]
        %v1463 = vld [vmem:[%s1447 + $0x78] sm:$0xff]
        %1464 = vmatprep.subr.mxu0 0.0
        %1465 = vmatpush1.msra.mxu0 %v1448
        %1466 = vmatprep.subr.mxu0 0.0
        %1467 = vmatpush1.msra.mxu0 %v1449
        %1468 = vmatprep.subr.mxu0 0.0
        %1469 = vmatpush1.msra.mxu0 %v1450
        %1470 = vmatprep.subr.mxu0 0.0
        %1471 = vmatpush1.msra.mxu0 %v1451
        %1472 = vmatprep.subr.mxu0 0.0
        %1473 = vmatpush1.msra.mxu0 %v1452
        %1474 = vmatprep.subr.mxu0 0.0
        %1475 = vmatpush1.msra.mxu0 %v1453
        %1476 = vmatprep.subr.mxu0 0.0
        %1477 = vmatpush1.msra.mxu0 %v1454
        %1478 = vmatprep.subr.mxu0 0.0
        %1479 = vmatpush1.msra.mxu0 %v1455
        %1480 = vmatprep.subr.mxu0 0.0
        %1481 = vmatpush1.msra.mxu0 %v1456
        %1482 = vmatprep.subr.mxu0 0.0
        %1483 = vmatpush1.msra.mxu0 %v1457
        %1484 = vmatprep.subr.mxu0 0.0
        %1485 = vmatpush1.msra.mxu0 %v1458
        %1486 = vmatprep.subr.mxu0 0.0
        %1487 = vmatpush1.msra.mxu0 %v1459
        %1488 = vmatprep.subr.mxu0 0.0
        %1489 = vmatpush1.msra.mxu0 %v1460
        %1490 = vmatprep.subr.mxu0 0.0
        %1491 = vmatpush1.msra.mxu0 %v1461
        %1492 = vmatprep.subr.mxu0 0.0
        %1493 = vmatpush1.msra.mxu0 %v1462
        %1494 = vmatprep.subr.mxu0 0.0
        %1495 = vmatpush1.msra.mxu0 %v1463
        %1496 = vmatprep.subr.mxu0 0.0
        %1497 = vmatpush1.msra.mxu0 0.0
        %1498 = vmatprep.subr.mxu0 0.0
        %1499 = vmatpush1.msra.mxu0 0.0
        %1500 = vmatprep.subr.mxu0 0.0
        %1501 = vmatpush1.msra.mxu0 0.0
        %1502 = vmatprep.subr.mxu0 0.0
        %1503 = vmatpush1.msra.mxu0 0.0
        %1504 = vmatprep.subr.mxu0 0.0
        %1505 = vmatpush1.msra.mxu0 0.0
        %1506 = vmatprep.subr.mxu0 0.0
        %1507 = vmatpush1.msra.mxu0 0.0
        %1508 = vmatprep.subr.mxu0 0.0
        %1509 = vmatpush1.msra.mxu0 0.0
        %1510 = vmatprep.subr.mxu0 0.0
        %1511 = vmatpush1.msra.mxu0 0.0
        %1512 = vmatprep.subr.mxu0 0.0
        %1513 = vmatpush1.msra.mxu0 0.0
        %1514 = vmatprep.subr.mxu0 0.0
        %1515 = vmatpush1.msra.mxu0 0.0
        %1516 = vmatprep.subr.mxu0 0.0
        %1517 = vmatpush1.msra.mxu0 0.0
        %1518 = vmatprep.subr.mxu0 0.0
        %1519 = vmatpush1.msra.mxu0 0.0
        %1520 = vmatprep.subr.mxu0 0.0
        %1521 = vmatpush1.msra.mxu0 0.0
        %1522 = vmatprep.subr.mxu0 0.0
        %1523 = vmatpush1.msra.mxu0 0.0
        %1524 = vmatprep.subr.mxu0 0.0
        %1525 = vmatpush1.msra.mxu0 0.0
        %1526 = vmatprep.subr.mxu0 0.0
        %1527 = vmatpush1.msra.mxu0 0.0
        %1528 = vmatprep.mubr.f32.mxu0 0.0
        %1529 = vmatmul.mubr.f32.gmra.mrb[0].mxu0 %v520
        %v1530 = vpop.f32.mrb[0].mxu0
        %v1531 = vadd.f32 0.0, %v1530
        %v1532 = vpop.f32.mrb[0].mxu0
        %1533 = vmatprep.mubr.f32.mxu0 0.0
        %1534 = vmatmul.mubr.f32.gmra.mrb[0].mxu0 %v521
        %v1535 = vpop.f32.mrb[0].mxu0
        %v1536 = vadd.f32 0.0, %v1535
        %v1537 = vpop.f32.mrb[0].mxu0
        %1538 = vdwg.mxu0
        %v1539 = vadd.f32 %v1439, %v1531
        %v1540 = vadd.f32 %v1444, %v1536
        %s1541 = scalar_lea.vmem [#allocation5], 1536
        %v1542 = vld [vmem:[%s1541] sm:$0xff]
        %v1543 = vld [vmem:[%s1541 + $0x8] sm:$0xff]
        %v1544 = vld [vmem:[%s1541 + $0x10] sm:$0xff]
        %v1545 = vld [vmem:[%s1541 + $0x18] sm:$0xff]
        %v1546 = vld [vmem:[%s1541 + $0x20] sm:$0xff]
        %v1547 = vld [vmem:[%s1541 + $0x28] sm:$0xff]
        %v1548 = vld [vmem:[%s1541 + $0x30] sm:$0xff]
        %v1549 = vld [vmem:[%s1541 + $0x38] sm:$0xff]
        %v1550 = vld [vmem:[%s1541 + $0x40] sm:$0xff]
        %v1551 = vld [vmem:[%s1541 + $0x48] sm:$0xff]
        %v1552 = vld [vmem:[%s1541 + $0x50] sm:$0xff]
        %v1553 = vld [vmem:[%s1541 + $0x58] sm:$0xff]
        %v1554 = vld [vmem:[%s1541 + $0x60] sm:$0xff]
        %v1555 = vld [vmem:[%s1541 + $0x68] sm:$0xff]
        %v1556 = vld [vmem:[%s1541 + $0x70] sm:$0xff]
        %v1557 = vld [vmem:[%s1541 + $0x78] sm:$0xff]
        %1558 = vmatprep.subr.mxu0 0.0
        %1559 = vmatpush1.msra.mxu0 %v1542
        %1560 = vmatprep.subr.mxu0 0.0
        %1561 = vmatpush1.msra.mxu0 %v1543
        %1562 = vmatprep.subr.mxu0 0.0
        %1563 = vmatpush1.msra.mxu0 %v1544
        %1564 = vmatprep.subr.mxu0 0.0
        %1565 = vmatpush1.msra.mxu0 %v1545
        %1566 = vmatprep.subr.mxu0 0.0
        %1567 = vmatpush1.msra.mxu0 %v1546
        %1568 = vmatprep.subr.mxu0 0.0
        %1569 = vmatpush1.msra.mxu0 %v1547
        %1570 = vmatprep.subr.mxu0 0.0
        %1571 = vmatpush1.msra.mxu0 %v1548
        %1572 = vmatprep.subr.mxu0 0.0
        %1573 = vmatpush1.msra.mxu0 %v1549
        %1574 = vmatprep.subr.mxu0 0.0
        %1575 = vmatpush1.msra.mxu0 %v1550
        %1576 = vmatprep.subr.mxu0 0.0
        %1577 = vmatpush1.msra.mxu0 %v1551
        %1578 = vmatprep.subr.mxu0 0.0
        %1579 = vmatpush1.msra.mxu0 %v1552
        %1580 = vmatprep.subr.mxu0 0.0
        %1581 = vmatpush1.msra.mxu0 %v1553
        %1582 = vmatprep.subr.mxu0 0.0
        %1583 = vmatpush1.msra.mxu0 %v1554
        %1584 = vmatprep.subr.mxu0 0.0
        %1585 = vmatpush1.msra.mxu0 %v1555
        %1586 = vmatprep.subr.mxu0 0.0
        %1587 = vmatpush1.msra.mxu0 %v1556
        %1588 = vmatprep.subr.mxu0 0.0
        %1589 = vmatpush1.msra.mxu0 %v1557
        %1590 = vmatprep.subr.mxu0 0.0
        %1591 = vmatpush1.msra.mxu0 0.0
        %1592 = vmatprep.subr.mxu0 0.0
        %1593 = vmatpush1.msra.mxu0 0.0
        %1594 = vmatprep.subr.mxu0 0.0
        %1595 = vmatpush1.msra.mxu0 0.0
        %1596 = vmatprep.subr.mxu0 0.0
        %1597 = vmatpush1.msra.mxu0 0.0
        %1598 = vmatprep.subr.mxu0 0.0
        %1599 = vmatpush1.msra.mxu0 0.0
        %1600 = vmatprep.subr.mxu0 0.0
        %1601 = vmatpush1.msra.mxu0 0.0
        %1602 = vmatprep.subr.mxu0 0.0
        %1603 = vmatpush1.msra.mxu0 0.0
        %1604 = vmatprep.subr.mxu0 0.0
        %1605 = vmatpush1.msra.mxu0 0.0
        %1606 = vmatprep.subr.mxu0 0.0
        %1607 = vmatpush1.msra.mxu0 0.0
        %1608 = vmatprep.subr.mxu0 0.0
        %1609 = vmatpush1.msra.mxu0 0.0
        %1610 = vmatprep.subr.mxu0 0.0
        %1611 = vmatpush1.msra.mxu0 0.0
        %1612 = vmatprep.subr.mxu0 0.0
        %1613 = vmatpush1.msra.mxu0 0.0
        %1614 = vmatprep.subr.mxu0 0.0
        %1615 = vmatpush1.msra.mxu0 0.0
        %1616 = vmatprep.subr.mxu0 0.0
        %1617 = vmatpush1.msra.mxu0 0.0
        %1618 = vmatprep.subr.mxu0 0.0
        %1619 = vmatpush1.msra.mxu0 0.0
        %1620 = vmatprep.subr.mxu0 0.0
        %1621 = vmatpush1.msra.mxu0 0.0
        %1622 = vmatprep.mubr.f32.mxu0 0.0
        %1623 = vmatmul.mubr.f32.gmra.mrb[0].mxu0 %v622
        %v1624 = vpop.f32.mrb[0].mxu0
        %v1625 = vadd.f32 0.0, %v1624
        %v1626 = vpop.f32.mrb[0].mxu0
        %1627 = vmatprep.mubr.f32.mxu0 0.0
        %1628 = vmatmul.mubr.f32.gmra.mrb[0].mxu0 %v624
        %v1629 = vpop.f32.mrb[0].mxu0
        %v1630 = vadd.f32 0.0, %v1629
        %v1631 = vpop.f32.mrb[0].mxu0
        %1632 = vdwg.mxu0
        %v1633 = vadd.f32 %v1539, %v1625
        %v1634 = vadd.f32 %v1540, %v1630
        %s1635 = scalar_lea.vmem [#allocation5], 1664
        %v1636 = vld [vmem:[%s1635] sm:$0xff]
        %v1637 = vld [vmem:[%s1635 + $0x8] sm:$0xff]
        %v1638 = vld [vmem:[%s1635 + $0x10] sm:$0xff]
        %v1639 = vld [vmem:[%s1635 + $0x18] sm:$0xff]
        %v1640 = vld [vmem:[%s1635 + $0x20] sm:$0xff]
        %v1641 = vld [vmem:[%s1635 + $0x28] sm:$0xff]
        %v1642 = vld [vmem:[%s1635 + $0x30] sm:$0xff]
        %v1643 = vld [vmem:[%s1635 + $0x38] sm:$0xff]
        %v1644 = vld [vmem:[%s1635 + $0x40] sm:$0xff]
        %v1645 = vld [vmem:[%s1635 + $0x48] sm:$0xff]
        %v1646 = vld [vmem:[%s1635 + $0x50] sm:$0xff]
        %v1647 = vld [vmem:[%s1635 + $0x58] sm:$0xff]
        %v1648 = vld [vmem:[%s1635 + $0x60] sm:$0xff]
        %v1649 = vld [vmem:[%s1635 + $0x68] sm:$0xff]
        %v1650 = vld [vmem:[%s1635 + $0x70] sm:$0xff]
        %v1651 = vld [vmem:[%s1635 + $0x78] sm:$0xff]
        %1652 = vmatprep.subr.mxu0 0.0
        %1653 = vmatpush1.msra.mxu0 %v1636
        %1654 = vmatprep.subr.mxu0 0.0
        %1655 = vmatpush1.msra.mxu0 %v1637
        %1656 = vmatprep.subr.mxu0 0.0
        %1657 = vmatpush1.msra.mxu0 %v1638
        %1658 = vmatprep.subr.mxu0 0.0
        %1659 = vmatpush1.msra.mxu0 %v1639
        %1660 = vmatprep.subr.mxu0 0.0
        %1661 = vmatpush1.msra.mxu0 %v1640
        %1662 = vmatprep.subr.mxu0 0.0
        %1663 = vmatpush1.msra.mxu0 %v1641
        %1664 = vmatprep.subr.mxu0 0.0
        %1665 = vmatpush1.msra.mxu0 %v1642
        %1666 = vmatprep.subr.mxu0 0.0
        %1667 = vmatpush1.msra.mxu0 %v1643
        %1668 = vmatprep.subr.mxu0 0.0
        %1669 = vmatpush1.msra.mxu0 %v1644
        %1670 = vmatprep.subr.mxu0 0.0
        %1671 = vmatpush1.msra.mxu0 %v1645
        %1672 = vmatprep.subr.mxu0 0.0
        %1673 = vmatpush1.msra.mxu0 %v1646
        %1674 = vmatprep.subr.mxu0 0.0
        %1675 = vmatpush1.msra.mxu0 %v1647
        %1676 = vmatprep.subr.mxu0 0.0
        %1677 = vmatpush1.msra.mxu0 %v1648
        %1678 = vmatprep.subr.mxu0 0.0
        %1679 = vmatpush1.msra.mxu0 %v1649
        %1680 = vmatprep.subr.mxu0 0.0
        %1681 = vmatpush1.msra.mxu0 %v1650
        %1682 = vmatprep.subr.mxu0 0.0
        %1683 = vmatpush1.msra.mxu0 %v1651
        %1684 = vmatprep.subr.mxu0 0.0
        %1685 = vmatpush1.msra.mxu0 0.0
        %1686 = vmatprep.subr.mxu0 0.0
        %1687 = vmatpush1.msra.mxu0 0.0
        %1688 = vmatprep.subr.mxu0 0.0
        %1689 = vmatpush1.msra.mxu0 0.0
        %1690 = vmatprep.subr.mxu0 0.0
        %1691 = vmatpush1.msra.mxu0 0.0
        %1692 = vmatprep.subr.mxu0 0.0
        %1693 = vmatpush1.msra.mxu0 0.0
        %1694 = vmatprep.subr.mxu0 0.0
        %1695 = vmatpush1.msra.mxu0 0.0
        %1696 = vmatprep.subr.mxu0 0.0
        %1697 = vmatpush1.msra.mxu0 0.0
        %1698 = vmatprep.subr.mxu0 0.0
        %1699 = vmatpush1.msra.mxu0 0.0
        %1700 = vmatprep.subr.mxu0 0.0
        %1701 = vmatpush1.msra.mxu0 0.0
        %1702 = vmatprep.subr.mxu0 0.0
        %1703 = vmatpush1.msra.mxu0 0.0
        %1704 = vmatprep.subr.mxu0 0.0
        %1705 = vmatpush1.msra.mxu0 0.0
        %1706 = vmatprep.subr.mxu0 0.0
        %1707 = vmatpush1.msra.mxu0 0.0
        %1708 = vmatprep.subr.mxu0 0.0
        %1709 = vmatpush1.msra.mxu0 0.0
        %1710 = vmatprep.subr.mxu0 0.0
        %1711 = vmatpush1.msra.mxu0 0.0
        %1712 = vmatprep.subr.mxu0 0.0
        %1713 = vmatpush1.msra.mxu0 0.0
        %1714 = vmatprep.subr.mxu0 0.0
        %1715 = vmatpush1.msra.mxu0 0.0
        %1716 = vmatprep.mubr.f32.mxu0 0.0
        %1717 = vmatmul.mubr.f32.gmra.mrb[0].mxu0 %v735
        %v1718 = vpop.f32.mrb[0].mxu0
        %v1719 = vadd.f32 0.0, %v1718
        %v1720 = vpop.f32.mrb[0].mxu0
        %1721 = vmatprep.mubr.f32.mxu0 0.0
        %1722 = vmatmul.mubr.f32.gmra.mrb[0].mxu0 %v736
        %v1723 = vpop.f32.mrb[0].mxu0
        %v1724 = vadd.f32 0.0, %v1723
        %v1725 = vpop.f32.mrb[0].mxu0
        %1726 = vdwg.mxu0
        %v1727 = vadd.f32 %v1633, %v1719
        %v1728 = vadd.f32 %v1634, %v1724
        %s1729 = scalar_lea.vmem [#allocation5], 1792
        %v1730 = vld [vmem:[%s1729] sm:$0xff]
        %v1731 = vld [vmem:[%s1729 + $0x8] sm:$0xff]
        %v1732 = vld [vmem:[%s1729 + $0x10] sm:$0xff]
        %v1733 = vld [vmem:[%s1729 + $0x18] sm:$0xff]
        %v1734 = vld [vmem:[%s1729 + $0x20] sm:$0xff]
        %v1735 = vld [vmem:[%s1729 + $0x28] sm:$0xff]
        %v1736 = vld [vmem:[%s1729 + $0x30] sm:$0xff]
        %v1737 = vld [vmem:[%s1729 + $0x38] sm:$0xff]
        %v1738 = vld [vmem:[%s1729 + $0x40] sm:$0xff]
        %v1739 = vld [vmem:[%s1729 + $0x48] sm:$0xff]
        %v1740 = vld [vmem:[%s1729 + $0x50] sm:$0xff]
        %v1741 = vld [vmem:[%s1729 + $0x58] sm:$0xff]
        %v1742 = vld [vmem:[%s1729 + $0x60] sm:$0xff]
        %v1743 = vld [vmem:[%s1729 + $0x68] sm:$0xff]
        %v1744 = vld [vmem:[%s1729 + $0x70] sm:$0xff]
        %v1745 = vld [vmem:[%s1729 + $0x78] sm:$0xff]
        %1746 = vmatprep.subr.mxu0 0.0
        %1747 = vmatpush1.msra.mxu0 %v1730
        %1748 = vmatprep.subr.mxu0 0.0
        %1749 = vmatpush1.msra.mxu0 %v1731
        %1750 = vmatprep.subr.mxu0 0.0
        %1751 = vmatpush1.msra.mxu0 %v1732
        %1752 = vmatprep.subr.mxu0 0.0
        %1753 = vmatpush1.msra.mxu0 %v1733
        %1754 = vmatprep.subr.mxu0 0.0
        %1755 = vmatpush1.msra.mxu0 %v1734
        %1756 = vmatprep.subr.mxu0 0.0
        %1757 = vmatpush1.msra.mxu0 %v1735
        %1758 = vmatprep.subr.mxu0 0.0
        %1759 = vmatpush1.msra.mxu0 %v1736
        %1760 = vmatprep.subr.mxu0 0.0
        %1761 = vmatpush1.msra.mxu0 %v1737
        %1762 = vmatprep.subr.mxu0 0.0
        %1763 = vmatpush1.msra.mxu0 %v1738
        %1764 = vmatprep.subr.mxu0 0.0
        %1765 = vmatpush1.msra.mxu0 %v1739
        %1766 = vmatprep.subr.mxu0 0.0
        %1767 = vmatpush1.msra.mxu0 %v1740
        %1768 = vmatprep.subr.mxu0 0.0
        %1769 = vmatpush1.msra.mxu0 %v1741
        %1770 = vmatprep.subr.mxu0 0.0
        %1771 = vmatpush1.msra.mxu0 %v1742
        %1772 = vmatprep.subr.mxu0 0.0
        %1773 = vmatpush1.msra.mxu0 %v1743
        %1774 = vmatprep.subr.mxu0 0.0
        %1775 = vmatpush1.msra.mxu0 %v1744
        %1776 = vmatprep.subr.mxu0 0.0
        %1777 = vmatpush1.msra.mxu0 %v1745
        %1778 = vmatprep.subr.mxu0 0.0
        %1779 = vmatpush1.msra.mxu0 0.0
        %1780 = vmatprep.subr.mxu0 0.0
        %1781 = vmatpush1.msra.mxu0 0.0
        %1782 = vmatprep.subr.mxu0 0.0
        %1783 = vmatpush1.msra.mxu0 0.0
        %1784 = vmatprep.subr.mxu0 0.0
        %1785 = vmatpush1.msra.mxu0 0.0
        %1786 = vmatprep.subr.mxu0 0.0
        %1787 = vmatpush1.msra.mxu0 0.0
        %1788 = vmatprep.subr.mxu0 0.0
        %1789 = vmatpush1.msra.mxu0 0.0
        %1790 = vmatprep.subr.mxu0 0.0
        %1791 = vmatpush1.msra.mxu0 0.0
        %1792 = vmatprep.subr.mxu0 0.0
        %1793 = vmatpush1.msra.mxu0 0.0
        %1794 = vmatprep.subr.mxu0 0.0
        %1795 = vmatpush1.msra.mxu0 0.0
        %1796 = vmatprep.subr.mxu0 0.0
        %1797 = vmatpush1.msra.mxu0 0.0
        %1798 = vmatprep.subr.mxu0 0.0
        %1799 = vmatpush1.msra.mxu0 0.0
        %1800 = vmatprep.subr.mxu0 0.0
        %1801 = vmatpush1.msra.mxu0 0.0
        %1802 = vmatprep.subr.mxu0 0.0
        %1803 = vmatpush1.msra.mxu0 0.0
        %1804 = vmatprep.subr.mxu0 0.0
        %1805 = vmatpush1.msra.mxu0 0.0
        %1806 = vmatprep.subr.mxu0 0.0
        %1807 = vmatpush1.msra.mxu0 0.0
        %1808 = vmatprep.subr.mxu0 0.0
        %1809 = vmatpush1.msra.mxu0 0.0
        %1810 = vmatprep.mubr.f32.mxu0 0.0
        %1811 = vmatmul.mubr.f32.gmra.mrb[0].mxu0 %v841
        %v1812 = vpop.f32.mrb[0].mxu0
        %v1813 = vadd.f32 0.0, %v1812
        %v1814 = vpop.f32.mrb[0].mxu0
        %1815 = vmatprep.mubr.f32.mxu0 0.0
        %1816 = vmatmul.mubr.f32.gmra.mrb[0].mxu0 %v842
        %v1817 = vpop.f32.mrb[0].mxu0
        %v1818 = vadd.f32 0.0, %v1817
        %v1819 = vpop.f32.mrb[0].mxu0
        %1820 = vdwg.mxu0
        %v1821 = vadd.f32 %v1727, %v1813
        %v1822 = vadd.f32 %v1728, %v1818
        %s1823 = scalar_lea.vmem [#allocation5], 1920
        %v1824 = vld [vmem:[%s1823] sm:$0xff]
        %v1825 = vld [vmem:[%s1823 + $0x8] sm:$0xff]
        %v1826 = vld [vmem:[%s1823 + $0x10] sm:$0xff]
        %v1827 = vld [vmem:[%s1823 + $0x18] sm:$0xff]
        %v1828 = vld [vmem:[%s1823 + $0x20] sm:$0xff]
        %v1829 = vld [vmem:[%s1823 + $0x28] sm:$0xff]
        %v1830 = vld [vmem:[%s1823 + $0x30] sm:$0xff]
        %v1831 = vld [vmem:[%s1823 + $0x38] sm:$0xff]
        %v1832 = vld [vmem:[%s1823 + $0x40] sm:$0xff]
        %v1833 = vld [vmem:[%s1823 + $0x48] sm:$0xff]
        %v1834 = vld [vmem:[%s1823 + $0x50] sm:$0xff]
        %v1835 = vld [vmem:[%s1823 + $0x58] sm:$0xff]
        %v1836 = vld [vmem:[%s1823 + $0x60] sm:$0xff]
        %v1837 = vld [vmem:[%s1823 + $0x68] sm:$0xff]
        %v1838 = vld [vmem:[%s1823 + $0x70] sm:$0xff]
        %v1839 = vld [vmem:[%s1823 + $0x78] sm:$0xff]
        %1840 = vmatprep.subr.mxu0 0.0
        %1841 = vmatpush1.msra.mxu0 %v1824
        %1842 = vmatprep.subr.mxu0 0.0
        %1843 = vmatpush1.msra.mxu0 %v1825
        %1844 = vmatprep.subr.mxu0 0.0
        %1845 = vmatpush1.msra.mxu0 %v1826
        %1846 = vmatprep.subr.mxu0 0.0
        %1847 = vmatpush1.msra.mxu0 %v1827
        %1848 = vmatprep.subr.mxu0 0.0
        %1849 = vmatpush1.msra.mxu0 %v1828
        %1850 = vmatprep.subr.mxu0 0.0
        %1851 = vmatpush1.msra.mxu0 %v1829
        %1852 = vmatprep.subr.mxu0 0.0
        %1853 = vmatpush1.msra.mxu0 %v1830
        %1854 = vmatprep.subr.mxu0 0.0
        %1855 = vmatpush1.msra.mxu0 %v1831
        %1856 = vmatprep.subr.mxu0 0.0
        %1857 = vmatpush1.msra.mxu0 %v1832
        %1858 = vmatprep.subr.mxu0 0.0
        %1859 = vmatpush1.msra.mxu0 %v1833
        %1860 = vmatprep.subr.mxu0 0.0
        %1861 = vmatpush1.msra.mxu0 %v1834
        %1862 = vmatprep.subr.mxu0 0.0
        %1863 = vmatpush1.msra.mxu0 %v1835
        %1864 = vmatprep.subr.mxu0 0.0
        %1865 = vmatpush1.msra.mxu0 %v1836
        %1866 = vmatprep.subr.mxu0 0.0
        %1867 = vmatpush1.msra.mxu0 %v1837
        %1868 = vmatprep.subr.mxu0 0.0
        %1869 = vmatpush1.msra.mxu0 %v1838
        %1870 = vmatprep.subr.mxu0 0.0
        %1871 = vmatpush1.msra.mxu0 %v1839
        %1872 = vmatprep.subr.mxu0 0.0
        %1873 = vmatpush1.msra.mxu0 0.0
        %1874 = vmatprep.subr.mxu0 0.0
        %1875 = vmatpush1.msra.mxu0 0.0
        %1876 = vmatprep.subr.mxu0 0.0
        %1877 = vmatpush1.msra.mxu0 0.0
        %1878 = vmatprep.subr.mxu0 0.0
        %1879 = vmatpush1.msra.mxu0 0.0
        %1880 = vmatprep.subr.mxu0 0.0
        %1881 = vmatpush1.msra.mxu0 0.0
        %1882 = vmatprep.subr.mxu0 0.0
        %1883 = vmatpush1.msra.mxu0 0.0
        %1884 = vmatprep.subr.mxu0 0.0
        %1885 = vmatpush1.msra.mxu0 0.0
        %1886 = vmatprep.subr.mxu0 0.0
        %1887 = vmatpush1.msra.mxu0 0.0
        %1888 = vmatprep.subr.mxu0 0.0
        %1889 = vmatpush1.msra.mxu0 0.0
        %1890 = vmatprep.subr.mxu0 0.0
        %1891 = vmatpush1.msra.mxu0 0.0
        %1892 = vmatprep.subr.mxu0 0.0
        %1893 = vmatpush1.msra.mxu0 0.0
        %1894 = vmatprep.subr.mxu0 0.0
        %1895 = vmatpush1.msra.mxu0 0.0
        %1896 = vmatprep.subr.mxu0 0.0
        %1897 = vmatpush1.msra.mxu0 0.0
        %1898 = vmatprep.subr.mxu0 0.0
        %1899 = vmatpush1.msra.mxu0 0.0
        %1900 = vmatprep.subr.mxu0 0.0
        %1901 = vmatpush1.msra.mxu0 0.0
        %1902 = vmatprep.subr.mxu0 0.0
        %1903 = vmatpush1.msra.mxu0 0.0
        %1904 = vmatprep.mubr.f32.mxu0 0.0
        %1905 = vmatmul.mubr.f32.gmra.mrb[0].mxu0 %v942
        %v1906 = vpop.f32.mrb[0].mxu0
        %v1907 = vadd.f32 0.0, %v1906
        %v1908 = vpop.f32.mrb[0].mxu0
        %1909 = vmatprep.mubr.f32.mxu0 0.0
        %1910 = vmatmul.mubr.f32.gmra.mrb[0].mxu0 %v944
        %v1911 = vpop.f32.mrb[0].mxu0
        %v1912 = vadd.f32 0.0, %v1911
        %v1913 = vpop.f32.mrb[0].mxu0
        %1914 = vdwg.mxu0
        %v1915 = vadd.f32 %v1821, %v1907
        %v1916 = vadd.f32 %v1822, %v1912
        %s1917 = scalar_lea.vmem [#allocation5], 2048
        %v1918 = vld [vmem:[%s1917] sm:$0xff]
        %v1919 = vld [vmem:[%s1917 + $0x8] sm:$0xff]
        %v1920 = vld [vmem:[%s1917 + $0x10] sm:$0xff]
        %v1921 = vld [vmem:[%s1917 + $0x18] sm:$0xff]
        %v1922 = vld [vmem:[%s1917 + $0x20] sm:$0xff]
        %v1923 = vld [vmem:[%s1917 + $0x28] sm:$0xff]
        %v1924 = vld [vmem:[%s1917 + $0x30] sm:$0xff]
        %v1925 = vld [vmem:[%s1917 + $0x38] sm:$0xff]
        %v1926 = vld [vmem:[%s1917 + $0x40] sm:$0xff]
        %v1927 = vld [vmem:[%s1917 + $0x48] sm:$0xff]
        %v1928 = vld [vmem:[%s1917 + $0x50] sm:$0xff]
        %v1929 = vld [vmem:[%s1917 + $0x58] sm:$0xff]
        %v1930 = vld [vmem:[%s1917 + $0x60] sm:$0xff]
        %v1931 = vld [vmem:[%s1917 + $0x68] sm:$0xff]
        %v1932 = vld [vmem:[%s1917 + $0x70] sm:$0xff]
        %v1933 = vld [vmem:[%s1917 + $0x78] sm:$0xff]
        %1934 = vmatprep.subr.mxu0 0.0
        %1935 = vmatpush1.msra.mxu0 %v1918
        %1936 = vmatprep.subr.mxu0 0.0
        %1937 = vmatpush1.msra.mxu0 %v1919
        %1938 = vmatprep.subr.mxu0 0.0
        %1939 = vmatpush1.msra.mxu0 %v1920
        %1940 = vmatprep.subr.mxu0 0.0
        %1941 = vmatpush1.msra.mxu0 %v1921
        %1942 = vmatprep.subr.mxu0 0.0
        %1943 = vmatpush1.msra.mxu0 %v1922
        %1944 = vmatprep.subr.mxu0 0.0
        %1945 = vmatpush1.msra.mxu0 %v1923
        %1946 = vmatprep.subr.mxu0 0.0
        %1947 = vmatpush1.msra.mxu0 %v1924
        %1948 = vmatprep.subr.mxu0 0.0
        %1949 = vmatpush1.msra.mxu0 %v1925
        %1950 = vmatprep.subr.mxu0 0.0
        %1951 = vmatpush1.msra.mxu0 %v1926
        %1952 = vmatprep.subr.mxu0 0.0
        %1953 = vmatpush1.msra.mxu0 %v1927
        %1954 = vmatprep.subr.mxu0 0.0
        %1955 = vmatpush1.msra.mxu0 %v1928
        %1956 = vmatprep.subr.mxu0 0.0
        %1957 = vmatpush1.msra.mxu0 %v1929
        %1958 = vmatprep.subr.mxu0 0.0
        %1959 = vmatpush1.msra.mxu0 %v1930
        %1960 = vmatprep.subr.mxu0 0.0
        %1961 = vmatpush1.msra.mxu0 %v1931
        %1962 = vmatprep.subr.mxu0 0.0
        %1963 = vmatpush1.msra.mxu0 %v1932
        %1964 = vmatprep.subr.mxu0 0.0
        %1965 = vmatpush1.msra.mxu0 %v1933
        %1966 = vmatprep.subr.mxu0 0.0
        %1967 = vmatpush1.msra.mxu0 0.0
        %1968 = vmatprep.subr.mxu0 0.0
        %1969 = vmatpush1.msra.mxu0 0.0
        %1970 = vmatprep.subr.mxu0 0.0
        %1971 = vmatpush1.msra.mxu0 0.0
        %1972 = vmatprep.subr.mxu0 0.0
        %1973 = vmatpush1.msra.mxu0 0.0
        %1974 = vmatprep.subr.mxu0 0.0
        %1975 = vmatpush1.msra.mxu0 0.0
        %1976 = vmatprep.subr.mxu0 0.0
        %1977 = vmatpush1.msra.mxu0 0.0
        %1978 = vmatprep.subr.mxu0 0.0
        %1979 = vmatpush1.msra.mxu0 0.0
        %1980 = vmatprep.subr.mxu0 0.0
        %1981 = vmatpush1.msra.mxu0 0.0
        %1982 = vmatprep.subr.mxu0 0.0
        %1983 = vmatpush1.msra.mxu0 0.0
        %1984 = vmatprep.subr.mxu0 0.0
        %1985 = vmatpush1.msra.mxu0 0.0
        %1986 = vmatprep.subr.mxu0 0.0
        %1987 = vmatpush1.msra.mxu0 0.0
        %1988 = vmatprep.subr.mxu0 0.0
        %1989 = vmatpush1.msra.mxu0 0.0
        %1990 = vmatprep.subr.mxu0 0.0
        %1991 = vmatpush1.msra.mxu0 0.0
        %1992 = vmatprep.subr.mxu0 0.0
        %1993 = vmatpush1.msra.mxu0 0.0
        %1994 = vmatprep.subr.mxu0 0.0
        %1995 = vmatpush1.msra.mxu0 0.0
        %1996 = vmatprep.subr.mxu0 0.0
        %1997 = vmatpush1.msra.mxu0 0.0
        %1998 = vmatprep.mubr.f32.mxu0 0.0
        %1999 = vmatmul.mubr.f32.gmra.mrb[0].mxu0 %v1054
        %v2000 = vpop.f32.mrb[0].mxu0
        %v2001 = vadd.f32 0.0, %v2000
        %v2002 = vpop.f32.mrb[0].mxu0
        %2003 = vmatprep.mubr.f32.mxu0 0.0
        %2004 = vmatmul.mubr.f32.gmra.mrb[0].mxu0 %v1055
        %v2005 = vpop.f32.mrb[0].mxu0
        %v2006 = vadd.f32 0.0, %v2005
        %v2007 = vpop.f32.mrb[0].mxu0
        %2008 = vdwg.mxu0
        %v2009 = vadd.f32 %v1915, %v2001
        %v2010 = vadd.f32 %v1916, %v2006
        %s2011 = scalar_lea.vmem [#allocation5], 2176
        %v2012 = vld [vmem:[%s2011] sm:$0xff]
        %v2013 = vld [vmem:[%s2011 + $0x8] sm:$0xff]
        %v2014 = vld [vmem:[%s2011 + $0x10] sm:$0xff]
        %v2015 = vld [vmem:[%s2011 + $0x18] sm:$0xff]
        %v2016 = vld [vmem:[%s2011 + $0x20] sm:$0xff]
        %v2017 = vld [vmem:[%s2011 + $0x28] sm:$0xff]
        %v2018 = vld [vmem:[%s2011 + $0x30] sm:$0xff]
        %v2019 = vld [vmem:[%s2011 + $0x38] sm:$0xff]
        %v2020 = vld [vmem:[%s2011 + $0x40] sm:$0xff]
        %v2021 = vld [vmem:[%s2011 + $0x48] sm:$0xff]
        %v2022 = vld [vmem:[%s2011 + $0x50] sm:$0xff]
        %v2023 = vld [vmem:[%s2011 + $0x58] sm:$0xff]
        %v2024 = vld [vmem:[%s2011 + $0x60] sm:$0xff]
        %v2025 = vld [vmem:[%s2011 + $0x68] sm:$0xff]
        %v2026 = vld [vmem:[%s2011 + $0x70] sm:$0xff]
        %v2027 = vld [vmem:[%s2011 + $0x78] sm:$0xff]
        %2028 = vmatprep.subr.mxu0 0.0
        %2029 = vmatpush1.msra.mxu0 %v2012
        %2030 = vmatprep.subr.mxu0 0.0
        %2031 = vmatpush1.msra.mxu0 %v2013
        %2032 = vmatprep.subr.mxu0 0.0
        %2033 = vmatpush1.msra.mxu0 %v2014
        %2034 = vmatprep.subr.mxu0 0.0
        %2035 = vmatpush1.msra.mxu0 %v2015
        %2036 = vmatprep.subr.mxu0 0.0
        %2037 = vmatpush1.msra.mxu0 %v2016
        %2038 = vmatprep.subr.mxu0 0.0
        %2039 = vmatpush1.msra.mxu0 %v2017
        %2040 = vmatprep.subr.mxu0 0.0
        %2041 = vmatpush1.msra.mxu0 %v2018
        %2042 = vmatprep.subr.mxu0 0.0
        %2043 = vmatpush1.msra.mxu0 %v2019
        %2044 = vmatprep.subr.mxu0 0.0
        %2045 = vmatpush1.msra.mxu0 %v2020
        %2046 = vmatprep.subr.mxu0 0.0
        %2047 = vmatpush1.msra.mxu0 %v2021
        %2048 = vmatprep.subr.mxu0 0.0
        %2049 = vmatpush1.msra.mxu0 %v2022
        %2050 = vmatprep.subr.mxu0 0.0
        %2051 = vmatpush1.msra.mxu0 %v2023
        %2052 = vmatprep.subr.mxu0 0.0
        %2053 = vmatpush1.msra.mxu0 %v2024
        %2054 = vmatprep.subr.mxu0 0.0
        %2055 = vmatpush1.msra.mxu0 %v2025
        %2056 = vmatprep.subr.mxu0 0.0
        %2057 = vmatpush1.msra.mxu0 %v2026
        %2058 = vmatprep.subr.mxu0 0.0
        %2059 = vmatpush1.msra.mxu0 %v2027
        %2060 = vmatprep.subr.mxu0 0.0
        %2061 = vmatpush1.msra.mxu0 0.0
        %2062 = vmatprep.subr.mxu0 0.0
        %2063 = vmatpush1.msra.mxu0 0.0
        %2064 = vmatprep.subr.mxu0 0.0
        %2065 = vmatpush1.msra.mxu0 0.0
        %2066 = vmatprep.subr.mxu0 0.0
        %2067 = vmatpush1.msra.mxu0 0.0
        %2068 = vmatprep.subr.mxu0 0.0
        %2069 = vmatpush1.msra.mxu0 0.0
        %2070 = vmatprep.subr.mxu0 0.0
        %2071 = vmatpush1.msra.mxu0 0.0
        %2072 = vmatprep.subr.mxu0 0.0
        %2073 = vmatpush1.msra.mxu0 0.0
        %2074 = vmatprep.subr.mxu0 0.0
        %2075 = vmatpush1.msra.mxu0 0.0
        %2076 = vmatprep.subr.mxu0 0.0
        %2077 = vmatpush1.msra.mxu0 0.0
        %2078 = vmatprep.subr.mxu0 0.0
        %2079 = vmatpush1.msra.mxu0 0.0
        %2080 = vmatprep.subr.mxu0 0.0
        %2081 = vmatpush1.msra.mxu0 0.0
        %2082 = vmatprep.subr.mxu0 0.0
        %2083 = vmatpush1.msra.mxu0 0.0
        %2084 = vmatprep.subr.mxu0 0.0
        %2085 = vmatpush1.msra.mxu0 0.0
        %2086 = vmatprep.subr.mxu0 0.0
        %2087 = vmatpush1.msra.mxu0 0.0
        %2088 = vmatprep.subr.mxu0 0.0
        %2089 = vmatpush1.msra.mxu0 0.0
        %2090 = vmatprep.subr.mxu0 0.0
        %2091 = vmatpush1.msra.mxu0 0.0
        %2092 = vmatprep.mubr.f32.mxu0 0.0
        %2093 = vmatmul.mubr.f32.gmra.mrb[0].mxu0 %v1160
        %v2094 = vpop.f32.mrb[0].mxu0
        %v2095 = vadd.f32 0.0, %v2094
        %v2096 = vpop.f32.mrb[0].mxu0
        %2097 = vmatprep.mubr.f32.mxu0 0.0
        %2098 = vmatmul.mubr.f32.gmra.mrb[0].mxu0 %v1161
        %v2099 = vpop.f32.mrb[0].mxu0
        %v2100 = vadd.f32 0.0, %v2099
        %v2101 = vpop.f32.mrb[0].mxu0
        %2102 = vdwg.mxu0
        %v2103 = vadd.f32 %v2009, %v2095
        %v2104 = vadd.f32 %v2010, %v2100
        %s2105 = scalar_lea.vmem [#allocation7], 1
        %v2106 = vld [vmem:[%s2105] sm:$0x1]
        %v2108 = vlaneseq
        %v2109 = vshrl.u32 %v2108, 7
        %v2110 = vsub.s32 0, %v2109
        %v2111 = vrot.slane %v2106, %v2110
        %v2113 = vmul.f32 %v2103, %v2111
        %v2114 = vmul.f32 %v2104, %v2111
        %s2115 = scalar_lea.vmem [#allocation8], 1
        %v2116 = vld [vmem:[%s2115] sm:$0x1]
        %v2118 = vlaneseq
        %v2119 = vshrl.u32 %v2118, 7
        %v2120 = vsub.s32 0, %v2119
        %v2121 = vrot.slane %v2116, %v2120
        %v2123 = vadd.f32 %v2113, %v2121
        %v2124 = vadd.f32 %v2114, %v2121
        %v2125 = vmax.f32 %v2123, 0.0
        %v2126 = vmax.f32 %v2124, 0.0
        %2129 = vrot.lane.b32.xlu0 %v1261, 8
        %v2130 = vpop.permute.xlu0 %2129
        %2131 = vrot.lane.b32.xlu0 %v1262, 8
        %v2132 = vpop.permute.xlu0 %2131
        %v2135 = vsel %vm270, 0.0, %v2130
        %v2136 = vsel %vm270, 0.0, %v2132
        %v2137 = vsel %vm270, %v2130, 0.0
        %v2138 = vsel %vm270, %v2132, 0.0
        %v2143 = vrot.slane %v2135, 7
        %v2144 = vrot.slane %v2137, 7
        %v2145 = vrot.slane %v2136, 7
        %v2146 = vsel %vm279, %v2143, %v2145
        %v2147 = vrot.slane %v2138, 7
        %v2148 = vsel %vm279, %v2144, %v2147
        %v2154 = vsel %vm279, 0.0, %v2143
        %v2155 = vsel %vm279, 0.0, %v2144
        %v2156 = vsel %vm279, %v2145, 0.0
        %v2157 = vsel %vm279, %v2147, 0.0
        %s2158 = scalar_lea.vmem [#allocation5], 4608
        %v2159 = vld [vmem:[%s2158] sm:$0xff]
        %v2160 = vld [vmem:[%s2158 + $0x8] sm:$0xff]
        %v2161 = vld [vmem:[%s2158 + $0x10] sm:$0xff]
        %v2162 = vld [vmem:[%s2158 + $0x18] sm:$0xff]
        %v2163 = vld [vmem:[%s2158 + $0x20] sm:$0xff]
        %v2164 = vld [vmem:[%s2158 + $0x28] sm:$0xff]
        %v2165 = vld [vmem:[%s2158 + $0x30] sm:$0xff]
        %v2166 = vld [vmem:[%s2158 + $0x38] sm:$0xff]
        %v2167 = vld [vmem:[%s2158 + $0x40] sm:$0xff]
        %v2168 = vld [vmem:[%s2158 + $0x48] sm:$0xff]
        %v2169 = vld [vmem:[%s2158 + $0x50] sm:$0xff]
        %v2170 = vld [vmem:[%s2158 + $0x58] sm:$0xff]
        %v2171 = vld [vmem:[%s2158 + $0x60] sm:$0xff]
        %v2172 = vld [vmem:[%s2158 + $0x68] sm:$0xff]
        %v2173 = vld [vmem:[%s2158 + $0x70] sm:$0xff]
        %v2174 = vld [vmem:[%s2158 + $0x78] sm:$0xff]
        %s2175 = scalar_lea.vmem [#allocation5], 4736
        %v2176 = vld [vmem:[%s2175] sm:$0xff]
        %v2177 = vld [vmem:[%s2175 + $0x8] sm:$0xff]
        %v2178 = vld [vmem:[%s2175 + $0x10] sm:$0xff]
        %v2179 = vld [vmem:[%s2175 + $0x18] sm:$0xff]
        %v2180 = vld [vmem:[%s2175 + $0x20] sm:$0xff]
        %v2181 = vld [vmem:[%s2175 + $0x28] sm:$0xff]
        %v2182 = vld [vmem:[%s2175 + $0x30] sm:$0xff]
        %v2183 = vld [vmem:[%s2175 + $0x38] sm:$0xff]
        %v2184 = vld [vmem:[%s2175 + $0x40] sm:$0xff]
        %v2185 = vld [vmem:[%s2175 + $0x48] sm:$0xff]
        %v2186 = vld [vmem:[%s2175 + $0x50] sm:$0xff]
        %v2187 = vld [vmem:[%s2175 + $0x58] sm:$0xff]
        %v2188 = vld [vmem:[%s2175 + $0x60] sm:$0xff]
        %v2189 = vld [vmem:[%s2175 + $0x68] sm:$0xff]
        %v2190 = vld [vmem:[%s2175 + $0x70] sm:$0xff]
        %v2191 = vld [vmem:[%s2175 + $0x78] sm:$0xff]
        %2194 = vrot.lane.b32.xlu0 %v2154, 120
        %v2195 = vpop.permute.xlu0 %2194
        %2196 = vrot.lane.b32.xlu0 %v2155, 120
        %v2197 = vpop.permute.xlu0 %2196
        %2198 = vrot.lane.b32.xlu0 %v2146, 120
        %v2199 = vpop.permute.xlu0 %2198
        %2200 = vrot.lane.b32.xlu0 %v2148, 120
        %v2201 = vpop.permute.xlu0 %2200
        %v2202 = vsel %vm339, %v2195, %v2197
        %v2203 = vsel %vm339, %v2199, %v2201
        %2206 = vmatprep.subr.mxu0 0.0
        %2207 = vmatpush1.msra.mxu0 %v2176
        %2208 = vmatprep.subr.mxu0 0.0
        %2209 = vmatpush1.msra.mxu0 %v2177
        %2210 = vmatprep.subr.mxu0 0.0
        %2211 = vmatpush1.msra.mxu0 %v2178
        %2212 = vmatprep.subr.mxu0 0.0
        %2213 = vmatpush1.msra.mxu0 %v2179
        %2214 = vmatprep.subr.mxu0 0.0
        %2215 = vmatpush1.msra.mxu0 %v2180
        %2216 = vmatprep.subr.mxu0 0.0
        %2217 = vmatpush1.msra.mxu0 %v2181
        %2218 = vmatprep.subr.mxu0 0.0
        %2219 = vmatpush1.msra.mxu0 %v2182
        %2220 = vmatprep.subr.mxu0 0.0
        %2221 = vmatpush1.msra.mxu0 %v2183
        %2222 = vmatprep.subr.mxu0 0.0
        %2223 = vmatpush1.msra.mxu0 %v2184
        %2224 = vmatprep.subr.mxu0 0.0
        %2225 = vmatpush1.msra.mxu0 %v2185
        %2226 = vmatprep.subr.mxu0 0.0
        %2227 = vmatpush1.msra.mxu0 %v2186
        %2228 = vmatprep.subr.mxu0 0.0
        %2229 = vmatpush1.msra.mxu0 %v2187
        %2230 = vmatprep.subr.mxu0 0.0
        %2231 = vmatpush1.msra.mxu0 %v2188
        %2232 = vmatprep.subr.mxu0 0.0
        %2233 = vmatpush1.msra.mxu0 %v2189
        %2234 = vmatprep.subr.mxu0 0.0
        %2235 = vmatpush1.msra.mxu0 %v2190
        %2236 = vmatprep.subr.mxu0 0.0
        %2237 = vmatpush1.msra.mxu0 %v2191
        %2238 = vmatprep.subr.mxu0 0.0
        %2239 = vmatpush1.msra.mxu0 0.0
        %2240 = vmatprep.subr.mxu0 0.0
        %2241 = vmatpush1.msra.mxu0 0.0
        %2242 = vmatprep.subr.mxu0 0.0
        %2243 = vmatpush1.msra.mxu0 0.0
        %2244 = vmatprep.subr.mxu0 0.0
        %2245 = vmatpush1.msra.mxu0 0.0
        %2246 = vmatprep.subr.mxu0 0.0
        %2247 = vmatpush1.msra.mxu0 0.0
        %2248 = vmatprep.subr.mxu0 0.0
        %2249 = vmatpush1.msra.mxu0 0.0
        %2250 = vmatprep.subr.mxu0 0.0
        %2251 = vmatpush1.msra.mxu0 0.0
        %2252 = vmatprep.subr.mxu0 0.0
        %2253 = vmatpush1.msra.mxu0 0.0
        %2254 = vmatprep.subr.mxu0 0.0
        %2255 = vmatpush1.msra.mxu0 0.0
        %2256 = vmatprep.subr.mxu0 0.0
        %2257 = vmatpush1.msra.mxu0 0.0
        %2258 = vmatprep.subr.mxu0 0.0
        %2259 = vmatpush1.msra.mxu0 0.0
        %2260 = vmatprep.subr.mxu0 0.0
        %2261 = vmatpush1.msra.mxu0 0.0
        %2262 = vmatprep.subr.mxu0 0.0
        %2263 = vmatpush1.msra.mxu0 0.0
        %2264 = vmatprep.subr.mxu0 0.0
        %2265 = vmatpush1.msra.mxu0 0.0
        %2266 = vmatprep.subr.mxu0 0.0
        %2267 = vmatpush1.msra.mxu0 0.0
        %2268 = vmatprep.subr.mxu0 0.0
        %2269 = vmatpush1.msra.mxu0 0.0
        %2270 = vmatprep.mubr.f32.mxu0 0.0
        %2271 = vmatmul.mubr.f32.gmra.mrb[0].mxu0 %v2202
        %v2272 = vpop.f32.mrb[0].mxu0
        %v2273 = vadd.f32 0.0, %v2272
        %v2274 = vpop.f32.mrb[0].mxu0
        %2275 = vmatprep.mubr.f32.mxu0 0.0
        %2276 = vmatmul.mubr.f32.gmra.mrb[0].mxu0 %v2203
        %v2277 = vpop.f32.mrb[0].mxu0
        %v2278 = vadd.f32 0.0, %v2277
        %v2279 = vpop.f32.mrb[0].mxu0
        %2280 = vdwg.mxu0
        %2281 = vmatprep.subr.mxu0 0.0
        %2282 = vmatpush1.msra.mxu0 %v2159
        %2283 = vmatprep.subr.mxu0 0.0
        %2284 = vmatpush1.msra.mxu0 %v2160
        %2285 = vmatprep.subr.mxu0 0.0
        %2286 = vmatpush1.msra.mxu0 %v2161
        %2287 = vmatprep.subr.mxu0 0.0
        %2288 = vmatpush1.msra.mxu0 %v2162
        %2289 = vmatprep.subr.mxu0 0.0
        %2290 = vmatpush1.msra.mxu0 %v2163
        %2291 = vmatprep.subr.mxu0 0.0
        %2292 = vmatpush1.msra.mxu0 %v2164
        %2293 = vmatprep.subr.mxu0 0.0
        %2294 = vmatpush1.msra.mxu0 %v2165
        %2295 = vmatprep.subr.mxu0 0.0
        %2296 = vmatpush1.msra.mxu0 %v2166
        %2297 = vmatprep.subr.mxu0 0.0
        %2298 = vmatpush1.msra.mxu0 %v2167
        %2299 = vmatprep.subr.mxu0 0.0
        %2300 = vmatpush1.msra.mxu0 %v2168
        %2301 = vmatprep.subr.mxu0 0.0
        %2302 = vmatpush1.msra.mxu0 %v2169
        %2303 = vmatprep.subr.mxu0 0.0
        %2304 = vmatpush1.msra.mxu0 %v2170
        %2305 = vmatprep.subr.mxu0 0.0
        %2306 = vmatpush1.msra.mxu0 %v2171
        %2307 = vmatprep.subr.mxu0 0.0
        %2308 = vmatpush1.msra.mxu0 %v2172
        %2309 = vmatprep.subr.mxu0 0.0
        %2310 = vmatpush1.msra.mxu0 %v2173
        %2311 = vmatprep.subr.mxu0 0.0
        %2312 = vmatpush1.msra.mxu0 %v2174
        %2313 = vmatprep.subr.mxu0 0.0
        %2314 = vmatpush1.msra.mxu0 0.0
        %2315 = vmatprep.subr.mxu0 0.0
        %2316 = vmatpush1.msra.mxu0 0.0
        %2317 = vmatprep.subr.mxu0 0.0
        %2318 = vmatpush1.msra.mxu0 0.0
        %2319 = vmatprep.subr.mxu0 0.0
        %2320 = vmatpush1.msra.mxu0 0.0
        %2321 = vmatprep.subr.mxu0 0.0
        %2322 = vmatpush1.msra.mxu0 0.0
        %2323 = vmatprep.subr.mxu0 0.0
        %2324 = vmatpush1.msra.mxu0 0.0
        %2325 = vmatprep.subr.mxu0 0.0
        %2326 = vmatpush1.msra.mxu0 0.0
        %2327 = vmatprep.subr.mxu0 0.0
        %2328 = vmatpush1.msra.mxu0 0.0
        %2329 = vmatprep.subr.mxu0 0.0
        %2330 = vmatpush1.msra.mxu0 0.0
        %2331 = vmatprep.subr.mxu0 0.0
        %2332 = vmatpush1.msra.mxu0 0.0
        %2333 = vmatprep.subr.mxu0 0.0
        %2334 = vmatpush1.msra.mxu0 0.0
        %2335 = vmatprep.subr.mxu0 0.0
        %2336 = vmatpush1.msra.mxu0 0.0
        %2337 = vmatprep.subr.mxu0 0.0
        %2338 = vmatpush1.msra.mxu0 0.0
        %2339 = vmatprep.subr.mxu0 0.0
        %2340 = vmatpush1.msra.mxu0 0.0
        %2341 = vmatprep.subr.mxu0 0.0
        %2342 = vmatpush1.msra.mxu0 0.0
        %2343 = vmatprep.subr.mxu0 0.0
        %2344 = vmatpush1.msra.mxu0 0.0
        %2345 = vmatprep.mubr.f32.mxu0 0.0
        %2346 = vmatmul.mubr.f32.gmra.mrb[0].mxu0 %v2154
        %v2347 = vpop.f32.mrb[0].mxu0
        %v2348 = vadd.f32 %v2273, %v2347
        %v2349 = vpop.f32.mrb[0].mxu0
        %2350 = vmatprep.mubr.f32.mxu0 0.0
        %2351 = vmatmul.mubr.f32.gmra.mrb[0].mxu0 %v2146
        %v2352 = vpop.f32.mrb[0].mxu0
        %v2353 = vadd.f32 %v2278, %v2352
        %v2354 = vpop.f32.mrb[0].mxu0
        %2355 = vdwg.mxu0
        %s2356 = scalar_lea.vmem [#allocation5], 4864
        %v2357 = vld [vmem:[%s2356] sm:$0xff]
        %v2358 = vld [vmem:[%s2356 + $0x8] sm:$0xff]
        %v2359 = vld [vmem:[%s2356 + $0x10] sm:$0xff]
        %v2360 = vld [vmem:[%s2356 + $0x18] sm:$0xff]
        %v2361 = vld [vmem:[%s2356 + $0x20] sm:$0xff]
        %v2362 = vld [vmem:[%s2356 + $0x28] sm:$0xff]
        %v2363 = vld [vmem:[%s2356 + $0x30] sm:$0xff]
        %v2364 = vld [vmem:[%s2356 + $0x38] sm:$0xff]
        %v2365 = vld [vmem:[%s2356 + $0x40] sm:$0xff]
        %v2366 = vld [vmem:[%s2356 + $0x48] sm:$0xff]
        %v2367 = vld [vmem:[%s2356 + $0x50] sm:$0xff]
        %v2368 = vld [vmem:[%s2356 + $0x58] sm:$0xff]
        %v2369 = vld [vmem:[%s2356 + $0x60] sm:$0xff]
        %v2370 = vld [vmem:[%s2356 + $0x68] sm:$0xff]
        %v2371 = vld [vmem:[%s2356 + $0x70] sm:$0xff]
        %v2372 = vld [vmem:[%s2356 + $0x78] sm:$0xff]
        %2373 = vrot.lane.b32.xlu0 %v2154, 112
        %v2374 = vpop.permute.xlu0 %2373
        %2375 = vrot.lane.b32.xlu0 %v2155, 112
        %v2376 = vpop.permute.xlu0 %2375
        %2377 = vrot.lane.b32.xlu0 %v2146, 112
        %v2378 = vpop.permute.xlu0 %2377
        %2379 = vrot.lane.b32.xlu0 %v2148, 112
        %v2380 = vpop.permute.xlu0 %2379
        %v2381 = vsel %vm519, %v2374, %v2376
        %v2382 = vsel %vm519, %v2378, %v2380
        %2385 = vmatprep.subr.mxu0 0.0
        %2386 = vmatpush1.msra.mxu0 %v2357
        %2387 = vmatprep.subr.mxu0 0.0
        %2388 = vmatpush1.msra.mxu0 %v2358
        %2389 = vmatprep.subr.mxu0 0.0
        %2390 = vmatpush1.msra.mxu0 %v2359
        %2391 = vmatprep.subr.mxu0 0.0
        %2392 = vmatpush1.msra.mxu0 %v2360
        %2393 = vmatprep.subr.mxu0 0.0
        %2394 = vmatpush1.msra.mxu0 %v2361
        %2395 = vmatprep.subr.mxu0 0.0
        %2396 = vmatpush1.msra.mxu0 %v2362
        %2397 = vmatprep.subr.mxu0 0.0
        %2398 = vmatpush1.msra.mxu0 %v2363
        %2399 = vmatprep.subr.mxu0 0.0
        %2400 = vmatpush1.msra.mxu0 %v2364
        %2401 = vmatprep.subr.mxu0 0.0
        %2402 = vmatpush1.msra.mxu0 %v2365
        %2403 = vmatprep.subr.mxu0 0.0
        %2404 = vmatpush1.msra.mxu0 %v2366
        %2405 = vmatprep.subr.mxu0 0.0
        %2406 = vmatpush1.msra.mxu0 %v2367
        %2407 = vmatprep.subr.mxu0 0.0
        %2408 = vmatpush1.msra.mxu0 %v2368
        %2409 = vmatprep.subr.mxu0 0.0
        %2410 = vmatpush1.msra.mxu0 %v2369
        %2411 = vmatprep.subr.mxu0 0.0
        %2412 = vmatpush1.msra.mxu0 %v2370
        %2413 = vmatprep.subr.mxu0 0.0
        %2414 = vmatpush1.msra.mxu0 %v2371
        %2415 = vmatprep.subr.mxu0 0.0
        %2416 = vmatpush1.msra.mxu0 %v2372
        %2417 = vmatprep.subr.mxu0 0.0
        %2418 = vmatpush1.msra.mxu0 0.0
        %2419 = vmatprep.subr.mxu0 0.0
        %2420 = vmatpush1.msra.mxu0 0.0
        %2421 = vmatprep.subr.mxu0 0.0
        %2422 = vmatpush1.msra.mxu0 0.0
        %2423 = vmatprep.subr.mxu0 0.0
        %2424 = vmatpush1.msra.mxu0 0.0
        %2425 = vmatprep.subr.mxu0 0.0
        %2426 = vmatpush1.msra.mxu0 0.0
        %2427 = vmatprep.subr.mxu0 0.0
        %2428 = vmatpush1.msra.mxu0 0.0
        %2429 = vmatprep.subr.mxu0 0.0
        %2430 = vmatpush1.msra.mxu0 0.0
        %2431 = vmatprep.subr.mxu0 0.0
        %2432 = vmatpush1.msra.mxu0 0.0
        %2433 = vmatprep.subr.mxu0 0.0
        %2434 = vmatpush1.msra.mxu0 0.0
        %2435 = vmatprep.subr.mxu0 0.0
        %2436 = vmatpush1.msra.mxu0 0.0
        %2437 = vmatprep.subr.mxu0 0.0
        %2438 = vmatpush1.msra.mxu0 0.0
        %2439 = vmatprep.subr.mxu0 0.0
        %2440 = vmatpush1.msra.mxu0 0.0
        %2441 = vmatprep.subr.mxu0 0.0
        %2442 = vmatpush1.msra.mxu0 0.0
        %2443 = vmatprep.subr.mxu0 0.0
        %2444 = vmatpush1.msra.mxu0 0.0
        %2445 = vmatprep.subr.mxu0 0.0
        %2446 = vmatpush1.msra.mxu0 0.0
        %2447 = vmatprep.subr.mxu0 0.0
        %2448 = vmatpush1.msra.mxu0 0.0
        %2449 = vmatprep.mubr.f32.mxu0 0.0
        %2450 = vmatmul.mubr.f32.gmra.mrb[0].mxu0 %v2381
        %v2451 = vpop.f32.mrb[0].mxu0
        %v2452 = vadd.f32 0.0, %v2451
        %v2453 = vpop.f32.mrb[0].mxu0
        %2454 = vmatprep.mubr.f32.mxu0 0.0
        %2455 = vmatmul.mubr.f32.gmra.mrb[0].mxu0 %v2382
        %v2456 = vpop.f32.mrb[0].mxu0
        %v2457 = vadd.f32 0.0, %v2456
        %v2458 = vpop.f32.mrb[0].mxu0
        %2459 = vdwg.mxu0
        %v2460 = vadd.f32 %v2348, %v2452
        %v2461 = vadd.f32 %v2353, %v2457
        %s2462 = scalar_lea.vmem [#allocation5], 4992
        %v2463 = vld [vmem:[%s2462] sm:$0xff]
        %v2464 = vld [vmem:[%s2462 + $0x8] sm:$0xff]
        %v2465 = vld [vmem:[%s2462 + $0x10] sm:$0xff]
        %v2466 = vld [vmem:[%s2462 + $0x18] sm:$0xff]
        %v2467 = vld [vmem:[%s2462 + $0x20] sm:$0xff]
        %v2468 = vld [vmem:[%s2462 + $0x28] sm:$0xff]
        %v2469 = vld [vmem:[%s2462 + $0x30] sm:$0xff]
        %v2470 = vld [vmem:[%s2462 + $0x38] sm:$0xff]
        %v2471 = vld [vmem:[%s2462 + $0x40] sm:$0xff]
        %v2472 = vld [vmem:[%s2462 + $0x48] sm:$0xff]
        %v2473 = vld [vmem:[%s2462 + $0x50] sm:$0xff]
        %v2474 = vld [vmem:[%s2462 + $0x58] sm:$0xff]
        %v2475 = vld [vmem:[%s2462 + $0x60] sm:$0xff]
        %v2476 = vld [vmem:[%s2462 + $0x68] sm:$0xff]
        %v2477 = vld [vmem:[%s2462 + $0x70] sm:$0xff]
        %v2478 = vld [vmem:[%s2462 + $0x78] sm:$0xff]
        %v2480 = vrot.slane %v2154, 1
        %v2481 = vrot.slane %v2146, 1
        %v2482 = vsel %vm619, %v2480, %v2481
        %v2483 = vrot.slane %v2156, 1
        %v2484 = vsel %vm619, %v2481, %v2483
        %2487 = vmatprep.subr.mxu0 0.0
        %2488 = vmatpush1.msra.mxu0 %v2463
        %2489 = vmatprep.subr.mxu0 0.0
        %2490 = vmatpush1.msra.mxu0 %v2464
        %2491 = vmatprep.subr.mxu0 0.0
        %2492 = vmatpush1.msra.mxu0 %v2465
        %2493 = vmatprep.subr.mxu0 0.0
        %2494 = vmatpush1.msra.mxu0 %v2466
        %2495 = vmatprep.subr.mxu0 0.0
        %2496 = vmatpush1.msra.mxu0 %v2467
        %2497 = vmatprep.subr.mxu0 0.0
        %2498 = vmatpush1.msra.mxu0 %v2468
        %2499 = vmatprep.subr.mxu0 0.0
        %2500 = vmatpush1.msra.mxu0 %v2469
        %2501 = vmatprep.subr.mxu0 0.0
        %2502 = vmatpush1.msra.mxu0 %v2470
        %2503 = vmatprep.subr.mxu0 0.0
        %2504 = vmatpush1.msra.mxu0 %v2471
        %2505 = vmatprep.subr.mxu0 0.0
        %2506 = vmatpush1.msra.mxu0 %v2472
        %2507 = vmatprep.subr.mxu0 0.0
        %2508 = vmatpush1.msra.mxu0 %v2473
        %2509 = vmatprep.subr.mxu0 0.0
        %2510 = vmatpush1.msra.mxu0 %v2474
        %2511 = vmatprep.subr.mxu0 0.0
        %2512 = vmatpush1.msra.mxu0 %v2475
        %2513 = vmatprep.subr.mxu0 0.0
        %2514 = vmatpush1.msra.mxu0 %v2476
        %2515 = vmatprep.subr.mxu0 0.0
        %2516 = vmatpush1.msra.mxu0 %v2477
        %2517 = vmatprep.subr.mxu0 0.0
        %2518 = vmatpush1.msra.mxu0 %v2478
        %2519 = vmatprep.subr.mxu0 0.0
        %2520 = vmatpush1.msra.mxu0 0.0
        %2521 = vmatprep.subr.mxu0 0.0
        %2522 = vmatpush1.msra.mxu0 0.0
        %2523 = vmatprep.subr.mxu0 0.0
        %2524 = vmatpush1.msra.mxu0 0.0
        %2525 = vmatprep.subr.mxu0 0.0
        %2526 = vmatpush1.msra.mxu0 0.0
        %2527 = vmatprep.subr.mxu0 0.0
        %2528 = vmatpush1.msra.mxu0 0.0
        %2529 = vmatprep.subr.mxu0 0.0
        %2530 = vmatpush1.msra.mxu0 0.0
        %2531 = vmatprep.subr.mxu0 0.0
        %2532 = vmatpush1.msra.mxu0 0.0
        %2533 = vmatprep.subr.mxu0 0.0
        %2534 = vmatpush1.msra.mxu0 0.0
        %2535 = vmatprep.subr.mxu0 0.0
        %2536 = vmatpush1.msra.mxu0 0.0
        %2537 = vmatprep.subr.mxu0 0.0
        %2538 = vmatpush1.msra.mxu0 0.0
        %2539 = vmatprep.subr.mxu0 0.0
        %2540 = vmatpush1.msra.mxu0 0.0
        %2541 = vmatprep.subr.mxu0 0.0
        %2542 = vmatpush1.msra.mxu0 0.0
        %2543 = vmatprep.subr.mxu0 0.0
        %2544 = vmatpush1.msra.mxu0 0.0
        %2545 = vmatprep.subr.mxu0 0.0
        %2546 = vmatpush1.msra.mxu0 0.0
        %2547 = vmatprep.subr.mxu0 0.0
        %2548 = vmatpush1.msra.mxu0 0.0
        %2549 = vmatprep.subr.mxu0 0.0
        %2550 = vmatpush1.msra.mxu0 0.0
        %2551 = vmatprep.mubr.f32.mxu0 0.0
        %2552 = vmatmul.mubr.f32.gmra.mrb[0].mxu0 %v2482
        %v2553 = vpop.f32.mrb[0].mxu0
        %v2554 = vadd.f32 0.0, %v2553
        %v2555 = vpop.f32.mrb[0].mxu0
        %2556 = vmatprep.mubr.f32.mxu0 0.0
        %2557 = vmatmul.mubr.f32.gmra.mrb[0].mxu0 %v2484
        %v2558 = vpop.f32.mrb[0].mxu0
        %v2559 = vadd.f32 0.0, %v2558
        %v2560 = vpop.f32.mrb[0].mxu0
        %2561 = vdwg.mxu0
        %v2562 = vadd.f32 %v2460, %v2554
        %v2563 = vadd.f32 %v2461, %v2559
        %s2564 = scalar_lea.vmem [#allocation5], 5120
        %v2565 = vld [vmem:[%s2564] sm:$0xff]
        %v2566 = vld [vmem:[%s2564 + $0x8] sm:$0xff]
        %v2567 = vld [vmem:[%s2564 + $0x10] sm:$0xff]
        %v2568 = vld [vmem:[%s2564 + $0x18] sm:$0xff]
        %v2569 = vld [vmem:[%s2564 + $0x20] sm:$0xff]
        %v2570 = vld [vmem:[%s2564 + $0x28] sm:$0xff]
        %v2571 = vld [vmem:[%s2564 + $0x30] sm:$0xff]
        %v2572 = vld [vmem:[%s2564 + $0x38] sm:$0xff]
        %v2573 = vld [vmem:[%s2564 + $0x40] sm:$0xff]
        %v2574 = vld [vmem:[%s2564 + $0x48] sm:$0xff]
        %v2575 = vld [vmem:[%s2564 + $0x50] sm:$0xff]
        %v2576 = vld [vmem:[%s2564 + $0x58] sm:$0xff]
        %v2577 = vld [vmem:[%s2564 + $0x60] sm:$0xff]
        %v2578 = vld [vmem:[%s2564 + $0x68] sm:$0xff]
        %v2579 = vld [vmem:[%s2564 + $0x70] sm:$0xff]
        %v2580 = vld [vmem:[%s2564 + $0x78] sm:$0xff]
        %v2582 = vrot.slane %v2155, 1
        %v2583 = vrot.slane %v2148, 1
        %v2584 = vsel %vm619, %v2582, %v2583
        %v2585 = vrot.slane %v2157, 1
        %v2586 = vsel %vm619, %v2583, %v2585
        %2587 = vrot.lane.b32.xlu0 %v2482, 120
        %v2588 = vpop.permute.xlu0 %2587
        %2589 = vrot.lane.b32.xlu0 %v2584, 120
        %v2590 = vpop.permute.xlu0 %2589
        %2591 = vrot.lane.b32.xlu0 %v2484, 120
        %v2592 = vpop.permute.xlu0 %2591
        %2593 = vrot.lane.b32.xlu0 %v2586, 120
        %v2594 = vpop.permute.xlu0 %2593
        %v2595 = vsel %vm339, %v2588, %v2590
        %v2596 = vsel %vm339, %v2592, %v2594
        %2599 = vmatprep.subr.mxu0 0.0
        %2600 = vmatpush1.msra.mxu0 %v2565
        %2601 = vmatprep.subr.mxu0 0.0
        %2602 = vmatpush1.msra.mxu0 %v2566
        %2603 = vmatprep.subr.mxu0 0.0
        %2604 = vmatpush1.msra.mxu0 %v2567
        %2605 = vmatprep.subr.mxu0 0.0
        %2606 = vmatpush1.msra.mxu0 %v2568
        %2607 = vmatprep.subr.mxu0 0.0
        %2608 = vmatpush1.msra.mxu0 %v2569
        %2609 = vmatprep.subr.mxu0 0.0
        %2610 = vmatpush1.msra.mxu0 %v2570
        %2611 = vmatprep.subr.mxu0 0.0
        %2612 = vmatpush1.msra.mxu0 %v2571
        %2613 = vmatprep.subr.mxu0 0.0
        %2614 = vmatpush1.msra.mxu0 %v2572
        %2615 = vmatprep.subr.mxu0 0.0
        %2616 = vmatpush1.msra.mxu0 %v2573
        %2617 = vmatprep.subr.mxu0 0.0
        %2618 = vmatpush1.msra.mxu0 %v2574
        %2619 = vmatprep.subr.mxu0 0.0
        %2620 = vmatpush1.msra.mxu0 %v2575
        %2621 = vmatprep.subr.mxu0 0.0
        %2622 = vmatpush1.msra.mxu0 %v2576
        %2623 = vmatprep.subr.mxu0 0.0
        %2624 = vmatpush1.msra.mxu0 %v2577
        %2625 = vmatprep.subr.mxu0 0.0
        %2626 = vmatpush1.msra.mxu0 %v2578
        %2627 = vmatprep.subr.mxu0 0.0
        %2628 = vmatpush1.msra.mxu0 %v2579
        %2629 = vmatprep.subr.mxu0 0.0
        %2630 = vmatpush1.msra.mxu0 %v2580
        %2631 = vmatprep.subr.mxu0 0.0
        %2632 = vmatpush1.msra.mxu0 0.0
        %2633 = vmatprep.subr.mxu0 0.0
        %2634 = vmatpush1.msra.mxu0 0.0
        %2635 = vmatprep.subr.mxu0 0.0
        %2636 = vmatpush1.msra.mxu0 0.0
        %2637 = vmatprep.subr.mxu0 0.0
        %2638 = vmatpush1.msra.mxu0 0.0
        %2639 = vmatprep.subr.mxu0 0.0
        %2640 = vmatpush1.msra.mxu0 0.0
        %2641 = vmatprep.subr.mxu0 0.0
        %2642 = vmatpush1.msra.mxu0 0.0
        %2643 = vmatprep.subr.mxu0 0.0
        %2644 = vmatpush1.msra.mxu0 0.0
        %2645 = vmatprep.subr.mxu0 0.0
        %2646 = vmatpush1.msra.mxu0 0.0
        %2647 = vmatprep.subr.mxu0 0.0
        %2648 = vmatpush1.msra.mxu0 0.0
        %2649 = vmatprep.subr.mxu0 0.0
        %2650 = vmatpush1.msra.mxu0 0.0
        %2651 = vmatprep.subr.mxu0 0.0
        %2652 = vmatpush1.msra.mxu0 0.0
        %2653 = vmatprep.subr.mxu0 0.0
        %2654 = vmatpush1.msra.mxu0 0.0
        %2655 = vmatprep.subr.mxu0 0.0
        %2656 = vmatpush1.msra.mxu0 0.0
        %2657 = vmatprep.subr.mxu0 0.0
        %2658 = vmatpush1.msra.mxu0 0.0
        %2659 = vmatprep.subr.mxu0 0.0
        %2660 = vmatpush1.msra.mxu0 0.0
        %2661 = vmatprep.subr.mxu0 0.0
        %2662 = vmatpush1.msra.mxu0 0.0
        %2663 = vmatprep.mubr.f32.mxu0 0.0
        %2664 = vmatmul.mubr.f32.gmra.mrb[0].mxu0 %v2595
        %v2665 = vpop.f32.mrb[0].mxu0
        %v2666 = vadd.f32 0.0, %v2665
        %v2667 = vpop.f32.mrb[0].mxu0
        %2668 = vmatprep.mubr.f32.mxu0 0.0
        %2669 = vmatmul.mubr.f32.gmra.mrb[0].mxu0 %v2596
        %v2670 = vpop.f32.mrb[0].mxu0
        %v2671 = vadd.f32 0.0, %v2670
        %v2672 = vpop.f32.mrb[0].mxu0
        %2673 = vdwg.mxu0
        %v2674 = vadd.f32 %v2562, %v2666
        %v2675 = vadd.f32 %v2563, %v2671
        %s2676 = scalar_lea.vmem [#allocation5], 5248
        %v2677 = vld [vmem:[%s2676] sm:$0xff]
        %v2678 = vld [vmem:[%s2676 + $0x8] sm:$0xff]
        %v2679 = vld [vmem:[%s2676 + $0x10] sm:$0xff]
        %v2680 = vld [vmem:[%s2676 + $0x18] sm:$0xff]
        %v2681 = vld [vmem:[%s2676 + $0x20] sm:$0xff]
        %v2682 = vld [vmem:[%s2676 + $0x28] sm:$0xff]
        %v2683 = vld [vmem:[%s2676 + $0x30] sm:$0xff]
        %v2684 = vld [vmem:[%s2676 + $0x38] sm:$0xff]
        %v2685 = vld [vmem:[%s2676 + $0x40] sm:$0xff]
        %v2686 = vld [vmem:[%s2676 + $0x48] sm:$0xff]
        %v2687 = vld [vmem:[%s2676 + $0x50] sm:$0xff]
        %v2688 = vld [vmem:[%s2676 + $0x58] sm:$0xff]
        %v2689 = vld [vmem:[%s2676 + $0x60] sm:$0xff]
        %v2690 = vld [vmem:[%s2676 + $0x68] sm:$0xff]
        %v2691 = vld [vmem:[%s2676 + $0x70] sm:$0xff]
        %v2692 = vld [vmem:[%s2676 + $0x78] sm:$0xff]
        %2693 = vrot.lane.b32.xlu0 %v2482, 112
        %v2694 = vpop.permute.xlu0 %2693
        %2695 = vrot.lane.b32.xlu0 %v2584, 112
        %v2696 = vpop.permute.xlu0 %2695
        %2697 = vrot.lane.b32.xlu0 %v2484, 112
        %v2698 = vpop.permute.xlu0 %2697
        %2699 = vrot.lane.b32.xlu0 %v2586, 112
        %v2700 = vpop.permute.xlu0 %2699
        %v2701 = vsel %vm519, %v2694, %v2696
        %v2702 = vsel %vm519, %v2698, %v2700
        %2705 = vmatprep.subr.mxu0 0.0
        %2706 = vmatpush1.msra.mxu0 %v2677
        %2707 = vmatprep.subr.mxu0 0.0
        %2708 = vmatpush1.msra.mxu0 %v2678
        %2709 = vmatprep.subr.mxu0 0.0
        %2710 = vmatpush1.msra.mxu0 %v2679
        %2711 = vmatprep.subr.mxu0 0.0
        %2712 = vmatpush1.msra.mxu0 %v2680
        %2713 = vmatprep.subr.mxu0 0.0
        %2714 = vmatpush1.msra.mxu0 %v2681
        %2715 = vmatprep.subr.mxu0 0.0
        %2716 = vmatpush1.msra.mxu0 %v2682
        %2717 = vmatprep.subr.mxu0 0.0
        %2718 = vmatpush1.msra.mxu0 %v2683
        %2719 = vmatprep.subr.mxu0 0.0
        %2720 = vmatpush1.msra.mxu0 %v2684
        %2721 = vmatprep.subr.mxu0 0.0
        %2722 = vmatpush1.msra.mxu0 %v2685
        %2723 = vmatprep.subr.mxu0 0.0
        %2724 = vmatpush1.msra.mxu0 %v2686
        %2725 = vmatprep.subr.mxu0 0.0
        %2726 = vmatpush1.msra.mxu0 %v2687
        %2727 = vmatprep.subr.mxu0 0.0
        %2728 = vmatpush1.msra.mxu0 %v2688
        %2729 = vmatprep.subr.mxu0 0.0
        %2730 = vmatpush1.msra.mxu0 %v2689
        %2731 = vmatprep.subr.mxu0 0.0
        %2732 = vmatpush1.msra.mxu0 %v2690
        %2733 = vmatprep.subr.mxu0 0.0
        %2734 = vmatpush1.msra.mxu0 %v2691
        %2735 = vmatprep.subr.mxu0 0.0
        %2736 = vmatpush1.msra.mxu0 %v2692
        %2737 = vmatprep.subr.mxu0 0.0
        %2738 = vmatpush1.msra.mxu0 0.0
        %2739 = vmatprep.subr.mxu0 0.0
        %2740 = vmatpush1.msra.mxu0 0.0
        %2741 = vmatprep.subr.mxu0 0.0
        %2742 = vmatpush1.msra.mxu0 0.0
        %2743 = vmatprep.subr.mxu0 0.0
        %2744 = vmatpush1.msra.mxu0 0.0
        %2745 = vmatprep.subr.mxu0 0.0
        %2746 = vmatpush1.msra.mxu0 0.0
        %2747 = vmatprep.subr.mxu0 0.0
        %2748 = vmatpush1.msra.mxu0 0.0
        %2749 = vmatprep.subr.mxu0 0.0
        %2750 = vmatpush1.msra.mxu0 0.0
        %2751 = vmatprep.subr.mxu0 0.0
        %2752 = vmatpush1.msra.mxu0 0.0
        %2753 = vmatprep.subr.mxu0 0.0
        %2754 = vmatpush1.msra.mxu0 0.0
        %2755 = vmatprep.subr.mxu0 0.0
        %2756 = vmatpush1.msra.mxu0 0.0
        %2757 = vmatprep.subr.mxu0 0.0
        %2758 = vmatpush1.msra.mxu0 0.0
        %2759 = vmatprep.subr.mxu0 0.0
        %2760 = vmatpush1.msra.mxu0 0.0
        %2761 = vmatprep.subr.mxu0 0.0
        %2762 = vmatpush1.msra.mxu0 0.0
        %2763 = vmatprep.subr.mxu0 0.0
        %2764 = vmatpush1.msra.mxu0 0.0
        %2765 = vmatprep.subr.mxu0 0.0
        %2766 = vmatpush1.msra.mxu0 0.0
        %2767 = vmatprep.subr.mxu0 0.0
        %2768 = vmatpush1.msra.mxu0 0.0
        %2769 = vmatprep.mubr.f32.mxu0 0.0
        %2770 = vmatmul.mubr.f32.gmra.mrb[0].mxu0 %v2701
        %v2771 = vpop.f32.mrb[0].mxu0
        %v2772 = vadd.f32 0.0, %v2771
        %v2773 = vpop.f32.mrb[0].mxu0
        %2774 = vmatprep.mubr.f32.mxu0 0.0
        %2775 = vmatmul.mubr.f32.gmra.mrb[0].mxu0 %v2702
        %v2776 = vpop.f32.mrb[0].mxu0
        %v2777 = vadd.f32 0.0, %v2776
        %v2778 = vpop.f32.mrb[0].mxu0
        %2779 = vdwg.mxu0
        %v2780 = vadd.f32 %v2674, %v2772
        %v2781 = vadd.f32 %v2675, %v2777
        %s2782 = scalar_lea.vmem [#allocation5], 5376
        %v2783 = vld [vmem:[%s2782] sm:$0xff]
        %v2784 = vld [vmem:[%s2782 + $0x8] sm:$0xff]
        %v2785 = vld [vmem:[%s2782 + $0x10] sm:$0xff]
        %v2786 = vld [vmem:[%s2782 + $0x18] sm:$0xff]
        %v2787 = vld [vmem:[%s2782 + $0x20] sm:$0xff]
        %v2788 = vld [vmem:[%s2782 + $0x28] sm:$0xff]
        %v2789 = vld [vmem:[%s2782 + $0x30] sm:$0xff]
        %v2790 = vld [vmem:[%s2782 + $0x38] sm:$0xff]
        %v2791 = vld [vmem:[%s2782 + $0x40] sm:$0xff]
        %v2792 = vld [vmem:[%s2782 + $0x48] sm:$0xff]
        %v2793 = vld [vmem:[%s2782 + $0x50] sm:$0xff]
        %v2794 = vld [vmem:[%s2782 + $0x58] sm:$0xff]
        %v2795 = vld [vmem:[%s2782 + $0x60] sm:$0xff]
        %v2796 = vld [vmem:[%s2782 + $0x68] sm:$0xff]
        %v2797 = vld [vmem:[%s2782 + $0x70] sm:$0xff]
        %v2798 = vld [vmem:[%s2782 + $0x78] sm:$0xff]
        %v2799 = vrot.slane %v2154, 2
        %v2800 = vrot.slane %v2146, 2
        %v2801 = vsel %vm939, %v2799, %v2800
        %v2802 = vrot.slane %v2156, 2
        %v2803 = vsel %vm939, %v2800, %v2802
        %2806 = vmatprep.subr.mxu0 0.0
        %2807 = vmatpush1.msra.mxu0 %v2783
        %2808 = vmatprep.subr.mxu0 0.0
        %2809 = vmatpush1.msra.mxu0 %v2784
        %2810 = vmatprep.subr.mxu0 0.0
        %2811 = vmatpush1.msra.mxu0 %v2785
        %2812 = vmatprep.subr.mxu0 0.0
        %2813 = vmatpush1.msra.mxu0 %v2786
        %2814 = vmatprep.subr.mxu0 0.0
        %2815 = vmatpush1.msra.mxu0 %v2787
        %2816 = vmatprep.subr.mxu0 0.0
        %2817 = vmatpush1.msra.mxu0 %v2788
        %2818 = vmatprep.subr.mxu0 0.0
        %2819 = vmatpush1.msra.mxu0 %v2789
        %2820 = vmatprep.subr.mxu0 0.0
        %2821 = vmatpush1.msra.mxu0 %v2790
        %2822 = vmatprep.subr.mxu0 0.0
        %2823 = vmatpush1.msra.mxu0 %v2791
        %2824 = vmatprep.subr.mxu0 0.0
        %2825 = vmatpush1.msra.mxu0 %v2792
        %2826 = vmatprep.subr.mxu0 0.0
        %2827 = vmatpush1.msra.mxu0 %v2793
        %2828 = vmatprep.subr.mxu0 0.0
        %2829 = vmatpush1.msra.mxu0 %v2794
        %2830 = vmatprep.subr.mxu0 0.0
        %2831 = vmatpush1.msra.mxu0 %v2795
        %2832 = vmatprep.subr.mxu0 0.0
        %2833 = vmatpush1.msra.mxu0 %v2796
        %2834 = vmatprep.subr.mxu0 0.0
        %2835 = vmatpush1.msra.mxu0 %v2797
        %2836 = vmatprep.subr.mxu0 0.0
        %2837 = vmatpush1.msra.mxu0 %v2798
        %2838 = vmatprep.subr.mxu0 0.0
        %2839 = vmatpush1.msra.mxu0 0.0
        %2840 = vmatprep.subr.mxu0 0.0
        %2841 = vmatpush1.msra.mxu0 0.0
        %2842 = vmatprep.subr.mxu0 0.0
        %2843 = vmatpush1.msra.mxu0 0.0
        %2844 = vmatprep.subr.mxu0 0.0
        %2845 = vmatpush1.msra.mxu0 0.0
        %2846 = vmatprep.subr.mxu0 0.0
        %2847 = vmatpush1.msra.mxu0 0.0
        %2848 = vmatprep.subr.mxu0 0.0
        %2849 = vmatpush1.msra.mxu0 0.0
        %2850 = vmatprep.subr.mxu0 0.0
        %2851 = vmatpush1.msra.mxu0 0.0
        %2852 = vmatprep.subr.mxu0 0.0
        %2853 = vmatpush1.msra.mxu0 0.0
        %2854 = vmatprep.subr.mxu0 0.0
        %2855 = vmatpush1.msra.mxu0 0.0
        %2856 = vmatprep.subr.mxu0 0.0
        %2857 = vmatpush1.msra.mxu0 0.0
        %2858 = vmatprep.subr.mxu0 0.0
        %2859 = vmatpush1.msra.mxu0 0.0
        %2860 = vmatprep.subr.mxu0 0.0
        %2861 = vmatpush1.msra.mxu0 0.0
        %2862 = vmatprep.subr.mxu0 0.0
        %2863 = vmatpush1.msra.mxu0 0.0
        %2864 = vmatprep.subr.mxu0 0.0
        %2865 = vmatpush1.msra.mxu0 0.0
        %2866 = vmatprep.subr.mxu0 0.0
        %2867 = vmatpush1.msra.mxu0 0.0
        %2868 = vmatprep.subr.mxu0 0.0
        %2869 = vmatpush1.msra.mxu0 0.0
        %2870 = vmatprep.mubr.f32.mxu0 0.0
        %2871 = vmatmul.mubr.f32.gmra.mrb[0].mxu0 %v2801
        %v2872 = vpop.f32.mrb[0].mxu0
        %v2873 = vadd.f32 0.0, %v2872
        %v2874 = vpop.f32.mrb[0].mxu0
        %2875 = vmatprep.mubr.f32.mxu0 0.0
        %2876 = vmatmul.mubr.f32.gmra.mrb[0].mxu0 %v2803
        %v2877 = vpop.f32.mrb[0].mxu0
        %v2878 = vadd.f32 0.0, %v2877
        %v2879 = vpop.f32.mrb[0].mxu0
        %2880 = vdwg.mxu0
        %v2881 = vadd.f32 %v2780, %v2873
        %v2882 = vadd.f32 %v2781, %v2878
        %s2883 = scalar_lea.vmem [#allocation5], 5504
        %v2884 = vld [vmem:[%s2883] sm:$0xff]
        %v2885 = vld [vmem:[%s2883 + $0x8] sm:$0xff]
        %v2886 = vld [vmem:[%s2883 + $0x10] sm:$0xff]
        %v2887 = vld [vmem:[%s2883 + $0x18] sm:$0xff]
        %v2888 = vld [vmem:[%s2883 + $0x20] sm:$0xff]
        %v2889 = vld [vmem:[%s2883 + $0x28] sm:$0xff]
        %v2890 = vld [vmem:[%s2883 + $0x30] sm:$0xff]
        %v2891 = vld [vmem:[%s2883 + $0x38] sm:$0xff]
        %v2892 = vld [vmem:[%s2883 + $0x40] sm:$0xff]
        %v2893 = vld [vmem:[%s2883 + $0x48] sm:$0xff]
        %v2894 = vld [vmem:[%s2883 + $0x50] sm:$0xff]
        %v2895 = vld [vmem:[%s2883 + $0x58] sm:$0xff]
        %v2896 = vld [vmem:[%s2883 + $0x60] sm:$0xff]
        %v2897 = vld [vmem:[%s2883 + $0x68] sm:$0xff]
        %v2898 = vld [vmem:[%s2883 + $0x70] sm:$0xff]
        %v2899 = vld [vmem:[%s2883 + $0x78] sm:$0xff]
        %v2900 = vrot.slane %v2155, 2
        %v2901 = vrot.slane %v2148, 2
        %v2902 = vsel %vm939, %v2900, %v2901
        %v2903 = vrot.slane %v2157, 2
        %v2904 = vsel %vm939, %v2901, %v2903
        %2905 = vrot.lane.b32.xlu0 %v2801, 120
        %v2906 = vpop.permute.xlu0 %2905
        %2907 = vrot.lane.b32.xlu0 %v2902, 120
        %v2908 = vpop.permute.xlu0 %2907
        %2909 = vrot.lane.b32.xlu0 %v2803, 120
        %v2910 = vpop.permute.xlu0 %2909
        %2911 = vrot.lane.b32.xlu0 %v2904, 120
        %v2912 = vpop.permute.xlu0 %2911
        %v2913 = vsel %vm339, %v2906, %v2908
        %v2914 = vsel %vm339, %v2910, %v2912
        %2917 = vmatprep.subr.mxu0 0.0
        %2918 = vmatpush1.msra.mxu0 %v2884
        %2919 = vmatprep.subr.mxu0 0.0
        %2920 = vmatpush1.msra.mxu0 %v2885
        %2921 = vmatprep.subr.mxu0 0.0
        %2922 = vmatpush1.msra.mxu0 %v2886
        %2923 = vmatprep.subr.mxu0 0.0
        %2924 = vmatpush1.msra.mxu0 %v2887
        %2925 = vmatprep.subr.mxu0 0.0
        %2926 = vmatpush1.msra.mxu0 %v2888
        %2927 = vmatprep.subr.mxu0 0.0
        %2928 = vmatpush1.msra.mxu0 %v2889
        %2929 = vmatprep.subr.mxu0 0.0
        %2930 = vmatpush1.msra.mxu0 %v2890
        %2931 = vmatprep.subr.mxu0 0.0
        %2932 = vmatpush1.msra.mxu0 %v2891
        %2933 = vmatprep.subr.mxu0 0.0
        %2934 = vmatpush1.msra.mxu0 %v2892
        %2935 = vmatprep.subr.mxu0 0.0
        %2936 = vmatpush1.msra.mxu0 %v2893
        %2937 = vmatprep.subr.mxu0 0.0
        %2938 = vmatpush1.msra.mxu0 %v2894
        %2939 = vmatprep.subr.mxu0 0.0
        %2940 = vmatpush1.msra.mxu0 %v2895
        %2941 = vmatprep.subr.mxu0 0.0
        %2942 = vmatpush1.msra.mxu0 %v2896
        %2943 = vmatprep.subr.mxu0 0.0
        %2944 = vmatpush1.msra.mxu0 %v2897
        %2945 = vmatprep.subr.mxu0 0.0
        %2946 = vmatpush1.msra.mxu0 %v2898
        %2947 = vmatprep.subr.mxu0 0.0
        %2948 = vmatpush1.msra.mxu0 %v2899
        %2949 = vmatprep.subr.mxu0 0.0
        %2950 = vmatpush1.msra.mxu0 0.0
        %2951 = vmatprep.subr.mxu0 0.0
        %2952 = vmatpush1.msra.mxu0 0.0
        %2953 = vmatprep.subr.mxu0 0.0
        %2954 = vmatpush1.msra.mxu0 0.0
        %2955 = vmatprep.subr.mxu0 0.0
        %2956 = vmatpush1.msra.mxu0 0.0
        %2957 = vmatprep.subr.mxu0 0.0
        %2958 = vmatpush1.msra.mxu0 0.0
        %2959 = vmatprep.subr.mxu0 0.0
        %2960 = vmatpush1.msra.mxu0 0.0
        %2961 = vmatprep.subr.mxu0 0.0
        %2962 = vmatpush1.msra.mxu0 0.0
        %2963 = vmatprep.subr.mxu0 0.0
        %2964 = vmatpush1.msra.mxu0 0.0
        %2965 = vmatprep.subr.mxu0 0.0
        %2966 = vmatpush1.msra.mxu0 0.0
        %2967 = vmatprep.subr.mxu0 0.0
        %2968 = vmatpush1.msra.mxu0 0.0
        %2969 = vmatprep.subr.mxu0 0.0
        %2970 = vmatpush1.msra.mxu0 0.0
        %2971 = vmatprep.subr.mxu0 0.0
        %2972 = vmatpush1.msra.mxu0 0.0
        %2973 = vmatprep.subr.mxu0 0.0
        %2974 = vmatpush1.msra.mxu0 0.0
        %2975 = vmatprep.subr.mxu0 0.0
        %2976 = vmatpush1.msra.mxu0 0.0
        %2977 = vmatprep.subr.mxu0 0.0
        %2978 = vmatpush1.msra.mxu0 0.0
        %2979 = vmatprep.subr.mxu0 0.0
        %2980 = vmatpush1.msra.mxu0 0.0
        %2981 = vmatprep.mubr.f32.mxu0 0.0
        %2982 = vmatmul.mubr.f32.gmra.mrb[0].mxu0 %v2913
        %v2983 = vpop.f32.mrb[0].mxu0
        %v2984 = vadd.f32 0.0, %v2983
        %v2985 = vpop.f32.mrb[0].mxu0
        %2986 = vmatprep.mubr.f32.mxu0 0.0
        %2987 = vmatmul.mubr.f32.gmra.mrb[0].mxu0 %v2914
        %v2988 = vpop.f32.mrb[0].mxu0
        %v2989 = vadd.f32 0.0, %v2988
        %v2990 = vpop.f32.mrb[0].mxu0
        %2991 = vdwg.mxu0
        %v2992 = vadd.f32 %v2881, %v2984
        %v2993 = vadd.f32 %v2882, %v2989
        %s2994 = scalar_lea.vmem [#allocation5], 5632
        %v2995 = vld [vmem:[%s2994] sm:$0xff]
        %v2996 = vld [vmem:[%s2994 + $0x8] sm:$0xff]
        %v2997 = vld [vmem:[%s2994 + $0x10] sm:$0xff]
        %v2998 = vld [vmem:[%s2994 + $0x18] sm:$0xff]
        %v2999 = vld [vmem:[%s2994 + $0x20] sm:$0xff]
        %v3000 = vld [vmem:[%s2994 + $0x28] sm:$0xff]
        %v3001 = vld [vmem:[%s2994 + $0x30] sm:$0xff]
        %v3002 = vld [vmem:[%s2994 + $0x38] sm:$0xff]
        %v3003 = vld [vmem:[%s2994 + $0x40] sm:$0xff]
        %v3004 = vld [vmem:[%s2994 + $0x48] sm:$0xff]
        %v3005 = vld [vmem:[%s2994 + $0x50] sm:$0xff]
        %v3006 = vld [vmem:[%s2994 + $0x58] sm:$0xff]
        %v3007 = vld [vmem:[%s2994 + $0x60] sm:$0xff]
        %v3008 = vld [vmem:[%s2994 + $0x68] sm:$0xff]
        %v3009 = vld [vmem:[%s2994 + $0x70] sm:$0xff]
        %v3010 = vld [vmem:[%s2994 + $0x78] sm:$0xff]
        %3011 = vrot.lane.b32.xlu0 %v2801, 112
        %v3012 = vpop.permute.xlu0 %3011
        %3013 = vrot.lane.b32.xlu0 %v2902, 112
        %v3014 = vpop.permute.xlu0 %3013
        %3015 = vrot.lane.b32.xlu0 %v2803, 112
        %v3016 = vpop.permute.xlu0 %3015
        %3017 = vrot.lane.b32.xlu0 %v2904, 112
        %v3018 = vpop.permute.xlu0 %3017
        %v3019 = vsel %vm519, %v3012, %v3014
        %v3020 = vsel %vm519, %v3016, %v3018
        %3023 = vmatprep.subr.mxu0 0.0
        %3024 = vmatpush1.msra.mxu0 %v2995
        %3025 = vmatprep.subr.mxu0 0.0
        %3026 = vmatpush1.msra.mxu0 %v2996
        %3027 = vmatprep.subr.mxu0 0.0
        %3028 = vmatpush1.msra.mxu0 %v2997
        %3029 = vmatprep.subr.mxu0 0.0
        %3030 = vmatpush1.msra.mxu0 %v2998
        %3031 = vmatprep.subr.mxu0 0.0
        %3032 = vmatpush1.msra.mxu0 %v2999
        %3033 = vmatprep.subr.mxu0 0.0
        %3034 = vmatpush1.msra.mxu0 %v3000
        %3035 = vmatprep.subr.mxu0 0.0
        %3036 = vmatpush1.msra.mxu0 %v3001
        %3037 = vmatprep.subr.mxu0 0.0
        %3038 = vmatpush1.msra.mxu0 %v3002
        %3039 = vmatprep.subr.mxu0 0.0
        %3040 = vmatpush1.msra.mxu0 %v3003
        %3041 = vmatprep.subr.mxu0 0.0
        %3042 = vmatpush1.msra.mxu0 %v3004
        %3043 = vmatprep.subr.mxu0 0.0
        %3044 = vmatpush1.msra.mxu0 %v3005
        %3045 = vmatprep.subr.mxu0 0.0
        %3046 = vmatpush1.msra.mxu0 %v3006
        %3047 = vmatprep.subr.mxu0 0.0
        %3048 = vmatpush1.msra.mxu0 %v3007
        %3049 = vmatprep.subr.mxu0 0.0
        %3050 = vmatpush1.msra.mxu0 %v3008
        %3051 = vmatprep.subr.mxu0 0.0
        %3052 = vmatpush1.msra.mxu0 %v3009
        %3053 = vmatprep.subr.mxu0 0.0
        %3054 = vmatpush1.msra.mxu0 %v3010
        %3055 = vmatprep.subr.mxu0 0.0
        %3056 = vmatpush1.msra.mxu0 0.0
        %3057 = vmatprep.subr.mxu0 0.0
        %3058 = vmatpush1.msra.mxu0 0.0
        %3059 = vmatprep.subr.mxu0 0.0
        %3060 = vmatpush1.msra.mxu0 0.0
        %3061 = vmatprep.subr.mxu0 0.0
        %3062 = vmatpush1.msra.mxu0 0.0
        %3063 = vmatprep.subr.mxu0 0.0
        %3064 = vmatpush1.msra.mxu0 0.0
        %3065 = vmatprep.subr.mxu0 0.0
        %3066 = vmatpush1.msra.mxu0 0.0
        %3067 = vmatprep.subr.mxu0 0.0
        %3068 = vmatpush1.msra.mxu0 0.0
        %3069 = vmatprep.subr.mxu0 0.0
        %3070 = vmatpush1.msra.mxu0 0.0
        %3071 = vmatprep.subr.mxu0 0.0
        %3072 = vmatpush1.msra.mxu0 0.0
        %3073 = vmatprep.subr.mxu0 0.0
        %3074 = vmatpush1.msra.mxu0 0.0
        %3075 = vmatprep.subr.mxu0 0.0
        %3076 = vmatpush1.msra.mxu0 0.0
        %3077 = vmatprep.subr.mxu0 0.0
        %3078 = vmatpush1.msra.mxu0 0.0
        %3079 = vmatprep.subr.mxu0 0.0
        %3080 = vmatpush1.msra.mxu0 0.0
        %3081 = vmatprep.subr.mxu0 0.0
        %3082 = vmatpush1.msra.mxu0 0.0
        %3083 = vmatprep.subr.mxu0 0.0
        %3084 = vmatpush1.msra.mxu0 0.0
        %3085 = vmatprep.subr.mxu0 0.0
        %3086 = vmatpush1.msra.mxu0 0.0
        %3087 = vmatprep.mubr.f32.mxu0 0.0
        %3088 = vmatmul.mubr.f32.gmra.mrb[0].mxu0 %v3019
        %v3089 = vpop.f32.mrb[0].mxu0
        %v3090 = vadd.f32 0.0, %v3089
        %v3091 = vpop.f32.mrb[0].mxu0
        %3092 = vmatprep.mubr.f32.mxu0 0.0
        %3093 = vmatmul.mubr.f32.gmra.mrb[0].mxu0 %v3020
        %v3094 = vpop.f32.mrb[0].mxu0
        %v3095 = vadd.f32 0.0, %v3094
        %v3096 = vpop.f32.mrb[0].mxu0
        %3097 = vdwg.mxu0
        %v3098 = vadd.f32 %v2992, %v3090
        %v3099 = vadd.f32 %v2993, %v3095
        %s3100 = scalar_lea.vmem [#allocation7], 4
        %v3101 = vld [vmem:[%s3100] sm:$0x1]
        %v3103 = vlaneseq
        %v3104 = vshrl.u32 %v3103, 7
        %v3105 = vsub.s32 0, %v3104
        %v3106 = vrot.slane %v3101, %v3105
        %v3108 = vmul.f32 %v3098, %v3106
        %v3109 = vmul.f32 %v3099, %v3106
        %s3110 = scalar_lea.vmem [#allocation8], 4
        %v3111 = vld [vmem:[%s3110] sm:$0x1]
        %v3113 = vlaneseq
        %v3114 = vshrl.u32 %v3113, 7
        %v3115 = vsub.s32 0, %v3114
        %v3116 = vrot.slane %v3111, %v3115
        %v3118 = vadd.f32 %v3108, %v3116
        %v3119 = vadd.f32 %v3109, %v3116
        %v3120 = vmax.f32 %v3118, 0.0
        %v3121 = vmax.f32 %v3119, 0.0
        %v3122 = vadd.f32 %v2125, %v3120
        %v3123 = vadd.f32 %v2126, %v3121
        %v3124 = vmul.f32 %v3122, 0.5
        %v3125 = vmul.f32 %v3123, 0.5
        %3128 = vrot.lane.b32.xlu0 %v3124, 8
        %v3129 = vpop.permute.xlu0 %3128
        %3130 = vrot.lane.b32.xlu0 %v3125, 8
        %v3131 = vpop.permute.xlu0 %3130
        %v3134 = vsel %vm270, 0.0, %v3129
        %v3135 = vsel %vm270, 0.0, %v3131
        %v3136 = vsel %vm270, %v3129, 0.0
        %v3137 = vsel %vm270, %v3131, 0.0
        %v3142 = vrot.slane %v3134, 7
        %v3143 = vrot.slane %v3136, 7
        %v3144 = vrot.slane %v3135, 7
        %v3145 = vsel %vm279, %v3142, %v3144
        %v3146 = vrot.slane %v3137, 7
        %v3147 = vsel %vm279, %v3143, %v3146
        %v3153 = vsel %vm279, 0.0, %v3142
        %v3154 = vsel %vm279, 0.0, %v3143
        %v3155 = vsel %vm279, %v3144, 0.0
        %v3156 = vsel %vm279, %v3146, 0.0
        %s3157 = scalar_lea.vmem [#allocation5], 5760
        %v3158 = vld [vmem:[%s3157] sm:$0xff]
        %v3159 = vld [vmem:[%s3157 + $0x8] sm:$0xff]
        %v3160 = vld [vmem:[%s3157 + $0x10] sm:$0xff]
        %v3161 = vld [vmem:[%s3157 + $0x18] sm:$0xff]
        %v3162 = vld [vmem:[%s3157 + $0x20] sm:$0xff]
        %v3163 = vld [vmem:[%s3157 + $0x28] sm:$0xff]
        %v3164 = vld [vmem:[%s3157 + $0x30] sm:$0xff]
        %v3165 = vld [vmem:[%s3157 + $0x38] sm:$0xff]
        %v3166 = vld [vmem:[%s3157 + $0x40] sm:$0xff]
        %v3167 = vld [vmem:[%s3157 + $0x48] sm:$0xff]
        %v3168 = vld [vmem:[%s3157 + $0x50] sm:$0xff]
        %v3169 = vld [vmem:[%s3157 + $0x58] sm:$0xff]
        %v3170 = vld [vmem:[%s3157 + $0x60] sm:$0xff]
        %v3171 = vld [vmem:[%s3157 + $0x68] sm:$0xff]
        %v3172 = vld [vmem:[%s3157 + $0x70] sm:$0xff]
        %v3173 = vld [vmem:[%s3157 + $0x78] sm:$0xff]
        %s3174 = scalar_lea.vmem [#allocation5], 5888
        %v3175 = vld [vmem:[%s3174] sm:$0xff]
        %v3176 = vld [vmem:[%s3174 + $0x8] sm:$0xff]
        %v3177 = vld [vmem:[%s3174 + $0x10] sm:$0xff]
        %v3178 = vld [vmem:[%s3174 + $0x18] sm:$0xff]
        %v3179 = vld [vmem:[%s3174 + $0x20] sm:$0xff]
        %v3180 = vld [vmem:[%s3174 + $0x28] sm:$0xff]
        %v3181 = vld [vmem:[%s3174 + $0x30] sm:$0xff]
        %v3182 = vld [vmem:[%s3174 + $0x38] sm:$0xff]
        %v3183 = vld [vmem:[%s3174 + $0x40] sm:$0xff]
        %v3184 = vld [vmem:[%s3174 + $0x48] sm:$0xff]
        %v3185 = vld [vmem:[%s3174 + $0x50] sm:$0xff]
        %v3186 = vld [vmem:[%s3174 + $0x58] sm:$0xff]
        %v3187 = vld [vmem:[%s3174 + $0x60] sm:$0xff]
        %v3188 = vld [vmem:[%s3174 + $0x68] sm:$0xff]
        %v3189 = vld [vmem:[%s3174 + $0x70] sm:$0xff]
        %v3190 = vld [vmem:[%s3174 + $0x78] sm:$0xff]
        %3193 = vrot.lane.b32.xlu0 %v3153, 120
        %v3194 = vpop.permute.xlu0 %3193
        %3195 = vrot.lane.b32.xlu0 %v3154, 120
        %v3196 = vpop.permute.xlu0 %3195
        %3197 = vrot.lane.b32.xlu0 %v3145, 120
        %v3198 = vpop.permute.xlu0 %3197
        %3199 = vrot.lane.b32.xlu0 %v3147, 120
        %v3200 = vpop.permute.xlu0 %3199
        %v3201 = vsel %vm339, %v3194, %v3196
        %v3202 = vsel %vm339, %v3198, %v3200
        %3205 = vmatprep.subr.mxu0 0.0
        %3206 = vmatpush1.msra.mxu0 %v3175
        %3207 = vmatprep.subr.mxu0 0.0
        %3208 = vmatpush1.msra.mxu0 %v3176
        %3209 = vmatprep.subr.mxu0 0.0
        %3210 = vmatpush1.msra.mxu0 %v3177
        %3211 = vmatprep.subr.mxu0 0.0
        %3212 = vmatpush1.msra.mxu0 %v3178
        %3213 = vmatprep.subr.mxu0 0.0
        %3214 = vmatpush1.msra.mxu0 %v3179
        %3215 = vmatprep.subr.mxu0 0.0
        %3216 = vmatpush1.msra.mxu0 %v3180
        %3217 = vmatprep.subr.mxu0 0.0
        %3218 = vmatpush1.msra.mxu0 %v3181
        %3219 = vmatprep.subr.mxu0 0.0
        %3220 = vmatpush1.msra.mxu0 %v3182
        %3221 = vmatprep.subr.mxu0 0.0
        %3222 = vmatpush1.msra.mxu0 %v3183
        %3223 = vmatprep.subr.mxu0 0.0
        %3224 = vmatpush1.msra.mxu0 %v3184
        %3225 = vmatprep.subr.mxu0 0.0
        %3226 = vmatpush1.msra.mxu0 %v3185
        %3227 = vmatprep.subr.mxu0 0.0
        %3228 = vmatpush1.msra.mxu0 %v3186
        %3229 = vmatprep.subr.mxu0 0.0
        %3230 = vmatpush1.msra.mxu0 %v3187
        %3231 = vmatprep.subr.mxu0 0.0
        %3232 = vmatpush1.msra.mxu0 %v3188
        %3233 = vmatprep.subr.mxu0 0.0
        %3234 = vmatpush1.msra.mxu0 %v3189
        %3235 = vmatprep.subr.mxu0 0.0
        %3236 = vmatpush1.msra.mxu0 %v3190
        %3237 = vmatprep.subr.mxu0 0.0
        %3238 = vmatpush1.msra.mxu0 0.0
        %3239 = vmatprep.subr.mxu0 0.0
        %3240 = vmatpush1.msra.mxu0 0.0
        %3241 = vmatprep.subr.mxu0 0.0
        %3242 = vmatpush1.msra.mxu0 0.0
        %3243 = vmatprep.subr.mxu0 0.0
        %3244 = vmatpush1.msra.mxu0 0.0
        %3245 = vmatprep.subr.mxu0 0.0
        %3246 = vmatpush1.msra.mxu0 0.0
        %3247 = vmatprep.subr.mxu0 0.0
        %3248 = vmatpush1.msra.mxu0 0.0
        %3249 = vmatprep.subr.mxu0 0.0
        %3250 = vmatpush1.msra.mxu0 0.0
        %3251 = vmatprep.subr.mxu0 0.0
        %3252 = vmatpush1.msra.mxu0 0.0
        %3253 = vmatprep.subr.mxu0 0.0
        %3254 = vmatpush1.msra.mxu0 0.0
        %3255 = vmatprep.subr.mxu0 0.0
        %3256 = vmatpush1.msra.mxu0 0.0
        %3257 = vmatprep.subr.mxu0 0.0
        %3258 = vmatpush1.msra.mxu0 0.0
        %3259 = vmatprep.subr.mxu0 0.0
        %3260 = vmatpush1.msra.mxu0 0.0
        %3261 = vmatprep.subr.mxu0 0.0
        %3262 = vmatpush1.msra.mxu0 0.0
        %3263 = vmatprep.subr.mxu0 0.0
        %3264 = vmatpush1.msra.mxu0 0.0
        %3265 = vmatprep.subr.mxu0 0.0
        %3266 = vmatpush1.msra.mxu0 0.0
        %3267 = vmatprep.subr.mxu0 0.0
        %3268 = vmatpush1.msra.mxu0 0.0
        %3269 = vmatprep.mubr.f32.mxu0 0.0
        %3270 = vmatmul.mubr.f32.gmra.mrb[0].mxu0 %v3201
        %v3271 = vpop.f32.mrb[0].mxu0
        %v3272 = vadd.f32 0.0, %v3271
        %v3273 = vpop.f32.mrb[0].mxu0
        %3274 = vmatprep.mubr.f32.mxu0 0.0
        %3275 = vmatmul.mubr.f32.gmra.mrb[0].mxu0 %v3202
        %v3276 = vpop.f32.mrb[0].mxu0
        %v3277 = vadd.f32 0.0, %v3276
        %v3278 = vpop.f32.mrb[0].mxu0
        %3279 = vdwg.mxu0
        %3280 = vmatprep.subr.mxu0 0.0
        %3281 = vmatpush1.msra.mxu0 %v3158
        %3282 = vmatprep.subr.mxu0 0.0
        %3283 = vmatpush1.msra.mxu0 %v3159
        %3284 = vmatprep.subr.mxu0 0.0
        %3285 = vmatpush1.msra.mxu0 %v3160
        %3286 = vmatprep.subr.mxu0 0.0
        %3287 = vmatpush1.msra.mxu0 %v3161
        %3288 = vmatprep.subr.mxu0 0.0
        %3289 = vmatpush1.msra.mxu0 %v3162
        %3290 = vmatprep.subr.mxu0 0.0
        %3291 = vmatpush1.msra.mxu0 %v3163
        %3292 = vmatprep.subr.mxu0 0.0
        %3293 = vmatpush1.msra.mxu0 %v3164
        %3294 = vmatprep.subr.mxu0 0.0
        %3295 = vmatpush1.msra.mxu0 %v3165
        %3296 = vmatprep.subr.mxu0 0.0
        %3297 = vmatpush1.msra.mxu0 %v3166
        %3298 = vmatprep.subr.mxu0 0.0
        %3299 = vmatpush1.msra.mxu0 %v3167
        %3300 = vmatprep.subr.mxu0 0.0
        %3301 = vmatpush1.msra.mxu0 %v3168
        %3302 = vmatprep.subr.mxu0 0.0
        %3303 = vmatpush1.msra.mxu0 %v3169
        %3304 = vmatprep.subr.mxu0 0.0
        %3305 = vmatpush1.msra.mxu0 %v3170
        %3306 = vmatprep.subr.mxu0 0.0
        %3307 = vmatpush1.msra.mxu0 %v3171
        %3308 = vmatprep.subr.mxu0 0.0
        %3309 = vmatpush1.msra.mxu0 %v3172
        %3310 = vmatprep.subr.mxu0 0.0
        %3311 = vmatpush1.msra.mxu0 %v3173
        %3312 = vmatprep.subr.mxu0 0.0
        %3313 = vmatpush1.msra.mxu0 0.0
        %3314 = vmatprep.subr.mxu0 0.0
        %3315 = vmatpush1.msra.mxu0 0.0
        %3316 = vmatprep.subr.mxu0 0.0
        %3317 = vmatpush1.msra.mxu0 0.0
        %3318 = vmatprep.subr.mxu0 0.0
        %3319 = vmatpush1.msra.mxu0 0.0
        %3320 = vmatprep.subr.mxu0 0.0
        %3321 = vmatpush1.msra.mxu0 0.0
        %3322 = vmatprep.subr.mxu0 0.0
        %3323 = vmatpush1.msra.mxu0 0.0
        %3324 = vmatprep.subr.mxu0 0.0
        %3325 = vmatpush1.msra.mxu0 0.0
        %3326 = vmatprep.subr.mxu0 0.0
        %3327 = vmatpush1.msra.mxu0 0.0
        %3328 = vmatprep.subr.mxu0 0.0
        %3329 = vmatpush1.msra.mxu0 0.0
        %3330 = vmatprep.subr.mxu0 0.0
        %3331 = vmatpush1.msra.mxu0 0.0
        %3332 = vmatprep.subr.mxu0 0.0
        %3333 = vmatpush1.msra.mxu0 0.0
        %3334 = vmatprep.subr.mxu0 0.0
        %3335 = vmatpush1.msra.mxu0 0.0
        %3336 = vmatprep.subr.mxu0 0.0
        %3337 = vmatpush1.msra.mxu0 0.0
        %3338 = vmatprep.subr.mxu0 0.0
        %3339 = vmatpush1.msra.mxu0 0.0
        %3340 = vmatprep.subr.mxu0 0.0
        %3341 = vmatpush1.msra.mxu0 0.0
        %3342 = vmatprep.subr.mxu0 0.0
        %3343 = vmatpush1.msra.mxu0 0.0
        %3344 = vmatprep.mubr.f32.mxu0 0.0
        %3345 = vmatmul.mubr.f32.gmra.mrb[0].mxu0 %v3153
        %v3346 = vpop.f32.mrb[0].mxu0
        %v3347 = vadd.f32 %v3272, %v3346
        %v3348 = vpop.f32.mrb[0].mxu0
        %3349 = vmatprep.mubr.f32.mxu0 0.0
        %3350 = vmatmul.mubr.f32.gmra.mrb[0].mxu0 %v3145
        %v3351 = vpop.f32.mrb[0].mxu0
        %v3352 = vadd.f32 %v3277, %v3351
        %v3353 = vpop.f32.mrb[0].mxu0
        %3354 = vdwg.mxu0
        %s3355 = scalar_lea.vmem [#allocation5], 6016
        %v3356 = vld [vmem:[%s3355] sm:$0xff]
        %v3357 = vld [vmem:[%s3355 + $0x8] sm:$0xff]
        %v3358 = vld [vmem:[%s3355 + $0x10] sm:$0xff]
        %v3359 = vld [vmem:[%s3355 + $0x18] sm:$0xff]
        %v3360 = vld [vmem:[%s3355 + $0x20] sm:$0xff]
        %v3361 = vld [vmem:[%s3355 + $0x28] sm:$0xff]
        %v3362 = vld [vmem:[%s3355 + $0x30] sm:$0xff]
        %v3363 = vld [vmem:[%s3355 + $0x38] sm:$0xff]
        %v3364 = vld [vmem:[%s3355 + $0x40] sm:$0xff]
        %v3365 = vld [vmem:[%s3355 + $0x48] sm:$0xff]
        %v3366 = vld [vmem:[%s3355 + $0x50] sm:$0xff]
        %v3367 = vld [vmem:[%s3355 + $0x58] sm:$0xff]
        %v3368 = vld [vmem:[%s3355 + $0x60] sm:$0xff]
        %v3369 = vld [vmem:[%s3355 + $0x68] sm:$0xff]
        %v3370 = vld [vmem:[%s3355 + $0x70] sm:$0xff]
        %v3371 = vld [vmem:[%s3355 + $0x78] sm:$0xff]
        %3372 = vrot.lane.b32.xlu0 %v3153, 112
        %v3373 = vpop.permute.xlu0 %3372
        %3374 = vrot.lane.b32.xlu0 %v3154, 112
        %v3375 = vpop.permute.xlu0 %3374
        %3376 = vrot.lane.b32.xlu0 %v3145, 112
        %v3377 = vpop.permute.xlu0 %3376
        %3378 = vrot.lane.b32.xlu0 %v3147, 112
        %v3379 = vpop.permute.xlu0 %3378
        %v3380 = vsel %vm519, %v3373, %v3375
        %v3381 = vsel %vm519, %v3377, %v3379
        %3384 = vmatprep.subr.mxu0 0.0
        %3385 = vmatpush1.msra.mxu0 %v3356
        %3386 = vmatprep.subr.mxu0 0.0
        %3387 = vmatpush1.msra.mxu0 %v3357
        %3388 = vmatprep.subr.mxu0 0.0
        %3389 = vmatpush1.msra.mxu0 %v3358
        %3390 = vmatprep.subr.mxu0 0.0
        %3391 = vmatpush1.msra.mxu0 %v3359
        %3392 = vmatprep.subr.mxu0 0.0
        %3393 = vmatpush1.msra.mxu0 %v3360
        %3394 = vmatprep.subr.mxu0 0.0
        %3395 = vmatpush1.msra.mxu0 %v3361
        %3396 = vmatprep.subr.mxu0 0.0
        %3397 = vmatpush1.msra.mxu0 %v3362
        %3398 = vmatprep.subr.mxu0 0.0
        %3399 = vmatpush1.msra.mxu0 %v3363
        %3400 = vmatprep.subr.mxu0 0.0
        %3401 = vmatpush1.msra.mxu0 %v3364
        %3402 = vmatprep.subr.mxu0 0.0
        %3403 = vmatpush1.msra.mxu0 %v3365
        %3404 = vmatprep.subr.mxu0 0.0
        %3405 = vmatpush1.msra.mxu0 %v3366
        %3406 = vmatprep.subr.mxu0 0.0
        %3407 = vmatpush1.msra.mxu0 %v3367
        %3408 = vmatprep.subr.mxu0 0.0
        %3409 = vmatpush1.msra.mxu0 %v3368
        %3410 = vmatprep.subr.mxu0 0.0
        %3411 = vmatpush1.msra.mxu0 %v3369
        %3412 = vmatprep.subr.mxu0 0.0
        %3413 = vmatpush1.msra.mxu0 %v3370
        %3414 = vmatprep.subr.mxu0 0.0
        %3415 = vmatpush1.msra.mxu0 %v3371
        %3416 = vmatprep.subr.mxu0 0.0
        %3417 = vmatpush1.msra.mxu0 0.0
        %3418 = vmatprep.subr.mxu0 0.0
        %3419 = vmatpush1.msra.mxu0 0.0
        %3420 = vmatprep.subr.mxu0 0.0
        %3421 = vmatpush1.msra.mxu0 0.0
        %3422 = vmatprep.subr.mxu0 0.0
        %3423 = vmatpush1.msra.mxu0 0.0
        %3424 = vmatprep.subr.mxu0 0.0
        %3425 = vmatpush1.msra.mxu0 0.0
        %3426 = vmatprep.subr.mxu0 0.0
        %3427 = vmatpush1.msra.mxu0 0.0
        %3428 = vmatprep.subr.mxu0 0.0
        %3429 = vmatpush1.msra.mxu0 0.0
        %3430 = vmatprep.subr.mxu0 0.0
        %3431 = vmatpush1.msra.mxu0 0.0
        %3432 = vmatprep.subr.mxu0 0.0
        %3433 = vmatpush1.msra.mxu0 0.0
        %3434 = vmatprep.subr.mxu0 0.0
        %3435 = vmatpush1.msra.mxu0 0.0
        %3436 = vmatprep.subr.mxu0 0.0
        %3437 = vmatpush1.msra.mxu0 0.0
        %3438 = vmatprep.subr.mxu0 0.0
        %3439 = vmatpush1.msra.mxu0 0.0
        %3440 = vmatprep.subr.mxu0 0.0
        %3441 = vmatpush1.msra.mxu0 0.0
        %3442 = vmatprep.subr.mxu0 0.0
        %3443 = vmatpush1.msra.mxu0 0.0
        %3444 = vmatprep.subr.mxu0 0.0
        %3445 = vmatpush1.msra.mxu0 0.0
        %3446 = vmatprep.subr.mxu0 0.0
        %3447 = vmatpush1.msra.mxu0 0.0
        %3448 = vmatprep.mubr.f32.mxu0 0.0
        %3449 = vmatmul.mubr.f32.gmra.mrb[0].mxu0 %v3380
        %v3450 = vpop.f32.mrb[0].mxu0
        %v3451 = vadd.f32 0.0, %v3450
        %v3452 = vpop.f32.mrb[0].mxu0
        %3453 = vmatprep.mubr.f32.mxu0 0.0
        %3454 = vmatmul.mubr.f32.gmra.mrb[0].mxu0 %v3381
        %v3455 = vpop.f32.mrb[0].mxu0
        %v3456 = vadd.f32 0.0, %v3455
        %v3457 = vpop.f32.mrb[0].mxu0
        %3458 = vdwg.mxu0
        %v3459 = vadd.f32 %v3347, %v3451
        %v3460 = vadd.f32 %v3352, %v3456
        %s3461 = scalar_lea.vmem [#allocation5], 6144
        %v3462 = vld [vmem:[%s3461] sm:$0xff]
        %v3463 = vld [vmem:[%s3461 + $0x8] sm:$0xff]
        %v3464 = vld [vmem:[%s3461 + $0x10] sm:$0xff]
        %v3465 = vld [vmem:[%s3461 + $0x18] sm:$0xff]
        %v3466 = vld [vmem:[%s3461 + $0x20] sm:$0xff]
        %v3467 = vld [vmem:[%s3461 + $0x28] sm:$0xff]
        %v3468 = vld [vmem:[%s3461 + $0x30] sm:$0xff]
        %v3469 = vld [vmem:[%s3461 + $0x38] sm:$0xff]
        %v3470 = vld [vmem:[%s3461 + $0x40] sm:$0xff]
        %v3471 = vld [vmem:[%s3461 + $0x48] sm:$0xff]
        %v3472 = vld [vmem:[%s3461 + $0x50] sm:$0xff]
        %v3473 = vld [vmem:[%s3461 + $0x58] sm:$0xff]
        %v3474 = vld [vmem:[%s3461 + $0x60] sm:$0xff]
        %v3475 = vld [vmem:[%s3461 + $0x68] sm:$0xff]
        %v3476 = vld [vmem:[%s3461 + $0x70] sm:$0xff]
        %v3477 = vld [vmem:[%s3461 + $0x78] sm:$0xff]
        %v3479 = vrot.slane %v3153, 1
        %v3480 = vrot.slane %v3145, 1
        %v3481 = vsel %vm619, %v3479, %v3480
        %v3482 = vrot.slane %v3155, 1
        %v3483 = vsel %vm619, %v3480, %v3482
        %3486 = vmatprep.subr.mxu0 0.0
        %3487 = vmatpush1.msra.mxu0 %v3462
        %3488 = vmatprep.subr.mxu0 0.0
        %3489 = vmatpush1.msra.mxu0 %v3463
        %3490 = vmatprep.subr.mxu0 0.0
        %3491 = vmatpush1.msra.mxu0 %v3464
        %3492 = vmatprep.subr.mxu0 0.0
        %3493 = vmatpush1.msra.mxu0 %v3465
        %3494 = vmatprep.subr.mxu0 0.0
        %3495 = vmatpush1.msra.mxu0 %v3466
        %3496 = vmatprep.subr.mxu0 0.0
        %3497 = vmatpush1.msra.mxu0 %v3467
        %3498 = vmatprep.subr.mxu0 0.0
        %3499 = vmatpush1.msra.mxu0 %v3468
        %3500 = vmatprep.subr.mxu0 0.0
        %3501 = vmatpush1.msra.mxu0 %v3469
        %3502 = vmatprep.subr.mxu0 0.0
        %3503 = vmatpush1.msra.mxu0 %v3470
        %3504 = vmatprep.subr.mxu0 0.0
        %3505 = vmatpush1.msra.mxu0 %v3471
        %3506 = vmatprep.subr.mxu0 0.0
        %3507 = vmatpush1.msra.mxu0 %v3472
        %3508 = vmatprep.subr.mxu0 0.0
        %3509 = vmatpush1.msra.mxu0 %v3473
        %3510 = vmatprep.subr.mxu0 0.0
        %3511 = vmatpush1.msra.mxu0 %v3474
        %3512 = vmatprep.subr.mxu0 0.0
        %3513 = vmatpush1.msra.mxu0 %v3475
        %3514 = vmatprep.subr.mxu0 0.0
        %3515 = vmatpush1.msra.mxu0 %v3476
        %3516 = vmatprep.subr.mxu0 0.0
        %3517 = vmatpush1.msra.mxu0 %v3477
        %3518 = vmatprep.subr.mxu0 0.0
        %3519 = vmatpush1.msra.mxu0 0.0
        %3520 = vmatprep.subr.mxu0 0.0
        %3521 = vmatpush1.msra.mxu0 0.0
        %3522 = vmatprep.subr.mxu0 0.0
        %3523 = vmatpush1.msra.mxu0 0.0
        %3524 = vmatprep.subr.mxu0 0.0
        %3525 = vmatpush1.msra.mxu0 0.0
        %3526 = vmatprep.subr.mxu0 0.0
        %3527 = vmatpush1.msra.mxu0 0.0
        %3528 = vmatprep.subr.mxu0 0.0
        %3529 = vmatpush1.msra.mxu0 0.0
        %3530 = vmatprep.subr.mxu0 0.0
        %3531 = vmatpush1.msra.mxu0 0.0
        %3532 = vmatprep.subr.mxu0 0.0
        %3533 = vmatpush1.msra.mxu0 0.0
        %3534 = vmatprep.subr.mxu0 0.0
        %3535 = vmatpush1.msra.mxu0 0.0
        %3536 = vmatprep.subr.mxu0 0.0
        %3537 = vmatpush1.msra.mxu0 0.0
        %3538 = vmatprep.subr.mxu0 0.0
        %3539 = vmatpush1.msra.mxu0 0.0
        %3540 = vmatprep.subr.mxu0 0.0
        %3541 = vmatpush1.msra.mxu0 0.0
        %3542 = vmatprep.subr.mxu0 0.0
        %3543 = vmatpush1.msra.mxu0 0.0
        %3544 = vmatprep.subr.mxu0 0.0
        %3545 = vmatpush1.msra.mxu0 0.0
        %3546 = vmatprep.subr.mxu0 0.0
        %3547 = vmatpush1.msra.mxu0 0.0
        %3548 = vmatprep.subr.mxu0 0.0
        %3549 = vmatpush1.msra.mxu0 0.0
        %3550 = vmatprep.mubr.f32.mxu0 0.0
        %3551 = vmatmul.mubr.f32.gmra.mrb[0].mxu0 %v3481
        %v3552 = vpop.f32.mrb[0].mxu0
        %v3553 = vadd.f32 0.0, %v3552
        %v3554 = vpop.f32.mrb[0].mxu0
        %3555 = vmatprep.mubr.f32.mxu0 0.0
        %3556 = vmatmul.mubr.f32.gmra.mrb[0].mxu0 %v3483
        %v3557 = vpop.f32.mrb[0].mxu0
        %v3558 = vadd.f32 0.0, %v3557
        %v3559 = vpop.f32.mrb[0].mxu0
        %3560 = vdwg.mxu0
        %v3561 = vadd.f32 %v3459, %v3553
        %v3562 = vadd.f32 %v3460, %v3558
        %s3563 = scalar_lea.vmem [#allocation5], 6272
        %v3564 = vld [vmem:[%s3563] sm:$0xff]
        %v3565 = vld [vmem:[%s3563 + $0x8] sm:$0xff]
        %v3566 = vld [vmem:[%s3563 + $0x10] sm:$0xff]
        %v3567 = vld [vmem:[%s3563 + $0x18] sm:$0xff]
        %v3568 = vld [vmem:[%s3563 + $0x20] sm:$0xff]
        %v3569 = vld [vmem:[%s3563 + $0x28] sm:$0xff]
        %v3570 = vld [vmem:[%s3563 + $0x30] sm:$0xff]
        %v3571 = vld [vmem:[%s3563 + $0x38] sm:$0xff]
        %v3572 = vld [vmem:[%s3563 + $0x40] sm:$0xff]
        %v3573 = vld [vmem:[%s3563 + $0x48] sm:$0xff]
        %v3574 = vld [vmem:[%s3563 + $0x50] sm:$0xff]
        %v3575 = vld [vmem:[%s3563 + $0x58] sm:$0xff]
        %v3576 = vld [vmem:[%s3563 + $0x60] sm:$0xff]
        %v3577 = vld [vmem:[%s3563 + $0x68] sm:$0xff]
        %v3578 = vld [vmem:[%s3563 + $0x70] sm:$0xff]
        %v3579 = vld [vmem:[%s3563 + $0x78] sm:$0xff]
        %v3581 = vrot.slane %v3154, 1
        %v3582 = vrot.slane %v3147, 1
        %v3583 = vsel %vm619, %v3581, %v3582
        %v3584 = vrot.slane %v3156, 1
        %v3585 = vsel %vm619, %v3582, %v3584
        %3586 = vrot.lane.b32.xlu0 %v3481, 120
        %v3587 = vpop.permute.xlu0 %3586
        %3588 = vrot.lane.b32.xlu0 %v3583, 120
        %v3589 = vpop.permute.xlu0 %3588
        %3590 = vrot.lane.b32.xlu0 %v3483, 120
        %v3591 = vpop.permute.xlu0 %3590
        %3592 = vrot.lane.b32.xlu0 %v3585, 120
        %v3593 = vpop.permute.xlu0 %3592
        %v3594 = vsel %vm339, %v3587, %v3589
        %v3595 = vsel %vm339, %v3591, %v3593
        %3598 = vmatprep.subr.mxu0 0.0
        %3599 = vmatpush1.msra.mxu0 %v3564
        %3600 = vmatprep.subr.mxu0 0.0
        %3601 = vmatpush1.msra.mxu0 %v3565
        %3602 = vmatprep.subr.mxu0 0.0
        %3603 = vmatpush1.msra.mxu0 %v3566
        %3604 = vmatprep.subr.mxu0 0.0
        %3605 = vmatpush1.msra.mxu0 %v3567
        %3606 = vmatprep.subr.mxu0 0.0
        %3607 = vmatpush1.msra.mxu0 %v3568
        %3608 = vmatprep.subr.mxu0 0.0
        %3609 = vmatpush1.msra.mxu0 %v3569
        %3610 = vmatprep.subr.mxu0 0.0
        %3611 = vmatpush1.msra.mxu0 %v3570
        %3612 = vmatprep.subr.mxu0 0.0
        %3613 = vmatpush1.msra.mxu0 %v3571
        %3614 = vmatprep.subr.mxu0 0.0
        %3615 = vmatpush1.msra.mxu0 %v3572
        %3616 = vmatprep.subr.mxu0 0.0
        %3617 = vmatpush1.msra.mxu0 %v3573
        %3618 = vmatprep.subr.mxu0 0.0
        %3619 = vmatpush1.msra.mxu0 %v3574
        %3620 = vmatprep.subr.mxu0 0.0
        %3621 = vmatpush1.msra.mxu0 %v3575
        %3622 = vmatprep.subr.mxu0 0.0
        %3623 = vmatpush1.msra.mxu0 %v3576
        %3624 = vmatprep.subr.mxu0 0.0
        %3625 = vmatpush1.msra.mxu0 %v3577
        %3626 = vmatprep.subr.mxu0 0.0
        %3627 = vmatpush1.msra.mxu0 %v3578
        %3628 = vmatprep.subr.mxu0 0.0
        %3629 = vmatpush1.msra.mxu0 %v3579
        %3630 = vmatprep.subr.mxu0 0.0
        %3631 = vmatpush1.msra.mxu0 0.0
        %3632 = vmatprep.subr.mxu0 0.0
        %3633 = vmatpush1.msra.mxu0 0.0
        %3634 = vmatprep.subr.mxu0 0.0
        %3635 = vmatpush1.msra.mxu0 0.0
        %3636 = vmatprep.subr.mxu0 0.0
        %3637 = vmatpush1.msra.mxu0 0.0
        %3638 = vmatprep.subr.mxu0 0.0
        %3639 = vmatpush1.msra.mxu0 0.0
        %3640 = vmatprep.subr.mxu0 0.0
        %3641 = vmatpush1.msra.mxu0 0.0
        %3642 = vmatprep.subr.mxu0 0.0
        %3643 = vmatpush1.msra.mxu0 0.0
        %3644 = vmatprep.subr.mxu0 0.0
        %3645 = vmatpush1.msra.mxu0 0.0
        %3646 = vmatprep.subr.mxu0 0.0
        %3647 = vmatpush1.msra.mxu0 0.0
        %3648 = vmatprep.subr.mxu0 0.0
        %3649 = vmatpush1.msra.mxu0 0.0
        %3650 = vmatprep.subr.mxu0 0.0
        %3651 = vmatpush1.msra.mxu0 0.0
        %3652 = vmatprep.subr.mxu0 0.0
        %3653 = vmatpush1.msra.mxu0 0.0
        %3654 = vmatprep.subr.mxu0 0.0
        %3655 = vmatpush1.msra.mxu0 0.0
        %3656 = vmatprep.subr.mxu0 0.0
        %3657 = vmatpush1.msra.mxu0 0.0
        %3658 = vmatprep.subr.mxu0 0.0
        %3659 = vmatpush1.msra.mxu0 0.0
        %3660 = vmatprep.subr.mxu0 0.0
        %3661 = vmatpush1.msra.mxu0 0.0
        %3662 = vmatprep.mubr.f32.mxu0 0.0
        %3663 = vmatmul.mubr.f32.gmra.mrb[0].mxu0 %v3594
        %v3664 = vpop.f32.mrb[0].mxu0
        %v3665 = vadd.f32 0.0, %v3664
        %v3666 = vpop.f32.mrb[0].mxu0
        %3667 = vmatprep.mubr.f32.mxu0 0.0
        %3668 = vmatmul.mubr.f32.gmra.mrb[0].mxu0 %v3595
        %v3669 = vpop.f32.mrb[0].mxu0
        %v3670 = vadd.f32 0.0, %v3669
        %v3671 = vpop.f32.mrb[0].mxu0
        %3672 = vdwg.mxu0
        %v3673 = vadd.f32 %v3561, %v3665
        %v3674 = vadd.f32 %v3562, %v3670
        %s3675 = scalar_lea.vmem [#allocation5], 6400
        %v3676 = vld [vmem:[%s3675] sm:$0xff]
        %v3677 = vld [vmem:[%s3675 + $0x8] sm:$0xff]
        %v3678 = vld [vmem:[%s3675 + $0x10] sm:$0xff]
        %v3679 = vld [vmem:[%s3675 + $0x18] sm:$0xff]
        %v3680 = vld [vmem:[%s3675 + $0x20] sm:$0xff]
        %v3681 = vld [vmem:[%s3675 + $0x28] sm:$0xff]
        %v3682 = vld [vmem:[%s3675 + $0x30] sm:$0xff]
        %v3683 = vld [vmem:[%s3675 + $0x38] sm:$0xff]
        %v3684 = vld [vmem:[%s3675 + $0x40] sm:$0xff]
        %v3685 = vld [vmem:[%s3675 + $0x48] sm:$0xff]
        %v3686 = vld [vmem:[%s3675 + $0x50] sm:$0xff]
        %v3687 = vld [vmem:[%s3675 + $0x58] sm:$0xff]
        %v3688 = vld [vmem:[%s3675 + $0x60] sm:$0xff]
        %v3689 = vld [vmem:[%s3675 + $0x68] sm:$0xff]
        %v3690 = vld [vmem:[%s3675 + $0x70] sm:$0xff]
        %v3691 = vld [vmem:[%s3675 + $0x78] sm:$0xff]
        %3692 = vrot.lane.b32.xlu0 %v3481, 112
        %v3693 = vpop.permute.xlu0 %3692
        %3694 = vrot.lane.b32.xlu0 %v3583, 112
        %v3695 = vpop.permute.xlu0 %3694
        %3696 = vrot.lane.b32.xlu0 %v3483, 112
        %v3697 = vpop.permute.xlu0 %3696
        %3698 = vrot.lane.b32.xlu0 %v3585, 112
        %v3699 = vpop.permute.xlu0 %3698
        %v3700 = vsel %vm519, %v3693, %v3695
        %v3701 = vsel %vm519, %v3697, %v3699
        %3704 = vmatprep.subr.mxu0 0.0
        %3705 = vmatpush1.msra.mxu0 %v3676
        %3706 = vmatprep.subr.mxu0 0.0
        %3707 = vmatpush1.msra.mxu0 %v3677
        %3708 = vmatprep.subr.mxu0 0.0
        %3709 = vmatpush1.msra.mxu0 %v3678
        %3710 = vmatprep.subr.mxu0 0.0
        %3711 = vmatpush1.msra.mxu0 %v3679
        %3712 = vmatprep.subr.mxu0 0.0
        %3713 = vmatpush1.msra.mxu0 %v3680
        %3714 = vmatprep.subr.mxu0 0.0
        %3715 = vmatpush1.msra.mxu0 %v3681
        %3716 = vmatprep.subr.mxu0 0.0
        %3717 = vmatpush1.msra.mxu0 %v3682
        %3718 = vmatprep.subr.mxu0 0.0
        %3719 = vmatpush1.msra.mxu0 %v3683
        %3720 = vmatprep.subr.mxu0 0.0
        %3721 = vmatpush1.msra.mxu0 %v3684
        %3722 = vmatprep.subr.mxu0 0.0
        %3723 = vmatpush1.msra.mxu0 %v3685
        %3724 = vmatprep.subr.mxu0 0.0
        %3725 = vmatpush1.msra.mxu0 %v3686
        %3726 = vmatprep.subr.mxu0 0.0
        %3727 = vmatpush1.msra.mxu0 %v3687
        %3728 = vmatprep.subr.mxu0 0.0
        %3729 = vmatpush1.msra.mxu0 %v3688
        %3730 = vmatprep.subr.mxu0 0.0
        %3731 = vmatpush1.msra.mxu0 %v3689
        %3732 = vmatprep.subr.mxu0 0.0
        %3733 = vmatpush1.msra.mxu0 %v3690
        %3734 = vmatprep.subr.mxu0 0.0
        %3735 = vmatpush1.msra.mxu0 %v3691
        %3736 = vmatprep.subr.mxu0 0.0
        %3737 = vmatpush1.msra.mxu0 0.0
        %3738 = vmatprep.subr.mxu0 0.0
        %3739 = vmatpush1.msra.mxu0 0.0
        %3740 = vmatprep.subr.mxu0 0.0
        %3741 = vmatpush1.msra.mxu0 0.0
        %3742 = vmatprep.subr.mxu0 0.0
        %3743 = vmatpush1.msra.mxu0 0.0
        %3744 = vmatprep.subr.mxu0 0.0
        %3745 = vmatpush1.msra.mxu0 0.0
        %3746 = vmatprep.subr.mxu0 0.0
        %3747 = vmatpush1.msra.mxu0 0.0
        %3748 = vmatprep.subr.mxu0 0.0
        %3749 = vmatpush1.msra.mxu0 0.0
        %3750 = vmatprep.subr.mxu0 0.0
        %3751 = vmatpush1.msra.mxu0 0.0
        %3752 = vmatprep.subr.mxu0 0.0
        %3753 = vmatpush1.msra.mxu0 0.0
        %3754 = vmatprep.subr.mxu0 0.0
        %3755 = vmatpush1.msra.mxu0 0.0
        %3756 = vmatprep.subr.mxu0 0.0
        %3757 = vmatpush1.msra.mxu0 0.0
        %3758 = vmatprep.subr.mxu0 0.0
        %3759 = vmatpush1.msra.mxu0 0.0
        %3760 = vmatprep.subr.mxu0 0.0
        %3761 = vmatpush1.msra.mxu0 0.0
        %3762 = vmatprep.subr.mxu0 0.0
        %3763 = vmatpush1.msra.mxu0 0.0
        %3764 = vmatprep.subr.mxu0 0.0
        %3765 = vmatpush1.msra.mxu0 0.0
        %3766 = vmatprep.subr.mxu0 0.0
        %3767 = vmatpush1.msra.mxu0 0.0
        %3768 = vmatprep.mubr.f32.mxu0 0.0
        %3769 = vmatmul.mubr.f32.gmra.mrb[0].mxu0 %v3700
        %v3770 = vpop.f32.mrb[0].mxu0
        %v3771 = vadd.f32 0.0, %v3770
        %v3772 = vpop.f32.mrb[0].mxu0
        %3773 = vmatprep.mubr.f32.mxu0 0.0
        %3774 = vmatmul.mubr.f32.gmra.mrb[0].mxu0 %v3701
        %v3775 = vpop.f32.mrb[0].mxu0
        %v3776 = vadd.f32 0.0, %v3775
        %v3777 = vpop.f32.mrb[0].mxu0
        %3778 = vdwg.mxu0
        %v3779 = vadd.f32 %v3673, %v3771
        %v3780 = vadd.f32 %v3674, %v3776
        %s3781 = scalar_lea.vmem [#allocation5], 6528
        %v3782 = vld [vmem:[%s3781] sm:$0xff]
        %v3783 = vld [vmem:[%s3781 + $0x8] sm:$0xff]
        %v3784 = vld [vmem:[%s3781 + $0x10] sm:$0xff]
        %v3785 = vld [vmem:[%s3781 + $0x18] sm:$0xff]
        %v3786 = vld [vmem:[%s3781 + $0x20] sm:$0xff]
        %v3787 = vld [vmem:[%s3781 + $0x28] sm:$0xff]
        %v3788 = vld [vmem:[%s3781 + $0x30] sm:$0xff]
        %v3789 = vld [vmem:[%s3781 + $0x38] sm:$0xff]
        %v3790 = vld [vmem:[%s3781 + $0x40] sm:$0xff]
        %v3791 = vld [vmem:[%s3781 + $0x48] sm:$0xff]
        %v3792 = vld [vmem:[%s3781 + $0x50] sm:$0xff]
        %v3793 = vld [vmem:[%s3781 + $0x58] sm:$0xff]
        %v3794 = vld [vmem:[%s3781 + $0x60] sm:$0xff]
        %v3795 = vld [vmem:[%s3781 + $0x68] sm:$0xff]
        %v3796 = vld [vmem:[%s3781 + $0x70] sm:$0xff]
        %v3797 = vld [vmem:[%s3781 + $0x78] sm:$0xff]
        %v3798 = vrot.slane %v3153, 2
        %v3799 = vrot.slane %v3145, 2
        %v3800 = vsel %vm939, %v3798, %v3799
        %v3801 = vrot.slane %v3155, 2
        %v3802 = vsel %vm939, %v3799, %v3801
        %3805 = vmatprep.subr.mxu0 0.0
        %3806 = vmatpush1.msra.mxu0 %v3782
        %3807 = vmatprep.subr.mxu0 0.0
        %3808 = vmatpush1.msra.mxu0 %v3783
        %3809 = vmatprep.subr.mxu0 0.0
        %3810 = vmatpush1.msra.mxu0 %v3784
        %3811 = vmatprep.subr.mxu0 0.0
        %3812 = vmatpush1.msra.mxu0 %v3785
        %3813 = vmatprep.subr.mxu0 0.0
        %3814 = vmatpush1.msra.mxu0 %v3786
        %3815 = vmatprep.subr.mxu0 0.0
        %3816 = vmatpush1.msra.mxu0 %v3787
        %3817 = vmatprep.subr.mxu0 0.0
        %3818 = vmatpush1.msra.mxu0 %v3788
        %3819 = vmatprep.subr.mxu0 0.0
        %3820 = vmatpush1.msra.mxu0 %v3789
        %3821 = vmatprep.subr.mxu0 0.0
        %3822 = vmatpush1.msra.mxu0 %v3790
        %3823 = vmatprep.subr.mxu0 0.0
        %3824 = vmatpush1.msra.mxu0 %v3791
        %3825 = vmatprep.subr.mxu0 0.0
        %3826 = vmatpush1.msra.mxu0 %v3792
        %3827 = vmatprep.subr.mxu0 0.0
        %3828 = vmatpush1.msra.mxu0 %v3793
        %3829 = vmatprep.subr.mxu0 0.0
        %3830 = vmatpush1.msra.mxu0 %v3794
        %3831 = vmatprep.subr.mxu0 0.0
        %3832 = vmatpush1.msra.mxu0 %v3795
        %3833 = vmatprep.subr.mxu0 0.0
        %3834 = vmatpush1.msra.mxu0 %v3796
        %3835 = vmatprep.subr.mxu0 0.0
        %3836 = vmatpush1.msra.mxu0 %v3797
        %3837 = vmatprep.subr.mxu0 0.0
        %3838 = vmatpush1.msra.mxu0 0.0
        %3839 = vmatprep.subr.mxu0 0.0
        %3840 = vmatpush1.msra.mxu0 0.0
        %3841 = vmatprep.subr.mxu0 0.0
        %3842 = vmatpush1.msra.mxu0 0.0
        %3843 = vmatprep.subr.mxu0 0.0
        %3844 = vmatpush1.msra.mxu0 0.0
        %3845 = vmatprep.subr.mxu0 0.0
        %3846 = vmatpush1.msra.mxu0 0.0
        %3847 = vmatprep.subr.mxu0 0.0
        %3848 = vmatpush1.msra.mxu0 0.0
        %3849 = vmatprep.subr.mxu0 0.0
        %3850 = vmatpush1.msra.mxu0 0.0
        %3851 = vmatprep.subr.mxu0 0.0
        %3852 = vmatpush1.msra.mxu0 0.0
        %3853 = vmatprep.subr.mxu0 0.0
        %3854 = vmatpush1.msra.mxu0 0.0
        %3855 = vmatprep.subr.mxu0 0.0
        %3856 = vmatpush1.msra.mxu0 0.0
        %3857 = vmatprep.subr.mxu0 0.0
        %3858 = vmatpush1.msra.mxu0 0.0
        %3859 = vmatprep.subr.mxu0 0.0
        %3860 = vmatpush1.msra.mxu0 0.0
        %3861 = vmatprep.subr.mxu0 0.0
        %3862 = vmatpush1.msra.mxu0 0.0
        %3863 = vmatprep.subr.mxu0 0.0
        %3864 = vmatpush1.msra.mxu0 0.0
        %3865 = vmatprep.subr.mxu0 0.0
        %3866 = vmatpush1.msra.mxu0 0.0
        %3867 = vmatprep.subr.mxu0 0.0
        %3868 = vmatpush1.msra.mxu0 0.0
        %3869 = vmatprep.mubr.f32.mxu0 0.0
        %3870 = vmatmul.mubr.f32.gmra.mrb[0].mxu0 %v3800
        %v3871 = vpop.f32.mrb[0].mxu0
        %v3872 = vadd.f32 0.0, %v3871
        %v3873 = vpop.f32.mrb[0].mxu0
        %3874 = vmatprep.mubr.f32.mxu0 0.0
        %3875 = vmatmul.mubr.f32.gmra.mrb[0].mxu0 %v3802
        %v3876 = vpop.f32.mrb[0].mxu0
        %v3877 = vadd.f32 0.0, %v3876
        %v3878 = vpop.f32.mrb[0].mxu0
        %3879 = vdwg.mxu0
        %v3880 = vadd.f32 %v3779, %v3872
        %v3881 = vadd.f32 %v3780, %v3877
        %s3882 = scalar_lea.vmem [#allocation5], 6656
        %v3883 = vld [vmem:[%s3882] sm:$0xff]
        %v3884 = vld [vmem:[%s3882 + $0x8] sm:$0xff]
        %v3885 = vld [vmem:[%s3882 + $0x10] sm:$0xff]
        %v3886 = vld [vmem:[%s3882 + $0x18] sm:$0xff]
        %v3887 = vld [vmem:[%s3882 + $0x20] sm:$0xff]
        %v3888 = vld [vmem:[%s3882 + $0x28] sm:$0xff]
        %v3889 = vld [vmem:[%s3882 + $0x30] sm:$0xff]
        %v3890 = vld [vmem:[%s3882 + $0x38] sm:$0xff]
        %v3891 = vld [vmem:[%s3882 + $0x40] sm:$0xff]
        %v3892 = vld [vmem:[%s3882 + $0x48] sm:$0xff]
        %v3893 = vld [vmem:[%s3882 + $0x50] sm:$0xff]
        %v3894 = vld [vmem:[%s3882 + $0x58] sm:$0xff]
        %v3895 = vld [vmem:[%s3882 + $0x60] sm:$0xff]
        %v3896 = vld [vmem:[%s3882 + $0x68] sm:$0xff]
        %v3897 = vld [vmem:[%s3882 + $0x70] sm:$0xff]
        %v3898 = vld [vmem:[%s3882 + $0x78] sm:$0xff]
        %v3899 = vrot.slane %v3154, 2
        %v3900 = vrot.slane %v3147, 2
        %v3901 = vsel %vm939, %v3899, %v3900
        %v3902 = vrot.slane %v3156, 2
        %v3903 = vsel %vm939, %v3900, %v3902
        %3904 = vrot.lane.b32.xlu0 %v3800, 120
        %v3905 = vpop.permute.xlu0 %3904
        %3906 = vrot.lane.b32.xlu0 %v3901, 120
        %v3907 = vpop.permute.xlu0 %3906
        %3908 = vrot.lane.b32.xlu0 %v3802, 120
        %v3909 = vpop.permute.xlu0 %3908
        %3910 = vrot.lane.b32.xlu0 %v3903, 120
        %v3911 = vpop.permute.xlu0 %3910
        %v3912 = vsel %vm339, %v3905, %v3907
        %v3913 = vsel %vm339, %v3909, %v3911
        %3916 = vmatprep.subr.mxu0 0.0
        %3917 = vmatpush1.msra.mxu0 %v3883
        %3918 = vmatprep.subr.mxu0 0.0
        %3919 = vmatpush1.msra.mxu0 %v3884
        %3920 = vmatprep.subr.mxu0 0.0
        %3921 = vmatpush1.msra.mxu0 %v3885
        %3922 = vmatprep.subr.mxu0 0.0
        %3923 = vmatpush1.msra.mxu0 %v3886
        %3924 = vmatprep.subr.mxu0 0.0
        %3925 = vmatpush1.msra.mxu0 %v3887
        %3926 = vmatprep.subr.mxu0 0.0
        %3927 = vmatpush1.msra.mxu0 %v3888
        %3928 = vmatprep.subr.mxu0 0.0
        %3929 = vmatpush1.msra.mxu0 %v3889
        %3930 = vmatprep.subr.mxu0 0.0
        %3931 = vmatpush1.msra.mxu0 %v3890
        %3932 = vmatprep.subr.mxu0 0.0
        %3933 = vmatpush1.msra.mxu0 %v3891
        %3934 = vmatprep.subr.mxu0 0.0
        %3935 = vmatpush1.msra.mxu0 %v3892
        %3936 = vmatprep.subr.mxu0 0.0
        %3937 = vmatpush1.msra.mxu0 %v3893
        %3938 = vmatprep.subr.mxu0 0.0
        %3939 = vmatpush1.msra.mxu0 %v3894
        %3940 = vmatprep.subr.mxu0 0.0
        %3941 = vmatpush1.msra.mxu0 %v3895
        %3942 = vmatprep.subr.mxu0 0.0
        %3943 = vmatpush1.msra.mxu0 %v3896
        %3944 = vmatprep.subr.mxu0 0.0
        %3945 = vmatpush1.msra.mxu0 %v3897
        %3946 = vmatprep.subr.mxu0 0.0
        %3947 = vmatpush1.msra.mxu0 %v3898
        %3948 = vmatprep.subr.mxu0 0.0
        %3949 = vmatpush1.msra.mxu0 0.0
        %3950 = vmatprep.subr.mxu0 0.0
        %3951 = vmatpush1.msra.mxu0 0.0
        %3952 = vmatprep.subr.mxu0 0.0
        %3953 = vmatpush1.msra.mxu0 0.0
        %3954 = vmatprep.subr.mxu0 0.0
        %3955 = vmatpush1.msra.mxu0 0.0
        %3956 = vmatprep.subr.mxu0 0.0
        %3957 = vmatpush1.msra.mxu0 0.0
        %3958 = vmatprep.subr.mxu0 0.0
        %3959 = vmatpush1.msra.mxu0 0.0
        %3960 = vmatprep.subr.mxu0 0.0
        %3961 = vmatpush1.msra.mxu0 0.0
        %3962 = vmatprep.subr.mxu0 0.0
        %3963 = vmatpush1.msra.mxu0 0.0
        %3964 = vmatprep.subr.mxu0 0.0
        %3965 = vmatpush1.msra.mxu0 0.0
        %3966 = vmatprep.subr.mxu0 0.0
        %3967 = vmatpush1.msra.mxu0 0.0
        %3968 = vmatprep.subr.mxu0 0.0
        %3969 = vmatpush1.msra.mxu0 0.0
        %3970 = vmatprep.subr.mxu0 0.0
        %3971 = vmatpush1.msra.mxu0 0.0
        %3972 = vmatprep.subr.mxu0 0.0
        %3973 = vmatpush1.msra.mxu0 0.0
        %3974 = vmatprep.subr.mxu0 0.0
        %3975 = vmatpush1.msra.mxu0 0.0
        %3976 = vmatprep.subr.mxu0 0.0
        %3977 = vmatpush1.msra.mxu0 0.0
        %3978 = vmatprep.subr.mxu0 0.0
        %3979 = vmatpush1.msra.mxu0 0.0
        %3980 = vmatprep.mubr.f32.mxu0 0.0
        %3981 = vmatmul.mubr.f32.gmra.mrb[0].mxu0 %v3912
        %v3982 = vpop.f32.mrb[0].mxu0
        %v3983 = vadd.f32 0.0, %v3982
        %v3984 = vpop.f32.mrb[0].mxu0
        %3985 = vmatprep.mubr.f32.mxu0 0.0
        %3986 = vmatmul.mubr.f32.gmra.mrb[0].mxu0 %v3913
        %v3987 = vpop.f32.mrb[0].mxu0
        %v3988 = vadd.f32 0.0, %v3987
        %v3989 = vpop.f32.mrb[0].mxu0
        %3990 = vdwg.mxu0
        %v3991 = vadd.f32 %v3880, %v3983
        %v3992 = vadd.f32 %v3881, %v3988
        %s3993 = scalar_lea.vmem [#allocation5], 6784
        %v3994 = vld [vmem:[%s3993] sm:$0xff]
        %v3995 = vld [vmem:[%s3993 + $0x8] sm:$0xff]
        %v3996 = vld [vmem:[%s3993 + $0x10] sm:$0xff]
        %v3997 = vld [vmem:[%s3993 + $0x18] sm:$0xff]
        %v3998 = vld [vmem:[%s3993 + $0x20] sm:$0xff]
        %v3999 = vld [vmem:[%s3993 + $0x28] sm:$0xff]
        %v4000 = vld [vmem:[%s3993 + $0x30] sm:$0xff]
        %v4001 = vld [vmem:[%s3993 + $0x38] sm:$0xff]
        %v4002 = vld [vmem:[%s3993 + $0x40] sm:$0xff]
        %v4003 = vld [vmem:[%s3993 + $0x48] sm:$0xff]
        %v4004 = vld [vmem:[%s3993 + $0x50] sm:$0xff]
        %v4005 = vld [vmem:[%s3993 + $0x58] sm:$0xff]
        %v4006 = vld [vmem:[%s3993 + $0x60] sm:$0xff]
        %v4007 = vld [vmem:[%s3993 + $0x68] sm:$0xff]
        %v4008 = vld [vmem:[%s3993 + $0x70] sm:$0xff]
        %v4009 = vld [vmem:[%s3993 + $0x78] sm:$0xff]
        %4010 = vrot.lane.b32.xlu0 %v3800, 112
        %v4011 = vpop.permute.xlu0 %4010
        %4012 = vrot.lane.b32.xlu0 %v3901, 112
        %v4013 = vpop.permute.xlu0 %4012
        %4014 = vrot.lane.b32.xlu0 %v3802, 112
        %v4015 = vpop.permute.xlu0 %4014
        %4016 = vrot.lane.b32.xlu0 %v3903, 112
        %v4017 = vpop.permute.xlu0 %4016
        %v4018 = vsel %vm519, %v4011, %v4013
        %v4019 = vsel %vm519, %v4015, %v4017
        %4022 = vmatprep.subr.mxu0 0.0
        %4023 = vmatpush1.msra.mxu0 %v3994
        %4024 = vmatprep.subr.mxu0 0.0
        %4025 = vmatpush1.msra.mxu0 %v3995
        %4026 = vmatprep.subr.mxu0 0.0
        %4027 = vmatpush1.msra.mxu0 %v3996
        %4028 = vmatprep.subr.mxu0 0.0
        %4029 = vmatpush1.msra.mxu0 %v3997
        %4030 = vmatprep.subr.mxu0 0.0
        %4031 = vmatpush1.msra.mxu0 %v3998
        %4032 = vmatprep.subr.mxu0 0.0
        %4033 = vmatpush1.msra.mxu0 %v3999
        %4034 = vmatprep.subr.mxu0 0.0
        %4035 = vmatpush1.msra.mxu0 %v4000
        %4036 = vmatprep.subr.mxu0 0.0
        %4037 = vmatpush1.msra.mxu0 %v4001
        %4038 = vmatprep.subr.mxu0 0.0
        %4039 = vmatpush1.msra.mxu0 %v4002
        %4040 = vmatprep.subr.mxu0 0.0
        %4041 = vmatpush1.msra.mxu0 %v4003
        %4042 = vmatprep.subr.mxu0 0.0
        %4043 = vmatpush1.msra.mxu0 %v4004
        %4044 = vmatprep.subr.mxu0 0.0
        %4045 = vmatpush1.msra.mxu0 %v4005
        %4046 = vmatprep.subr.mxu0 0.0
        %4047 = vmatpush1.msra.mxu0 %v4006
        %4048 = vmatprep.subr.mxu0 0.0
        %4049 = vmatpush1.msra.mxu0 %v4007
        %4050 = vmatprep.subr.mxu0 0.0
        %4051 = vmatpush1.msra.mxu0 %v4008
        %4052 = vmatprep.subr.mxu0 0.0
        %4053 = vmatpush1.msra.mxu0 %v4009
        %4054 = vmatprep.subr.mxu0 0.0
        %4055 = vmatpush1.msra.mxu0 0.0
        %4056 = vmatprep.subr.mxu0 0.0
        %4057 = vmatpush1.msra.mxu0 0.0
        %4058 = vmatprep.subr.mxu0 0.0
        %4059 = vmatpush1.msra.mxu0 0.0
        %4060 = vmatprep.subr.mxu0 0.0
        %4061 = vmatpush1.msra.mxu0 0.0
        %4062 = vmatprep.subr.mxu0 0.0
        %4063 = vmatpush1.msra.mxu0 0.0
        %4064 = vmatprep.subr.mxu0 0.0
        %4065 = vmatpush1.msra.mxu0 0.0
        %4066 = vmatprep.subr.mxu0 0.0
        %4067 = vmatpush1.msra.mxu0 0.0
        %4068 = vmatprep.subr.mxu0 0.0
        %4069 = vmatpush1.msra.mxu0 0.0
        %4070 = vmatprep.subr.mxu0 0.0
        %4071 = vmatpush1.msra.mxu0 0.0
        %4072 = vmatprep.subr.mxu0 0.0
        %4073 = vmatpush1.msra.mxu0 0.0
        %4074 = vmatprep.subr.mxu0 0.0
        %4075 = vmatpush1.msra.mxu0 0.0
        %4076 = vmatprep.subr.mxu0 0.0
        %4077 = vmatpush1.msra.mxu0 0.0
        %4078 = vmatprep.subr.mxu0 0.0
        %4079 = vmatpush1.msra.mxu0 0.0
        %4080 = vmatprep.subr.mxu0 0.0
        %4081 = vmatpush1.msra.mxu0 0.0
        %4082 = vmatprep.subr.mxu0 0.0
        %4083 = vmatpush1.msra.mxu0 0.0
        %4084 = vmatprep.subr.mxu0 0.0
        %4085 = vmatpush1.msra.mxu0 0.0
        %4086 = vmatprep.mubr.f32.mxu0 0.0
        %4087 = vmatmul.mubr.f32.gmra.mrb[0].mxu0 %v4018
        %v4088 = vpop.f32.mrb[0].mxu0
        %v4089 = vadd.f32 0.0, %v4088
        %v4090 = vpop.f32.mrb[0].mxu0
        %4091 = vmatprep.mubr.f32.mxu0 0.0
        %4092 = vmatmul.mubr.f32.gmra.mrb[0].mxu0 %v4019
        %v4093 = vpop.f32.mrb[0].mxu0
        %v4094 = vadd.f32 0.0, %v4093
        %v4095 = vpop.f32.mrb[0].mxu0
        %4096 = vdwg.mxu0
        %v4097 = vadd.f32 %v3991, %v4089
        %v4098 = vadd.f32 %v3992, %v4094
        %s4099 = scalar_lea.vmem [#allocation7], 5
        %v4100 = vld [vmem:[%s4099] sm:$0x1]
        %v4102 = vlaneseq
        %v4103 = vshrl.u32 %v4102, 7
        %v4104 = vsub.s32 0, %v4103
        %v4105 = vrot.slane %v4100, %v4104
        %v4107 = vmul.f32 %v4097, %v4105
        %v4108 = vmul.f32 %v4098, %v4105
        %s4109 = scalar_lea.vmem [#allocation8], 5
        %v4110 = vld [vmem:[%s4109] sm:$0x1]
        %v4112 = vlaneseq
        %v4113 = vshrl.u32 %v4112, 7
        %v4114 = vsub.s32 0, %v4113
        %v4115 = vrot.slane %v4110, %v4114
        %v4117 = vadd.f32 %v4107, %v4115
        %v4118 = vadd.f32 %v4108, %v4115
        %v4119 = vmax.f32 %v4117, 0.0
        %v4120 = vmax.f32 %v4118, 0.0
        %v4121 = vld [vmem:[#allocation5] sm:$0xff]
        %v4122 = vld [vmem:[#allocation5 + $0x8] sm:$0xff]
        %v4123 = vld [vmem:[#allocation5 + $0x10] sm:$0xff]
        %v4124 = vld [vmem:[#allocation5 + $0x18] sm:$0xff]
        %v4125 = vld [vmem:[#allocation5 + $0x20] sm:$0xff]
        %v4126 = vld [vmem:[#allocation5 + $0x28] sm:$0xff]
        %v4127 = vld [vmem:[#allocation5 + $0x30] sm:$0xff]
        %v4128 = vld [vmem:[#allocation5 + $0x38] sm:$0xff]
        %v4129 = vld [vmem:[#allocation5 + $0x40] sm:$0xff]
        %v4130 = vld [vmem:[#allocation5 + $0x48] sm:$0xff]
        %v4131 = vld [vmem:[#allocation5 + $0x50] sm:$0xff]
        %v4132 = vld [vmem:[#allocation5 + $0x58] sm:$0xff]
        %v4133 = vld [vmem:[#allocation5 + $0x60] sm:$0xff]
        %v4134 = vld [vmem:[#allocation5 + $0x68] sm:$0xff]
        %v4135 = vld [vmem:[#allocation5 + $0x70] sm:$0xff]
        %v4136 = vld [vmem:[#allocation5 + $0x78] sm:$0xff]
        %s4137 = scalar_lea.vmem [#allocation5], 128
        %v4138 = vld [vmem:[%s4137] sm:$0xff]
        %v4139 = vld [vmem:[%s4137 + $0x8] sm:$0xff]
        %v4140 = vld [vmem:[%s4137 + $0x10] sm:$0xff]
        %v4141 = vld [vmem:[%s4137 + $0x18] sm:$0xff]
        %v4142 = vld [vmem:[%s4137 + $0x20] sm:$0xff]
        %v4143 = vld [vmem:[%s4137 + $0x28] sm:$0xff]
        %v4144 = vld [vmem:[%s4137 + $0x30] sm:$0xff]
        %v4145 = vld [vmem:[%s4137 + $0x38] sm:$0xff]
        %v4146 = vld [vmem:[%s4137 + $0x40] sm:$0xff]
        %v4147 = vld [vmem:[%s4137 + $0x48] sm:$0xff]
        %v4148 = vld [vmem:[%s4137 + $0x50] sm:$0xff]
        %v4149 = vld [vmem:[%s4137 + $0x58] sm:$0xff]
        %v4150 = vld [vmem:[%s4137 + $0x60] sm:$0xff]
        %v4151 = vld [vmem:[%s4137 + $0x68] sm:$0xff]
        %v4152 = vld [vmem:[%s4137 + $0x70] sm:$0xff]
        %v4153 = vld [vmem:[%s4137 + $0x78] sm:$0xff]
        %4154 = vmatprep.subr.mxu0 0.0
        %4155 = vmatpush1.msra.mxu0 %v4138
        %4156 = vmatprep.subr.mxu0 0.0
        %4157 = vmatpush1.msra.mxu0 %v4139
        %4158 = vmatprep.subr.mxu0 0.0
        %4159 = vmatpush1.msra.mxu0 %v4140
        %4160 = vmatprep.subr.mxu0 0.0
        %4161 = vmatpush1.msra.mxu0 %v4141
        %4162 = vmatprep.subr.mxu0 0.0
        %4163 = vmatpush1.msra.mxu0 %v4142
        %4164 = vmatprep.subr.mxu0 0.0
        %4165 = vmatpush1.msra.mxu0 %v4143
        %4166 = vmatprep.subr.mxu0 0.0
        %4167 = vmatpush1.msra.mxu0 %v4144
        %4168 = vmatprep.subr.mxu0 0.0
        %4169 = vmatpush1.msra.mxu0 %v4145
        %4170 = vmatprep.subr.mxu0 0.0
        %4171 = vmatpush1.msra.mxu0 %v4146
        %4172 = vmatprep.subr.mxu0 0.0
        %4173 = vmatpush1.msra.mxu0 %v4147
        %4174 = vmatprep.subr.mxu0 0.0
        %4175 = vmatpush1.msra.mxu0 %v4148
        %4176 = vmatprep.subr.mxu0 0.0
        %4177 = vmatpush1.msra.mxu0 %v4149
        %4178 = vmatprep.subr.mxu0 0.0
        %4179 = vmatpush1.msra.mxu0 %v4150
        %4180 = vmatprep.subr.mxu0 0.0
        %4181 = vmatpush1.msra.mxu0 %v4151
        %4182 = vmatprep.subr.mxu0 0.0
        %4183 = vmatpush1.msra.mxu0 %v4152
        %4184 = vmatprep.subr.mxu0 0.0
        %4185 = vmatpush1.msra.mxu0 %v4153
        %4186 = vmatprep.subr.mxu0 0.0
        %4187 = vmatpush1.msra.mxu0 0.0
        %4188 = vmatprep.subr.mxu0 0.0
        %4189 = vmatpush1.msra.mxu0 0.0
        %4190 = vmatprep.subr.mxu0 0.0
        %4191 = vmatpush1.msra.mxu0 0.0
        %4192 = vmatprep.subr.mxu0 0.0
        %4193 = vmatpush1.msra.mxu0 0.0
        %4194 = vmatprep.subr.mxu0 0.0
        %4195 = vmatpush1.msra.mxu0 0.0
        %4196 = vmatprep.subr.mxu0 0.0
        %4197 = vmatpush1.msra.mxu0 0.0
        %4198 = vmatprep.subr.mxu0 0.0
        %4199 = vmatpush1.msra.mxu0 0.0
        %4200 = vmatprep.subr.mxu0 0.0
        %4201 = vmatpush1.msra.mxu0 0.0
        %4202 = vmatprep.subr.mxu0 0.0
        %4203 = vmatpush1.msra.mxu0 0.0
        %4204 = vmatprep.subr.mxu0 0.0
        %4205 = vmatpush1.msra.mxu0 0.0
        %4206 = vmatprep.subr.mxu0 0.0
        %4207 = vmatpush1.msra.mxu0 0.0
        %4208 = vmatprep.subr.mxu0 0.0
        %4209 = vmatpush1.msra.mxu0 0.0
        %4210 = vmatprep.subr.mxu0 0.0
        %4211 = vmatpush1.msra.mxu0 0.0
        %4212 = vmatprep.subr.mxu0 0.0
        %4213 = vmatpush1.msra.mxu0 0.0
        %4214 = vmatprep.subr.mxu0 0.0
        %4215 = vmatpush1.msra.mxu0 0.0
        %4216 = vmatprep.subr.mxu0 0.0
        %4217 = vmatpush1.msra.mxu0 0.0
        %4218 = vmatprep.mubr.f32.mxu0 0.0
        %4219 = vmatmul.mubr.f32.gmra.mrb[0].mxu0 %v340
        %v4220 = vpop.f32.mrb[0].mxu0
        %v4221 = vadd.f32 0.0, %v4220
        %v4222 = vpop.f32.mrb[0].mxu0
        %4223 = vmatprep.mubr.f32.mxu0 0.0
        %4224 = vmatmul.mubr.f32.gmra.mrb[0].mxu0 %v341
        %v4225 = vpop.f32.mrb[0].mxu0
        %v4226 = vadd.f32 0.0, %v4225
        %v4227 = vpop.f32.mrb[0].mxu0
        %4228 = vdwg.mxu0
        %4229 = vmatprep.subr.mxu0 0.0
        %4230 = vmatpush1.msra.mxu0 %v4121
        %4231 = vmatprep.subr.mxu0 0.0
        %4232 = vmatpush1.msra.mxu0 %v4122
        %4233 = vmatprep.subr.mxu0 0.0
        %4234 = vmatpush1.msra.mxu0 %v4123
        %4235 = vmatprep.subr.mxu0 0.0
        %4236 = vmatpush1.msra.mxu0 %v4124
        %4237 = vmatprep.subr.mxu0 0.0
        %4238 = vmatpush1.msra.mxu0 %v4125
        %4239 = vmatprep.subr.mxu0 0.0
        %4240 = vmatpush1.msra.mxu0 %v4126
        %4241 = vmatprep.subr.mxu0 0.0
        %4242 = vmatpush1.msra.mxu0 %v4127
        %4243 = vmatprep.subr.mxu0 0.0
        %4244 = vmatpush1.msra.mxu0 %v4128
        %4245 = vmatprep.subr.mxu0 0.0
        %4246 = vmatpush1.msra.mxu0 %v4129
        %4247 = vmatprep.subr.mxu0 0.0
        %4248 = vmatpush1.msra.mxu0 %v4130
        %4249 = vmatprep.subr.mxu0 0.0
        %4250 = vmatpush1.msra.mxu0 %v4131
        %4251 = vmatprep.subr.mxu0 0.0
        %4252 = vmatpush1.msra.mxu0 %v4132
        %4253 = vmatprep.subr.mxu0 0.0
        %4254 = vmatpush1.msra.mxu0 %v4133
        %4255 = vmatprep.subr.mxu0 0.0
        %4256 = vmatpush1.msra.mxu0 %v4134
        %4257 = vmatprep.subr.mxu0 0.0
        %4258 = vmatpush1.msra.mxu0 %v4135
        %4259 = vmatprep.subr.mxu0 0.0
        %4260 = vmatpush1.msra.mxu0 %v4136
        %4261 = vmatprep.subr.mxu0 0.0
        %4262 = vmatpush1.msra.mxu0 0.0
        %4263 = vmatprep.subr.mxu0 0.0
        %4264 = vmatpush1.msra.mxu0 0.0
        %4265 = vmatprep.subr.mxu0 0.0
        %4266 = vmatpush1.msra.mxu0 0.0
        %4267 = vmatprep.subr.mxu0 0.0
        %4268 = vmatpush1.msra.mxu0 0.0
        %4269 = vmatprep.subr.mxu0 0.0
        %4270 = vmatpush1.msra.mxu0 0.0
        %4271 = vmatprep.subr.mxu0 0.0
        %4272 = vmatpush1.msra.mxu0 0.0
        %4273 = vmatprep.subr.mxu0 0.0
        %4274 = vmatpush1.msra.mxu0 0.0
        %4275 = vmatprep.subr.mxu0 0.0
        %4276 = vmatpush1.msra.mxu0 0.0
        %4277 = vmatprep.subr.mxu0 0.0
        %4278 = vmatpush1.msra.mxu0 0.0
        %4279 = vmatprep.subr.mxu0 0.0
        %4280 = vmatpush1.msra.mxu0 0.0
        %4281 = vmatprep.subr.mxu0 0.0
        %4282 = vmatpush1.msra.mxu0 0.0
        %4283 = vmatprep.subr.mxu0 0.0
        %4284 = vmatpush1.msra.mxu0 0.0
        %4285 = vmatprep.subr.mxu0 0.0
        %4286 = vmatpush1.msra.mxu0 0.0
        %4287 = vmatprep.subr.mxu0 0.0
        %4288 = vmatpush1.msra.mxu0 0.0
        %4289 = vmatprep.subr.mxu0 0.0
        %4290 = vmatpush1.msra.mxu0 0.0
        %4291 = vmatprep.subr.mxu0 0.0
        %4292 = vmatpush1.msra.mxu0 0.0
        %4293 = vmatprep.mubr.f32.mxu0 0.0
        %4294 = vmatmul.mubr.f32.gmra.mrb[0].mxu0 %v291
        %v4295 = vpop.f32.mrb[0].mxu0
        %v4296 = vadd.f32 %v4221, %v4295
        %v4297 = vpop.f32.mrb[0].mxu0
        %4298 = vmatprep.mubr.f32.mxu0 0.0
        %4299 = vmatmul.mubr.f32.gmra.mrb[0].mxu0 %v283
        %v4300 = vpop.f32.mrb[0].mxu0
        %v4301 = vadd.f32 %v4226, %v4300
        %v4302 = vpop.f32.mrb[0].mxu0
        %4303 = vdwg.mxu0
        %s4304 = scalar_lea.vmem [#allocation5], 256
        %v4305 = vld [vmem:[%s4304] sm:$0xff]
        %v4306 = vld [vmem:[%s4304 + $0x8] sm:$0xff]
        %v4307 = vld [vmem:[%s4304 + $0x10] sm:$0xff]
        %v4308 = vld [vmem:[%s4304 + $0x18] sm:$0xff]
        %v4309 = vld [vmem:[%s4304 + $0x20] sm:$0xff]
        %v4310 = vld [vmem:[%s4304 + $0x28] sm:$0xff]
        %v4311 = vld [vmem:[%s4304 + $0x30] sm:$0xff]
        %v4312 = vld [vmem:[%s4304 + $0x38] sm:$0xff]
        %v4313 = vld [vmem:[%s4304 + $0x40] sm:$0xff]
        %v4314 = vld [vmem:[%s4304 + $0x48] sm:$0xff]
        %v4315 = vld [vmem:[%s4304 + $0x50] sm:$0xff]
        %v4316 = vld [vmem:[%s4304 + $0x58] sm:$0xff]
        %v4317 = vld [vmem:[%s4304 + $0x60] sm:$0xff]
        %v4318 = vld [vmem:[%s4304 + $0x68] sm:$0xff]
        %v4319 = vld [vmem:[%s4304 + $0x70] sm:$0xff]
        %v4320 = vld [vmem:[%s4304 + $0x78] sm:$0xff]
        %4321 = vmatprep.subr.mxu0 0.0
        %4322 = vmatpush1.msra.mxu0 %v4305
        %4323 = vmatprep.subr.mxu0 0.0
        %4324 = vmatpush1.msra.mxu0 %v4306
        %4325 = vmatprep.subr.mxu0 0.0
        %4326 = vmatpush1.msra.mxu0 %v4307
        %4327 = vmatprep.subr.mxu0 0.0
        %4328 = vmatpush1.msra.mxu0 %v4308
        %4329 = vmatprep.subr.mxu0 0.0
        %4330 = vmatpush1.msra.mxu0 %v4309
        %4331 = vmatprep.subr.mxu0 0.0
        %4332 = vmatpush1.msra.mxu0 %v4310
        %4333 = vmatprep.subr.mxu0 0.0
        %4334 = vmatpush1.msra.mxu0 %v4311
        %4335 = vmatprep.subr.mxu0 0.0
        %4336 = vmatpush1.msra.mxu0 %v4312
        %4337 = vmatprep.subr.mxu0 0.0
        %4338 = vmatpush1.msra.mxu0 %v4313
        %4339 = vmatprep.subr.mxu0 0.0
        %4340 = vmatpush1.msra.mxu0 %v4314
        %4341 = vmatprep.subr.mxu0 0.0
        %4342 = vmatpush1.msra.mxu0 %v4315
        %4343 = vmatprep.subr.mxu0 0.0
        %4344 = vmatpush1.msra.mxu0 %v4316
        %4345 = vmatprep.subr.mxu0 0.0
        %4346 = vmatpush1.msra.mxu0 %v4317
        %4347 = vmatprep.subr.mxu0 0.0
        %4348 = vmatpush1.msra.mxu0 %v4318
        %4349 = vmatprep.subr.mxu0 0.0
        %4350 = vmatpush1.msra.mxu0 %v4319
        %4351 = vmatprep.subr.mxu0 0.0
        %4352 = vmatpush1.msra.mxu0 %v4320
        %4353 = vmatprep.subr.mxu0 0.0
        %4354 = vmatpush1.msra.mxu0 0.0
        %4355 = vmatprep.subr.mxu0 0.0
        %4356 = vmatpush1.msra.mxu0 0.0
        %4357 = vmatprep.subr.mxu0 0.0
        %4358 = vmatpush1.msra.mxu0 0.0
        %4359 = vmatprep.subr.mxu0 0.0
        %4360 = vmatpush1.msra.mxu0 0.0
        %4361 = vmatprep.subr.mxu0 0.0
        %4362 = vmatpush1.msra.mxu0 0.0
        %4363 = vmatprep.subr.mxu0 0.0
        %4364 = vmatpush1.msra.mxu0 0.0
        %4365 = vmatprep.subr.mxu0 0.0
        %4366 = vmatpush1.msra.mxu0 0.0
        %4367 = vmatprep.subr.mxu0 0.0
        %4368 = vmatpush1.msra.mxu0 0.0
        %4369 = vmatprep.subr.mxu0 0.0
        %4370 = vmatpush1.msra.mxu0 0.0
        %4371 = vmatprep.subr.mxu0 0.0
        %4372 = vmatpush1.msra.mxu0 0.0
        %4373 = vmatprep.subr.mxu0 0.0
        %4374 = vmatpush1.msra.mxu0 0.0
        %4375 = vmatprep.subr.mxu0 0.0
        %4376 = vmatpush1.msra.mxu0 0.0
        %4377 = vmatprep.subr.mxu0 0.0
        %4378 = vmatpush1.msra.mxu0 0.0
        %4379 = vmatprep.subr.mxu0 0.0
        %4380 = vmatpush1.msra.mxu0 0.0
        %4381 = vmatprep.subr.mxu0 0.0
        %4382 = vmatpush1.msra.mxu0 0.0
        %4383 = vmatprep.subr.mxu0 0.0
        %4384 = vmatpush1.msra.mxu0 0.0
        %4385 = vmatprep.mubr.f32.mxu0 0.0
        %4386 = vmatmul.mubr.f32.gmra.mrb[0].mxu0 %v520
        %v4387 = vpop.f32.mrb[0].mxu0
        %v4388 = vadd.f32 0.0, %v4387
        %v4389 = vpop.f32.mrb[0].mxu0
        %4390 = vmatprep.mubr.f32.mxu0 0.0
        %4391 = vmatmul.mubr.f32.gmra.mrb[0].mxu0 %v521
        %v4392 = vpop.f32.mrb[0].mxu0
        %v4393 = vadd.f32 0.0, %v4392
        %v4394 = vpop.f32.mrb[0].mxu0
        %4395 = vdwg.mxu0
        %v4396 = vadd.f32 %v4296, %v4388
        %v4397 = vadd.f32 %v4301, %v4393
        %s4398 = scalar_lea.vmem [#allocation5], 384
        %v4399 = vld [vmem:[%s4398] sm:$0xff]
        %v4400 = vld [vmem:[%s4398 + $0x8] sm:$0xff]
        %v4401 = vld [vmem:[%s4398 + $0x10] sm:$0xff]
        %v4402 = vld [vmem:[%s4398 + $0x18] sm:$0xff]
        %v4403 = vld [vmem:[%s4398 + $0x20] sm:$0xff]
        %v4404 = vld [vmem:[%s4398 + $0x28] sm:$0xff]
        %v4405 = vld [vmem:[%s4398 + $0x30] sm:$0xff]
        %v4406 = vld [vmem:[%s4398 + $0x38] sm:$0xff]
        %v4407 = vld [vmem:[%s4398 + $0x40] sm:$0xff]
        %v4408 = vld [vmem:[%s4398 + $0x48] sm:$0xff]
        %v4409 = vld [vmem:[%s4398 + $0x50] sm:$0xff]
        %v4410 = vld [vmem:[%s4398 + $0x58] sm:$0xff]
        %v4411 = vld [vmem:[%s4398 + $0x60] sm:$0xff]
        %v4412 = vld [vmem:[%s4398 + $0x68] sm:$0xff]
        %v4413 = vld [vmem:[%s4398 + $0x70] sm:$0xff]
        %v4414 = vld [vmem:[%s4398 + $0x78] sm:$0xff]
        %4415 = vmatprep.subr.mxu0 0.0
        %4416 = vmatpush1.msra.mxu0 %v4399
        %4417 = vmatprep.subr.mxu0 0.0
        %4418 = vmatpush1.msra.mxu0 %v4400
        %4419 = vmatprep.subr.mxu0 0.0
        %4420 = vmatpush1.msra.mxu0 %v4401
        %4421 = vmatprep.subr.mxu0 0.0
        %4422 = vmatpush1.msra.mxu0 %v4402
        %4423 = vmatprep.subr.mxu0 0.0
        %4424 = vmatpush1.msra.mxu0 %v4403
        %4425 = vmatprep.subr.mxu0 0.0
        %4426 = vmatpush1.msra.mxu0 %v4404
        %4427 = vmatprep.subr.mxu0 0.0
        %4428 = vmatpush1.msra.mxu0 %v4405
        %4429 = vmatprep.subr.mxu0 0.0
        %4430 = vmatpush1.msra.mxu0 %v4406
        %4431 = vmatprep.subr.mxu0 0.0
        %4432 = vmatpush1.msra.mxu0 %v4407
        %4433 = vmatprep.subr.mxu0 0.0
        %4434 = vmatpush1.msra.mxu0 %v4408
        %4435 = vmatprep.subr.mxu0 0.0
        %4436 = vmatpush1.msra.mxu0 %v4409
        %4437 = vmatprep.subr.mxu0 0.0
        %4438 = vmatpush1.msra.mxu0 %v4410
        %4439 = vmatprep.subr.mxu0 0.0
        %4440 = vmatpush1.msra.mxu0 %v4411
        %4441 = vmatprep.subr.mxu0 0.0
        %4442 = vmatpush1.msra.mxu0 %v4412
        %4443 = vmatprep.subr.mxu0 0.0
        %4444 = vmatpush1.msra.mxu0 %v4413
        %4445 = vmatprep.subr.mxu0 0.0
        %4446 = vmatpush1.msra.mxu0 %v4414
        %4447 = vmatprep.subr.mxu0 0.0
        %4448 = vmatpush1.msra.mxu0 0.0
        %4449 = vmatprep.subr.mxu0 0.0
        %4450 = vmatpush1.msra.mxu0 0.0
        %4451 = vmatprep.subr.mxu0 0.0
        %4452 = vmatpush1.msra.mxu0 0.0
        %4453 = vmatprep.subr.mxu0 0.0
        %4454 = vmatpush1.msra.mxu0 0.0
        %4455 = vmatprep.subr.mxu0 0.0
        %4456 = vmatpush1.msra.mxu0 0.0
        %4457 = vmatprep.subr.mxu0 0.0
        %4458 = vmatpush1.msra.mxu0 0.0
        %4459 = vmatprep.subr.mxu0 0.0
        %4460 = vmatpush1.msra.mxu0 0.0
        %4461 = vmatprep.subr.mxu0 0.0
        %4462 = vmatpush1.msra.mxu0 0.0
        %4463 = vmatprep.subr.mxu0 0.0
        %4464 = vmatpush1.msra.mxu0 0.0
        %4465 = vmatprep.subr.mxu0 0.0
        %4466 = vmatpush1.msra.mxu0 0.0
        %4467 = vmatprep.subr.mxu0 0.0
        %4468 = vmatpush1.msra.mxu0 0.0
        %4469 = vmatprep.subr.mxu0 0.0
        %4470 = vmatpush1.msra.mxu0 0.0
        %4471 = vmatprep.subr.mxu0 0.0
        %4472 = vmatpush1.msra.mxu0 0.0
        %4473 = vmatprep.subr.mxu0 0.0
        %4474 = vmatpush1.msra.mxu0 0.0
        %4475 = vmatprep.subr.mxu0 0.0
        %4476 = vmatpush1.msra.mxu0 0.0
        %4477 = vmatprep.subr.mxu0 0.0
        %4478 = vmatpush1.msra.mxu0 0.0
        %4479 = vmatprep.mubr.f32.mxu0 0.0
        %4480 = vmatmul.mubr.f32.gmra.mrb[0].mxu0 %v622
        %v4481 = vpop.f32.mrb[0].mxu0
        %v4482 = vadd.f32 0.0, %v4481
        %v4483 = vpop.f32.mrb[0].mxu0
        %4484 = vmatprep.mubr.f32.mxu0 0.0
        %4485 = vmatmul.mubr.f32.gmra.mrb[0].mxu0 %v624
        %v4486 = vpop.f32.mrb[0].mxu0
        %v4487 = vadd.f32 0.0, %v4486
        %v4488 = vpop.f32.mrb[0].mxu0
        %4489 = vdwg.mxu0
        %v4490 = vadd.f32 %v4396, %v4482
        %v4491 = vadd.f32 %v4397, %v4487
        %s4492 = scalar_lea.vmem [#allocation5], 512
        %v4493 = vld [vmem:[%s4492] sm:$0xff]
        %v4494 = vld [vmem:[%s4492 + $0x8] sm:$0xff]
        %v4495 = vld [vmem:[%s4492 + $0x10] sm:$0xff]
        %v4496 = vld [vmem:[%s4492 + $0x18] sm:$0xff]
        %v4497 = vld [vmem:[%s4492 + $0x20] sm:$0xff]
        %v4498 = vld [vmem:[%s4492 + $0x28] sm:$0xff]
        %v4499 = vld [vmem:[%s4492 + $0x30] sm:$0xff]
        %v4500 = vld [vmem:[%s4492 + $0x38] sm:$0xff]
        %v4501 = vld [vmem:[%s4492 + $0x40] sm:$0xff]
        %v4502 = vld [vmem:[%s4492 + $0x48] sm:$0xff]
        %v4503 = vld [vmem:[%s4492 + $0x50] sm:$0xff]
        %v4504 = vld [vmem:[%s4492 + $0x58] sm:$0xff]
        %v4505 = vld [vmem:[%s4492 + $0x60] sm:$0xff]
        %v4506 = vld [vmem:[%s4492 + $0x68] sm:$0xff]
        %v4507 = vld [vmem:[%s4492 + $0x70] sm:$0xff]
        %v4508 = vld [vmem:[%s4492 + $0x78] sm:$0xff]
        %4509 = vmatprep.subr.mxu0 0.0
        %4510 = vmatpush1.msra.mxu0 %v4493
        %4511 = vmatprep.subr.mxu0 0.0
        %4512 = vmatpush1.msra.mxu0 %v4494
        %4513 = vmatprep.subr.mxu0 0.0
        %4514 = vmatpush1.msra.mxu0 %v4495
        %4515 = vmatprep.subr.mxu0 0.0
        %4516 = vmatpush1.msra.mxu0 %v4496
        %4517 = vmatprep.subr.mxu0 0.0
        %4518 = vmatpush1.msra.mxu0 %v4497
        %4519 = vmatprep.subr.mxu0 0.0
        %4520 = vmatpush1.msra.mxu0 %v4498
        %4521 = vmatprep.subr.mxu0 0.0
        %4522 = vmatpush1.msra.mxu0 %v4499
        %4523 = vmatprep.subr.mxu0 0.0
        %4524 = vmatpush1.msra.mxu0 %v4500
        %4525 = vmatprep.subr.mxu0 0.0
        %4526 = vmatpush1.msra.mxu0 %v4501
        %4527 = vmatprep.subr.mxu0 0.0
        %4528 = vmatpush1.msra.mxu0 %v4502
        %4529 = vmatprep.subr.mxu0 0.0
        %4530 = vmatpush1.msra.mxu0 %v4503
        %4531 = vmatprep.subr.mxu0 0.0
        %4532 = vmatpush1.msra.mxu0 %v4504
        %4533 = vmatprep.subr.mxu0 0.0
        %4534 = vmatpush1.msra.mxu0 %v4505
        %4535 = vmatprep.subr.mxu0 0.0
        %4536 = vmatpush1.msra.mxu0 %v4506
        %4537 = vmatprep.subr.mxu0 0.0
        %4538 = vmatpush1.msra.mxu0 %v4507
        %4539 = vmatprep.subr.mxu0 0.0
        %4540 = vmatpush1.msra.mxu0 %v4508
        %4541 = vmatprep.subr.mxu0 0.0
        %4542 = vmatpush1.msra.mxu0 0.0
        %4543 = vmatprep.subr.mxu0 0.0
        %4544 = vmatpush1.msra.mxu0 0.0
        %4545 = vmatprep.subr.mxu0 0.0
        %4546 = vmatpush1.msra.mxu0 0.0
        %4547 = vmatprep.subr.mxu0 0.0
        %4548 = vmatpush1.msra.mxu0 0.0
        %4549 = vmatprep.subr.mxu0 0.0
        %4550 = vmatpush1.msra.mxu0 0.0
        %4551 = vmatprep.subr.mxu0 0.0
        %4552 = vmatpush1.msra.mxu0 0.0
        %4553 = vmatprep.subr.mxu0 0.0
        %4554 = vmatpush1.msra.mxu0 0.0
        %4555 = vmatprep.subr.mxu0 0.0
        %4556 = vmatpush1.msra.mxu0 0.0
        %4557 = vmatprep.subr.mxu0 0.0
        %4558 = vmatpush1.msra.mxu0 0.0
        %4559 = vmatprep.subr.mxu0 0.0
        %4560 = vmatpush1.msra.mxu0 0.0
        %4561 = vmatprep.subr.mxu0 0.0
        %4562 = vmatpush1.msra.mxu0 0.0
        %4563 = vmatprep.subr.mxu0 0.0
        %4564 = vmatpush1.msra.mxu0 0.0
        %4565 = vmatprep.subr.mxu0 0.0
        %4566 = vmatpush1.msra.mxu0 0.0
        %4567 = vmatprep.subr.mxu0 0.0
        %4568 = vmatpush1.msra.mxu0 0.0
        %4569 = vmatprep.subr.mxu0 0.0
        %4570 = vmatpush1.msra.mxu0 0.0
        %4571 = vmatprep.subr.mxu0 0.0
        %4572 = vmatpush1.msra.mxu0 0.0
        %4573 = vmatprep.mubr.f32.mxu0 0.0
        %4574 = vmatmul.mubr.f32.gmra.mrb[0].mxu0 %v735
        %v4575 = vpop.f32.mrb[0].mxu0
        %v4576 = vadd.f32 0.0, %v4575
        %v4577 = vpop.f32.mrb[0].mxu0
        %4578 = vmatprep.mubr.f32.mxu0 0.0
        %4579 = vmatmul.mubr.f32.gmra.mrb[0].mxu0 %v736
        %v4580 = vpop.f32.mrb[0].mxu0
        %v4581 = vadd.f32 0.0, %v4580
        %v4582 = vpop.f32.mrb[0].mxu0
        %4583 = vdwg.mxu0
        %v4584 = vadd.f32 %v4490, %v4576
        %v4585 = vadd.f32 %v4491, %v4581
        %s4586 = scalar_lea.vmem [#allocation5], 640
        %v4587 = vld [vmem:[%s4586] sm:$0xff]
        %v4588 = vld [vmem:[%s4586 + $0x8] sm:$0xff]
        %v4589 = vld [vmem:[%s4586 + $0x10] sm:$0xff]
        %v4590 = vld [vmem:[%s4586 + $0x18] sm:$0xff]
        %v4591 = vld [vmem:[%s4586 + $0x20] sm:$0xff]
        %v4592 = vld [vmem:[%s4586 + $0x28] sm:$0xff]
        %v4593 = vld [vmem:[%s4586 + $0x30] sm:$0xff]
        %v4594 = vld [vmem:[%s4586 + $0x38] sm:$0xff]
        %v4595 = vld [vmem:[%s4586 + $0x40] sm:$0xff]
        %v4596 = vld [vmem:[%s4586 + $0x48] sm:$0xff]
        %v4597 = vld [vmem:[%s4586 + $0x50] sm:$0xff]
        %v4598 = vld [vmem:[%s4586 + $0x58] sm:$0xff]
        %v4599 = vld [vmem:[%s4586 + $0x60] sm:$0xff]
        %v4600 = vld [vmem:[%s4586 + $0x68] sm:$0xff]
        %v4601 = vld [vmem:[%s4586 + $0x70] sm:$0xff]
        %v4602 = vld [vmem:[%s4586 + $0x78] sm:$0xff]
        %4603 = vmatprep.subr.mxu0 0.0
        %4604 = vmatpush1.msra.mxu0 %v4587
        %4605 = vmatprep.subr.mxu0 0.0
        %4606 = vmatpush1.msra.mxu0 %v4588
        %4607 = vmatprep.subr.mxu0 0.0
        %4608 = vmatpush1.msra.mxu0 %v4589
        %4609 = vmatprep.subr.mxu0 0.0
        %4610 = vmatpush1.msra.mxu0 %v4590
        %4611 = vmatprep.subr.mxu0 0.0
        %4612 = vmatpush1.msra.mxu0 %v4591
        %4613 = vmatprep.subr.mxu0 0.0
        %4614 = vmatpush1.msra.mxu0 %v4592
        %4615 = vmatprep.subr.mxu0 0.0
        %4616 = vmatpush1.msra.mxu0 %v4593
        %4617 = vmatprep.subr.mxu0 0.0
        %4618 = vmatpush1.msra.mxu0 %v4594
        %4619 = vmatprep.subr.mxu0 0.0
        %4620 = vmatpush1.msra.mxu0 %v4595
        %4621 = vmatprep.subr.mxu0 0.0
        %4622 = vmatpush1.msra.mxu0 %v4596
        %4623 = vmatprep.subr.mxu0 0.0
        %4624 = vmatpush1.msra.mxu0 %v4597
        %4625 = vmatprep.subr.mxu0 0.0
        %4626 = vmatpush1.msra.mxu0 %v4598
        %4627 = vmatprep.subr.mxu0 0.0
        %4628 = vmatpush1.msra.mxu0 %v4599
        %4629 = vmatprep.subr.mxu0 0.0
        %4630 = vmatpush1.msra.mxu0 %v4600
        %4631 = vmatprep.subr.mxu0 0.0
        %4632 = vmatpush1.msra.mxu0 %v4601
        %4633 = vmatprep.subr.mxu0 0.0
        %4634 = vmatpush1.msra.mxu0 %v4602
        %4635 = vmatprep.subr.mxu0 0.0
        %4636 = vmatpush1.msra.mxu0 0.0
        %4637 = vmatprep.subr.mxu0 0.0
        %4638 = vmatpush1.msra.mxu0 0.0
        %4639 = vmatprep.subr.mxu0 0.0
        %4640 = vmatpush1.msra.mxu0 0.0
        %4641 = vmatprep.subr.mxu0 0.0
        %4642 = vmatpush1.msra.mxu0 0.0
        %4643 = vmatprep.subr.mxu0 0.0
        %4644 = vmatpush1.msra.mxu0 0.0
        %4645 = vmatprep.subr.mxu0 0.0
        %4646 = vmatpush1.msra.mxu0 0.0
        %4647 = vmatprep.subr.mxu0 0.0
        %4648 = vmatpush1.msra.mxu0 0.0
        %4649 = vmatprep.subr.mxu0 0.0
        %4650 = vmatpush1.msra.mxu0 0.0
        %4651 = vmatprep.subr.mxu0 0.0
        %4652 = vmatpush1.msra.mxu0 0.0
        %4653 = vmatprep.subr.mxu0 0.0
        %4654 = vmatpush1.msra.mxu0 0.0
        %4655 = vmatprep.subr.mxu0 0.0
        %4656 = vmatpush1.msra.mxu0 0.0
        %4657 = vmatprep.subr.mxu0 0.0
        %4658 = vmatpush1.msra.mxu0 0.0
        %4659 = vmatprep.subr.mxu0 0.0
        %4660 = vmatpush1.msra.mxu0 0.0
        %4661 = vmatprep.subr.mxu0 0.0
        %4662 = vmatpush1.msra.mxu0 0.0
        %4663 = vmatprep.subr.mxu0 0.0
        %4664 = vmatpush1.msra.mxu0 0.0
        %4665 = vmatprep.subr.mxu0 0.0
        %4666 = vmatpush1.msra.mxu0 0.0
        %4667 = vmatprep.mubr.f32.mxu0 0.0
        %4668 = vmatmul.mubr.f32.gmra.mrb[0].mxu0 %v841
        %v4669 = vpop.f32.mrb[0].mxu0
        %v4670 = vadd.f32 0.0, %v4669
        %v4671 = vpop.f32.mrb[0].mxu0
        %4672 = vmatprep.mubr.f32.mxu0 0.0
        %4673 = vmatmul.mubr.f32.gmra.mrb[0].mxu0 %v842
        %v4674 = vpop.f32.mrb[0].mxu0
        %v4675 = vadd.f32 0.0, %v4674
        %v4676 = vpop.f32.mrb[0].mxu0
        %4677 = vdwg.mxu0
        %v4678 = vadd.f32 %v4584, %v4670
        %v4679 = vadd.f32 %v4585, %v4675
        %s4680 = scalar_lea.vmem [#allocation5], 768
        %v4681 = vld [vmem:[%s4680] sm:$0xff]
        %v4682 = vld [vmem:[%s4680 + $0x8] sm:$0xff]
        %v4683 = vld [vmem:[%s4680 + $0x10] sm:$0xff]
        %v4684 = vld [vmem:[%s4680 + $0x18] sm:$0xff]
        %v4685 = vld [vmem:[%s4680 + $0x20] sm:$0xff]
        %v4686 = vld [vmem:[%s4680 + $0x28] sm:$0xff]
        %v4687 = vld [vmem:[%s4680 + $0x30] sm:$0xff]
        %v4688 = vld [vmem:[%s4680 + $0x38] sm:$0xff]
        %v4689 = vld [vmem:[%s4680 + $0x40] sm:$0xff]
        %v4690 = vld [vmem:[%s4680 + $0x48] sm:$0xff]
        %v4691 = vld [vmem:[%s4680 + $0x50] sm:$0xff]
        %v4692 = vld [vmem:[%s4680 + $0x58] sm:$0xff]
        %v4693 = vld [vmem:[%s4680 + $0x60] sm:$0xff]
        %v4694 = vld [vmem:[%s4680 + $0x68] sm:$0xff]
        %v4695 = vld [vmem:[%s4680 + $0x70] sm:$0xff]
        %v4696 = vld [vmem:[%s4680 + $0x78] sm:$0xff]
        %4697 = vmatprep.subr.mxu0 0.0
        %4698 = vmatpush1.msra.mxu0 %v4681
        %4699 = vmatprep.subr.mxu0 0.0
        %4700 = vmatpush1.msra.mxu0 %v4682
        %4701 = vmatprep.subr.mxu0 0.0
        %4702 = vmatpush1.msra.mxu0 %v4683
        %4703 = vmatprep.subr.mxu0 0.0
        %4704 = vmatpush1.msra.mxu0 %v4684
        %4705 = vmatprep.subr.mxu0 0.0
        %4706 = vmatpush1.msra.mxu0 %v4685
        %4707 = vmatprep.subr.mxu0 0.0
        %4708 = vmatpush1.msra.mxu0 %v4686
        %4709 = vmatprep.subr.mxu0 0.0
        %4710 = vmatpush1.msra.mxu0 %v4687
        %4711 = vmatprep.subr.mxu0 0.0
        %4712 = vmatpush1.msra.mxu0 %v4688
        %4713 = vmatprep.subr.mxu0 0.0
        %4714 = vmatpush1.msra.mxu0 %v4689
        %4715 = vmatprep.subr.mxu0 0.0
        %4716 = vmatpush1.msra.mxu0 %v4690
        %4717 = vmatprep.subr.mxu0 0.0
        %4718 = vmatpush1.msra.mxu0 %v4691
        %4719 = vmatprep.subr.mxu0 0.0
        %4720 = vmatpush1.msra.mxu0 %v4692
        %4721 = vmatprep.subr.mxu0 0.0
        %4722 = vmatpush1.msra.mxu0 %v4693
        %4723 = vmatprep.subr.mxu0 0.0
        %4724 = vmatpush1.msra.mxu0 %v4694
        %4725 = vmatprep.subr.mxu0 0.0
        %4726 = vmatpush1.msra.mxu0 %v4695
        %4727 = vmatprep.subr.mxu0 0.0
        %4728 = vmatpush1.msra.mxu0 %v4696
        %4729 = vmatprep.subr.mxu0 0.0
        %4730 = vmatpush1.msra.mxu0 0.0
        %4731 = vmatprep.subr.mxu0 0.0
        %4732 = vmatpush1.msra.mxu0 0.0
        %4733 = vmatprep.subr.mxu0 0.0
        %4734 = vmatpush1.msra.mxu0 0.0
        %4735 = vmatprep.subr.mxu0 0.0
        %4736 = vmatpush1.msra.mxu0 0.0
        %4737 = vmatprep.subr.mxu0 0.0
        %4738 = vmatpush1.msra.mxu0 0.0
        %4739 = vmatprep.subr.mxu0 0.0
        %4740 = vmatpush1.msra.mxu0 0.0
        %4741 = vmatprep.subr.mxu0 0.0
        %4742 = vmatpush1.msra.mxu0 0.0
        %4743 = vmatprep.subr.mxu0 0.0
        %4744 = vmatpush1.msra.mxu0 0.0
        %4745 = vmatprep.subr.mxu0 0.0
        %4746 = vmatpush1.msra.mxu0 0.0
        %4747 = vmatprep.subr.mxu0 0.0
        %4748 = vmatpush1.msra.mxu0 0.0
        %4749 = vmatprep.subr.mxu0 0.0
        %4750 = vmatpush1.msra.mxu0 0.0
        %4751 = vmatprep.subr.mxu0 0.0
        %4752 = vmatpush1.msra.mxu0 0.0
        %4753 = vmatprep.subr.mxu0 0.0
        %4754 = vmatpush1.msra.mxu0 0.0
        %4755 = vmatprep.subr.mxu0 0.0
        %4756 = vmatpush1.msra.mxu0 0.0
        %4757 = vmatprep.subr.mxu0 0.0
        %4758 = vmatpush1.msra.mxu0 0.0
        %4759 = vmatprep.subr.mxu0 0.0
        %4760 = vmatpush1.msra.mxu0 0.0
        %4761 = vmatprep.mubr.f32.mxu0 0.0
        %4762 = vmatmul.mubr.f32.gmra.mrb[0].mxu0 %v942
        %v4763 = vpop.f32.mrb[0].mxu0
        %v4764 = vadd.f32 0.0, %v4763
        %v4765 = vpop.f32.mrb[0].mxu0
        %4766 = vmatprep.mubr.f32.mxu0 0.0
        %4767 = vmatmul.mubr.f32.gmra.mrb[0].mxu0 %v944
        %v4768 = vpop.f32.mrb[0].mxu0
        %v4769 = vadd.f32 0.0, %v4768
        %v4770 = vpop.f32.mrb[0].mxu0
        %4771 = vdwg.mxu0
        %v4772 = vadd.f32 %v4678, %v4764
        %v4773 = vadd.f32 %v4679, %v4769
        %s4774 = scalar_lea.vmem [#allocation5], 896
        %v4775 = vld [vmem:[%s4774] sm:$0xff]
        %v4776 = vld [vmem:[%s4774 + $0x8] sm:$0xff]
        %v4777 = vld [vmem:[%s4774 + $0x10] sm:$0xff]
        %v4778 = vld [vmem:[%s4774 + $0x18] sm:$0xff]
        %v4779 = vld [vmem:[%s4774 + $0x20] sm:$0xff]
        %v4780 = vld [vmem:[%s4774 + $0x28] sm:$0xff]
        %v4781 = vld [vmem:[%s4774 + $0x30] sm:$0xff]
        %v4782 = vld [vmem:[%s4774 + $0x38] sm:$0xff]
        %v4783 = vld [vmem:[%s4774 + $0x40] sm:$0xff]
        %v4784 = vld [vmem:[%s4774 + $0x48] sm:$0xff]
        %v4785 = vld [vmem:[%s4774 + $0x50] sm:$0xff]
        %v4786 = vld [vmem:[%s4774 + $0x58] sm:$0xff]
        %v4787 = vld [vmem:[%s4774 + $0x60] sm:$0xff]
        %v4788 = vld [vmem:[%s4774 + $0x68] sm:$0xff]
        %v4789 = vld [vmem:[%s4774 + $0x70] sm:$0xff]
        %v4790 = vld [vmem:[%s4774 + $0x78] sm:$0xff]
        %4791 = vmatprep.subr.mxu0 0.0
        %4792 = vmatpush1.msra.mxu0 %v4775
        %4793 = vmatprep.subr.mxu0 0.0
        %4794 = vmatpush1.msra.mxu0 %v4776
        %4795 = vmatprep.subr.mxu0 0.0
        %4796 = vmatpush1.msra.mxu0 %v4777
        %4797 = vmatprep.subr.mxu0 0.0
        %4798 = vmatpush1.msra.mxu0 %v4778
        %4799 = vmatprep.subr.mxu0 0.0
        %4800 = vmatpush1.msra.mxu0 %v4779
        %4801 = vmatprep.subr.mxu0 0.0
        %4802 = vmatpush1.msra.mxu0 %v4780
        %4803 = vmatprep.subr.mxu0 0.0
        %4804 = vmatpush1.msra.mxu0 %v4781
        %4805 = vmatprep.subr.mxu0 0.0
        %4806 = vmatpush1.msra.mxu0 %v4782
        %4807 = vmatprep.subr.mxu0 0.0
        %4808 = vmatpush1.msra.mxu0 %v4783
        %4809 = vmatprep.subr.mxu0 0.0
        %4810 = vmatpush1.msra.mxu0 %v4784
        %4811 = vmatprep.subr.mxu0 0.0
        %4812 = vmatpush1.msra.mxu0 %v4785
        %4813 = vmatprep.subr.mxu0 0.0
        %4814 = vmatpush1.msra.mxu0 %v4786
        %4815 = vmatprep.subr.mxu0 0.0
        %4816 = vmatpush1.msra.mxu0 %v4787
        %4817 = vmatprep.subr.mxu0 0.0
        %4818 = vmatpush1.msra.mxu0 %v4788
        %4819 = vmatprep.subr.mxu0 0.0
        %4820 = vmatpush1.msra.mxu0 %v4789
        %4821 = vmatprep.subr.mxu0 0.0
        %4822 = vmatpush1.msra.mxu0 %v4790
        %4823 = vmatprep.subr.mxu0 0.0
        %4824 = vmatpush1.msra.mxu0 0.0
        %4825 = vmatprep.subr.mxu0 0.0
        %4826 = vmatpush1.msra.mxu0 0.0
        %4827 = vmatprep.subr.mxu0 0.0
        %4828 = vmatpush1.msra.mxu0 0.0
        %4829 = vmatprep.subr.mxu0 0.0
        %4830 = vmatpush1.msra.mxu0 0.0
        %4831 = vmatprep.subr.mxu0 0.0
        %4832 = vmatpush1.msra.mxu0 0.0
        %4833 = vmatprep.subr.mxu0 0.0
        %4834 = vmatpush1.msra.mxu0 0.0
        %4835 = vmatprep.subr.mxu0 0.0
        %4836 = vmatpush1.msra.mxu0 0.0
        %4837 = vmatprep.subr.mxu0 0.0
        %4838 = vmatpush1.msra.mxu0 0.0
        %4839 = vmatprep.subr.mxu0 0.0
        %4840 = vmatpush1.msra.mxu0 0.0
        %4841 = vmatprep.subr.mxu0 0.0
        %4842 = vmatpush1.msra.mxu0 0.0
        %4843 = vmatprep.subr.mxu0 0.0
        %4844 = vmatpush1.msra.mxu0 0.0
        %4845 = vmatprep.subr.mxu0 0.0
        %4846 = vmatpush1.msra.mxu0 0.0
        %4847 = vmatprep.subr.mxu0 0.0
        %4848 = vmatpush1.msra.mxu0 0.0
        %4849 = vmatprep.subr.mxu0 0.0
        %4850 = vmatpush1.msra.mxu0 0.0
        %4851 = vmatprep.subr.mxu0 0.0
        %4852 = vmatpush1.msra.mxu0 0.0
        %4853 = vmatprep.subr.mxu0 0.0
        %4854 = vmatpush1.msra.mxu0 0.0
        %4855 = vmatprep.mubr.f32.mxu0 0.0
        %4856 = vmatmul.mubr.f32.gmra.mrb[0].mxu0 %v1054
        %v4857 = vpop.f32.mrb[0].mxu0
        %v4858 = vadd.f32 0.0, %v4857
        %v4859 = vpop.f32.mrb[0].mxu0
        %4860 = vmatprep.mubr.f32.mxu0 0.0
        %4861 = vmatmul.mubr.f32.gmra.mrb[0].mxu0 %v1055
        %v4862 = vpop.f32.mrb[0].mxu0
        %v4863 = vadd.f32 0.0, %v4862
        %v4864 = vpop.f32.mrb[0].mxu0
        %4865 = vdwg.mxu0
        %v4866 = vadd.f32 %v4772, %v4858
        %v4867 = vadd.f32 %v4773, %v4863
        %s4868 = scalar_lea.vmem [#allocation5], 1024
        %v4869 = vld [vmem:[%s4868] sm:$0xff]
        %v4870 = vld [vmem:[%s4868 + $0x8] sm:$0xff]
        %v4871 = vld [vmem:[%s4868 + $0x10] sm:$0xff]
        %v4872 = vld [vmem:[%s4868 + $0x18] sm:$0xff]
        %v4873 = vld [vmem:[%s4868 + $0x20] sm:$0xff]
        %v4874 = vld [vmem:[%s4868 + $0x28] sm:$0xff]
        %v4875 = vld [vmem:[%s4868 + $0x30] sm:$0xff]
        %v4876 = vld [vmem:[%s4868 + $0x38] sm:$0xff]
        %v4877 = vld [vmem:[%s4868 + $0x40] sm:$0xff]
        %v4878 = vld [vmem:[%s4868 + $0x48] sm:$0xff]
        %v4879 = vld [vmem:[%s4868 + $0x50] sm:$0xff]
        %v4880 = vld [vmem:[%s4868 + $0x58] sm:$0xff]
        %v4881 = vld [vmem:[%s4868 + $0x60] sm:$0xff]
        %v4882 = vld [vmem:[%s4868 + $0x68] sm:$0xff]
        %v4883 = vld [vmem:[%s4868 + $0x70] sm:$0xff]
        %v4884 = vld [vmem:[%s4868 + $0x78] sm:$0xff]
        %4885 = vmatprep.subr.mxu0 0.0
        %4886 = vmatpush1.msra.mxu0 %v4869
        %4887 = vmatprep.subr.mxu0 0.0
        %4888 = vmatpush1.msra.mxu0 %v4870
        %4889 = vmatprep.subr.mxu0 0.0
        %4890 = vmatpush1.msra.mxu0 %v4871
        %4891 = vmatprep.subr.mxu0 0.0
        %4892 = vmatpush1.msra.mxu0 %v4872
        %4893 = vmatprep.subr.mxu0 0.0
        %4894 = vmatpush1.msra.mxu0 %v4873
        %4895 = vmatprep.subr.mxu0 0.0
        %4896 = vmatpush1.msra.mxu0 %v4874
        %4897 = vmatprep.subr.mxu0 0.0
        %4898 = vmatpush1.msra.mxu0 %v4875
        %4899 = vmatprep.subr.mxu0 0.0
        %4900 = vmatpush1.msra.mxu0 %v4876
        %4901 = vmatprep.subr.mxu0 0.0
        %4902 = vmatpush1.msra.mxu0 %v4877
        %4903 = vmatprep.subr.mxu0 0.0
        %4904 = vmatpush1.msra.mxu0 %v4878
        %4905 = vmatprep.subr.mxu0 0.0
        %4906 = vmatpush1.msra.mxu0 %v4879
        %4907 = vmatprep.subr.mxu0 0.0
        %4908 = vmatpush1.msra.mxu0 %v4880
        %4909 = vmatprep.subr.mxu0 0.0
        %4910 = vmatpush1.msra.mxu0 %v4881
        %4911 = vmatprep.subr.mxu0 0.0
        %4912 = vmatpush1.msra.mxu0 %v4882
        %4913 = vmatprep.subr.mxu0 0.0
        %4914 = vmatpush1.msra.mxu0 %v4883
        %4915 = vmatprep.subr.mxu0 0.0
        %4916 = vmatpush1.msra.mxu0 %v4884
        %4917 = vmatprep.subr.mxu0 0.0
        %4918 = vmatpush1.msra.mxu0 0.0
        %4919 = vmatprep.subr.mxu0 0.0
        %4920 = vmatpush1.msra.mxu0 0.0
        %4921 = vmatprep.subr.mxu0 0.0
        %4922 = vmatpush1.msra.mxu0 0.0
        %4923 = vmatprep.subr.mxu0 0.0
        %4924 = vmatpush1.msra.mxu0 0.0
        %4925 = vmatprep.subr.mxu0 0.0
        %4926 = vmatpush1.msra.mxu0 0.0
        %4927 = vmatprep.subr.mxu0 0.0
        %4928 = vmatpush1.msra.mxu0 0.0
        %4929 = vmatprep.subr.mxu0 0.0
        %4930 = vmatpush1.msra.mxu0 0.0
        %4931 = vmatprep.subr.mxu0 0.0
        %4932 = vmatpush1.msra.mxu0 0.0
        %4933 = vmatprep.subr.mxu0 0.0
        %4934 = vmatpush1.msra.mxu0 0.0
        %4935 = vmatprep.subr.mxu0 0.0
        %4936 = vmatpush1.msra.mxu0 0.0
        %4937 = vmatprep.subr.mxu0 0.0
        %4938 = vmatpush1.msra.mxu0 0.0
        %4939 = vmatprep.subr.mxu0 0.0
        %4940 = vmatpush1.msra.mxu0 0.0
        %4941 = vmatprep.subr.mxu0 0.0
        %4942 = vmatpush1.msra.mxu0 0.0
        %4943 = vmatprep.subr.mxu0 0.0
        %4944 = vmatpush1.msra.mxu0 0.0
        %4945 = vmatprep.subr.mxu0 0.0
        %4946 = vmatpush1.msra.mxu0 0.0
        %4947 = vmatprep.subr.mxu0 0.0
        %4948 = vmatpush1.msra.mxu0 0.0
        %4949 = vmatprep.mubr.f32.mxu0 0.0
        %4950 = vmatmul.mubr.f32.gmra.mrb[0].mxu0 %v1160
        %v4951 = vpop.f32.mrb[0].mxu0
        %v4952 = vadd.f32 0.0, %v4951
        %v4953 = vpop.f32.mrb[0].mxu0
        %4954 = vmatprep.mubr.f32.mxu0 0.0
        %4955 = vmatmul.mubr.f32.gmra.mrb[0].mxu0 %v1161
        %v4956 = vpop.f32.mrb[0].mxu0
        %v4957 = vadd.f32 0.0, %v4956
        %v4958 = vpop.f32.mrb[0].mxu0
        %4959 = vdwg.mxu0
        %v4960 = vadd.f32 %v4866, %v4952
        %v4961 = vadd.f32 %v4867, %v4957
        %v4962 = vld [vmem:[#allocation7] sm:$0x1]
        %v4964 = vlaneseq
        %v4965 = vshrl.u32 %v4964, 7
        %v4966 = vsub.s32 0, %v4965
        %v4967 = vrot.slane %v4962, %v4966
        %v4969 = vmul.f32 %v4960, %v4967
        %v4970 = vmul.f32 %v4961, %v4967
        %v4971 = vld [vmem:[#allocation8] sm:$0x1]
        %v4973 = vlaneseq
        %v4974 = vshrl.u32 %v4973, 7
        %v4975 = vsub.s32 0, %v4974
        %v4976 = vrot.slane %v4971, %v4975
        %v4978 = vadd.f32 %v4969, %v4976
        %v4979 = vadd.f32 %v4970, %v4976
        %v4980 = vmax.f32 %v4978, 0.0
        %v4981 = vmax.f32 %v4979, 0.0
        %s4982 = scalar_lea.vmem [#allocation5], 2304
        %v4983 = vld [vmem:[%s4982] sm:$0xff]
        %v4984 = vld [vmem:[%s4982 + $0x8] sm:$0xff]
        %v4985 = vld [vmem:[%s4982 + $0x10] sm:$0xff]
        %v4986 = vld [vmem:[%s4982 + $0x18] sm:$0xff]
        %v4987 = vld [vmem:[%s4982 + $0x20] sm:$0xff]
        %v4988 = vld [vmem:[%s4982 + $0x28] sm:$0xff]
        %v4989 = vld [vmem:[%s4982 + $0x30] sm:$0xff]
        %v4990 = vld [vmem:[%s4982 + $0x38] sm:$0xff]
        %v4991 = vld [vmem:[%s4982 + $0x40] sm:$0xff]
        %v4992 = vld [vmem:[%s4982 + $0x48] sm:$0xff]
        %v4993 = vld [vmem:[%s4982 + $0x50] sm:$0xff]
        %v4994 = vld [vmem:[%s4982 + $0x58] sm:$0xff]
        %v4995 = vld [vmem:[%s4982 + $0x60] sm:$0xff]
        %v4996 = vld [vmem:[%s4982 + $0x68] sm:$0xff]
        %v4997 = vld [vmem:[%s4982 + $0x70] sm:$0xff]
        %v4998 = vld [vmem:[%s4982 + $0x78] sm:$0xff]
        %s4999 = scalar_lea.vmem [#allocation5], 2432
        %v5000 = vld [vmem:[%s4999] sm:$0xff]
        %v5001 = vld [vmem:[%s4999 + $0x8] sm:$0xff]
        %v5002 = vld [vmem:[%s4999 + $0x10] sm:$0xff]
        %v5003 = vld [vmem:[%s4999 + $0x18] sm:$0xff]
        %v5004 = vld [vmem:[%s4999 + $0x20] sm:$0xff]
        %v5005 = vld [vmem:[%s4999 + $0x28] sm:$0xff]
        %v5006 = vld [vmem:[%s4999 + $0x30] sm:$0xff]
        %v5007 = vld [vmem:[%s4999 + $0x38] sm:$0xff]
        %v5008 = vld [vmem:[%s4999 + $0x40] sm:$0xff]
        %v5009 = vld [vmem:[%s4999 + $0x48] sm:$0xff]
        %v5010 = vld [vmem:[%s4999 + $0x50] sm:$0xff]
        %v5011 = vld [vmem:[%s4999 + $0x58] sm:$0xff]
        %v5012 = vld [vmem:[%s4999 + $0x60] sm:$0xff]
        %v5013 = vld [vmem:[%s4999 + $0x68] sm:$0xff]
        %v5014 = vld [vmem:[%s4999 + $0x70] sm:$0xff]
        %v5015 = vld [vmem:[%s4999 + $0x78] sm:$0xff]
        %5016 = vmatprep.subr.mxu0 0.0
        %5017 = vmatpush1.msra.mxu0 %v5000
        %5018 = vmatprep.subr.mxu0 0.0
        %5019 = vmatpush1.msra.mxu0 %v5001
        %5020 = vmatprep.subr.mxu0 0.0
        %5021 = vmatpush1.msra.mxu0 %v5002
        %5022 = vmatprep.subr.mxu0 0.0
        %5023 = vmatpush1.msra.mxu0 %v5003
        %5024 = vmatprep.subr.mxu0 0.0
        %5025 = vmatpush1.msra.mxu0 %v5004
        %5026 = vmatprep.subr.mxu0 0.0
        %5027 = vmatpush1.msra.mxu0 %v5005
        %5028 = vmatprep.subr.mxu0 0.0
        %5029 = vmatpush1.msra.mxu0 %v5006
        %5030 = vmatprep.subr.mxu0 0.0
        %5031 = vmatpush1.msra.mxu0 %v5007
        %5032 = vmatprep.subr.mxu0 0.0
        %5033 = vmatpush1.msra.mxu0 %v5008
        %5034 = vmatprep.subr.mxu0 0.0
        %5035 = vmatpush1.msra.mxu0 %v5009
        %5036 = vmatprep.subr.mxu0 0.0
        %5037 = vmatpush1.msra.mxu0 %v5010
        %5038 = vmatprep.subr.mxu0 0.0
        %5039 = vmatpush1.msra.mxu0 %v5011
        %5040 = vmatprep.subr.mxu0 0.0
        %5041 = vmatpush1.msra.mxu0 %v5012
        %5042 = vmatprep.subr.mxu0 0.0
        %5043 = vmatpush1.msra.mxu0 %v5013
        %5044 = vmatprep.subr.mxu0 0.0
        %5045 = vmatpush1.msra.mxu0 %v5014
        %5046 = vmatprep.subr.mxu0 0.0
        %5047 = vmatpush1.msra.mxu0 %v5015
        %5048 = vmatprep.subr.mxu0 0.0
        %5049 = vmatpush1.msra.mxu0 0.0
        %5050 = vmatprep.subr.mxu0 0.0
        %5051 = vmatpush1.msra.mxu0 0.0
        %5052 = vmatprep.subr.mxu0 0.0
        %5053 = vmatpush1.msra.mxu0 0.0
        %5054 = vmatprep.subr.mxu0 0.0
        %5055 = vmatpush1.msra.mxu0 0.0
        %5056 = vmatprep.subr.mxu0 0.0
        %5057 = vmatpush1.msra.mxu0 0.0
        %5058 = vmatprep.subr.mxu0 0.0
        %5059 = vmatpush1.msra.mxu0 0.0
        %5060 = vmatprep.subr.mxu0 0.0
        %5061 = vmatpush1.msra.mxu0 0.0
        %5062 = vmatprep.subr.mxu0 0.0
        %5063 = vmatpush1.msra.mxu0 0.0
        %5064 = vmatprep.subr.mxu0 0.0
        %5065 = vmatpush1.msra.mxu0 0.0
        %5066 = vmatprep.subr.mxu0 0.0
        %5067 = vmatpush1.msra.mxu0 0.0
        %5068 = vmatprep.subr.mxu0 0.0
        %5069 = vmatpush1.msra.mxu0 0.0
        %5070 = vmatprep.subr.mxu0 0.0
        %5071 = vmatpush1.msra.mxu0 0.0
        %5072 = vmatprep.subr.mxu0 0.0
        %5073 = vmatpush1.msra.mxu0 0.0
        %5074 = vmatprep.subr.mxu0 0.0
        %5075 = vmatpush1.msra.mxu0 0.0
        %5076 = vmatprep.subr.mxu0 0.0
        %5077 = vmatpush1.msra.mxu0 0.0
        %5078 = vmatprep.subr.mxu0 0.0
        %5079 = vmatpush1.msra.mxu0 0.0
        %5080 = vmatprep.mubr.f32.mxu0 0.0
        %5081 = vmatmul.mubr.f32.gmra.mrb[0].mxu0 %v3201
        %v5082 = vpop.f32.mrb[0].mxu0
        %v5083 = vadd.f32 0.0, %v5082
        %v5084 = vpop.f32.mrb[0].mxu0
        %5085 = vmatprep.mubr.f32.mxu0 0.0
        %5086 = vmatmul.mubr.f32.gmra.mrb[0].mxu0 %v3202
        %v5087 = vpop.f32.mrb[0].mxu0
        %v5088 = vadd.f32 0.0, %v5087
        %v5089 = vpop.f32.mrb[0].mxu0
        %5090 = vdwg.mxu0
        %5091 = vmatprep.subr.mxu0 0.0
        %5092 = vmatpush1.msra.mxu0 %v4983
        %5093 = vmatprep.subr.mxu0 0.0
        %5094 = vmatpush1.msra.mxu0 %v4984
        %5095 = vmatprep.subr.mxu0 0.0
        %5096 = vmatpush1.msra.mxu0 %v4985
        %5097 = vmatprep.subr.mxu0 0.0
        %5098 = vmatpush1.msra.mxu0 %v4986
        %5099 = vmatprep.subr.mxu0 0.0
        %5100 = vmatpush1.msra.mxu0 %v4987
        %5101 = vmatprep.subr.mxu0 0.0
        %5102 = vmatpush1.msra.mxu0 %v4988
        %5103 = vmatprep.subr.mxu0 0.0
        %5104 = vmatpush1.msra.mxu0 %v4989
        %5105 = vmatprep.subr.mxu0 0.0
        %5106 = vmatpush1.msra.mxu0 %v4990
        %5107 = vmatprep.subr.mxu0 0.0
        %5108 = vmatpush1.msra.mxu0 %v4991
        %5109 = vmatprep.subr.mxu0 0.0
        %5110 = vmatpush1.msra.mxu0 %v4992
        %5111 = vmatprep.subr.mxu0 0.0
        %5112 = vmatpush1.msra.mxu0 %v4993
        %5113 = vmatprep.subr.mxu0 0.0
        %5114 = vmatpush1.msra.mxu0 %v4994
        %5115 = vmatprep.subr.mxu0 0.0
        %5116 = vmatpush1.msra.mxu0 %v4995
        %5117 = vmatprep.subr.mxu0 0.0
        %5118 = vmatpush1.msra.mxu0 %v4996
        %5119 = vmatprep.subr.mxu0 0.0
        %5120 = vmatpush1.msra.mxu0 %v4997
        %5121 = vmatprep.subr.mxu0 0.0
        %5122 = vmatpush1.msra.mxu0 %v4998
        %5123 = vmatprep.subr.mxu0 0.0
        %5124 = vmatpush1.msra.mxu0 0.0
        %5125 = vmatprep.subr.mxu0 0.0
        %5126 = vmatpush1.msra.mxu0 0.0
        %5127 = vmatprep.subr.mxu0 0.0
        %5128 = vmatpush1.msra.mxu0 0.0
        %5129 = vmatprep.subr.mxu0 0.0
        %5130 = vmatpush1.msra.mxu0 0.0
        %5131 = vmatprep.subr.mxu0 0.0
        %5132 = vmatpush1.msra.mxu0 0.0
        %5133 = vmatprep.subr.mxu0 0.0
        %5134 = vmatpush1.msra.mxu0 0.0
        %5135 = vmatprep.subr.mxu0 0.0
        %5136 = vmatpush1.msra.mxu0 0.0
        %5137 = vmatprep.subr.mxu0 0.0
        %5138 = vmatpush1.msra.mxu0 0.0
        %5139 = vmatprep.subr.mxu0 0.0
        %5140 = vmatpush1.msra.mxu0 0.0
        %5141 = vmatprep.subr.mxu0 0.0
        %5142 = vmatpush1.msra.mxu0 0.0
        %5143 = vmatprep.subr.mxu0 0.0
        %5144 = vmatpush1.msra.mxu0 0.0
        %5145 = vmatprep.subr.mxu0 0.0
        %5146 = vmatpush1.msra.mxu0 0.0
        %5147 = vmatprep.subr.mxu0 0.0
        %5148 = vmatpush1.msra.mxu0 0.0
        %5149 = vmatprep.subr.mxu0 0.0
        %5150 = vmatpush1.msra.mxu0 0.0
        %5151 = vmatprep.subr.mxu0 0.0
        %5152 = vmatpush1.msra.mxu0 0.0
        %5153 = vmatprep.subr.mxu0 0.0
        %5154 = vmatpush1.msra.mxu0 0.0
        %5155 = vmatprep.mubr.f32.mxu0 0.0
        %5156 = vmatmul.mubr.f32.gmra.mrb[0].mxu0 %v3153
        %v5157 = vpop.f32.mrb[0].mxu0
        %v5158 = vadd.f32 %v5083, %v5157
        %v5159 = vpop.f32.mrb[0].mxu0
        %5160 = vmatprep.mubr.f32.mxu0 0.0
        %5161 = vmatmul.mubr.f32.gmra.mrb[0].mxu0 %v3145
        %v5162 = vpop.f32.mrb[0].mxu0
        %v5163 = vadd.f32 %v5088, %v5162
        %v5164 = vpop.f32.mrb[0].mxu0
        %5165 = vdwg.mxu0
        %s5166 = scalar_lea.vmem [#allocation5], 2560
        %v5167 = vld [vmem:[%s5166] sm:$0xff]
        %v5168 = vld [vmem:[%s5166 + $0x8] sm:$0xff]
        %v5169 = vld [vmem:[%s5166 + $0x10] sm:$0xff]
        %v5170 = vld [vmem:[%s5166 + $0x18] sm:$0xff]
        %v5171 = vld [vmem:[%s5166 + $0x20] sm:$0xff]
        %v5172 = vld [vmem:[%s5166 + $0x28] sm:$0xff]
        %v5173 = vld [vmem:[%s5166 + $0x30] sm:$0xff]
        %v5174 = vld [vmem:[%s5166 + $0x38] sm:$0xff]
        %v5175 = vld [vmem:[%s5166 + $0x40] sm:$0xff]
        %v5176 = vld [vmem:[%s5166 + $0x48] sm:$0xff]
        %v5177 = vld [vmem:[%s5166 + $0x50] sm:$0xff]
        %v5178 = vld [vmem:[%s5166 + $0x58] sm:$0xff]
        %v5179 = vld [vmem:[%s5166 + $0x60] sm:$0xff]
        %v5180 = vld [vmem:[%s5166 + $0x68] sm:$0xff]
        %v5181 = vld [vmem:[%s5166 + $0x70] sm:$0xff]
        %v5182 = vld [vmem:[%s5166 + $0x78] sm:$0xff]
        %5183 = vmatprep.subr.mxu0 0.0
        %5184 = vmatpush1.msra.mxu0 %v5167
        %5185 = vmatprep.subr.mxu0 0.0
        %5186 = vmatpush1.msra.mxu0 %v5168
        %5187 = vmatprep.subr.mxu0 0.0
        %5188 = vmatpush1.msra.mxu0 %v5169
        %5189 = vmatprep.subr.mxu0 0.0
        %5190 = vmatpush1.msra.mxu0 %v5170
        %5191 = vmatprep.subr.mxu0 0.0
        %5192 = vmatpush1.msra.mxu0 %v5171
        %5193 = vmatprep.subr.mxu0 0.0
        %5194 = vmatpush1.msra.mxu0 %v5172
        %5195 = vmatprep.subr.mxu0 0.0
        %5196 = vmatpush1.msra.mxu0 %v5173
        %5197 = vmatprep.subr.mxu0 0.0
        %5198 = vmatpush1.msra.mxu0 %v5174
        %5199 = vmatprep.subr.mxu0 0.0
        %5200 = vmatpush1.msra.mxu0 %v5175
        %5201 = vmatprep.subr.mxu0 0.0
        %5202 = vmatpush1.msra.mxu0 %v5176
        %5203 = vmatprep.subr.mxu0 0.0
        %5204 = vmatpush1.msra.mxu0 %v5177
        %5205 = vmatprep.subr.mxu0 0.0
        %5206 = vmatpush1.msra.mxu0 %v5178
        %5207 = vmatprep.subr.mxu0 0.0
        %5208 = vmatpush1.msra.mxu0 %v5179
        %5209 = vmatprep.subr.mxu0 0.0
        %5210 = vmatpush1.msra.mxu0 %v5180
        %5211 = vmatprep.subr.mxu0 0.0
        %5212 = vmatpush1.msra.mxu0 %v5181
        %5213 = vmatprep.subr.mxu0 0.0
        %5214 = vmatpush1.msra.mxu0 %v5182
        %5215 = vmatprep.subr.mxu0 0.0
        %5216 = vmatpush1.msra.mxu0 0.0
        %5217 = vmatprep.subr.mxu0 0.0
        %5218 = vmatpush1.msra.mxu0 0.0
        %5219 = vmatprep.subr.mxu0 0.0
        %5220 = vmatpush1.msra.mxu0 0.0
        %5221 = vmatprep.subr.mxu0 0.0
        %5222 = vmatpush1.msra.mxu0 0.0
        %5223 = vmatprep.subr.mxu0 0.0
        %5224 = vmatpush1.msra.mxu0 0.0
        %5225 = vmatprep.subr.mxu0 0.0
        %5226 = vmatpush1.msra.mxu0 0.0
        %5227 = vmatprep.subr.mxu0 0.0
        %5228 = vmatpush1.msra.mxu0 0.0
        %5229 = vmatprep.subr.mxu0 0.0
        %5230 = vmatpush1.msra.mxu0 0.0
        %5231 = vmatprep.subr.mxu0 0.0
        %5232 = vmatpush1.msra.mxu0 0.0
        %5233 = vmatprep.subr.mxu0 0.0
        %5234 = vmatpush1.msra.mxu0 0.0
        %5235 = vmatprep.subr.mxu0 0.0
        %5236 = vmatpush1.msra.mxu0 0.0
        %5237 = vmatprep.subr.mxu0 0.0
        %5238 = vmatpush1.msra.mxu0 0.0
        %5239 = vmatprep.subr.mxu0 0.0
        %5240 = vmatpush1.msra.mxu0 0.0
        %5241 = vmatprep.subr.mxu0 0.0
        %5242 = vmatpush1.msra.mxu0 0.0
        %5243 = vmatprep.subr.mxu0 0.0
        %5244 = vmatpush1.msra.mxu0 0.0
        %5245 = vmatprep.subr.mxu0 0.0
        %5246 = vmatpush1.msra.mxu0 0.0
        %5247 = vmatprep.mubr.f32.mxu0 0.0
        %5248 = vmatmul.mubr.f32.gmra.mrb[0].mxu0 %v3380
        %v5249 = vpop.f32.mrb[0].mxu0
        %v5250 = vadd.f32 0.0, %v5249
        %v5251 = vpop.f32.mrb[0].mxu0
        %5252 = vmatprep.mubr.f32.mxu0 0.0
        %5253 = vmatmul.mubr.f32.gmra.mrb[0].mxu0 %v3381
        %v5254 = vpop.f32.mrb[0].mxu0
        %v5255 = vadd.f32 0.0, %v5254
        %v5256 = vpop.f32.mrb[0].mxu0
        %5257 = vdwg.mxu0
        %v5258 = vadd.f32 %v5158, %v5250
        %v5259 = vadd.f32 %v5163, %v5255
        %s5260 = scalar_lea.vmem [#allocation5], 2688
        %v5261 = vld [vmem:[%s5260] sm:$0xff]
        %v5262 = vld [vmem:[%s5260 + $0x8] sm:$0xff]
        %v5263 = vld [vmem:[%s5260 + $0x10] sm:$0xff]
        %v5264 = vld [vmem:[%s5260 + $0x18] sm:$0xff]
        %v5265 = vld [vmem:[%s5260 + $0x20] sm:$0xff]
        %v5266 = vld [vmem:[%s5260 + $0x28] sm:$0xff]
        %v5267 = vld [vmem:[%s5260 + $0x30] sm:$0xff]
        %v5268 = vld [vmem:[%s5260 + $0x38] sm:$0xff]
        %v5269 = vld [vmem:[%s5260 + $0x40] sm:$0xff]
        %v5270 = vld [vmem:[%s5260 + $0x48] sm:$0xff]
        %v5271 = vld [vmem:[%s5260 + $0x50] sm:$0xff]
        %v5272 = vld [vmem:[%s5260 + $0x58] sm:$0xff]
        %v5273 = vld [vmem:[%s5260 + $0x60] sm:$0xff]
        %v5274 = vld [vmem:[%s5260 + $0x68] sm:$0xff]
        %v5275 = vld [vmem:[%s5260 + $0x70] sm:$0xff]
        %v5276 = vld [vmem:[%s5260 + $0x78] sm:$0xff]
        %5277 = vmatprep.subr.mxu0 0.0
        %5278 = vmatpush1.msra.mxu0 %v5261
        %5279 = vmatprep.subr.mxu0 0.0
        %5280 = vmatpush1.msra.mxu0 %v5262
        %5281 = vmatprep.subr.mxu0 0.0
        %5282 = vmatpush1.msra.mxu0 %v5263
        %5283 = vmatprep.subr.mxu0 0.0
        %5284 = vmatpush1.msra.mxu0 %v5264
        %5285 = vmatprep.subr.mxu0 0.0
        %5286 = vmatpush1.msra.mxu0 %v5265
        %5287 = vmatprep.subr.mxu0 0.0
        %5288 = vmatpush1.msra.mxu0 %v5266
        %5289 = vmatprep.subr.mxu0 0.0
        %5290 = vmatpush1.msra.mxu0 %v5267
        %5291 = vmatprep.subr.mxu0 0.0
        %5292 = vmatpush1.msra.mxu0 %v5268
        %5293 = vmatprep.subr.mxu0 0.0
        %5294 = vmatpush1.msra.mxu0 %v5269
        %5295 = vmatprep.subr.mxu0 0.0
        %5296 = vmatpush1.msra.mxu0 %v5270
        %5297 = vmatprep.subr.mxu0 0.0
        %5298 = vmatpush1.msra.mxu0 %v5271
        %5299 = vmatprep.subr.mxu0 0.0
        %5300 = vmatpush1.msra.mxu0 %v5272
        %5301 = vmatprep.subr.mxu0 0.0
        %5302 = vmatpush1.msra.mxu0 %v5273
        %5303 = vmatprep.subr.mxu0 0.0
        %5304 = vmatpush1.msra.mxu0 %v5274
        %5305 = vmatprep.subr.mxu0 0.0
        %5306 = vmatpush1.msra.mxu0 %v5275
        %5307 = vmatprep.subr.mxu0 0.0
        %5308 = vmatpush1.msra.mxu0 %v5276
        %5309 = vmatprep.subr.mxu0 0.0
        %5310 = vmatpush1.msra.mxu0 0.0
        %5311 = vmatprep.subr.mxu0 0.0
        %5312 = vmatpush1.msra.mxu0 0.0
        %5313 = vmatprep.subr.mxu0 0.0
        %5314 = vmatpush1.msra.mxu0 0.0
        %5315 = vmatprep.subr.mxu0 0.0
        %5316 = vmatpush1.msra.mxu0 0.0
        %5317 = vmatprep.subr.mxu0 0.0
        %5318 = vmatpush1.msra.mxu0 0.0
        %5319 = vmatprep.subr.mxu0 0.0
        %5320 = vmatpush1.msra.mxu0 0.0
        %5321 = vmatprep.subr.mxu0 0.0
        %5322 = vmatpush1.msra.mxu0 0.0
        %5323 = vmatprep.subr.mxu0 0.0
        %5324 = vmatpush1.msra.mxu0 0.0
        %5325 = vmatprep.subr.mxu0 0.0
        %5326 = vmatpush1.msra.mxu0 0.0
        %5327 = vmatprep.subr.mxu0 0.0
        %5328 = vmatpush1.msra.mxu0 0.0
        %5329 = vmatprep.subr.mxu0 0.0
        %5330 = vmatpush1.msra.mxu0 0.0
        %5331 = vmatprep.subr.mxu0 0.0
        %5332 = vmatpush1.msra.mxu0 0.0
        %5333 = vmatprep.subr.mxu0 0.0
        %5334 = vmatpush1.msra.mxu0 0.0
        %5335 = vmatprep.subr.mxu0 0.0
        %5336 = vmatpush1.msra.mxu0 0.0
        %5337 = vmatprep.subr.mxu0 0.0
        %5338 = vmatpush1.msra.mxu0 0.0
        %5339 = vmatprep.subr.mxu0 0.0
        %5340 = vmatpush1.msra.mxu0 0.0
        %5341 = vmatprep.mubr.f32.mxu0 0.0
        %5342 = vmatmul.mubr.f32.gmra.mrb[0].mxu0 %v3481
        %v5343 = vpop.f32.mrb[0].mxu0
        %v5344 = vadd.f32 0.0, %v5343
        %v5345 = vpop.f32.mrb[0].mxu0
        %5346 = vmatprep.mubr.f32.mxu0 0.0
        %5347 = vmatmul.mubr.f32.gmra.mrb[0].mxu0 %v3483
        %v5348 = vpop.f32.mrb[0].mxu0
        %v5349 = vadd.f32 0.0, %v5348
        %v5350 = vpop.f32.mrb[0].mxu0
        %5351 = vdwg.mxu0
        %v5352 = vadd.f32 %v5258, %v5344
        %v5353 = vadd.f32 %v5259, %v5349
        %s5354 = scalar_lea.vmem [#allocation5], 2816
        %v5355 = vld [vmem:[%s5354] sm:$0xff]
        %v5356 = vld [vmem:[%s5354 + $0x8] sm:$0xff]
        %v5357 = vld [vmem:[%s5354 + $0x10] sm:$0xff]
        %v5358 = vld [vmem:[%s5354 + $0x18] sm:$0xff]
        %v5359 = vld [vmem:[%s5354 + $0x20] sm:$0xff]
        %v5360 = vld [vmem:[%s5354 + $0x28] sm:$0xff]
        %v5361 = vld [vmem:[%s5354 + $0x30] sm:$0xff]
        %v5362 = vld [vmem:[%s5354 + $0x38] sm:$0xff]
        %v5363 = vld [vmem:[%s5354 + $0x40] sm:$0xff]
        %v5364 = vld [vmem:[%s5354 + $0x48] sm:$0xff]
        %v5365 = vld [vmem:[%s5354 + $0x50] sm:$0xff]
        %v5366 = vld [vmem:[%s5354 + $0x58] sm:$0xff]
        %v5367 = vld [vmem:[%s5354 + $0x60] sm:$0xff]
        %v5368 = vld [vmem:[%s5354 + $0x68] sm:$0xff]
        %v5369 = vld [vmem:[%s5354 + $0x70] sm:$0xff]
        %v5370 = vld [vmem:[%s5354 + $0x78] sm:$0xff]
        %5371 = vmatprep.subr.mxu0 0.0
        %5372 = vmatpush1.msra.mxu0 %v5355
        %5373 = vmatprep.subr.mxu0 0.0
        %5374 = vmatpush1.msra.mxu0 %v5356
        %5375 = vmatprep.subr.mxu0 0.0
        %5376 = vmatpush1.msra.mxu0 %v5357
        %5377 = vmatprep.subr.mxu0 0.0
        %5378 = vmatpush1.msra.mxu0 %v5358
        %5379 = vmatprep.subr.mxu0 0.0
        %5380 = vmatpush1.msra.mxu0 %v5359
        %5381 = vmatprep.subr.mxu0 0.0
        %5382 = vmatpush1.msra.mxu0 %v5360
        %5383 = vmatprep.subr.mxu0 0.0
        %5384 = vmatpush1.msra.mxu0 %v5361
        %5385 = vmatprep.subr.mxu0 0.0
        %5386 = vmatpush1.msra.mxu0 %v5362
        %5387 = vmatprep.subr.mxu0 0.0
        %5388 = vmatpush1.msra.mxu0 %v5363
        %5389 = vmatprep.subr.mxu0 0.0
        %5390 = vmatpush1.msra.mxu0 %v5364
        %5391 = vmatprep.subr.mxu0 0.0
        %5392 = vmatpush1.msra.mxu0 %v5365
        %5393 = vmatprep.subr.mxu0 0.0
        %5394 = vmatpush1.msra.mxu0 %v5366
        %5395 = vmatprep.subr.mxu0 0.0
        %5396 = vmatpush1.msra.mxu0 %v5367
        %5397 = vmatprep.subr.mxu0 0.0
        %5398 = vmatpush1.msra.mxu0 %v5368
        %5399 = vmatprep.subr.mxu0 0.0
        %5400 = vmatpush1.msra.mxu0 %v5369
        %5401 = vmatprep.subr.mxu0 0.0
        %5402 = vmatpush1.msra.mxu0 %v5370
        %5403 = vmatprep.subr.mxu0 0.0
        %5404 = vmatpush1.msra.mxu0 0.0
        %5405 = vmatprep.subr.mxu0 0.0
        %5406 = vmatpush1.msra.mxu0 0.0
        %5407 = vmatprep.subr.mxu0 0.0
        %5408 = vmatpush1.msra.mxu0 0.0
        %5409 = vmatprep.subr.mxu0 0.0
        %5410 = vmatpush1.msra.mxu0 0.0
        %5411 = vmatprep.subr.mxu0 0.0
        %5412 = vmatpush1.msra.mxu0 0.0
        %5413 = vmatprep.subr.mxu0 0.0
        %5414 = vmatpush1.msra.mxu0 0.0
        %5415 = vmatprep.subr.mxu0 0.0
        %5416 = vmatpush1.msra.mxu0 0.0
        %5417 = vmatprep.subr.mxu0 0.0
        %5418 = vmatpush1.msra.mxu0 0.0
        %5419 = vmatprep.subr.mxu0 0.0
        %5420 = vmatpush1.msra.mxu0 0.0
        %5421 = vmatprep.subr.mxu0 0.0
        %5422 = vmatpush1.msra.mxu0 0.0
        %5423 = vmatprep.subr.mxu0 0.0
        %5424 = vmatpush1.msra.mxu0 0.0
        %5425 = vmatprep.subr.mxu0 0.0
        %5426 = vmatpush1.msra.mxu0 0.0
        %5427 = vmatprep.subr.mxu0 0.0
        %5428 = vmatpush1.msra.mxu0 0.0
        %5429 = vmatprep.subr.mxu0 0.0
        %5430 = vmatpush1.msra.mxu0 0.0
        %5431 = vmatprep.subr.mxu0 0.0
        %5432 = vmatpush1.msra.mxu0 0.0
        %5433 = vmatprep.subr.mxu0 0.0
        %5434 = vmatpush1.msra.mxu0 0.0
        %5435 = vmatprep.mubr.f32.mxu0 0.0
        %5436 = vmatmul.mubr.f32.gmra.mrb[0].mxu0 %v3594
        %v5437 = vpop.f32.mrb[0].mxu0
        %v5438 = vadd.f32 0.0, %v5437
        %v5439 = vpop.f32.mrb[0].mxu0
        %5440 = vmatprep.mubr.f32.mxu0 0.0
        %5441 = vmatmul.mubr.f32.gmra.mrb[0].mxu0 %v3595
        %v5442 = vpop.f32.mrb[0].mxu0
        %v5443 = vadd.f32 0.0, %v5442
        %v5444 = vpop.f32.mrb[0].mxu0
        %5445 = vdwg.mxu0
        %v5446 = vadd.f32 %v5352, %v5438
        %v5447 = vadd.f32 %v5353, %v5443
        %s5448 = scalar_lea.vmem [#allocation5], 2944
        %v5449 = vld [vmem:[%s5448] sm:$0xff]
        %v5450 = vld [vmem:[%s5448 + $0x8] sm:$0xff]
        %v5451 = vld [vmem:[%s5448 + $0x10] sm:$0xff]
        %v5452 = vld [vmem:[%s5448 + $0x18] sm:$0xff]
        %v5453 = vld [vmem:[%s5448 + $0x20] sm:$0xff]
        %v5454 = vld [vmem:[%s5448 + $0x28] sm:$0xff]
        %v5455 = vld [vmem:[%s5448 + $0x30] sm:$0xff]
        %v5456 = vld [vmem:[%s5448 + $0x38] sm:$0xff]
        %v5457 = vld [vmem:[%s5448 + $0x40] sm:$0xff]
        %v5458 = vld [vmem:[%s5448 + $0x48] sm:$0xff]
        %v5459 = vld [vmem:[%s5448 + $0x50] sm:$0xff]
        %v5460 = vld [vmem:[%s5448 + $0x58] sm:$0xff]
        %v5461 = vld [vmem:[%s5448 + $0x60] sm:$0xff]
        %v5462 = vld [vmem:[%s5448 + $0x68] sm:$0xff]
        %v5463 = vld [vmem:[%s5448 + $0x70] sm:$0xff]
        %v5464 = vld [vmem:[%s5448 + $0x78] sm:$0xff]
        %5465 = vmatprep.subr.mxu0 0.0
        %5466 = vmatpush1.msra.mxu0 %v5449
        %5467 = vmatprep.subr.mxu0 0.0
        %5468 = vmatpush1.msra.mxu0 %v5450
        %5469 = vmatprep.subr.mxu0 0.0
        %5470 = vmatpush1.msra.mxu0 %v5451
        %5471 = vmatprep.subr.mxu0 0.0
        %5472 = vmatpush1.msra.mxu0 %v5452
        %5473 = vmatprep.subr.mxu0 0.0
        %5474 = vmatpush1.msra.mxu0 %v5453
        %5475 = vmatprep.subr.mxu0 0.0
        %5476 = vmatpush1.msra.mxu0 %v5454
        %5477 = vmatprep.subr.mxu0 0.0
        %5478 = vmatpush1.msra.mxu0 %v5455
        %5479 = vmatprep.subr.mxu0 0.0
        %5480 = vmatpush1.msra.mxu0 %v5456
        %5481 = vmatprep.subr.mxu0 0.0
        %5482 = vmatpush1.msra.mxu0 %v5457
        %5483 = vmatprep.subr.mxu0 0.0
        %5484 = vmatpush1.msra.mxu0 %v5458
        %5485 = vmatprep.subr.mxu0 0.0
        %5486 = vmatpush1.msra.mxu0 %v5459
        %5487 = vmatprep.subr.mxu0 0.0
        %5488 = vmatpush1.msra.mxu0 %v5460
        %5489 = vmatprep.subr.mxu0 0.0
        %5490 = vmatpush1.msra.mxu0 %v5461
        %5491 = vmatprep.subr.mxu0 0.0
        %5492 = vmatpush1.msra.mxu0 %v5462
        %5493 = vmatprep.subr.mxu0 0.0
        %5494 = vmatpush1.msra.mxu0 %v5463
        %5495 = vmatprep.subr.mxu0 0.0
        %5496 = vmatpush1.msra.mxu0 %v5464
        %5497 = vmatprep.subr.mxu0 0.0
        %5498 = vmatpush1.msra.mxu0 0.0
        %5499 = vmatprep.subr.mxu0 0.0
        %5500 = vmatpush1.msra.mxu0 0.0
        %5501 = vmatprep.subr.mxu0 0.0
        %5502 = vmatpush1.msra.mxu0 0.0
        %5503 = vmatprep.subr.mxu0 0.0
        %5504 = vmatpush1.msra.mxu0 0.0
        %5505 = vmatprep.subr.mxu0 0.0
        %5506 = vmatpush1.msra.mxu0 0.0
        %5507 = vmatprep.subr.mxu0 0.0
        %5508 = vmatpush1.msra.mxu0 0.0
        %5509 = vmatprep.subr.mxu0 0.0
        %5510 = vmatpush1.msra.mxu0 0.0
        %5511 = vmatprep.subr.mxu0 0.0
        %5512 = vmatpush1.msra.mxu0 0.0
        %5513 = vmatprep.subr.mxu0 0.0
        %5514 = vmatpush1.msra.mxu0 0.0
        %5515 = vmatprep.subr.mxu0 0.0
        %5516 = vmatpush1.msra.mxu0 0.0
        %5517 = vmatprep.subr.mxu0 0.0
        %5518 = vmatpush1.msra.mxu0 0.0
        %5519 = vmatprep.subr.mxu0 0.0
        %5520 = vmatpush1.msra.mxu0 0.0
        %5521 = vmatprep.subr.mxu0 0.0
        %5522 = vmatpush1.msra.mxu0 0.0
        %5523 = vmatprep.subr.mxu0 0.0
        %5524 = vmatpush1.msra.mxu0 0.0
        %5525 = vmatprep.subr.mxu0 0.0
        %5526 = vmatpush1.msra.mxu0 0.0
        %5527 = vmatprep.subr.mxu0 0.0
        %5528 = vmatpush1.msra.mxu0 0.0
        %5529 = vmatprep.mubr.f32.mxu0 0.0
        %5530 = vmatmul.mubr.f32.gmra.mrb[0].mxu0 %v3700
        %v5531 = vpop.f32.mrb[0].mxu0
        %v5532 = vadd.f32 0.0, %v5531
        %v5533 = vpop.f32.mrb[0].mxu0
        %5534 = vmatprep.mubr.f32.mxu0 0.0
        %5535 = vmatmul.mubr.f32.gmra.mrb[0].mxu0 %v3701
        %v5536 = vpop.f32.mrb[0].mxu0
        %v5537 = vadd.f32 0.0, %v5536
        %v5538 = vpop.f32.mrb[0].mxu0
        %5539 = vdwg.mxu0
        %v5540 = vadd.f32 %v5446, %v5532
        %v5541 = vadd.f32 %v5447, %v5537
        %s5542 = scalar_lea.vmem [#allocation5], 3072
        %v5543 = vld [vmem:[%s5542] sm:$0xff]
        %v5544 = vld [vmem:[%s5542 + $0x8] sm:$0xff]
        %v5545 = vld [vmem:[%s5542 + $0x10] sm:$0xff]
        %v5546 = vld [vmem:[%s5542 + $0x18] sm:$0xff]
        %v5547 = vld [vmem:[%s5542 + $0x20] sm:$0xff]
        %v5548 = vld [vmem:[%s5542 + $0x28] sm:$0xff]
        %v5549 = vld [vmem:[%s5542 + $0x30] sm:$0xff]
        %v5550 = vld [vmem:[%s5542 + $0x38] sm:$0xff]
        %v5551 = vld [vmem:[%s5542 + $0x40] sm:$0xff]
        %v5552 = vld [vmem:[%s5542 + $0x48] sm:$0xff]
        %v5553 = vld [vmem:[%s5542 + $0x50] sm:$0xff]
        %v5554 = vld [vmem:[%s5542 + $0x58] sm:$0xff]
        %v5555 = vld [vmem:[%s5542 + $0x60] sm:$0xff]
        %v5556 = vld [vmem:[%s5542 + $0x68] sm:$0xff]
        %v5557 = vld [vmem:[%s5542 + $0x70] sm:$0xff]
        %v5558 = vld [vmem:[%s5542 + $0x78] sm:$0xff]
        %5559 = vmatprep.subr.mxu0 0.0
        %5560 = vmatpush1.msra.mxu0 %v5543
        %5561 = vmatprep.subr.mxu0 0.0
        %5562 = vmatpush1.msra.mxu0 %v5544
        %5563 = vmatprep.subr.mxu0 0.0
        %5564 = vmatpush1.msra.mxu0 %v5545
        %5565 = vmatprep.subr.mxu0 0.0
        %5566 = vmatpush1.msra.mxu0 %v5546
        %5567 = vmatprep.subr.mxu0 0.0
        %5568 = vmatpush1.msra.mxu0 %v5547
        %5569 = vmatprep.subr.mxu0 0.0
        %5570 = vmatpush1.msra.mxu0 %v5548
        %5571 = vmatprep.subr.mxu0 0.0
        %5572 = vmatpush1.msra.mxu0 %v5549
        %5573 = vmatprep.subr.mxu0 0.0
        %5574 = vmatpush1.msra.mxu0 %v5550
        %5575 = vmatprep.subr.mxu0 0.0
        %5576 = vmatpush1.msra.mxu0 %v5551
        %5577 = vmatprep.subr.mxu0 0.0
        %5578 = vmatpush1.msra.mxu0 %v5552
        %5579 = vmatprep.subr.mxu0 0.0
        %5580 = vmatpush1.msra.mxu0 %v5553
        %5581 = vmatprep.subr.mxu0 0.0
        %5582 = vmatpush1.msra.mxu0 %v5554
        %5583 = vmatprep.subr.mxu0 0.0
        %5584 = vmatpush1.msra.mxu0 %v5555
        %5585 = vmatprep.subr.mxu0 0.0
        %5586 = vmatpush1.msra.mxu0 %v5556
        %5587 = vmatprep.subr.mxu0 0.0
        %5588 = vmatpush1.msra.mxu0 %v5557
        %5589 = vmatprep.subr.mxu0 0.0
        %5590 = vmatpush1.msra.mxu0 %v5558
        %5591 = vmatprep.subr.mxu0 0.0
        %5592 = vmatpush1.msra.mxu0 0.0
        %5593 = vmatprep.subr.mxu0 0.0
        %5594 = vmatpush1.msra.mxu0 0.0
        %5595 = vmatprep.subr.mxu0 0.0
        %5596 = vmatpush1.msra.mxu0 0.0
        %5597 = vmatprep.subr.mxu0 0.0
        %5598 = vmatpush1.msra.mxu0 0.0
        %5599 = vmatprep.subr.mxu0 0.0
        %5600 = vmatpush1.msra.mxu0 0.0
        %5601 = vmatprep.subr.mxu0 0.0
        %5602 = vmatpush1.msra.mxu0 0.0
        %5603 = vmatprep.subr.mxu0 0.0
        %5604 = vmatpush1.msra.mxu0 0.0
        %5605 = vmatprep.subr.mxu0 0.0
        %5606 = vmatpush1.msra.mxu0 0.0
        %5607 = vmatprep.subr.mxu0 0.0
        %5608 = vmatpush1.msra.mxu0 0.0
        %5609 = vmatprep.subr.mxu0 0.0
        %5610 = vmatpush1.msra.mxu0 0.0
        %5611 = vmatprep.subr.mxu0 0.0
        %5612 = vmatpush1.msra.mxu0 0.0
        %5613 = vmatprep.subr.mxu0 0.0
        %5614 = vmatpush1.msra.mxu0 0.0
        %5615 = vmatprep.subr.mxu0 0.0
        %5616 = vmatpush1.msra.mxu0 0.0
        %5617 = vmatprep.subr.mxu0 0.0
        %5618 = vmatpush1.msra.mxu0 0.0
        %5619 = vmatprep.subr.mxu0 0.0
        %5620 = vmatpush1.msra.mxu0 0.0
        %5621 = vmatprep.subr.mxu0 0.0
        %5622 = vmatpush1.msra.mxu0 0.0
        %5623 = vmatprep.mubr.f32.mxu0 0.0
        %5624 = vmatmul.mubr.f32.gmra.mrb[0].mxu0 %v3800
        %v5625 = vpop.f32.mrb[0].mxu0
        %v5626 = vadd.f32 0.0, %v5625
        %v5627 = vpop.f32.mrb[0].mxu0
        %5628 = vmatprep.mubr.f32.mxu0 0.0
        %5629 = vmatmul.mubr.f32.gmra.mrb[0].mxu0 %v3802
        %v5630 = vpop.f32.mrb[0].mxu0
        %v5631 = vadd.f32 0.0, %v5630
        %v5632 = vpop.f32.mrb[0].mxu0
        %5633 = vdwg.mxu0
        %v5634 = vadd.f32 %v5540, %v5626
        %v5635 = vadd.f32 %v5541, %v5631
        %s5636 = scalar_lea.vmem [#allocation5], 3200
        %v5637 = vld [vmem:[%s5636] sm:$0xff]
        %v5638 = vld [vmem:[%s5636 + $0x8] sm:$0xff]
        %v5639 = vld [vmem:[%s5636 + $0x10] sm:$0xff]
        %v5640 = vld [vmem:[%s5636 + $0x18] sm:$0xff]
        %v5641 = vld [vmem:[%s5636 + $0x20] sm:$0xff]
        %v5642 = vld [vmem:[%s5636 + $0x28] sm:$0xff]
        %v5643 = vld [vmem:[%s5636 + $0x30] sm:$0xff]
        %v5644 = vld [vmem:[%s5636 + $0x38] sm:$0xff]
        %v5645 = vld [vmem:[%s5636 + $0x40] sm:$0xff]
        %v5646 = vld [vmem:[%s5636 + $0x48] sm:$0xff]
        %v5647 = vld [vmem:[%s5636 + $0x50] sm:$0xff]
        %v5648 = vld [vmem:[%s5636 + $0x58] sm:$0xff]
        %v5649 = vld [vmem:[%s5636 + $0x60] sm:$0xff]
        %v5650 = vld [vmem:[%s5636 + $0x68] sm:$0xff]
        %v5651 = vld [vmem:[%s5636 + $0x70] sm:$0xff]
        %v5652 = vld [vmem:[%s5636 + $0x78] sm:$0xff]
        %5653 = vmatprep.subr.mxu0 0.0
        %5654 = vmatpush1.msra.mxu0 %v5637
        %5655 = vmatprep.subr.mxu0 0.0
        %5656 = vmatpush1.msra.mxu0 %v5638
        %5657 = vmatprep.subr.mxu0 0.0
        %5658 = vmatpush1.msra.mxu0 %v5639
        %5659 = vmatprep.subr.mxu0 0.0
        %5660 = vmatpush1.msra.mxu0 %v5640
        %5661 = vmatprep.subr.mxu0 0.0
        %5662 = vmatpush1.msra.mxu0 %v5641
        %5663 = vmatprep.subr.mxu0 0.0
        %5664 = vmatpush1.msra.mxu0 %v5642
        %5665 = vmatprep.subr.mxu0 0.0
        %5666 = vmatpush1.msra.mxu0 %v5643
        %5667 = vmatprep.subr.mxu0 0.0
        %5668 = vmatpush1.msra.mxu0 %v5644
        %5669 = vmatprep.subr.mxu0 0.0
        %5670 = vmatpush1.msra.mxu0 %v5645
        %5671 = vmatprep.subr.mxu0 0.0
        %5672 = vmatpush1.msra.mxu0 %v5646
        %5673 = vmatprep.subr.mxu0 0.0
        %5674 = vmatpush1.msra.mxu0 %v5647
        %5675 = vmatprep.subr.mxu0 0.0
        %5676 = vmatpush1.msra.mxu0 %v5648
        %5677 = vmatprep.subr.mxu0 0.0
        %5678 = vmatpush1.msra.mxu0 %v5649
        %5679 = vmatprep.subr.mxu0 0.0
        %5680 = vmatpush1.msra.mxu0 %v5650
        %5681 = vmatprep.subr.mxu0 0.0
        %5682 = vmatpush1.msra.mxu0 %v5651
        %5683 = vmatprep.subr.mxu0 0.0
        %5684 = vmatpush1.msra.mxu0 %v5652
        %5685 = vmatprep.subr.mxu0 0.0
        %5686 = vmatpush1.msra.mxu0 0.0
        %5687 = vmatprep.subr.mxu0 0.0
        %5688 = vmatpush1.msra.mxu0 0.0
        %5689 = vmatprep.subr.mxu0 0.0
        %5690 = vmatpush1.msra.mxu0 0.0
        %5691 = vmatprep.subr.mxu0 0.0
        %5692 = vmatpush1.msra.mxu0 0.0
        %5693 = vmatprep.subr.mxu0 0.0
        %5694 = vmatpush1.msra.mxu0 0.0
        %5695 = vmatprep.subr.mxu0 0.0
        %5696 = vmatpush1.msra.mxu0 0.0
        %5697 = vmatprep.subr.mxu0 0.0
        %5698 = vmatpush1.msra.mxu0 0.0
        %5699 = vmatprep.subr.mxu0 0.0
        %5700 = vmatpush1.msra.mxu0 0.0
        %5701 = vmatprep.subr.mxu0 0.0
        %5702 = vmatpush1.msra.mxu0 0.0
        %5703 = vmatprep.subr.mxu0 0.0
        %5704 = vmatpush1.msra.mxu0 0.0
        %5705 = vmatprep.subr.mxu0 0.0
        %5706 = vmatpush1.msra.mxu0 0.0
        %5707 = vmatprep.subr.mxu0 0.0
        %5708 = vmatpush1.msra.mxu0 0.0
        %5709 = vmatprep.subr.mxu0 0.0
        %5710 = vmatpush1.msra.mxu0 0.0
        %5711 = vmatprep.subr.mxu0 0.0
        %5712 = vmatpush1.msra.mxu0 0.0
        %5713 = vmatprep.subr.mxu0 0.0
        %5714 = vmatpush1.msra.mxu0 0.0
        %5715 = vmatprep.subr.mxu0 0.0
        %5716 = vmatpush1.msra.mxu0 0.0
        %5717 = vmatprep.mubr.f32.mxu0 0.0
        %5718 = vmatmul.mubr.f32.gmra.mrb[0].mxu0 %v3912
        %v5719 = vpop.f32.mrb[0].mxu0
        %v5720 = vadd.f32 0.0, %v5719
        %v5721 = vpop.f32.mrb[0].mxu0
        %5722 = vmatprep.mubr.f32.mxu0 0.0
        %5723 = vmatmul.mubr.f32.gmra.mrb[0].mxu0 %v3913
        %v5724 = vpop.f32.mrb[0].mxu0
        %v5725 = vadd.f32 0.0, %v5724
        %v5726 = vpop.f32.mrb[0].mxu0
        %5727 = vdwg.mxu0
        %v5728 = vadd.f32 %v5634, %v5720
        %v5729 = vadd.f32 %v5635, %v5725
        %s5730 = scalar_lea.vmem [#allocation5], 3328
        %v5731 = vld [vmem:[%s5730] sm:$0xff]
        %v5732 = vld [vmem:[%s5730 + $0x8] sm:$0xff]
        %v5733 = vld [vmem:[%s5730 + $0x10] sm:$0xff]
        %v5734 = vld [vmem:[%s5730 + $0x18] sm:$0xff]
        %v5735 = vld [vmem:[%s5730 + $0x20] sm:$0xff]
        %v5736 = vld [vmem:[%s5730 + $0x28] sm:$0xff]
        %v5737 = vld [vmem:[%s5730 + $0x30] sm:$0xff]
        %v5738 = vld [vmem:[%s5730 + $0x38] sm:$0xff]
        %v5739 = vld [vmem:[%s5730 + $0x40] sm:$0xff]
        %v5740 = vld [vmem:[%s5730 + $0x48] sm:$0xff]
        %v5741 = vld [vmem:[%s5730 + $0x50] sm:$0xff]
        %v5742 = vld [vmem:[%s5730 + $0x58] sm:$0xff]
        %v5743 = vld [vmem:[%s5730 + $0x60] sm:$0xff]
        %v5744 = vld [vmem:[%s5730 + $0x68] sm:$0xff]
        %v5745 = vld [vmem:[%s5730 + $0x70] sm:$0xff]
        %v5746 = vld [vmem:[%s5730 + $0x78] sm:$0xff]
        %5747 = vmatprep.subr.mxu0 0.0
        %5748 = vmatpush1.msra.mxu0 %v5731
        %5749 = vmatprep.subr.mxu0 0.0
        %5750 = vmatpush1.msra.mxu0 %v5732
        %5751 = vmatprep.subr.mxu0 0.0
        %5752 = vmatpush1.msra.mxu0 %v5733
        %5753 = vmatprep.subr.mxu0 0.0
        %5754 = vmatpush1.msra.mxu0 %v5734
        %5755 = vmatprep.subr.mxu0 0.0
        %5756 = vmatpush1.msra.mxu0 %v5735
        %5757 = vmatprep.subr.mxu0 0.0
        %5758 = vmatpush1.msra.mxu0 %v5736
        %5759 = vmatprep.subr.mxu0 0.0
        %5760 = vmatpush1.msra.mxu0 %v5737
        %5761 = vmatprep.subr.mxu0 0.0
        %5762 = vmatpush1.msra.mxu0 %v5738
        %5763 = vmatprep.subr.mxu0 0.0
        %5764 = vmatpush1.msra.mxu0 %v5739
        %5765 = vmatprep.subr.mxu0 0.0
        %5766 = vmatpush1.msra.mxu0 %v5740
        %5767 = vmatprep.subr.mxu0 0.0
        %5768 = vmatpush1.msra.mxu0 %v5741
        %5769 = vmatprep.subr.mxu0 0.0
        %5770 = vmatpush1.msra.mxu0 %v5742
        %5771 = vmatprep.subr.mxu0 0.0
        %5772 = vmatpush1.msra.mxu0 %v5743
        %5773 = vmatprep.subr.mxu0 0.0
        %5774 = vmatpush1.msra.mxu0 %v5744
        %5775 = vmatprep.subr.mxu0 0.0
        %5776 = vmatpush1.msra.mxu0 %v5745
        %5777 = vmatprep.subr.mxu0 0.0
        %5778 = vmatpush1.msra.mxu0 %v5746
        %5779 = vmatprep.subr.mxu0 0.0
        %5780 = vmatpush1.msra.mxu0 0.0
        %5781 = vmatprep.subr.mxu0 0.0
        %5782 = vmatpush1.msra.mxu0 0.0
        %5783 = vmatprep.subr.mxu0 0.0
        %5784 = vmatpush1.msra.mxu0 0.0
        %5785 = vmatprep.subr.mxu0 0.0
        %5786 = vmatpush1.msra.mxu0 0.0
        %5787 = vmatprep.subr.mxu0 0.0
        %5788 = vmatpush1.msra.mxu0 0.0
        %5789 = vmatprep.subr.mxu0 0.0
        %5790 = vmatpush1.msra.mxu0 0.0
        %5791 = vmatprep.subr.mxu0 0.0
        %5792 = vmatpush1.msra.mxu0 0.0
        %5793 = vmatprep.subr.mxu0 0.0
        %5794 = vmatpush1.msra.mxu0 0.0
        %5795 = vmatprep.subr.mxu0 0.0
        %5796 = vmatpush1.msra.mxu0 0.0
        %5797 = vmatprep.subr.mxu0 0.0
        %5798 = vmatpush1.msra.mxu0 0.0
        %5799 = vmatprep.subr.mxu0 0.0
        %5800 = vmatpush1.msra.mxu0 0.0
        %5801 = vmatprep.subr.mxu0 0.0
        %5802 = vmatpush1.msra.mxu0 0.0
        %5803 = vmatprep.subr.mxu0 0.0
        %5804 = vmatpush1.msra.mxu0 0.0
        %5805 = vmatprep.subr.mxu0 0.0
        %5806 = vmatpush1.msra.mxu0 0.0
        %5807 = vmatprep.subr.mxu0 0.0
        %5808 = vmatpush1.msra.mxu0 0.0
        %5809 = vmatprep.subr.mxu0 0.0
        %5810 = vmatpush1.msra.mxu0 0.0
        %5811 = vmatprep.mubr.f32.mxu0 0.0
        %5812 = vmatmul.mubr.f32.gmra.mrb[0].mxu0 %v4018
        %v5813 = vpop.f32.mrb[0].mxu0
        %v5814 = vadd.f32 0.0, %v5813
        %v5815 = vpop.f32.mrb[0].mxu0
        %5816 = vmatprep.mubr.f32.mxu0 0.0
        %5817 = vmatmul.mubr.f32.gmra.mrb[0].mxu0 %v4019
        %v5818 = vpop.f32.mrb[0].mxu0
        %v5819 = vadd.f32 0.0, %v5818
        %v5820 = vpop.f32.mrb[0].mxu0
        %5821 = vdwg.mxu0
        %v5822 = vadd.f32 %v5728, %v5814
        %v5823 = vadd.f32 %v5729, %v5819
        %s5824 = scalar_lea.vmem [#allocation7], 2
        %v5825 = vld [vmem:[%s5824] sm:$0x1]
        %v5827 = vlaneseq
        %v5828 = vshrl.u32 %v5827, 7
        %v5829 = vsub.s32 0, %v5828
        %v5830 = vrot.slane %v5825, %v5829
        %v5832 = vmul.f32 %v5822, %v5830
        %v5833 = vmul.f32 %v5823, %v5830
        %s5834 = scalar_lea.vmem [#allocation8], 2
        %v5835 = vld [vmem:[%s5834] sm:$0x1]
        %v5837 = vlaneseq
        %v5838 = vshrl.u32 %v5837, 7
        %v5839 = vsub.s32 0, %v5838
        %v5840 = vrot.slane %v5835, %v5839
        %v5842 = vadd.f32 %v5832, %v5840
        %v5843 = vadd.f32 %v5833, %v5840
        %v5844 = vmax.f32 %v5842, 0.0
        %v5845 = vmax.f32 %v5843, 0.0
        %v5846 = vadd.f32 %v4980, %v5844
        %v5847 = vadd.f32 %v4981, %v5845
        %5850 = vrot.lane.b32.xlu0 %v4119, 8
        %v5851 = vpop.permute.xlu0 %5850
        %5852 = vrot.lane.b32.xlu0 %v4120, 8
        %v5853 = vpop.permute.xlu0 %5852
        %v5856 = vsel %vm270, 0.0, %v5851
        %v5857 = vsel %vm270, 0.0, %v5853
        %v5858 = vsel %vm270, %v5851, 0.0
        %v5859 = vsel %vm270, %v5853, 0.0
        %v5864 = vrot.slane %v5856, 7
        %v5865 = vrot.slane %v5858, 7
        %v5866 = vrot.slane %v5857, 7
        %v5867 = vsel %vm279, %v5864, %v5866
        %v5868 = vrot.slane %v5859, 7
        %v5869 = vsel %vm279, %v5865, %v5868
        %v5875 = vsel %vm279, 0.0, %v5864
        %v5876 = vsel %vm279, 0.0, %v5865
        %v5877 = vsel %vm279, %v5866, 0.0
        %v5878 = vsel %vm279, %v5868, 0.0
        %s5879 = scalar_lea.vmem [#allocation5], 6912
        %v5880 = vld [vmem:[%s5879] sm:$0xff]
        %v5881 = vld [vmem:[%s5879 + $0x8] sm:$0xff]
        %v5882 = vld [vmem:[%s5879 + $0x10] sm:$0xff]
        %v5883 = vld [vmem:[%s5879 + $0x18] sm:$0xff]
        %v5884 = vld [vmem:[%s5879 + $0x20] sm:$0xff]
        %v5885 = vld [vmem:[%s5879 + $0x28] sm:$0xff]
        %v5886 = vld [vmem:[%s5879 + $0x30] sm:$0xff]
        %v5887 = vld [vmem:[%s5879 + $0x38] sm:$0xff]
        %v5888 = vld [vmem:[%s5879 + $0x40] sm:$0xff]
        %v5889 = vld [vmem:[%s5879 + $0x48] sm:$0xff]
        %v5890 = vld [vmem:[%s5879 + $0x50] sm:$0xff]
        %v5891 = vld [vmem:[%s5879 + $0x58] sm:$0xff]
        %v5892 = vld [vmem:[%s5879 + $0x60] sm:$0xff]
        %v5893 = vld [vmem:[%s5879 + $0x68] sm:$0xff]
        %v5894 = vld [vmem:[%s5879 + $0x70] sm:$0xff]
        %v5895 = vld [vmem:[%s5879 + $0x78] sm:$0xff]
        %s5896 = scalar_lea.vmem [#allocation5], 7040
        %v5897 = vld [vmem:[%s5896] sm:$0xff]
        %v5898 = vld [vmem:[%s5896 + $0x8] sm:$0xff]
        %v5899 = vld [vmem:[%s5896 + $0x10] sm:$0xff]
        %v5900 = vld [vmem:[%s5896 + $0x18] sm:$0xff]
        %v5901 = vld [vmem:[%s5896 + $0x20] sm:$0xff]
        %v5902 = vld [vmem:[%s5896 + $0x28] sm:$0xff]
        %v5903 = vld [vmem:[%s5896 + $0x30] sm:$0xff]
        %v5904 = vld [vmem:[%s5896 + $0x38] sm:$0xff]
        %v5905 = vld [vmem:[%s5896 + $0x40] sm:$0xff]
        %v5906 = vld [vmem:[%s5896 + $0x48] sm:$0xff]
        %v5907 = vld [vmem:[%s5896 + $0x50] sm:$0xff]
        %v5908 = vld [vmem:[%s5896 + $0x58] sm:$0xff]
        %v5909 = vld [vmem:[%s5896 + $0x60] sm:$0xff]
        %v5910 = vld [vmem:[%s5896 + $0x68] sm:$0xff]
        %v5911 = vld [vmem:[%s5896 + $0x70] sm:$0xff]
        %v5912 = vld [vmem:[%s5896 + $0x78] sm:$0xff]
        %5915 = vrot.lane.b32.xlu0 %v5875, 120
        %v5916 = vpop.permute.xlu0 %5915
        %5917 = vrot.lane.b32.xlu0 %v5876, 120
        %v5918 = vpop.permute.xlu0 %5917
        %5919 = vrot.lane.b32.xlu0 %v5867, 120
        %v5920 = vpop.permute.xlu0 %5919
        %5921 = vrot.lane.b32.xlu0 %v5869, 120
        %v5922 = vpop.permute.xlu0 %5921
        %v5923 = vsel %vm339, %v5916, %v5918
        %v5924 = vsel %vm339, %v5920, %v5922
        %5927 = vmatprep.subr.mxu0 0.0
        %5928 = vmatpush1.msra.mxu0 %v5897
        %5929 = vmatprep.subr.mxu0 0.0
        %5930 = vmatpush1.msra.mxu0 %v5898
        %5931 = vmatprep.subr.mxu0 0.0
        %5932 = vmatpush1.msra.mxu0 %v5899
        %5933 = vmatprep.subr.mxu0 0.0
        %5934 = vmatpush1.msra.mxu0 %v5900
        %5935 = vmatprep.subr.mxu0 0.0
        %5936 = vmatpush1.msra.mxu0 %v5901
        %5937 = vmatprep.subr.mxu0 0.0
        %5938 = vmatpush1.msra.mxu0 %v5902
        %5939 = vmatprep.subr.mxu0 0.0
        %5940 = vmatpush1.msra.mxu0 %v5903
        %5941 = vmatprep.subr.mxu0 0.0
        %5942 = vmatpush1.msra.mxu0 %v5904
        %5943 = vmatprep.subr.mxu0 0.0
        %5944 = vmatpush1.msra.mxu0 %v5905
        %5945 = vmatprep.subr.mxu0 0.0
        %5946 = vmatpush1.msra.mxu0 %v5906
        %5947 = vmatprep.subr.mxu0 0.0
        %5948 = vmatpush1.msra.mxu0 %v5907
        %5949 = vmatprep.subr.mxu0 0.0
        %5950 = vmatpush1.msra.mxu0 %v5908
        %5951 = vmatprep.subr.mxu0 0.0
        %5952 = vmatpush1.msra.mxu0 %v5909
        %5953 = vmatprep.subr.mxu0 0.0
        %5954 = vmatpush1.msra.mxu0 %v5910
        %5955 = vmatprep.subr.mxu0 0.0
        %5956 = vmatpush1.msra.mxu0 %v5911
        %5957 = vmatprep.subr.mxu0 0.0
        %5958 = vmatpush1.msra.mxu0 %v5912
        %5959 = vmatprep.subr.mxu0 0.0
        %5960 = vmatpush1.msra.mxu0 0.0
        %5961 = vmatprep.subr.mxu0 0.0
        %5962 = vmatpush1.msra.mxu0 0.0
        %5963 = vmatprep.subr.mxu0 0.0
        %5964 = vmatpush1.msra.mxu0 0.0
        %5965 = vmatprep.subr.mxu0 0.0
        %5966 = vmatpush1.msra.mxu0 0.0
        %5967 = vmatprep.subr.mxu0 0.0
        %5968 = vmatpush1.msra.mxu0 0.0
        %5969 = vmatprep.subr.mxu0 0.0
        %5970 = vmatpush1.msra.mxu0 0.0
        %5971 = vmatprep.subr.mxu0 0.0
        %5972 = vmatpush1.msra.mxu0 0.0
        %5973 = vmatprep.subr.mxu0 0.0
        %5974 = vmatpush1.msra.mxu0 0.0
        %5975 = vmatprep.subr.mxu0 0.0
        %5976 = vmatpush1.msra.mxu0 0.0
        %5977 = vmatprep.subr.mxu0 0.0
        %5978 = vmatpush1.msra.mxu0 0.0
        %5979 = vmatprep.subr.mxu0 0.0
        %5980 = vmatpush1.msra.mxu0 0.0
        %5981 = vmatprep.subr.mxu0 0.0
        %5982 = vmatpush1.msra.mxu0 0.0
        %5983 = vmatprep.subr.mxu0 0.0
        %5984 = vmatpush1.msra.mxu0 0.0
        %5985 = vmatprep.subr.mxu0 0.0
        %5986 = vmatpush1.msra.mxu0 0.0
        %5987 = vmatprep.subr.mxu0 0.0
        %5988 = vmatpush1.msra.mxu0 0.0
        %5989 = vmatprep.subr.mxu0 0.0
        %5990 = vmatpush1.msra.mxu0 0.0
        %5991 = vmatprep.mubr.f32.mxu0 0.0
        %5992 = vmatmul.mubr.f32.gmra.mrb[0].mxu0 %v5923
        %v5993 = vpop.f32.mrb[0].mxu0
        %v5994 = vadd.f32 0.0, %v5993
        %v5995 = vpop.f32.mrb[0].mxu0
        %5996 = vmatprep.mubr.f32.mxu0 0.0
        %5997 = vmatmul.mubr.f32.gmra.mrb[0].mxu0 %v5924
        %v5998 = vpop.f32.mrb[0].mxu0
        %v5999 = vadd.f32 0.0, %v5998
        %v6000 = vpop.f32.mrb[0].mxu0
        %6001 = vdwg.mxu0
        %6002 = vmatprep.subr.mxu0 0.0
        %6003 = vmatpush1.msra.mxu0 %v5880
        %6004 = vmatprep.subr.mxu0 0.0
        %6005 = vmatpush1.msra.mxu0 %v5881
        %6006 = vmatprep.subr.mxu0 0.0
        %6007 = vmatpush1.msra.mxu0 %v5882
        %6008 = vmatprep.subr.mxu0 0.0
        %6009 = vmatpush1.msra.mxu0 %v5883
        %6010 = vmatprep.subr.mxu0 0.0
        %6011 = vmatpush1.msra.mxu0 %v5884
        %6012 = vmatprep.subr.mxu0 0.0
        %6013 = vmatpush1.msra.mxu0 %v5885
        %6014 = vmatprep.subr.mxu0 0.0
        %6015 = vmatpush1.msra.mxu0 %v5886
        %6016 = vmatprep.subr.mxu0 0.0
        %6017 = vmatpush1.msra.mxu0 %v5887
        %6018 = vmatprep.subr.mxu0 0.0
        %6019 = vmatpush1.msra.mxu0 %v5888
        %6020 = vmatprep.subr.mxu0 0.0
        %6021 = vmatpush1.msra.mxu0 %v5889
        %6022 = vmatprep.subr.mxu0 0.0
        %6023 = vmatpush1.msra.mxu0 %v5890
        %6024 = vmatprep.subr.mxu0 0.0
        %6025 = vmatpush1.msra.mxu0 %v5891
        %6026 = vmatprep.subr.mxu0 0.0
        %6027 = vmatpush1.msra.mxu0 %v5892
        %6028 = vmatprep.subr.mxu0 0.0
        %6029 = vmatpush1.msra.mxu0 %v5893
        %6030 = vmatprep.subr.mxu0 0.0
        %6031 = vmatpush1.msra.mxu0 %v5894
        %6032 = vmatprep.subr.mxu0 0.0
        %6033 = vmatpush1.msra.mxu0 %v5895
        %6034 = vmatprep.subr.mxu0 0.0
        %6035 = vmatpush1.msra.mxu0 0.0
        %6036 = vmatprep.subr.mxu0 0.0
        %6037 = vmatpush1.msra.mxu0 0.0
        %6038 = vmatprep.subr.mxu0 0.0
        %6039 = vmatpush1.msra.mxu0 0.0
        %6040 = vmatprep.subr.mxu0 0.0
        %6041 = vmatpush1.msra.mxu0 0.0
        %6042 = vmatprep.subr.mxu0 0.0
        %6043 = vmatpush1.msra.mxu0 0.0
        %6044 = vmatprep.subr.mxu0 0.0
        %6045 = vmatpush1.msra.mxu0 0.0
        %6046 = vmatprep.subr.mxu0 0.0
        %6047 = vmatpush1.msra.mxu0 0.0
        %6048 = vmatprep.subr.mxu0 0.0
        %6049 = vmatpush1.msra.mxu0 0.0
        %6050 = vmatprep.subr.mxu0 0.0
        %6051 = vmatpush1.msra.mxu0 0.0
        %6052 = vmatprep.subr.mxu0 0.0
        %6053 = vmatpush1.msra.mxu0 0.0
        %6054 = vmatprep.subr.mxu0 0.0
        %6055 = vmatpush1.msra.mxu0 0.0
        %6056 = vmatprep.subr.mxu0 0.0
        %6057 = vmatpush1.msra.mxu0 0.0
        %6058 = vmatprep.subr.mxu0 0.0
        %6059 = vmatpush1.msra.mxu0 0.0
        %6060 = vmatprep.subr.mxu0 0.0
        %6061 = vmatpush1.msra.mxu0 0.0
        %6062 = vmatprep.subr.mxu0 0.0
        %6063 = vmatpush1.msra.mxu0 0.0
        %6064 = vmatprep.subr.mxu0 0.0
        %6065 = vmatpush1.msra.mxu0 0.0
        %6066 = vmatprep.mubr.f32.mxu0 0.0
        %6067 = vmatmul.mubr.f32.gmra.mrb[0].mxu0 %v5875
        %v6068 = vpop.f32.mrb[0].mxu0
        %v6069 = vadd.f32 %v5994, %v6068
        %v6070 = vpop.f32.mrb[0].mxu0
        %6071 = vmatprep.mubr.f32.mxu0 0.0
        %6072 = vmatmul.mubr.f32.gmra.mrb[0].mxu0 %v5867
        %v6073 = vpop.f32.mrb[0].mxu0
        %v6074 = vadd.f32 %v5999, %v6073
        %v6075 = vpop.f32.mrb[0].mxu0
        %6076 = vdwg.mxu0
        %s6077 = scalar_lea.vmem [#allocation5], 7168
        %v6078 = vld [vmem:[%s6077] sm:$0xff]
        %v6079 = vld [vmem:[%s6077 + $0x8] sm:$0xff]
        %v6080 = vld [vmem:[%s6077 + $0x10] sm:$0xff]
        %v6081 = vld [vmem:[%s6077 + $0x18] sm:$0xff]
        %v6082 = vld [vmem:[%s6077 + $0x20] sm:$0xff]
        %v6083 = vld [vmem:[%s6077 + $0x28] sm:$0xff]
        %v6084 = vld [vmem:[%s6077 + $0x30] sm:$0xff]
        %v6085 = vld [vmem:[%s6077 + $0x38] sm:$0xff]
        %v6086 = vld [vmem:[%s6077 + $0x40] sm:$0xff]
        %v6087 = vld [vmem:[%s6077 + $0x48] sm:$0xff]
        %v6088 = vld [vmem:[%s6077 + $0x50] sm:$0xff]
        %v6089 = vld [vmem:[%s6077 + $0x58] sm:$0xff]
        %v6090 = vld [vmem:[%s6077 + $0x60] sm:$0xff]
        %v6091 = vld [vmem:[%s6077 + $0x68] sm:$0xff]
        %v6092 = vld [vmem:[%s6077 + $0x70] sm:$0xff]
        %v6093 = vld [vmem:[%s6077 + $0x78] sm:$0xff]
        %6094 = vrot.lane.b32.xlu0 %v5875, 112
        %v6095 = vpop.permute.xlu0 %6094
        %6096 = vrot.lane.b32.xlu0 %v5876, 112
        %v6097 = vpop.permute.xlu0 %6096
        %6098 = vrot.lane.b32.xlu0 %v5867, 112
        %v6099 = vpop.permute.xlu0 %6098
        %6100 = vrot.lane.b32.xlu0 %v5869, 112
        %v6101 = vpop.permute.xlu0 %6100
        %v6102 = vsel %vm519, %v6095, %v6097
        %v6103 = vsel %vm519, %v6099, %v6101
        %6106 = vmatprep.subr.mxu0 0.0
        %6107 = vmatpush1.msra.mxu0 %v6078
        %6108 = vmatprep.subr.mxu0 0.0
        %6109 = vmatpush1.msra.mxu0 %v6079
        %6110 = vmatprep.subr.mxu0 0.0
        %6111 = vmatpush1.msra.mxu0 %v6080
        %6112 = vmatprep.subr.mxu0 0.0
        %6113 = vmatpush1.msra.mxu0 %v6081
        %6114 = vmatprep.subr.mxu0 0.0
        %6115 = vmatpush1.msra.mxu0 %v6082
        %6116 = vmatprep.subr.mxu0 0.0
        %6117 = vmatpush1.msra.mxu0 %v6083
        %6118 = vmatprep.subr.mxu0 0.0
        %6119 = vmatpush1.msra.mxu0 %v6084
        %6120 = vmatprep.subr.mxu0 0.0
        %6121 = vmatpush1.msra.mxu0 %v6085
        %6122 = vmatprep.subr.mxu0 0.0
        %6123 = vmatpush1.msra.mxu0 %v6086
        %6124 = vmatprep.subr.mxu0 0.0
        %6125 = vmatpush1.msra.mxu0 %v6087
        %6126 = vmatprep.subr.mxu0 0.0
        %6127 = vmatpush1.msra.mxu0 %v6088
        %6128 = vmatprep.subr.mxu0 0.0
        %6129 = vmatpush1.msra.mxu0 %v6089
        %6130 = vmatprep.subr.mxu0 0.0
        %6131 = vmatpush1.msra.mxu0 %v6090
        %6132 = vmatprep.subr.mxu0 0.0
        %6133 = vmatpush1.msra.mxu0 %v6091
        %6134 = vmatprep.subr.mxu0 0.0
        %6135 = vmatpush1.msra.mxu0 %v6092
        %6136 = vmatprep.subr.mxu0 0.0
        %6137 = vmatpush1.msra.mxu0 %v6093
        %6138 = vmatprep.subr.mxu0 0.0
        %6139 = vmatpush1.msra.mxu0 0.0
        %6140 = vmatprep.subr.mxu0 0.0
        %6141 = vmatpush1.msra.mxu0 0.0
        %6142 = vmatprep.subr.mxu0 0.0
        %6143 = vmatpush1.msra.mxu0 0.0
        %6144 = vmatprep.subr.mxu0 0.0
        %6145 = vmatpush1.msra.mxu0 0.0
        %6146 = vmatprep.subr.mxu0 0.0
        %6147 = vmatpush1.msra.mxu0 0.0
        %6148 = vmatprep.subr.mxu0 0.0
        %6149 = vmatpush1.msra.mxu0 0.0
        %6150 = vmatprep.subr.mxu0 0.0
        %6151 = vmatpush1.msra.mxu0 0.0
        %6152 = vmatprep.subr.mxu0 0.0
        %6153 = vmatpush1.msra.mxu0 0.0
        %6154 = vmatprep.subr.mxu0 0.0
        %6155 = vmatpush1.msra.mxu0 0.0
        %6156 = vmatprep.subr.mxu0 0.0
        %6157 = vmatpush1.msra.mxu0 0.0
        %6158 = vmatprep.subr.mxu0 0.0
        %6159 = vmatpush1.msra.mxu0 0.0
        %6160 = vmatprep.subr.mxu0 0.0
        %6161 = vmatpush1.msra.mxu0 0.0
        %6162 = vmatprep.subr.mxu0 0.0
        %6163 = vmatpush1.msra.mxu0 0.0
        %6164 = vmatprep.subr.mxu0 0.0
        %6165 = vmatpush1.msra.mxu0 0.0
        %6166 = vmatprep.subr.mxu0 0.0
        %6167 = vmatpush1.msra.mxu0 0.0
        %6168 = vmatprep.subr.mxu0 0.0
        %6169 = vmatpush1.msra.mxu0 0.0
        %6170 = vmatprep.mubr.f32.mxu0 0.0
        %6171 = vmatmul.mubr.f32.gmra.mrb[0].mxu0 %v6102
        %v6172 = vpop.f32.mrb[0].mxu0
        %v6173 = vadd.f32 0.0, %v6172
        %v6174 = vpop.f32.mrb[0].mxu0
        %6175 = vmatprep.mubr.f32.mxu0 0.0
        %6176 = vmatmul.mubr.f32.gmra.mrb[0].mxu0 %v6103
        %v6177 = vpop.f32.mrb[0].mxu0
        %v6178 = vadd.f32 0.0, %v6177
        %v6179 = vpop.f32.mrb[0].mxu0
        %6180 = vdwg.mxu0
        %v6181 = vadd.f32 %v6069, %v6173
        %v6182 = vadd.f32 %v6074, %v6178
        %s6183 = scalar_lea.vmem [#allocation5], 7296
        %v6184 = vld [vmem:[%s6183] sm:$0xff]
        %v6185 = vld [vmem:[%s6183 + $0x8] sm:$0xff]
        %v6186 = vld [vmem:[%s6183 + $0x10] sm:$0xff]
        %v6187 = vld [vmem:[%s6183 + $0x18] sm:$0xff]
        %v6188 = vld [vmem:[%s6183 + $0x20] sm:$0xff]
        %v6189 = vld [vmem:[%s6183 + $0x28] sm:$0xff]
        %v6190 = vld [vmem:[%s6183 + $0x30] sm:$0xff]
        %v6191 = vld [vmem:[%s6183 + $0x38] sm:$0xff]
        %v6192 = vld [vmem:[%s6183 + $0x40] sm:$0xff]
        %v6193 = vld [vmem:[%s6183 + $0x48] sm:$0xff]
        %v6194 = vld [vmem:[%s6183 + $0x50] sm:$0xff]
        %v6195 = vld [vmem:[%s6183 + $0x58] sm:$0xff]
        %v6196 = vld [vmem:[%s6183 + $0x60] sm:$0xff]
        %v6197 = vld [vmem:[%s6183 + $0x68] sm:$0xff]
        %v6198 = vld [vmem:[%s6183 + $0x70] sm:$0xff]
        %v6199 = vld [vmem:[%s6183 + $0x78] sm:$0xff]
        %v6201 = vrot.slane %v5875, 1
        %v6202 = vrot.slane %v5867, 1
        %v6203 = vsel %vm619, %v6201, %v6202
        %v6204 = vrot.slane %v5877, 1
        %v6205 = vsel %vm619, %v6202, %v6204
        %6208 = vmatprep.subr.mxu0 0.0
        %6209 = vmatpush1.msra.mxu0 %v6184
        %6210 = vmatprep.subr.mxu0 0.0
        %6211 = vmatpush1.msra.mxu0 %v6185
        %6212 = vmatprep.subr.mxu0 0.0
        %6213 = vmatpush1.msra.mxu0 %v6186
        %6214 = vmatprep.subr.mxu0 0.0
        %6215 = vmatpush1.msra.mxu0 %v6187
        %6216 = vmatprep.subr.mxu0 0.0
        %6217 = vmatpush1.msra.mxu0 %v6188
        %6218 = vmatprep.subr.mxu0 0.0
        %6219 = vmatpush1.msra.mxu0 %v6189
        %6220 = vmatprep.subr.mxu0 0.0
        %6221 = vmatpush1.msra.mxu0 %v6190
        %6222 = vmatprep.subr.mxu0 0.0
        %6223 = vmatpush1.msra.mxu0 %v6191
        %6224 = vmatprep.subr.mxu0 0.0
        %6225 = vmatpush1.msra.mxu0 %v6192
        %6226 = vmatprep.subr.mxu0 0.0
        %6227 = vmatpush1.msra.mxu0 %v6193
        %6228 = vmatprep.subr.mxu0 0.0
        %6229 = vmatpush1.msra.mxu0 %v6194
        %6230 = vmatprep.subr.mxu0 0.0
        %6231 = vmatpush1.msra.mxu0 %v6195
        %6232 = vmatprep.subr.mxu0 0.0
        %6233 = vmatpush1.msra.mxu0 %v6196
        %6234 = vmatprep.subr.mxu0 0.0
        %6235 = vmatpush1.msra.mxu0 %v6197
        %6236 = vmatprep.subr.mxu0 0.0
        %6237 = vmatpush1.msra.mxu0 %v6198
        %6238 = vmatprep.subr.mxu0 0.0
        %6239 = vmatpush1.msra.mxu0 %v6199
        %6240 = vmatprep.subr.mxu0 0.0
        %6241 = vmatpush1.msra.mxu0 0.0
        %6242 = vmatprep.subr.mxu0 0.0
        %6243 = vmatpush1.msra.mxu0 0.0
        %6244 = vmatprep.subr.mxu0 0.0
        %6245 = vmatpush1.msra.mxu0 0.0
        %6246 = vmatprep.subr.mxu0 0.0
        %6247 = vmatpush1.msra.mxu0 0.0
        %6248 = vmatprep.subr.mxu0 0.0
        %6249 = vmatpush1.msra.mxu0 0.0
        %6250 = vmatprep.subr.mxu0 0.0
        %6251 = vmatpush1.msra.mxu0 0.0
        %6252 = vmatprep.subr.mxu0 0.0
        %6253 = vmatpush1.msra.mxu0 0.0
        %6254 = vmatprep.subr.mxu0 0.0
        %6255 = vmatpush1.msra.mxu0 0.0
        %6256 = vmatprep.subr.mxu0 0.0
        %6257 = vmatpush1.msra.mxu0 0.0
        %6258 = vmatprep.subr.mxu0 0.0
        %6259 = vmatpush1.msra.mxu0 0.0
        %6260 = vmatprep.subr.mxu0 0.0
        %6261 = vmatpush1.msra.mxu0 0.0
        %6262 = vmatprep.subr.mxu0 0.0
        %6263 = vmatpush1.msra.mxu0 0.0
        %6264 = vmatprep.subr.mxu0 0.0
        %6265 = vmatpush1.msra.mxu0 0.0
        %6266 = vmatprep.subr.mxu0 0.0
        %6267 = vmatpush1.msra.mxu0 0.0
        %6268 = vmatprep.subr.mxu0 0.0
        %6269 = vmatpush1.msra.mxu0 0.0
        %6270 = vmatprep.subr.mxu0 0.0
        %6271 = vmatpush1.msra.mxu0 0.0
        %6272 = vmatprep.mubr.f32.mxu0 0.0
        %6273 = vmatmul.mubr.f32.gmra.mrb[0].mxu0 %v6203
        %v6274 = vpop.f32.mrb[0].mxu0
        %v6275 = vadd.f32 0.0, %v6274
        %v6276 = vpop.f32.mrb[0].mxu0
        %6277 = vmatprep.mubr.f32.mxu0 0.0
        %6278 = vmatmul.mubr.f32.gmra.mrb[0].mxu0 %v6205
        %v6279 = vpop.f32.mrb[0].mxu0
        %v6280 = vadd.f32 0.0, %v6279
        %v6281 = vpop.f32.mrb[0].mxu0
        %6282 = vdwg.mxu0
        %v6283 = vadd.f32 %v6181, %v6275
        %v6284 = vadd.f32 %v6182, %v6280
        %s6285 = scalar_lea.vmem [#allocation5], 7424
        %v6286 = vld [vmem:[%s6285] sm:$0xff]
        %v6287 = vld [vmem:[%s6285 + $0x8] sm:$0xff]
        %v6288 = vld [vmem:[%s6285 + $0x10] sm:$0xff]
        %v6289 = vld [vmem:[%s6285 + $0x18] sm:$0xff]
        %v6290 = vld [vmem:[%s6285 + $0x20] sm:$0xff]
        %v6291 = vld [vmem:[%s6285 + $0x28] sm:$0xff]
        %v6292 = vld [vmem:[%s6285 + $0x30] sm:$0xff]
        %v6293 = vld [vmem:[%s6285 + $0x38] sm:$0xff]
        %v6294 = vld [vmem:[%s6285 + $0x40] sm:$0xff]
        %v6295 = vld [vmem:[%s6285 + $0x48] sm:$0xff]
        %v6296 = vld [vmem:[%s6285 + $0x50] sm:$0xff]
        %v6297 = vld [vmem:[%s6285 + $0x58] sm:$0xff]
        %v6298 = vld [vmem:[%s6285 + $0x60] sm:$0xff]
        %v6299 = vld [vmem:[%s6285 + $0x68] sm:$0xff]
        %v6300 = vld [vmem:[%s6285 + $0x70] sm:$0xff]
        %v6301 = vld [vmem:[%s6285 + $0x78] sm:$0xff]
        %v6303 = vrot.slane %v5876, 1
        %v6304 = vrot.slane %v5869, 1
        %v6305 = vsel %vm619, %v6303, %v6304
        %v6306 = vrot.slane %v5878, 1
        %v6307 = vsel %vm619, %v6304, %v6306
        %6308 = vrot.lane.b32.xlu0 %v6203, 120
        %v6309 = vpop.permute.xlu0 %6308
        %6310 = vrot.lane.b32.xlu0 %v6305, 120
        %v6311 = vpop.permute.xlu0 %6310
        %6312 = vrot.lane.b32.xlu0 %v6205, 120
        %v6313 = vpop.permute.xlu0 %6312
        %6314 = vrot.lane.b32.xlu0 %v6307, 120
        %v6315 = vpop.permute.xlu0 %6314
        %v6316 = vsel %vm339, %v6309, %v6311
        %v6317 = vsel %vm339, %v6313, %v6315
        %6320 = vmatprep.subr.mxu0 0.0
        %6321 = vmatpush1.msra.mxu0 %v6286
        %6322 = vmatprep.subr.mxu0 0.0
        %6323 = vmatpush1.msra.mxu0 %v6287
        %6324 = vmatprep.subr.mxu0 0.0
        %6325 = vmatpush1.msra.mxu0 %v6288
        %6326 = vmatprep.subr.mxu0 0.0
        %6327 = vmatpush1.msra.mxu0 %v6289
        %6328 = vmatprep.subr.mxu0 0.0
        %6329 = vmatpush1.msra.mxu0 %v6290
        %6330 = vmatprep.subr.mxu0 0.0
        %6331 = vmatpush1.msra.mxu0 %v6291
        %6332 = vmatprep.subr.mxu0 0.0
        %6333 = vmatpush1.msra.mxu0 %v6292
        %6334 = vmatprep.subr.mxu0 0.0
        %6335 = vmatpush1.msra.mxu0 %v6293
        %6336 = vmatprep.subr.mxu0 0.0
        %6337 = vmatpush1.msra.mxu0 %v6294
        %6338 = vmatprep.subr.mxu0 0.0
        %6339 = vmatpush1.msra.mxu0 %v6295
        %6340 = vmatprep.subr.mxu0 0.0
        %6341 = vmatpush1.msra.mxu0 %v6296
        %6342 = vmatprep.subr.mxu0 0.0
        %6343 = vmatpush1.msra.mxu0 %v6297
        %6344 = vmatprep.subr.mxu0 0.0
        %6345 = vmatpush1.msra.mxu0 %v6298
        %6346 = vmatprep.subr.mxu0 0.0
        %6347 = vmatpush1.msra.mxu0 %v6299
        %6348 = vmatprep.subr.mxu0 0.0
        %6349 = vmatpush1.msra.mxu0 %v6300
        %6350 = vmatprep.subr.mxu0 0.0
        %6351 = vmatpush1.msra.mxu0 %v6301
        %6352 = vmatprep.subr.mxu0 0.0
        %6353 = vmatpush1.msra.mxu0 0.0
        %6354 = vmatprep.subr.mxu0 0.0
        %6355 = vmatpush1.msra.mxu0 0.0
        %6356 = vmatprep.subr.mxu0 0.0
        %6357 = vmatpush1.msra.mxu0 0.0
        %6358 = vmatprep.subr.mxu0 0.0
        %6359 = vmatpush1.msra.mxu0 0.0
        %6360 = vmatprep.subr.mxu0 0.0
        %6361 = vmatpush1.msra.mxu0 0.0
        %6362 = vmatprep.subr.mxu0 0.0
        %6363 = vmatpush1.msra.mxu0 0.0
        %6364 = vmatprep.subr.mxu0 0.0
        %6365 = vmatpush1.msra.mxu0 0.0
        %6366 = vmatprep.subr.mxu0 0.0
        %6367 = vmatpush1.msra.mxu0 0.0
        %6368 = vmatprep.subr.mxu0 0.0
        %6369 = vmatpush1.msra.mxu0 0.0
        %6370 = vmatprep.subr.mxu0 0.0
        %6371 = vmatpush1.msra.mxu0 0.0
        %6372 = vmatprep.subr.mxu0 0.0
        %6373 = vmatpush1.msra.mxu0 0.0
        %6374 = vmatprep.subr.mxu0 0.0
        %6375 = vmatpush1.msra.mxu0 0.0
        %6376 = vmatprep.subr.mxu0 0.0
        %6377 = vmatpush1.msra.mxu0 0.0
        %6378 = vmatprep.subr.mxu0 0.0
        %6379 = vmatpush1.msra.mxu0 0.0
        %6380 = vmatprep.subr.mxu0 0.0
        %6381 = vmatpush1.msra.mxu0 0.0
        %6382 = vmatprep.subr.mxu0 0.0
        %6383 = vmatpush1.msra.mxu0 0.0
        %6384 = vmatprep.mubr.f32.mxu0 0.0
        %6385 = vmatmul.mubr.f32.gmra.mrb[0].mxu0 %v6316
        %v6386 = vpop.f32.mrb[0].mxu0
        %v6387 = vadd.f32 0.0, %v6386
        %v6388 = vpop.f32.mrb[0].mxu0
        %6389 = vmatprep.mubr.f32.mxu0 0.0
        %6390 = vmatmul.mubr.f32.gmra.mrb[0].mxu0 %v6317
        %v6391 = vpop.f32.mrb[0].mxu0
        %v6392 = vadd.f32 0.0, %v6391
        %v6393 = vpop.f32.mrb[0].mxu0
        %6394 = vdwg.mxu0
        %v6395 = vadd.f32 %v6283, %v6387
        %v6396 = vadd.f32 %v6284, %v6392
        %s6397 = scalar_lea.vmem [#allocation5], 7552
        %v6398 = vld [vmem:[%s6397] sm:$0xff]
        %v6399 = vld [vmem:[%s6397 + $0x8] sm:$0xff]
        %v6400 = vld [vmem:[%s6397 + $0x10] sm:$0xff]
        %v6401 = vld [vmem:[%s6397 + $0x18] sm:$0xff]
        %v6402 = vld [vmem:[%s6397 + $0x20] sm:$0xff]
        %v6403 = vld [vmem:[%s6397 + $0x28] sm:$0xff]
        %v6404 = vld [vmem:[%s6397 + $0x30] sm:$0xff]
        %v6405 = vld [vmem:[%s6397 + $0x38] sm:$0xff]
        %v6406 = vld [vmem:[%s6397 + $0x40] sm:$0xff]
        %v6407 = vld [vmem:[%s6397 + $0x48] sm:$0xff]
        %v6408 = vld [vmem:[%s6397 + $0x50] sm:$0xff]
        %v6409 = vld [vmem:[%s6397 + $0x58] sm:$0xff]
        %v6410 = vld [vmem:[%s6397 + $0x60] sm:$0xff]
        %v6411 = vld [vmem:[%s6397 + $0x68] sm:$0xff]
        %v6412 = vld [vmem:[%s6397 + $0x70] sm:$0xff]
        %v6413 = vld [vmem:[%s6397 + $0x78] sm:$0xff]
        %6414 = vrot.lane.b32.xlu0 %v6203, 112
        %v6415 = vpop.permute.xlu0 %6414
        %6416 = vrot.lane.b32.xlu0 %v6305, 112
        %v6417 = vpop.permute.xlu0 %6416
        %6418 = vrot.lane.b32.xlu0 %v6205, 112
        %v6419 = vpop.permute.xlu0 %6418
        %6420 = vrot.lane.b32.xlu0 %v6307, 112
        %v6421 = vpop.permute.xlu0 %6420
        %v6422 = vsel %vm519, %v6415, %v6417
        %v6423 = vsel %vm519, %v6419, %v6421
        %6426 = vmatprep.subr.mxu0 0.0
        %6427 = vmatpush1.msra.mxu0 %v6398
        %6428 = vmatprep.subr.mxu0 0.0
        %6429 = vmatpush1.msra.mxu0 %v6399
        %6430 = vmatprep.subr.mxu0 0.0
        %6431 = vmatpush1.msra.mxu0 %v6400
        %6432 = vmatprep.subr.mxu0 0.0
        %6433 = vmatpush1.msra.mxu0 %v6401
        %6434 = vmatprep.subr.mxu0 0.0
        %6435 = vmatpush1.msra.mxu0 %v6402
        %6436 = vmatprep.subr.mxu0 0.0
        %6437 = vmatpush1.msra.mxu0 %v6403
        %6438 = vmatprep.subr.mxu0 0.0
        %6439 = vmatpush1.msra.mxu0 %v6404
        %6440 = vmatprep.subr.mxu0 0.0
        %6441 = vmatpush1.msra.mxu0 %v6405
        %6442 = vmatprep.subr.mxu0 0.0
        %6443 = vmatpush1.msra.mxu0 %v6406
        %6444 = vmatprep.subr.mxu0 0.0
        %6445 = vmatpush1.msra.mxu0 %v6407
        %6446 = vmatprep.subr.mxu0 0.0
        %6447 = vmatpush1.msra.mxu0 %v6408
        %6448 = vmatprep.subr.mxu0 0.0
        %6449 = vmatpush1.msra.mxu0 %v6409
        %6450 = vmatprep.subr.mxu0 0.0
        %6451 = vmatpush1.msra.mxu0 %v6410
        %6452 = vmatprep.subr.mxu0 0.0
        %6453 = vmatpush1.msra.mxu0 %v6411
        %6454 = vmatprep.subr.mxu0 0.0
        %6455 = vmatpush1.msra.mxu0 %v6412
        %6456 = vmatprep.subr.mxu0 0.0
        %6457 = vmatpush1.msra.mxu0 %v6413
        %6458 = vmatprep.subr.mxu0 0.0
        %6459 = vmatpush1.msra.mxu0 0.0
        %6460 = vmatprep.subr.mxu0 0.0
        %6461 = vmatpush1.msra.mxu0 0.0
        %6462 = vmatprep.subr.mxu0 0.0
        %6463 = vmatpush1.msra.mxu0 0.0
        %6464 = vmatprep.subr.mxu0 0.0
        %6465 = vmatpush1.msra.mxu0 0.0
        %6466 = vmatprep.subr.mxu0 0.0
        %6467 = vmatpush1.msra.mxu0 0.0
        %6468 = vmatprep.subr.mxu0 0.0
        %6469 = vmatpush1.msra.mxu0 0.0
        %6470 = vmatprep.subr.mxu0 0.0
        %6471 = vmatpush1.msra.mxu0 0.0
        %6472 = vmatprep.subr.mxu0 0.0
        %6473 = vmatpush1.msra.mxu0 0.0
        %6474 = vmatprep.subr.mxu0 0.0
        %6475 = vmatpush1.msra.mxu0 0.0
        %6476 = vmatprep.subr.mxu0 0.0
        %6477 = vmatpush1.msra.mxu0 0.0
        %6478 = vmatprep.subr.mxu0 0.0
        %6479 = vmatpush1.msra.mxu0 0.0
        %6480 = vmatprep.subr.mxu0 0.0
        %6481 = vmatpush1.msra.mxu0 0.0
        %6482 = vmatprep.subr.mxu0 0.0
        %6483 = vmatpush1.msra.mxu0 0.0
        %6484 = vmatprep.subr.mxu0 0.0
        %6485 = vmatpush1.msra.mxu0 0.0
        %6486 = vmatprep.subr.mxu0 0.0
        %6487 = vmatpush1.msra.mxu0 0.0
        %6488 = vmatprep.subr.mxu0 0.0
        %6489 = vmatpush1.msra.mxu0 0.0
        %6490 = vmatprep.mubr.f32.mxu0 0.0
        %6491 = vmatmul.mubr.f32.gmra.mrb[0].mxu0 %v6422
        %v6492 = vpop.f32.mrb[0].mxu0
        %v6493 = vadd.f32 0.0, %v6492
        %v6494 = vpop.f32.mrb[0].mxu0
        %6495 = vmatprep.mubr.f32.mxu0 0.0
        %6496 = vmatmul.mubr.f32.gmra.mrb[0].mxu0 %v6423
        %v6497 = vpop.f32.mrb[0].mxu0
        %v6498 = vadd.f32 0.0, %v6497
        %v6499 = vpop.f32.mrb[0].mxu0
        %6500 = vdwg.mxu0
        %v6501 = vadd.f32 %v6395, %v6493
        %v6502 = vadd.f32 %v6396, %v6498
        %s6503 = scalar_lea.vmem [#allocation5], 7680
        %v6504 = vld [vmem:[%s6503] sm:$0xff]
        %v6505 = vld [vmem:[%s6503 + $0x8] sm:$0xff]
        %v6506 = vld [vmem:[%s6503 + $0x10] sm:$0xff]
        %v6507 = vld [vmem:[%s6503 + $0x18] sm:$0xff]
        %v6508 = vld [vmem:[%s6503 + $0x20] sm:$0xff]
        %v6509 = vld [vmem:[%s6503 + $0x28] sm:$0xff]
        %v6510 = vld [vmem:[%s6503 + $0x30] sm:$0xff]
        %v6511 = vld [vmem:[%s6503 + $0x38] sm:$0xff]
        %v6512 = vld [vmem:[%s6503 + $0x40] sm:$0xff]
        %v6513 = vld [vmem:[%s6503 + $0x48] sm:$0xff]
        %v6514 = vld [vmem:[%s6503 + $0x50] sm:$0xff]
        %v6515 = vld [vmem:[%s6503 + $0x58] sm:$0xff]
        %v6516 = vld [vmem:[%s6503 + $0x60] sm:$0xff]
        %v6517 = vld [vmem:[%s6503 + $0x68] sm:$0xff]
        %v6518 = vld [vmem:[%s6503 + $0x70] sm:$0xff]
        %v6519 = vld [vmem:[%s6503 + $0x78] sm:$0xff]
        %v6520 = vrot.slane %v5875, 2
        %v6521 = vrot.slane %v5867, 2
        %v6522 = vsel %vm939, %v6520, %v6521
        %v6523 = vrot.slane %v5877, 2
        %v6524 = vsel %vm939, %v6521, %v6523
        %6527 = vmatprep.subr.mxu0 0.0
        %6528 = vmatpush1.msra.mxu0 %v6504
        %6529 = vmatprep.subr.mxu0 0.0
        %6530 = vmatpush1.msra.mxu0 %v6505
        %6531 = vmatprep.subr.mxu0 0.0
        %6532 = vmatpush1.msra.mxu0 %v6506
        %6533 = vmatprep.subr.mxu0 0.0
        %6534 = vmatpush1.msra.mxu0 %v6507
        %6535 = vmatprep.subr.mxu0 0.0
        %6536 = vmatpush1.msra.mxu0 %v6508
        %6537 = vmatprep.subr.mxu0 0.0
        %6538 = vmatpush1.msra.mxu0 %v6509
        %6539 = vmatprep.subr.mxu0 0.0
        %6540 = vmatpush1.msra.mxu0 %v6510
        %6541 = vmatprep.subr.mxu0 0.0
        %6542 = vmatpush1.msra.mxu0 %v6511
        %6543 = vmatprep.subr.mxu0 0.0
        %6544 = vmatpush1.msra.mxu0 %v6512
        %6545 = vmatprep.subr.mxu0 0.0
        %6546 = vmatpush1.msra.mxu0 %v6513
        %6547 = vmatprep.subr.mxu0 0.0
        %6548 = vmatpush1.msra.mxu0 %v6514
        %6549 = vmatprep.subr.mxu0 0.0
        %6550 = vmatpush1.msra.mxu0 %v6515
        %6551 = vmatprep.subr.mxu0 0.0
        %6552 = vmatpush1.msra.mxu0 %v6516
        %6553 = vmatprep.subr.mxu0 0.0
        %6554 = vmatpush1.msra.mxu0 %v6517
        %6555 = vmatprep.subr.mxu0 0.0
        %6556 = vmatpush1.msra.mxu0 %v6518
        %6557 = vmatprep.subr.mxu0 0.0
        %6558 = vmatpush1.msra.mxu0 %v6519
        %6559 = vmatprep.subr.mxu0 0.0
        %6560 = vmatpush1.msra.mxu0 0.0
        %6561 = vmatprep.subr.mxu0 0.0
        %6562 = vmatpush1.msra.mxu0 0.0
        %6563 = vmatprep.subr.mxu0 0.0
        %6564 = vmatpush1.msra.mxu0 0.0
        %6565 = vmatprep.subr.mxu0 0.0
        %6566 = vmatpush1.msra.mxu0 0.0
        %6567 = vmatprep.subr.mxu0 0.0
        %6568 = vmatpush1.msra.mxu0 0.0
        %6569 = vmatprep.subr.mxu0 0.0
        %6570 = vmatpush1.msra.mxu0 0.0
        %6571 = vmatprep.subr.mxu0 0.0
        %6572 = vmatpush1.msra.mxu0 0.0
        %6573 = vmatprep.subr.mxu0 0.0
        %6574 = vmatpush1.msra.mxu0 0.0
        %6575 = vmatprep.subr.mxu0 0.0
        %6576 = vmatpush1.msra.mxu0 0.0
        %6577 = vmatprep.subr.mxu0 0.0
        %6578 = vmatpush1.msra.mxu0 0.0
        %6579 = vmatprep.subr.mxu0 0.0
        %6580 = vmatpush1.msra.mxu0 0.0
        %6581 = vmatprep.subr.mxu0 0.0
        %6582 = vmatpush1.msra.mxu0 0.0
        %6583 = vmatprep.subr.mxu0 0.0
        %6584 = vmatpush1.msra.mxu0 0.0
        %6585 = vmatprep.subr.mxu0 0.0
        %6586 = vmatpush1.msra.mxu0 0.0
        %6587 = vmatprep.subr.mxu0 0.0
        %6588 = vmatpush1.msra.mxu0 0.0
        %6589 = vmatprep.subr.mxu0 0.0
        %6590 = vmatpush1.msra.mxu0 0.0
        %6591 = vmatprep.mubr.f32.mxu0 0.0
        %6592 = vmatmul.mubr.f32.gmra.mrb[0].mxu0 %v6522
        %v6593 = vpop.f32.mrb[0].mxu0
        %v6594 = vadd.f32 0.0, %v6593
        %v6595 = vpop.f32.mrb[0].mxu0
        %6596 = vmatprep.mubr.f32.mxu0 0.0
        %6597 = vmatmul.mubr.f32.gmra.mrb[0].mxu0 %v6524
        %v6598 = vpop.f32.mrb[0].mxu0
        %v6599 = vadd.f32 0.0, %v6598
        %v6600 = vpop.f32.mrb[0].mxu0
        %6601 = vdwg.mxu0
        %v6602 = vadd.f32 %v6501, %v6594
        %v6603 = vadd.f32 %v6502, %v6599
        %s6604 = scalar_lea.vmem [#allocation5], 7808
        %v6605 = vld [vmem:[%s6604] sm:$0xff]
        %v6606 = vld [vmem:[%s6604 + $0x8] sm:$0xff]
        %v6607 = vld [vmem:[%s6604 + $0x10] sm:$0xff]
        %v6608 = vld [vmem:[%s6604 + $0x18] sm:$0xff]
        %v6609 = vld [vmem:[%s6604 + $0x20] sm:$0xff]
        %v6610 = vld [vmem:[%s6604 + $0x28] sm:$0xff]
        %v6611 = vld [vmem:[%s6604 + $0x30] sm:$0xff]
        %v6612 = vld [vmem:[%s6604 + $0x38] sm:$0xff]
        %v6613 = vld [vmem:[%s6604 + $0x40] sm:$0xff]
        %v6614 = vld [vmem:[%s6604 + $0x48] sm:$0xff]
        %v6615 = vld [vmem:[%s6604 + $0x50] sm:$0xff]
        %v6616 = vld [vmem:[%s6604 + $0x58] sm:$0xff]
        %v6617 = vld [vmem:[%s6604 + $0x60] sm:$0xff]
        %v6618 = vld [vmem:[%s6604 + $0x68] sm:$0xff]
        %v6619 = vld [vmem:[%s6604 + $0x70] sm:$0xff]
        %v6620 = vld [vmem:[%s6604 + $0x78] sm:$0xff]
        %v6621 = vrot.slane %v5876, 2
        %v6622 = vrot.slane %v5869, 2
        %v6623 = vsel %vm939, %v6621, %v6622
        %v6624 = vrot.slane %v5878, 2
        %v6625 = vsel %vm939, %v6622, %v6624
        %6626 = vrot.lane.b32.xlu0 %v6522, 120
        %v6627 = vpop.permute.xlu0 %6626
        %6628 = vrot.lane.b32.xlu0 %v6623, 120
        %v6629 = vpop.permute.xlu0 %6628
        %6630 = vrot.lane.b32.xlu0 %v6524, 120
        %v6631 = vpop.permute.xlu0 %6630
        %6632 = vrot.lane.b32.xlu0 %v6625, 120
        %v6633 = vpop.permute.xlu0 %6632
        %v6634 = vsel %vm339, %v6627, %v6629
        %v6635 = vsel %vm339, %v6631, %v6633
        %6638 = vmatprep.subr.mxu0 0.0
        %6639 = vmatpush1.msra.mxu0 %v6605
        %6640 = vmatprep.subr.mxu0 0.0
        %6641 = vmatpush1.msra.mxu0 %v6606
        %6642 = vmatprep.subr.mxu0 0.0
        %6643 = vmatpush1.msra.mxu0 %v6607
        %6644 = vmatprep.subr.mxu0 0.0
        %6645 = vmatpush1.msra.mxu0 %v6608
        %6646 = vmatprep.subr.mxu0 0.0
        %6647 = vmatpush1.msra.mxu0 %v6609
        %6648 = vmatprep.subr.mxu0 0.0
        %6649 = vmatpush1.msra.mxu0 %v6610
        %6650 = vmatprep.subr.mxu0 0.0
        %6651 = vmatpush1.msra.mxu0 %v6611
        %6652 = vmatprep.subr.mxu0 0.0
        %6653 = vmatpush1.msra.mxu0 %v6612
        %6654 = vmatprep.subr.mxu0 0.0
        %6655 = vmatpush1.msra.mxu0 %v6613
        %6656 = vmatprep.subr.mxu0 0.0
        %6657 = vmatpush1.msra.mxu0 %v6614
        %6658 = vmatprep.subr.mxu0 0.0
        %6659 = vmatpush1.msra.mxu0 %v6615
        %6660 = vmatprep.subr.mxu0 0.0
        %6661 = vmatpush1.msra.mxu0 %v6616
        %6662 = vmatprep.subr.mxu0 0.0
        %6663 = vmatpush1.msra.mxu0 %v6617
        %6664 = vmatprep.subr.mxu0 0.0
        %6665 = vmatpush1.msra.mxu0 %v6618
        %6666 = vmatprep.subr.mxu0 0.0
        %6667 = vmatpush1.msra.mxu0 %v6619
        %6668 = vmatprep.subr.mxu0 0.0
        %6669 = vmatpush1.msra.mxu0 %v6620
        %6670 = vmatprep.subr.mxu0 0.0
        %6671 = vmatpush1.msra.mxu0 0.0
        %6672 = vmatprep.subr.mxu0 0.0
        %6673 = vmatpush1.msra.mxu0 0.0
        %6674 = vmatprep.subr.mxu0 0.0
        %6675 = vmatpush1.msra.mxu0 0.0
        %6676 = vmatprep.subr.mxu0 0.0
        %6677 = vmatpush1.msra.mxu0 0.0
        %6678 = vmatprep.subr.mxu0 0.0
        %6679 = vmatpush1.msra.mxu0 0.0
        %6680 = vmatprep.subr.mxu0 0.0
        %6681 = vmatpush1.msra.mxu0 0.0
        %6682 = vmatprep.subr.mxu0 0.0
        %6683 = vmatpush1.msra.mxu0 0.0
        %6684 = vmatprep.subr.mxu0 0.0
        %6685 = vmatpush1.msra.mxu0 0.0
        %6686 = vmatprep.subr.mxu0 0.0
        %6687 = vmatpush1.msra.mxu0 0.0
        %6688 = vmatprep.subr.mxu0 0.0
        %6689 = vmatpush1.msra.mxu0 0.0
        %6690 = vmatprep.subr.mxu0 0.0
        %6691 = vmatpush1.msra.mxu0 0.0
        %6692 = vmatprep.subr.mxu0 0.0
        %6693 = vmatpush1.msra.mxu0 0.0
        %6694 = vmatprep.subr.mxu0 0.0
        %6695 = vmatpush1.msra.mxu0 0.0
        %6696 = vmatprep.subr.mxu0 0.0
        %6697 = vmatpush1.msra.mxu0 0.0
        %6698 = vmatprep.subr.mxu0 0.0
        %6699 = vmatpush1.msra.mxu0 0.0
        %6700 = vmatprep.subr.mxu0 0.0
        %6701 = vmatpush1.msra.mxu0 0.0
        %6702 = vmatprep.mubr.f32.mxu0 0.0
        %6703 = vmatmul.mubr.f32.gmra.mrb[0].mxu0 %v6634
        %v6704 = vpop.f32.mrb[0].mxu0
        %v6705 = vadd.f32 0.0, %v6704
        %v6706 = vpop.f32.mrb[0].mxu0
        %6707 = vmatprep.mubr.f32.mxu0 0.0
        %6708 = vmatmul.mubr.f32.gmra.mrb[0].mxu0 %v6635
        %v6709 = vpop.f32.mrb[0].mxu0
        %v6710 = vadd.f32 0.0, %v6709
        %v6711 = vpop.f32.mrb[0].mxu0
        %6712 = vdwg.mxu0
        %v6713 = vadd.f32 %v6602, %v6705
        %v6714 = vadd.f32 %v6603, %v6710
        %s6715 = scalar_lea.vmem [#allocation5], 7936
        %v6716 = vld [vmem:[%s6715] sm:$0xff]
        %v6717 = vld [vmem:[%s6715 + $0x8] sm:$0xff]
        %v6718 = vld [vmem:[%s6715 + $0x10] sm:$0xff]
        %v6719 = vld [vmem:[%s6715 + $0x18] sm:$0xff]
        %v6720 = vld [vmem:[%s6715 + $0x20] sm:$0xff]
        %v6721 = vld [vmem:[%s6715 + $0x28] sm:$0xff]
        %v6722 = vld [vmem:[%s6715 + $0x30] sm:$0xff]
        %v6723 = vld [vmem:[%s6715 + $0x38] sm:$0xff]
        %v6724 = vld [vmem:[%s6715 + $0x40] sm:$0xff]
        %v6725 = vld [vmem:[%s6715 + $0x48] sm:$0xff]
        %v6726 = vld [vmem:[%s6715 + $0x50] sm:$0xff]
        %v6727 = vld [vmem:[%s6715 + $0x58] sm:$0xff]
        %v6728 = vld [vmem:[%s6715 + $0x60] sm:$0xff]
        %v6729 = vld [vmem:[%s6715 + $0x68] sm:$0xff]
        %v6730 = vld [vmem:[%s6715 + $0x70] sm:$0xff]
        %v6731 = vld [vmem:[%s6715 + $0x78] sm:$0xff]
        %6732 = vrot.lane.b32.xlu0 %v6522, 112
        %v6733 = vpop.permute.xlu0 %6732
        %6734 = vrot.lane.b32.xlu0 %v6623, 112
        %v6735 = vpop.permute.xlu0 %6734
        %6736 = vrot.lane.b32.xlu0 %v6524, 112
        %v6737 = vpop.permute.xlu0 %6736
        %6738 = vrot.lane.b32.xlu0 %v6625, 112
        %v6739 = vpop.permute.xlu0 %6738
        %v6740 = vsel %vm519, %v6733, %v6735
        %v6741 = vsel %vm519, %v6737, %v6739
        %6744 = vmatprep.subr.mxu0 0.0
        %6745 = vmatpush1.msra.mxu0 %v6716
        %6746 = vmatprep.subr.mxu0 0.0
        %6747 = vmatpush1.msra.mxu0 %v6717
        %6748 = vmatprep.subr.mxu0 0.0
        %6749 = vmatpush1.msra.mxu0 %v6718
        %6750 = vmatprep.subr.mxu0 0.0
        %6751 = vmatpush1.msra.mxu0 %v6719
        %6752 = vmatprep.subr.mxu0 0.0
        %6753 = vmatpush1.msra.mxu0 %v6720
        %6754 = vmatprep.subr.mxu0 0.0
        %6755 = vmatpush1.msra.mxu0 %v6721
        %6756 = vmatprep.subr.mxu0 0.0
        %6757 = vmatpush1.msra.mxu0 %v6722
        %6758 = vmatprep.subr.mxu0 0.0
        %6759 = vmatpush1.msra.mxu0 %v6723
        %6760 = vmatprep.subr.mxu0 0.0
        %6761 = vmatpush1.msra.mxu0 %v6724
        %6762 = vmatprep.subr.mxu0 0.0
        %6763 = vmatpush1.msra.mxu0 %v6725
        %6764 = vmatprep.subr.mxu0 0.0
        %6765 = vmatpush1.msra.mxu0 %v6726
        %6766 = vmatprep.subr.mxu0 0.0
        %6767 = vmatpush1.msra.mxu0 %v6727
        %6768 = vmatprep.subr.mxu0 0.0
        %6769 = vmatpush1.msra.mxu0 %v6728
        %6770 = vmatprep.subr.mxu0 0.0
        %6771 = vmatpush1.msra.mxu0 %v6729
        %6772 = vmatprep.subr.mxu0 0.0
        %6773 = vmatpush1.msra.mxu0 %v6730
        %6774 = vmatprep.subr.mxu0 0.0
        %6775 = vmatpush1.msra.mxu0 %v6731
        %6776 = vmatprep.subr.mxu0 0.0
        %6777 = vmatpush1.msra.mxu0 0.0
        %6778 = vmatprep.subr.mxu0 0.0
        %6779 = vmatpush1.msra.mxu0 0.0
        %6780 = vmatprep.subr.mxu0 0.0
        %6781 = vmatpush1.msra.mxu0 0.0
        %6782 = vmatprep.subr.mxu0 0.0
        %6783 = vmatpush1.msra.mxu0 0.0
        %6784 = vmatprep.subr.mxu0 0.0
        %6785 = vmatpush1.msra.mxu0 0.0
        %6786 = vmatprep.subr.mxu0 0.0
        %6787 = vmatpush1.msra.mxu0 0.0
        %6788 = vmatprep.subr.mxu0 0.0
        %6789 = vmatpush1.msra.mxu0 0.0
        %6790 = vmatprep.subr.mxu0 0.0
        %6791 = vmatpush1.msra.mxu0 0.0
        %6792 = vmatprep.subr.mxu0 0.0
        %6793 = vmatpush1.msra.mxu0 0.0
        %6794 = vmatprep.subr.mxu0 0.0
        %6795 = vmatpush1.msra.mxu0 0.0
        %6796 = vmatprep.subr.mxu0 0.0
        %6797 = vmatpush1.msra.mxu0 0.0
        %6798 = vmatprep.subr.mxu0 0.0
        %6799 = vmatpush1.msra.mxu0 0.0
        %6800 = vmatprep.subr.mxu0 0.0
        %6801 = vmatpush1.msra.mxu0 0.0
        %6802 = vmatprep.subr.mxu0 0.0
        %6803 = vmatpush1.msra.mxu0 0.0
        %6804 = vmatprep.subr.mxu0 0.0
        %6805 = vmatpush1.msra.mxu0 0.0
        %6806 = vmatprep.subr.mxu0 0.0
        %6807 = vmatpush1.msra.mxu0 0.0
        %6808 = vmatprep.mubr.f32.mxu0 0.0
        %6809 = vmatmul.mubr.f32.gmra.mrb[0].mxu0 %v6740
        %v6810 = vpop.f32.mrb[0].mxu0
        %v6811 = vadd.f32 0.0, %v6810
        %v6812 = vpop.f32.mrb[0].mxu0
        %6813 = vmatprep.mubr.f32.mxu0 0.0
        %6814 = vmatmul.mubr.f32.gmra.mrb[0].mxu0 %v6741
        %v6815 = vpop.f32.mrb[0].mxu0
        %v6816 = vadd.f32 0.0, %v6815
        %v6817 = vpop.f32.mrb[0].mxu0
        %6818 = vdwg.mxu0
        %v6819 = vadd.f32 %v6713, %v6811
        %v6820 = vadd.f32 %v6714, %v6816
        %s6821 = scalar_lea.vmem [#allocation7], 6
        %v6822 = vld [vmem:[%s6821] sm:$0x1]
        %v6824 = vlaneseq
        %v6825 = vshrl.u32 %v6824, 7
        %v6826 = vsub.s32 0, %v6825
        %v6827 = vrot.slane %v6822, %v6826
        %v6829 = vmul.f32 %v6819, %v6827
        %v6830 = vmul.f32 %v6820, %v6827
        %s6831 = scalar_lea.vmem [#allocation8], 6
        %v6832 = vld [vmem:[%s6831] sm:$0x1]
        %v6834 = vlaneseq
        %v6835 = vshrl.u32 %v6834, 7
        %v6836 = vsub.s32 0, %v6835
        %v6837 = vrot.slane %v6832, %v6836
        %v6839 = vadd.f32 %v6829, %v6837
        %v6840 = vadd.f32 %v6830, %v6837
        %v6841 = vmax.f32 %v6839, 0.0
        %v6842 = vmax.f32 %v6840, 0.0
        %v6843 = vadd.f32 %v5846, %v6841
        %v6844 = vadd.f32 %v5847, %v6842
        %v6845 = vmul.f32 %v6843, 0.33333334
        %v6846 = vmul.f32 %v6844, 0.33333334
        %6847 = vst [vmem:[%s259] sm:$0xff] %v6845
        %6848 = vst [vmem:[%s259 + $0x8] sm:$0xff] %v6846
        %s6849 = sand.u32 %s120, 1
        %s6850 = scalar_lea.sflag [#allocation4], %s6849
        %s6851 = sand.u32 %s120, 1
        %s6852 = smul.addr %s6851, 16
        %s6853 = scalar_lea.vmem [#allocation10], %s6852
        // Predicated region
        $region53: #{tpu_custom_call.1} parent=35 // pred_check
          %p6854 = pneg %p130
        $region54: #{tpu_custom_call.1} parent=35 // pred_check_branch
          %6856 = sbr.rel (%p6854) target = $region56
        $region55: #{tpu_custom_call.1} parent=35 // pred_region
          %s6858 = ssub.s32 256, 256
          %6859 = vsyncadd %s6850, %s6858
          %s6860 = smul.addr %s23, 2
          %s6861 = smul.addr %s6860, 128
          %s6862 = scalar_lea.hbm %s4, %s6861
          %s6863 = sshll.u32 %s6853, 4
          %s6864 = int_to_ptr.vmem [resolvable:$true] %s6863
          %6869 = dma.vmem_to_hbm [thread:$0]  %s6864, 256, %s6862, %s6850, 128, 128, 8
        $region56: #{tpu_custom_call.1} parent=35 // pred_fallthru
          _
      $region36: #{tpu_custom_call.1} parent=5 // pred_fallthru
        _
      %p6870 = scmp.le.s32.totalorder 2, %s18
      // Predicated region
      $region57: #{tpu_custom_call.1} parent=5 // pred_check
        %p6871 = pneg %p6870
      $region58: #{tpu_custom_call.1} parent=5 // pred_check_branch
        %6873 = sbr.rel (%p6871) target = $region60
      $region59: #{tpu_custom_call.1} parent=5 // pred_region
        %s6874 = ssub.s32 %s18, 2
        // Predicated region
        $region61: #{tpu_custom_call.1} parent=59 // pred_check
          %p6875 = pneg %p136
        $region62: #{tpu_custom_call.1} parent=59 // pred_check_branch
          %6877 = sbr.rel (%p6875) target = $region64
        $region63: #{tpu_custom_call.1} parent=59 // pred_region
          %s6878 = sand.u32 %s121, 1
          %s6879 = scalar_lea.sflag [#allocation4], %s6878
          %s6880 = sand.u32 %s121, 1
          %s6881 = smul.addr %s6880, 16
          %s6882 = scalar_lea.vmem [#allocation10], %s6881
          %6883 = dma.done %s6879, 256
        $region64: #{tpu_custom_call.1} parent=59 // pred_fallthru
          _
      $region60: #{tpu_custom_call.1} parent=5 // pred_fallthru
        _
    $region6: #{tpu_custom_call.1} parent=1 // loop_footer
      %s22 = sadd.s32 1, %s18
    $region7: #{tpu_custom_call.1} parent=1 // loop_footer_branch
      %17 = sbr.rel target = $region3
    $region8: #{tpu_custom_call.1} parent=1 // loop_exit
      _
    %6884 = vsyncpa [#allocation3], 1
    %s6885 = scalar_lea.sflag [#allocation3], 1
    %6886 = vsyncpa %s6885, 1
    %6887 = vsyncpa [#allocation6], 1
    %6888 = vsyncpa [#allocation9], 1
    %6889 = vsyncpa [#allocation4], 1
    %s6890 = scalar_lea.sflag [#allocation4], 1
    %6891 = vsyncpa %s6890, 1

</llo_original>
